<compile_context>
chip_gen: v7x
topology: tpu7x:2x2x1
jax: 0.10.0
libtpu: 0.0.40
codegen_flags: <defaults>
</compile_context>

<pallas_src>
import functools

import jax
import jax.numpy as jnp
import numpy as np
from jax import lax
from jax.experimental import pallas as pl
from jax.experimental.pallas import tpu as pltpu


# ----------------------------- fused stage body -----------------------------

def _stage(in_ref, out_ref, t_ref, sel_ref, g_ref, gt_ref, ga_ref, be_ref,
           my, blk, pwc, inv_count, *, eps):
    """conv(5x5 via Toeplitz taps) -> BatchNorm(batch stats) -> 2x2 maxpool -> ReLU.

    in_ref : (N*H_in, W_in*C_in)   f32   activation, samples stacked on rows
    t_ref  : (5, W_in*C_in, 2*blk) bf16  per-tap Toeplitz weights; output
             columns laid out (dj, q, c_out), each dj block padded to `blk`
    sel_ref: (2, N*PH, my)         f32   0/1 row-phase (di) selection matrices
    g_ref  : (2*blk, C_out)        f32   lane -> channel reduction matrix
    gt_ref : (C_out, 2*blk)        f32   channel -> lane broadcast matrix
    ga/be  : (1, C_out)            f32   BN gamma / beta
    out_ref: (N*PH, pwc)           f32   pooled+ReLU output (= next stage input)
    """
    kh = t_ref.shape[0]
    # conv:  Yfull[j, :] = sum_ki A[j+ki, :] @ T[ki]
    # Rows that straddle the sample boundary are junk; `sel` never selects them
    # and BN stats are taken after selection, so they never contribute.
    y = None
    for ki in range(kh):
        lhs = in_ref[ki:ki + my, :].astype(jnp.bfloat16)
        part = jnp.dot(lhs, t_ref[ki], preferred_element_type=jnp.float32)
        y = part if y is None else y + part

    # Pool row-phase selection (rows 2p+di of the conv output) for all samples
    # at once, done on the MXU with a 0/1 matrix (avoids strided sublane reads).
    r0 = jnp.dot(sel_ref[0], y, preferred_element_type=jnp.float32)
    r1 = jnp.dot(sel_ref[1], y, preferred_element_type=jnp.float32)

    # BatchNorm batch statistics over the FULL conv output, single pass
    # (sum and sum of squares), reduced to per-channel via a tiny matmul.
    # NOTE: the conv bias is intentionally dropped here -- a per-channel
    # constant is exactly cancelled by training-mode BatchNorm.
    s1 = jnp.sum(r0, axis=0, keepdims=True) + jnp.sum(r1, axis=0, keepdims=True)
    s2 = (jnp.sum(r0 * r0, axis=0, keepdims=True)
          + jnp.sum(r1 * r1, axis=0, keepdims=True))
    mean = jnp.dot(s1, g_ref[...], preferred_element_type=jnp.float32) * inv_count
    ey2 = jnp.dot(s2, g_ref[...], preferred_element_type=jnp.float32) * inv_count
    var = ey2 - mean * mean                       # biased variance (training mode)
    scale_c = ga_ref[...] * lax.rsqrt(var + eps)
    shift_c = be_ref[...] - mean * scale_c
    scale = jnp.dot(scale_c, gt_ref[...], preferred_element_type=jnp.float32)
    shift = jnp.dot(shift_c, gt_ref[...], preferred_element_type=jnp.float32)

    z0 = r0 * scale + shift
    z1 = r1 * scale + shift
    zm = jnp.maximum(z0, z1)                                   # pool over di
    pooled = jnp.maximum(zm[:, 0:pwc], zm[:, blk:blk + pwc])   # pool over dj
    out_ref[...] = jnp.maximum(pooled, 0.0)                    # ReLU


# ------------------------------- whole network ------------------------------

def _fcn_kernel(x_ref,
                t1_ref, sel1_ref, g1_ref, gt1_ref, ga1_ref, be1_ref,
                t2_ref, sel2_ref, g2_ref, gt2_ref, ga2_ref, be2_ref,
                t3_ref, sel3_ref, g3_ref, gt3_ref, ga3_ref, be3_ref,
                w4_ref, b4_ref, wd_ref, bd_ref,
                o_ref,
                act1_ref, act2_ref, act3_ref,
                *, cfgs, eps):
    _stage(x_ref, act1_ref, t1_ref, sel1_ref, g1_ref, gt1_ref, ga1_ref, be1_ref,
           *cfgs[0], eps=eps)
    _stage(act1_ref, act2_ref, t2_ref, sel2_ref, g2_ref, gt2_ref, ga2_ref, be2_ref,
           *cfgs[1], eps=eps)
    _stage(act2_ref, act3_ref, t3_ref, sel3_ref, g3_ref, gt3_ref, ga3_ref, be3_ref,
           *cfgs[2], eps=eps)
    # Head: conv4 (1x1 spatial -> plain matmul) + ReLU + Flatten + Linear.
    x3 = act3_ref[...].astype(jnp.bfloat16)
    y4 = jnp.dot(x3, w4_ref[...], preferred_element_type=jnp.float32) + b4_ref[...]
    y4 = jnp.maximum(y4, 0.0)
    o_ref[...] = jnp.dot(y4.astype(jnp.bfloat16), wd_ref[...],
                         preferred_element_type=jnp.float32) + bd_ref[...]


# --------------------------- host-side weight prep ---------------------------

def build_fcn_forward(params, n, h, w, out_dim, eps=1e-5):
    """Prepacks weights (Toeplitz / selection / channel maps) once and returns
    a jit-able forward(x_nchw) that issues a single fused pallas_call."""
    kh = kw = 5

    def toeplitz(wt, win, cout, cin, blk, pw):
        t = np.zeros((kh, win * cin, 2 * blk), np.float32)
        wnp = np.asarray(wt, np.float32)
        for ki in range(kh):
            for dj in range(2):
                for q in range(pw):
                    for kj in range(kw):
                        col = 2 * q + dj + kj
                        t[ki, col * cin:(col + 1) * cin,
                          dj * blk + q * cout: dj * blk + (q + 1) * cout] = \
                            wnp[:, :, ki, kj].T
        return jnp.asarray(t, jnp.bfloat16)

    def selection(hin, ph, my):
        s = np.zeros((2, n * ph, my), np.float32)
        for di in range(2):
            for nn in range(n):
                for p in range(ph):
                    s[di, nn * ph + p, nn * hin + 2 * p + di] = 1.0
        return jnp.asarray(s)

    def chan_maps(blk, pw, cout):
        g = np.zeros((2 * blk, cout), np.float32)
        eye = np.eye(cout, dtype=np.float32)
        for dj in range(2):
            for q in range(pw):
                g[dj * blk + q * cout: dj * blk + (q + 1) * cout, :] = eye
        return jnp.asarray(g), jnp.asarray(g.T)

    arrays = []
    cfgs = []
    act_shapes = []
    hin, win, cin = h, w, 6
    for wkey, gkey, bkey in (('w1', 'g1', 'be1'),
                             ('w2', 'g2', 'be2'),
                             ('w3', 'g3', 'be3')):
        wt = params[wkey]
        cout = int(wt.shape[0])
        oh, ow = hin - kh + 1, win - kw + 1
        # Fused conv+BN+pool path requires even conv outputs (true for 36x36);
        # for odd sizes PyTorch's BN stats include rows/cols the pool discards.
        assert oh % 2 == 0 and ow % 2 == 0, "conv output must be even"
        ph, pw = oh // 2, ow // 2
        pwc = pw * cout
        blk = -(-pwc // 128) * 128
        my = n * hin - (kh - 1)
        g_mat, gt_mat = chan_maps(blk, pw, cout)
        arrays += [toeplitz(wt, win, cout, cin, blk, pw),
                   selection(hin, ph, my), g_mat, gt_mat,
                   jnp.asarray(params[gkey], jnp.float32).reshape(1, cout),
                   jnp.asarray(params[bkey], jnp.float32).reshape(1, cout)]
        cfgs.append((my, blk, pwc, 1.0 / float(n * oh * ow)))
        act_shapes.append((n * ph, pwc))
        hin, win, cin = ph, pw, cout

    # Head (conv4 is 1x1 on a 1x1 map for this config -> plain matmul).
    # TODO(synk): size3 > 1 would need a row-flatten of the last activation.
    assert params['w4'].shape[2] == 1 and params['w4'].shape[3] == 1
    w4m = jnp.asarray(params['w4'][:, :, 0, 0].T, jnp.bfloat16)        # (64,128)
    b4 = jnp.asarray(params['b4'], jnp.float32).reshape(1, -1)          # (1,128)
    wd = jnp.asarray(params['wd'], jnp.float32)                         # (out,128)
    wdm = jnp.pad(wd.T, ((0, 0), (0, 128 - out_dim))).astype(jnp.bfloat16)
    bd = jnp.pad(jnp.asarray(params['bd'], jnp.float32).reshape(1, -1),
                 ((0, 0), (0, 128 - out_dim)))
    arrays += [w4m, b4, wdm, bd]

    kernel = functools.partial(_fcn_kernel, cfgs=tuple(cfgs), eps=eps)
    wc0 = w * 6

    def forward(x_nchw):
        x = jnp.transpose(x_nchw, (0, 2, 3, 1)).astype(jnp.float32)  # NCHW->NHWC
        x2d = x.reshape(n * h, wc0)                                  # (N*H, W*C)
        out = pl.pallas_call(
            kernel,
            out_shape=jax.ShapeDtypeStruct((n, 128), jnp.float32),   # lane-dense
            scratch_shapes=[pltpu.VMEM(s, jnp.float32) for s in act_shapes],
        )(x2d, *arrays)
        return out[:, :out_dim]

    return forward


# ------------------------------ pure-JAX reference ---------------------------

def fcn_reference(x_nchw, params, eps=1e-5):
    def conv(x, w, b):
        y = lax.conv_general_dilated(
            x, w, (1, 1), 'VALID',
            dimension_numbers=('NCHW', 'OIHW', 'NCHW'),
            precision=lax.Precision.HIGHEST)
        return y + b[None, :, None, None]

    def bn(x, g, be):
        mean = jnp.mean(x, axis=(0, 2, 3), keepdims=True)
        var = jnp.mean((x - mean) ** 2, axis=(0, 2, 3), keepdims=True)
        return ((x - mean) / jnp.sqrt(var + eps)) * g[None, :, None, None] \
            + be[None, :, None, None]

    def pool(x):
        return lax.reduce_window(x, -jnp.inf, lax.max,
                                 (1, 1, 2, 2), (1, 1, 2, 2), 'VALID')

    h = conv(x_nchw, params['w1'], params['b1'])
    h = jnp.maximum(pool(bn(h, params['g1'], params['be1'])), 0.0)
    h = conv(h, params['w2'], params['b2'])
    h = jnp.maximum(pool(bn(h, params['g2'], params['be2'])), 0.0)
    h = conv(h, params['w3'], params['b3'])
    h = jnp.maximum(pool(bn(h, params['g3'], params['be3'])), 0.0)
    h = jnp.maximum(conv(h, params['w4'], params['b4']), 0.0)
    h = h.reshape(h.shape[0], -1)
    return jnp.dot(h, params['wd'].T, precision=lax.Precision.HIGHEST) + params['bd']


# ------------------------------ deterministic init ---------------------------

def init_params(key, h, w, out):
    size1 = [(h - 4) // 2, (w - 4) // 2]
    size2 = [(size1[0] - 4) // 2, (size1[1] - 4) // 2]
    size3 = [(size2[0] - 4) // 2, (size2[1] - 4) // 2]
    ks = jax.random.split(key, 10)

    def wconv(k, cout, cin, kh, kw):
        fan = cin * kh * kw
        return jax.random.normal(k, (cout, cin, kh, kw), jnp.float32) / np.sqrt(fan)

    return {
        'w1': wconv(ks[0], 16, 6, 5, 5),
        'b1': 0.1 * jax.random.normal(ks[1], (16,), jnp.float32),
        'g1': jnp.ones((16,), jnp.float32), 'be1': jnp.zeros((16,), jnp.float32),
        'w2': wconv(ks[2], 32, 16, 5, 5),
        'b2': 0.1 * jax.random.normal(ks[3], (32,), jnp.float32),
        'g2': jnp.ones((32,), jnp.float32), 'be2': jnp.zeros((32,), jnp.float32),
        'w3': wconv(ks[4], 64, 32, 5, 5),
        'b3': 0.1 * jax.random.normal(ks[5], (64,), jnp.float32),
        'g3': jnp.ones((64,), jnp.float32), 'be3': jnp.zeros((64,), jnp.float32),
        'w4': wconv(ks[6], 128, 64, size3[0], size3[1]),
        'b4': 0.1 * jax.random.normal(ks[7], (128,), jnp.float32),
        'wd': jax.random.normal(ks[8], (out, 128), jnp.float32) / np.sqrt(128.0),
        'bd': 0.1 * jax.random.normal(ks[9], (out,), jnp.float32),
    }


# ----------------------------------- main ------------------------------------

if __name__ == "__main__":
    N, H, W, OUT = 2, 36, 36, 10      # size1=[16,16], size2=[6,6], size3=[1,1]
    key = jax.random.PRNGKey(0)
    kx, kp = jax.random.split(key)
    x = jax.random.normal(kx, (N, 6, H, W), jnp.float32)
    params = init_params(kp, H, W, OUT)

    fwd = jax.jit(build_fcn_forward(params, N, H, W, OUT))
    y = jax.block_until_ready(fwd(x))

    y_ref = jax.block_until_ready(fcn_reference(x, params))
    assert y.shape == (N, OUT), y.shape
    # bf16 matmul operands (f32 accumulation) -> compare at 2e-2.
    np.testing.assert_allclose(np.asarray(y), np.asarray(y_ref),
                               rtol=2e-2, atol=2e-2)
    print("KERNEL_OK")
</pallas_src>

<mosaic_0001>
module attributes {stable_mosaic.version = 11 : i64} {
  func.func @_fcn_kernel(%arg0: memref<72x216xf32, #tpu.memory_space<vmem>>, %arg1: memref<5x216x512xbf16, #tpu.memory_space<vmem>>, %arg2: memref<2x32x68xf32, #tpu.memory_space<vmem>>, %arg3: memref<512x16xf32, #tpu.memory_space<vmem>>, %arg4: memref<16x512xf32, #tpu.memory_space<vmem>>, %arg5: memref<1x16xf32, #tpu.memory_space<vmem>>, %arg6: memref<1x16xf32, #tpu.memory_space<vmem>>, %arg7: memref<5x256x512xbf16, #tpu.memory_space<vmem>>, %arg8: memref<2x12x28xf32, #tpu.memory_space<vmem>>, %arg9: memref<512x32xf32, #tpu.memory_space<vmem>>, %arg10: memref<32x512xf32, #tpu.memory_space<vmem>>, %arg11: memref<1x32xf32, #tpu.memory_space<vmem>>, %arg12: memref<1x32xf32, #tpu.memory_space<vmem>>, %arg13: memref<5x192x256xbf16, #tpu.memory_space<vmem>>, %arg14: memref<2x2x8xf32, #tpu.memory_space<vmem>>, %arg15: memref<256x64xf32, #tpu.memory_space<vmem>>, %arg16: memref<64x256xf32, #tpu.memory_space<vmem>>, %arg17: memref<1x64xf32, #tpu.memory_space<vmem>>, %arg18: memref<1x64xf32, #tpu.memory_space<vmem>>, %arg19: memref<64x128xbf16, #tpu.memory_space<vmem>>, %arg20: memref<1x128xf32, #tpu.memory_space<vmem>>, %arg21: memref<128x128xbf16, #tpu.memory_space<vmem>>, %arg22: memref<1x128xf32, #tpu.memory_space<vmem>>, %arg23: memref<2x128xf32, #tpu.memory_space<vmem>>, %arg24: memref<32x256xf32, #tpu.memory_space<vmem>>, %arg25: memref<12x192xf32, #tpu.memory_space<vmem>>, %arg26: memref<2x64xf32, #tpu.memory_space<vmem>>) attributes {dimension_semantics = [], scalar_prefetch = 0 : i64, scratch_operands = 3 : i64, tpu.core_type = #tpu.core_type<tc>} {
    %c0 = arith.constant 0 : index
    %c0_0 = arith.constant 0 : index
    %0 = vector.load %arg0[%c0, %c0_0] : memref<72x216xf32, #tpu.memory_space<vmem>>, vector<68x216xf32>
    %1 = arith.truncf %0 : vector<68x216xf32> to vector<68x216xbf16>
    %c0_1 = arith.constant 0 : index
    %c0_2 = arith.constant 0 : index
    %c0_3 = arith.constant 0 : index
    %2 = vector.load %arg1[%c0_1, %c0_2, %c0_3] : memref<5x216x512xbf16, #tpu.memory_space<vmem>>, vector<1x216x512xbf16>
    %3 = vector.shape_cast %2 : vector<1x216x512xbf16> to vector<216x512xbf16>
    %cst = arith.constant dense<0.000000e+00> : vector<68x512xf32>
    %4 = tpu.matmul %1, %3, %cst {dimension_numbers = #tpu.dot_dimension_numbers<[1], [0], [0], [1], [0, 0, 1, 1], [], []>} : vector<68x216xbf16>, vector<216x512xbf16>, vector<68x512xf32> -> vector<68x512xf32>
    %c1 = arith.constant 1 : index
    %c0_4 = arith.constant 0 : index
    %5 = vector.load %arg0[%c1, %c0_4] : memref<72x216xf32, #tpu.memory_space<vmem>>, vector<68x216xf32>
    %6 = arith.truncf %5 : vector<68x216xf32> to vector<68x216xbf16>
    %c1_5 = arith.constant 1 : index
    %c0_6 = arith.constant 0 : index
    %c0_7 = arith.constant 0 : index
    %7 = vector.load %arg1[%c1_5, %c0_6, %c0_7] : memref<5x216x512xbf16, #tpu.memory_space<vmem>>, vector<1x216x512xbf16>
    %8 = vector.shape_cast %7 : vector<1x216x512xbf16> to vector<216x512xbf16>
    %cst_8 = arith.constant dense<0.000000e+00> : vector<68x512xf32>
    %9 = tpu.matmul %6, %8, %cst_8 {dimension_numbers = #tpu.dot_dimension_numbers<[1], [0], [0], [1], [0, 0, 1, 1], [], []>} : vector<68x216xbf16>, vector<216x512xbf16>, vector<68x512xf32> -> vector<68x512xf32>
    %10 = arith.addf %4, %9 : vector<68x512xf32>
    %c2 = arith.constant 2 : index
    %c0_9 = arith.constant 0 : index
    %11 = vector.load %arg0[%c2, %c0_9] : memref<72x216xf32, #tpu.memory_space<vmem>>, vector<68x216xf32>
    %12 = arith.truncf %11 : vector<68x216xf32> to vector<68x216xbf16>
    %c2_10 = arith.constant 2 : index
    %c0_11 = arith.constant 0 : index
    %c0_12 = arith.constant 0 : index
    %13 = vector.load %arg1[%c2_10, %c0_11, %c0_12] : memref<5x216x512xbf16, #tpu.memory_space<vmem>>, vector<1x216x512xbf16>
    %14 = vector.shape_cast %13 : vector<1x216x512xbf16> to vector<216x512xbf16>
    %cst_13 = arith.constant dense<0.000000e+00> : vector<68x512xf32>
    %15 = tpu.matmul %12, %14, %cst_13 {dimension_numbers = #tpu.dot_dimension_numbers<[1], [0], [0], [1], [0, 0, 1, 1], [], []>} : vector<68x216xbf16>, vector<216x512xbf16>, vector<68x512xf32> -> vector<68x512xf32>
    %16 = arith.addf %10, %15 : vector<68x512xf32>
    %c3 = arith.constant 3 : index
    %c0_14 = arith.constant 0 : index
    %17 = vector.load %arg0[%c3, %c0_14] : memref<72x216xf32, #tpu.memory_space<vmem>>, vector<68x216xf32>
    %18 = arith.truncf %17 : vector<68x216xf32> to vector<68x216xbf16>
    %c3_15 = arith.constant 3 : index
    %c0_16 = arith.constant 0 : index
    %c0_17 = arith.constant 0 : index
    %19 = vector.load %arg1[%c3_15, %c0_16, %c0_17] : memref<5x216x512xbf16, #tpu.memory_space<vmem>>, vector<1x216x512xbf16>
    %20 = vector.shape_cast %19 : vector<1x216x512xbf16> to vector<216x512xbf16>
    %cst_18 = arith.constant dense<0.000000e+00> : vector<68x512xf32>
    %21 = tpu.matmul %18, %20, %cst_18 {dimension_numbers = #tpu.dot_dimension_numbers<[1], [0], [0], [1], [0, 0, 1, 1], [], []>} : vector<68x216xbf16>, vector<216x512xbf16>, vector<68x512xf32> -> vector<68x512xf32>
    %22 = arith.addf %16, %21 : vector<68x512xf32>
    %c4 = arith.constant 4 : index
    %c0_19 = arith.constant 0 : index
    %23 = vector.load %arg0[%c4, %c0_19] : memref<72x216xf32, #tpu.memory_space<vmem>>, vector<68x216xf32>
    %24 = arith.truncf %23 : vector<68x216xf32> to vector<68x216xbf16>
    %c4_20 = arith.constant 4 : index
    %c0_21 = arith.constant 0 : index
    %c0_22 = arith.constant 0 : index
    %25 = vector.load %arg1[%c4_20, %c0_21, %c0_22] : memref<5x216x512xbf16, #tpu.memory_space<vmem>>, vector<1x216x512xbf16>
    %26 = vector.shape_cast %25 : vector<1x216x512xbf16> to vector<216x512xbf16>
    %cst_23 = arith.constant dense<0.000000e+00> : vector<68x512xf32>
    %27 = tpu.matmul %24, %26, %cst_23 {dimension_numbers = #tpu.dot_dimension_numbers<[1], [0], [0], [1], [0, 0, 1, 1], [], []>} : vector<68x216xbf16>, vector<216x512xbf16>, vector<68x512xf32> -> vector<68x512xf32>
    %28 = arith.addf %22, %27 : vector<68x512xf32>
    %c0_24 = arith.constant 0 : index
    %c0_25 = arith.constant 0 : index
    %c0_26 = arith.constant 0 : index
    %29 = vector.load %arg2[%c0_24, %c0_25, %c0_26] : memref<2x32x68xf32, #tpu.memory_space<vmem>>, vector<1x32x68xf32>
    %30 = vector.shape_cast %29 : vector<1x32x68xf32> to vector<32x68xf32>
    %cst_27 = arith.constant dense<0.000000e+00> : vector<32x512xf32>
    %31 = tpu.matmul %30, %28, %cst_27 {dimension_numbers = #tpu.dot_dimension_numbers<[1], [0], [0], [1], [0, 0, 1, 1], [], []>} : vector<32x68xf32>, vector<68x512xf32>, vector<32x512xf32> -> vector<32x512xf32>
    %c1_28 = arith.constant 1 : index
    %c0_29 = arith.constant 0 : index
    %c0_30 = arith.constant 0 : index
    %32 = vector.load %arg2[%c1_28, %c0_29, %c0_30] : memref<2x32x68xf32, #tpu.memory_space<vmem>>, vector<1x32x68xf32>
    %33 = vector.shape_cast %32 : vector<1x32x68xf32> to vector<32x68xf32>
    %cst_31 = arith.constant dense<0.000000e+00> : vector<32x512xf32>
    %34 = tpu.matmul %33, %28, %cst_31 {dimension_numbers = #tpu.dot_dimension_numbers<[1], [0], [0], [1], [0, 0, 1, 1], [], []>} : vector<32x68xf32>, vector<68x512xf32>, vector<32x512xf32> -> vector<32x512xf32>
    %cst_32 = arith.constant dense<0.000000e+00> : vector<512xf32>
    %35 = vector.multi_reduction <add>, %31, %cst_32 [0] : vector<32x512xf32> to vector<512xf32>
    %36 = vector.shape_cast %35 : vector<512xf32> to vector<1x512xf32>
    %cst_33 = arith.constant dense<0.000000e+00> : vector<512xf32>
    %37 = vector.multi_reduction <add>, %34, %cst_33 [0] : vector<32x512xf32> to vector<512xf32>
    %38 = vector.shape_cast %37 : vector<512xf32> to vector<1x512xf32>
    %39 = arith.addf %36, %38 : vector<1x512xf32>
    %40 = arith.mulf %31, %31 : vector<32x512xf32>
    %cst_34 = arith.constant dense<0.000000e+00> : vector<512xf32>
    %41 = vector.multi_reduction <add>, %40, %cst_34 [0] : vector<32x512xf32> to vector<512xf32>
    %42 = vector.shape_cast %41 : vector<512xf32> to vector<1x512xf32>
    %43 = arith.mulf %34, %34 : vector<32x512xf32>
    %cst_35 = arith.constant dense<0.000000e+00> : vector<512xf32>
    %44 = vector.multi_reduction <add>, %43, %cst_35 [0] : vector<32x512xf32> to vector<512xf32>
    %45 = vector.shape_cast %44 : vector<512xf32> to vector<1x512xf32>
    %46 = arith.addf %42, %45 : vector<1x512xf32>
    %c0_36 = arith.constant 0 : index
    %c0_37 = arith.constant 0 : index
    %47 = vector.load %arg3[%c0_36, %c0_37] : memref<512x16xf32, #tpu.memory_space<vmem>>, vector<512x16xf32>
    %cst_38 = arith.constant dense<0.000000e+00> : vector<1x16xf32>
    %48 = tpu.matmul %39, %47, %cst_38 {dimension_numbers = #tpu.dot_dimension_numbers<[1], [0], [0], [1], [0, 0, 1, 1], [], []>} : vector<1x512xf32>, vector<512x16xf32>, vector<1x16xf32> -> vector<1x16xf32>
    %cst_39 = arith.constant 4.8828125E-4 : f32
    %49 = vector.broadcast %cst_39 : f32 to vector<1x16xf32>
    %50 = arith.mulf %48, %49 : vector<1x16xf32>
    %c0_40 = arith.constant 0 : index
    %c0_41 = arith.constant 0 : index
    %51 = vector.load %arg3[%c0_40, %c0_41] : memref<512x16xf32, #tpu.memory_space<vmem>>, vector<512x16xf32>
    %cst_42 = arith.constant dense<0.000000e+00> : vector<1x16xf32>
    %52 = tpu.matmul %46, %51, %cst_42 {dimension_numbers = #tpu.dot_dimension_numbers<[1], [0], [0], [1], [0, 0, 1, 1], [], []>} : vector<1x512xf32>, vector<512x16xf32>, vector<1x16xf32> -> vector<1x16xf32>
    %cst_43 = arith.constant 4.8828125E-4 : f32
    %53 = vector.broadcast %cst_43 : f32 to vector<1x16xf32>
    %54 = arith.mulf %52, %53 : vector<1x16xf32>
    %55 = arith.mulf %50, %50 : vector<1x16xf32>
    %56 = arith.subf %54, %55 : vector<1x16xf32>
    %c0_44 = arith.constant 0 : index
    %c0_45 = arith.constant 0 : index
    %57 = vector.load %arg5[%c0_44, %c0_45] : memref<1x16xf32, #tpu.memory_space<vmem>>, vector<1x16xf32>
    %cst_46 = arith.constant 9.99999974E-6 : f32
    %58 = vector.broadcast %cst_46 : f32 to vector<1x16xf32>
    %59 = arith.addf %56, %58 : vector<1x16xf32>
    %60 = math.rsqrt %59 : vector<1x16xf32>
    %61 = arith.mulf %57, %60 : vector<1x16xf32>
    %c0_47 = arith.constant 0 : index
    %c0_48 = arith.constant 0 : index
    %62 = vector.load %arg6[%c0_47, %c0_48] : memref<1x16xf32, #tpu.memory_space<vmem>>, vector<1x16xf32>
    %63 = arith.mulf %50, %61 : vector<1x16xf32>
    %64 = arith.subf %62, %63 : vector<1x16xf32>
    %c0_49 = arith.constant 0 : index
    %c0_50 = arith.constant 0 : index
    %65 = vector.load %arg4[%c0_49, %c0_50] : memref<16x512xf32, #tpu.memory_space<vmem>>, vector<16x512xf32>
    %cst_51 = arith.constant dense<0.000000e+00> : vector<1x512xf32>
    %66 = tpu.matmul %61, %65, %cst_51 {dimension_numbers = #tpu.dot_dimension_numbers<[1], [0], [0], [1], [0, 0, 1, 1], [], []>} : vector<1x16xf32>, vector<16x512xf32>, vector<1x512xf32> -> vector<1x512xf32>
    %c0_52 = arith.constant 0 : index
    %c0_53 = arith.constant 0 : index
    %67 = vector.load %arg4[%c0_52, %c0_53] : memref<16x512xf32, #tpu.memory_space<vmem>>, vector<16x512xf32>
    %cst_54 = arith.constant dense<0.000000e+00> : vector<1x512xf32>
    %68 = tpu.matmul %64, %67, %cst_54 {dimension_numbers = #tpu.dot_dimension_numbers<[1], [0], [0], [1], [0, 0, 1, 1], [], []>} : vector<1x16xf32>, vector<16x512xf32>, vector<1x512xf32> -> vector<1x512xf32>
    %69 = vector.broadcast %66 : vector<1x512xf32> to vector<32x512xf32>
    %70 = arith.mulf %31, %69 : vector<32x512xf32>
    %71 = vector.broadcast %68 : vector<1x512xf32> to vector<32x512xf32>
    %72 = arith.addf %70, %71 : vector<32x512xf32>
    %73 = vector.broadcast %66 : vector<1x512xf32> to vector<32x512xf32>
    %74 = arith.mulf %34, %73 : vector<32x512xf32>
    %75 = vector.broadcast %68 : vector<1x512xf32> to vector<32x512xf32>
    %76 = arith.addf %74, %75 : vector<32x512xf32>
    %77 = arith.maximumf %72, %76 : vector<32x512xf32>
    %78 = vector.extract_strided_slice %77 {offsets = [0, 0], sizes = [32, 256], strides = [1, 1]} : vector<32x512xf32> to vector<32x256xf32>
    %79 = vector.extract_strided_slice %77 {offsets = [0, 256], sizes = [32, 256], strides = [1, 1]} : vector<32x512xf32> to vector<32x256xf32>
    %80 = arith.maximumf %78, %79 : vector<32x256xf32>
    %cst_55 = arith.constant 0.000000e+00 : f32
    %81 = vector.broadcast %cst_55 : f32 to vector<32x256xf32>
    %82 = arith.maximumf %80, %81 : vector<32x256xf32>
    %c0_56 = arith.constant 0 : index
    %c0_57 = arith.constant 0 : index
    %83 = vector.load %arg24[%c0_56, %c0_57] : memref<32x256xf32, #tpu.memory_space<vmem>>, vector<32x256xf32>
    tpu.vector_store %arg24[%c0_56, %c0_57], %82 {strides = array<i32>} : memref<32x256xf32, #tpu.memory_space<vmem>>, vector<32x256xf32>,
    %c0_58 = arith.constant 0 : index
    %c0_59 = arith.constant 0 : index
    %84 = vector.load %arg24[%c0_58, %c0_59] : memref<32x256xf32, #tpu.memory_space<vmem>>, vector<28x256xf32>
    %85 = arith.truncf %84 : vector<28x256xf32> to vector<28x256xbf16>
    %c0_60 = arith.constant 0 : index
    %c0_61 = arith.constant 0 : index
    %c0_62 = arith.constant 0 : index
    %86 = vector.load %arg7[%c0_60, %c0_61, %c0_62] : memref<5x256x512xbf16, #tpu.memory_space<vmem>>, vector<1x256x512xbf16>
    %87 = vector.shape_cast %86 : vector<1x256x512xbf16> to vector<256x512xbf16>
    %cst_63 = arith.constant dense<0.000000e+00> : vector<28x512xf32>
    %88 = tpu.matmul %85, %87, %cst_63 {dimension_numbers = #tpu.dot_dimension_numbers<[1], [0], [0], [1], [0, 0, 1, 1], [], []>} : vector<28x256xbf16>, vector<256x512xbf16>, vector<28x512xf32> -> vector<28x512xf32>
    %c1_64 = arith.constant 1 : index
    %c0_65 = arith.constant 0 : index
    %89 = vector.load %arg24[%c1_64, %c0_65] : memref<32x256xf32, #tpu.memory_space<vmem>>, vector<28x256xf32>
    %90 = arith.truncf %89 : vector<28x256xf32> to vector<28x256xbf16>
    %c1_66 = arith.constant 1 : index
    %c0_67 = arith.constant 0 : index
    %c0_68 = arith.constant 0 : index
    %91 = vector.load %arg7[%c1_66, %c0_67, %c0_68] : memref<5x256x512xbf16, #tpu.memory_space<vmem>>, vector<1x256x512xbf16>
    %92 = vector.shape_cast %91 : vector<1x256x512xbf16> to vector<256x512xbf16>
    %cst_69 = arith.constant dense<0.000000e+00> : vector<28x512xf32>
    %93 = tpu.matmul %90, %92, %cst_69 {dimension_numbers = #tpu.dot_dimension_numbers<[1], [0], [0], [1], [0, 0, 1, 1], [], []>} : vector<28x256xbf16>, vector<256x512xbf16>, vector<28x512xf32> -> vector<28x512xf32>
    %94 = arith.addf %88, %93 : vector<28x512xf32>
    %c2_70 = arith.constant 2 : index
    %c0_71 = arith.constant 0 : index
    %95 = vector.load %arg24[%c2_70, %c0_71] : memref<32x256xf32, #tpu.memory_space<vmem>>, vector<28x256xf32>
    %96 = arith.truncf %95 : vector<28x256xf32> to vector<28x256xbf16>
    %c2_72 = arith.constant 2 : index
    %c0_73 = arith.constant 0 : index
    %c0_74 = arith.constant 0 : index
    %97 = vector.load %arg7[%c2_72, %c0_73, %c0_74] : memref<5x256x512xbf16, #tpu.memory_space<vmem>>, vector<1x256x512xbf16>
    %98 = vector.shape_cast %97 : vector<1x256x512xbf16> to vector<256x512xbf16>
    %cst_75 = arith.constant dense<0.000000e+00> : vector<28x512xf32>
    %99 = tpu.matmul %96, %98, %cst_75 {dimension_numbers = #tpu.dot_dimension_numbers<[1], [0], [0], [1], [0, 0, 1, 1], [], []>} : vector<28x256xbf16>, vector<256x512xbf16>, vector<28x512xf32> -> vector<28x512xf32>
    %100 = arith.addf %94, %99 : vector<28x512xf32>
    %c3_76 = arith.constant 3 : index
    %c0_77 = arith.constant 0 : index
    %101 = vector.load %arg24[%c3_76, %c0_77] : memref<32x256xf32, #tpu.memory_space<vmem>>, vector<28x256xf32>
    %102 = arith.truncf %101 : vector<28x256xf32> to vector<28x256xbf16>
    %c3_78 = arith.constant 3 : index
    %c0_79 = arith.constant 0 : index
    %c0_80 = arith.constant 0 : index
    %103 = vector.load %arg7[%c3_78, %c0_79, %c0_80] : memref<5x256x512xbf16, #tpu.memory_space<vmem>>, vector<1x256x512xbf16>
    %104 = vector.shape_cast %103 : vector<1x256x512xbf16> to vector<256x512xbf16>
    %cst_81 = arith.constant dense<0.000000e+00> : vector<28x512xf32>
    %105 = tpu.matmul %102, %104, %cst_81 {dimension_numbers = #tpu.dot_dimension_numbers<[1], [0], [0], [1], [0, 0, 1, 1], [], []>} : vector<28x256xbf16>, vector<256x512xbf16>, vector<28x512xf32> -> vector<28x512xf32>
    %106 = arith.addf %100, %105 : vector<28x512xf32>
    %c4_82 = arith.constant 4 : index
    %c0_83 = arith.constant 0 : index
    %107 = vector.load %arg24[%c4_82, %c0_83] : memref<32x256xf32, #tpu.memory_space<vmem>>, vector<28x256xf32>
    %108 = arith.truncf %107 : vector<28x256xf32> to vector<28x256xbf16>
    %c4_84 = arith.constant 4 : index
    %c0_85 = arith.constant 0 : index
    %c0_86 = arith.constant 0 : index
    %109 = vector.load %arg7[%c4_84, %c0_85, %c0_86] : memref<5x256x512xbf16, #tpu.memory_space<vmem>>, vector<1x256x512xbf16>
    %110 = vector.shape_cast %109 : vector<1x256x512xbf16> to vector<256x512xbf16>
    %cst_87 = arith.constant dense<0.000000e+00> : vector<28x512xf32>
    %111 = tpu.matmul %108, %110, %cst_87 {dimension_numbers = #tpu.dot_dimension_numbers<[1], [0], [0], [1], [0, 0, 1, 1], [], []>} : vector<28x256xbf16>, vector<256x512xbf16>, vector<28x512xf32> -> vector<28x512xf32>
    %112 = arith.addf %106, %111 : vector<28x512xf32>
    %c0_88 = arith.constant 0 : index
    %c0_89 = arith.constant 0 : index
    %c0_90 = arith.constant 0 : index
    %113 = vector.load %arg8[%c0_88, %c0_89, %c0_90] : memref<2x12x28xf32, #tpu.memory_space<vmem>>, vector<1x12x28xf32>
    %114 = vector.shape_cast %113 : vector<1x12x28xf32> to vector<12x28xf32>
    %cst_91 = arith.constant dense<0.000000e+00> : vector<12x512xf32>
    %115 = tpu.matmul %114, %112, %cst_91 {dimension_numbers = #tpu.dot_dimension_numbers<[1], [0], [0], [1], [0, 0, 1, 1], [], []>} : vector<12x28xf32>, vector<28x512xf32>, vector<12x512xf32> -> vector<12x512xf32>
    %c1_92 = arith.constant 1 : index
    %c0_93 = arith.constant 0 : index
    %c0_94 = arith.constant 0 : index
    %116 = vector.load %arg8[%c1_92, %c0_93, %c0_94] : memref<2x12x28xf32, #tpu.memory_space<vmem>>, vector<1x12x28xf32>
    %117 = vector.shape_cast %116 : vector<1x12x28xf32> to vector<12x28xf32>
    %cst_95 = arith.constant dense<0.000000e+00> : vector<12x512xf32>
    %118 = tpu.matmul %117, %112, %cst_95 {dimension_numbers = #tpu.dot_dimension_numbers<[1], [0], [0], [1], [0, 0, 1, 1], [], []>} : vector<12x28xf32>, vector<28x512xf32>, vector<12x512xf32> -> vector<12x512xf32>
    %cst_96 = arith.constant dense<0.000000e+00> : vector<512xf32>
    %119 = vector.multi_reduction <add>, %115, %cst_96 [0] : vector<12x512xf32> to vector<512xf32>
    %120 = vector.shape_cast %119 : vector<512xf32> to vector<1x512xf32>
    %cst_97 = arith.constant dense<0.000000e+00> : vector<512xf32>
    %121 = vector.multi_reduction <add>, %118, %cst_97 [0] : vector<12x512xf32> to vector<512xf32>
    %122 = vector.shape_cast %121 : vector<512xf32> to vector<1x512xf32>
    %123 = arith.addf %120, %122 : vector<1x512xf32>
    %124 = arith.mulf %115, %115 : vector<12x512xf32>
    %cst_98 = arith.constant dense<0.000000e+00> : vector<512xf32>
    %125 = vector.multi_reduction <add>, %124, %cst_98 [0] : vector<12x512xf32> to vector<512xf32>
    %126 = vector.shape_cast %125 : vector<512xf32> to vector<1x512xf32>
    %127 = arith.mulf %118, %118 : vector<12x512xf32>
    %cst_99 = arith.constant dense<0.000000e+00> : vector<512xf32>
    %128 = vector.multi_reduction <add>, %127, %cst_99 [0] : vector<12x512xf32> to vector<512xf32>
    %129 = vector.shape_cast %128 : vector<512xf32> to vector<1x512xf32>
    %130 = arith.addf %126, %129 : vector<1x512xf32>
    %c0_100 = arith.constant 0 : index
    %c0_101 = arith.constant 0 : index
    %131 = vector.load %arg9[%c0_100, %c0_101] : memref<512x32xf32, #tpu.memory_space<vmem>>, vector<512x32xf32>
    %cst_102 = arith.constant dense<0.000000e+00> : vector<1x32xf32>
    %132 = tpu.matmul %123, %131, %cst_102 {dimension_numbers = #tpu.dot_dimension_numbers<[1], [0], [0], [1], [0, 0, 1, 1], [], []>} : vector<1x512xf32>, vector<512x32xf32>, vector<1x32xf32> -> vector<1x32xf32>
    %cst_103 = arith.constant 0.00347222225 : f32
    %133 = vector.broadcast %cst_103 : f32 to vector<1x32xf32>
    %134 = arith.mulf %132, %133 : vector<1x32xf32>
    %c0_104 = arith.constant 0 : index
    %c0_105 = arith.constant 0 : index
    %135 = vector.load %arg9[%c0_104, %c0_105] : memref<512x32xf32, #tpu.memory_space<vmem>>, vector<512x32xf32>
    %cst_106 = arith.constant dense<0.000000e+00> : vector<1x32xf32>
    %136 = tpu.matmul %130, %135, %cst_106 {dimension_numbers = #tpu.dot_dimension_numbers<[1], [0], [0], [1], [0, 0, 1, 1], [], []>} : vector<1x512xf32>, vector<512x32xf32>, vector<1x32xf32> -> vector<1x32xf32>
    %cst_107 = arith.constant 0.00347222225 : f32
    %137 = vector.broadcast %cst_107 : f32 to vector<1x32xf32>
    %138 = arith.mulf %136, %137 : vector<1x32xf32>
    %139 = arith.mulf %134, %134 : vector<1x32xf32>
    %140 = arith.subf %138, %139 : vector<1x32xf32>
    %c0_108 = arith.constant 0 : index
    %c0_109 = arith.constant 0 : index
    %141 = vector.load %arg11[%c0_108, %c0_109] : memref<1x32xf32, #tpu.memory_space<vmem>>, vector<1x32xf32>
    %cst_110 = arith.constant 9.99999974E-6 : f32
    %142 = vector.broadcast %cst_110 : f32 to vector<1x32xf32>
    %143 = arith.addf %140, %142 : vector<1x32xf32>
    %144 = math.rsqrt %143 : vector<1x32xf32>
    %145 = arith.mulf %141, %144 : vector<1x32xf32>
    %c0_111 = arith.constant 0 : index
    %c0_112 = arith.constant 0 : index
    %146 = vector.load %arg12[%c0_111, %c0_112] : memref<1x32xf32, #tpu.memory_space<vmem>>, vector<1x32xf32>
    %147 = arith.mulf %134, %145 : vector<1x32xf32>
    %148 = arith.subf %146, %147 : vector<1x32xf32>
    %c0_113 = arith.constant 0 : index
    %c0_114 = arith.constant 0 : index
    %149 = vector.load %arg10[%c0_113, %c0_114] : memref<32x512xf32, #tpu.memory_space<vmem>>, vector<32x512xf32>
    %cst_115 = arith.constant dense<0.000000e+00> : vector<1x512xf32>
    %150 = tpu.matmul %145, %149, %cst_115 {dimension_numbers = #tpu.dot_dimension_numbers<[1], [0], [0], [1], [0, 0, 1, 1], [], []>} : vector<1x32xf32>, vector<32x512xf32>, vector<1x512xf32> -> vector<1x512xf32>
    %c0_116 = arith.constant 0 : index
    %c0_117 = arith.constant 0 : index
    %151 = vector.load %arg10[%c0_116, %c0_117] : memref<32x512xf32, #tpu.memory_space<vmem>>, vector<32x512xf32>
    %cst_118 = arith.constant dense<0.000000e+00> : vector<1x512xf32>
    %152 = tpu.matmul %148, %151, %cst_118 {dimension_numbers = #tpu.dot_dimension_numbers<[1], [0], [0], [1], [0, 0, 1, 1], [], []>} : vector<1x32xf32>, vector<32x512xf32>, vector<1x512xf32> -> vector<1x512xf32>
    %153 = vector.broadcast %150 : vector<1x512xf32> to vector<12x512xf32>
    %154 = arith.mulf %115, %153 : vector<12x512xf32>
    %155 = vector.broadcast %152 : vector<1x512xf32> to vector<12x512xf32>
    %156 = arith.addf %154, %155 : vector<12x512xf32>
    %157 = vector.broadcast %150 : vector<1x512xf32> to vector<12x512xf32>
    %158 = arith.mulf %118, %157 : vector<12x512xf32>
    %159 = vector.broadcast %152 : vector<1x512xf32> to vector<12x512xf32>
    %160 = arith.addf %158, %159 : vector<12x512xf32>
    %161 = arith.maximumf %156, %160 : vector<12x512xf32>
    %162 = vector.extract_strided_slice %161 {offsets = [0, 0], sizes = [12, 192], strides = [1, 1]} : vector<12x512xf32> to vector<12x192xf32>
    %163 = vector.extract_strided_slice %161 {offsets = [0, 256], sizes = [12, 192], strides = [1, 1]} : vector<12x512xf32> to vector<12x192xf32>
    %164 = arith.maximumf %162, %163 : vector<12x192xf32>
    %cst_119 = arith.constant 0.000000e+00 : f32
    %165 = vector.broadcast %cst_119 : f32 to vector<12x192xf32>
    %166 = arith.maximumf %164, %165 : vector<12x192xf32>
    %c0_120 = arith.constant 0 : index
    %c0_121 = arith.constant 0 : index
    %167 = vector.load %arg25[%c0_120, %c0_121] : memref<12x192xf32, #tpu.memory_space<vmem>>, vector<12x192xf32>
    tpu.vector_store %arg25[%c0_120, %c0_121], %166 {strides = array<i32>} : memref<12x192xf32, #tpu.memory_space<vmem>>, vector<12x192xf32>,
    %c0_122 = arith.constant 0 : index
    %c0_123 = arith.constant 0 : index
    %168 = vector.load %arg25[%c0_122, %c0_123] : memref<12x192xf32, #tpu.memory_space<vmem>>, vector<8x192xf32>
    %169 = arith.truncf %168 : vector<8x192xf32> to vector<8x192xbf16>
    %c0_124 = arith.constant 0 : index
    %c0_125 = arith.constant 0 : index
    %c0_126 = arith.constant 0 : index
    %170 = vector.load %arg13[%c0_124, %c0_125, %c0_126] : memref<5x192x256xbf16, #tpu.memory_space<vmem>>, vector<1x192x256xbf16>
    %171 = vector.shape_cast %170 : vector<1x192x256xbf16> to vector<192x256xbf16>
    %cst_127 = arith.constant dense<0.000000e+00> : vector<8x256xf32>
    %172 = tpu.matmul %169, %171, %cst_127 {dimension_numbers = #tpu.dot_dimension_numbers<[1], [0], [0], [1], [0, 0, 1, 1], [], []>} : vector<8x192xbf16>, vector<192x256xbf16>, vector<8x256xf32> -> vector<8x256xf32>
    %c1_128 = arith.constant 1 : index
    %c0_129 = arith.constant 0 : index
    %173 = vector.load %arg25[%c1_128, %c0_129] : memref<12x192xf32, #tpu.memory_space<vmem>>, vector<8x192xf32>
    %174 = arith.truncf %173 : vector<8x192xf32> to vector<8x192xbf16>
    %c1_130 = arith.constant 1 : index
    %c0_131 = arith.constant 0 : index
    %c0_132 = arith.constant 0 : index
    %175 = vector.load %arg13[%c1_130, %c0_131, %c0_132] : memref<5x192x256xbf16, #tpu.memory_space<vmem>>, vector<1x192x256xbf16>
    %176 = vector.shape_cast %175 : vector<1x192x256xbf16> to vector<192x256xbf16>
    %cst_133 = arith.constant dense<0.000000e+00> : vector<8x256xf32>
    %177 = tpu.matmul %174, %176, %cst_133 {dimension_numbers = #tpu.dot_dimension_numbers<[1], [0], [0], [1], [0, 0, 1, 1], [], []>} : vector<8x192xbf16>, vector<192x256xbf16>, vector<8x256xf32> -> vector<8x256xf32>
    %178 = arith.addf %172, %177 : vector<8x256xf32>
    %c2_134 = arith.constant 2 : index
    %c0_135 = arith.constant 0 : index
    %179 = vector.load %arg25[%c2_134, %c0_135] : memref<12x192xf32, #tpu.memory_space<vmem>>, vector<8x192xf32>
    %180 = arith.truncf %179 : vector<8x192xf32> to vector<8x192xbf16>
    %c2_136 = arith.constant 2 : index
    %c0_137 = arith.constant 0 : index
    %c0_138 = arith.constant 0 : index
    %181 = vector.load %arg13[%c2_136, %c0_137, %c0_138] : memref<5x192x256xbf16, #tpu.memory_space<vmem>>, vector<1x192x256xbf16>
    %182 = vector.shape_cast %181 : vector<1x192x256xbf16> to vector<192x256xbf16>
    %cst_139 = arith.constant dense<0.000000e+00> : vector<8x256xf32>
    %183 = tpu.matmul %180, %182, %cst_139 {dimension_numbers = #tpu.dot_dimension_numbers<[1], [0], [0], [1], [0, 0, 1, 1], [], []>} : vector<8x192xbf16>, vector<192x256xbf16>, vector<8x256xf32> -> vector<8x256xf32>
    %184 = arith.addf %178, %183 : vector<8x256xf32>
    %c3_140 = arith.constant 3 : index
    %c0_141 = arith.constant 0 : index
    %185 = vector.load %arg25[%c3_140, %c0_141] : memref<12x192xf32, #tpu.memory_space<vmem>>, vector<8x192xf32>
    %186 = arith.truncf %185 : vector<8x192xf32> to vector<8x192xbf16>
    %c3_142 = arith.constant 3 : index
    %c0_143 = arith.constant 0 : index
    %c0_144 = arith.constant 0 : index
    %187 = vector.load %arg13[%c3_142, %c0_143, %c0_144] : memref<5x192x256xbf16, #tpu.memory_space<vmem>>, vector<1x192x256xbf16>
    %188 = vector.shape_cast %187 : vector<1x192x256xbf16> to vector<192x256xbf16>
    %cst_145 = arith.constant dense<0.000000e+00> : vector<8x256xf32>
    %189 = tpu.matmul %186, %188, %cst_145 {dimension_numbers = #tpu.dot_dimension_numbers<[1], [0], [0], [1], [0, 0, 1, 1], [], []>} : vector<8x192xbf16>, vector<192x256xbf16>, vector<8x256xf32> -> vector<8x256xf32>
    %190 = arith.addf %184, %189 : vector<8x256xf32>
    %c4_146 = arith.constant 4 : index
    %c0_147 = arith.constant 0 : index
    %191 = vector.load %arg25[%c4_146, %c0_147] : memref<12x192xf32, #tpu.memory_space<vmem>>, vector<8x192xf32>
    %192 = arith.truncf %191 : vector<8x192xf32> to vector<8x192xbf16>
    %c4_148 = arith.constant 4 : index
    %c0_149 = arith.constant 0 : index
    %c0_150 = arith.constant 0 : index
    %193 = vector.load %arg13[%c4_148, %c0_149, %c0_150] : memref<5x192x256xbf16, #tpu.memory_space<vmem>>, vector<1x192x256xbf16>
    %194 = vector.shape_cast %193 : vector<1x192x256xbf16> to vector<192x256xbf16>
    %cst_151 = arith.constant dense<0.000000e+00> : vector<8x256xf32>
    %195 = tpu.matmul %192, %194, %cst_151 {dimension_numbers = #tpu.dot_dimension_numbers<[1], [0], [0], [1], [0, 0, 1, 1], [], []>} : vector<8x192xbf16>, vector<192x256xbf16>, vector<8x256xf32> -> vector<8x256xf32>
    %196 = arith.addf %190, %195 : vector<8x256xf32>
    %c0_152 = arith.constant 0 : index
    %c0_153 = arith.constant 0 : index
    %c0_154 = arith.constant 0 : index
    %197 = vector.load %arg14[%c0_152, %c0_153, %c0_154] : memref<2x2x8xf32, #tpu.memory_space<vmem>>, vector<1x2x8xf32>
    %198 = vector.shape_cast %197 : vector<1x2x8xf32> to vector<2x8xf32>
    %cst_155 = arith.constant dense<0.000000e+00> : vector<2x256xf32>
    %199 = tpu.matmul %198, %196, %cst_155 {dimension_numbers = #tpu.dot_dimension_numbers<[1], [0], [0], [1], [0, 0, 1, 1], [], []>} : vector<2x8xf32>, vector<8x256xf32>, vector<2x256xf32> -> vector<2x256xf32>
    %c1_156 = arith.constant 1 : index
    %c0_157 = arith.constant 0 : index
    %c0_158 = arith.constant 0 : index
    %200 = vector.load %arg14[%c1_156, %c0_157, %c0_158] : memref<2x2x8xf32, #tpu.memory_space<vmem>>, vector<1x2x8xf32>
    %201 = vector.shape_cast %200 : vector<1x2x8xf32> to vector<2x8xf32>
    %cst_159 = arith.constant dense<0.000000e+00> : vector<2x256xf32>
    %202 = tpu.matmul %201, %196, %cst_159 {dimension_numbers = #tpu.dot_dimension_numbers<[1], [0], [0], [1], [0, 0, 1, 1], [], []>} : vector<2x8xf32>, vector<8x256xf32>, vector<2x256xf32> -> vector<2x256xf32>
    %cst_160 = arith.constant dense<0.000000e+00> : vector<256xf32>
    %203 = vector.multi_reduction <add>, %199, %cst_160 [0] : vector<2x256xf32> to vector<256xf32>
    %204 = vector.shape_cast %203 : vector<256xf32> to vector<1x256xf32>
    %cst_161 = arith.constant dense<0.000000e+00> : vector<256xf32>
    %205 = vector.multi_reduction <add>, %202, %cst_161 [0] : vector<2x256xf32> to vector<256xf32>
    %206 = vector.shape_cast %205 : vector<256xf32> to vector<1x256xf32>
    %207 = arith.addf %204, %206 : vector<1x256xf32>
    %208 = arith.mulf %199, %199 : vector<2x256xf32>
    %cst_162 = arith.constant dense<0.000000e+00> : vector<256xf32>
    %209 = vector.multi_reduction <add>, %208, %cst_162 [0] : vector<2x256xf32> to vector<256xf32>
    %210 = vector.shape_cast %209 : vector<256xf32> to vector<1x256xf32>
    %211 = arith.mulf %202, %202 : vector<2x256xf32>
    %cst_163 = arith.constant dense<0.000000e+00> : vector<256xf32>
    %212 = vector.multi_reduction <add>, %211, %cst_163 [0] : vector<2x256xf32> to vector<256xf32>
    %213 = vector.shape_cast %212 : vector<256xf32> to vector<1x256xf32>
    %214 = arith.addf %210, %213 : vector<1x256xf32>
    %c0_164 = arith.constant 0 : index
    %c0_165 = arith.constant 0 : index
    %215 = vector.load %arg15[%c0_164, %c0_165] : memref<256x64xf32, #tpu.memory_space<vmem>>, vector<256x64xf32>
    %cst_166 = arith.constant dense<0.000000e+00> : vector<1x64xf32>
    %216 = tpu.matmul %207, %215, %cst_166 {dimension_numbers = #tpu.dot_dimension_numbers<[1], [0], [0], [1], [0, 0, 1, 1], [], []>} : vector<1x256xf32>, vector<256x64xf32>, vector<1x64xf32> -> vector<1x64xf32>
    %cst_167 = arith.constant 1.250000e-01 : f32
    %217 = vector.broadcast %cst_167 : f32 to vector<1x64xf32>
    %218 = arith.mulf %216, %217 : vector<1x64xf32>
    %c0_168 = arith.constant 0 : index
    %c0_169 = arith.constant 0 : index
    %219 = vector.load %arg15[%c0_168, %c0_169] : memref<256x64xf32, #tpu.memory_space<vmem>>, vector<256x64xf32>
    %cst_170 = arith.constant dense<0.000000e+00> : vector<1x64xf32>
    %220 = tpu.matmul %214, %219, %cst_170 {dimension_numbers = #tpu.dot_dimension_numbers<[1], [0], [0], [1], [0, 0, 1, 1], [], []>} : vector<1x256xf32>, vector<256x64xf32>, vector<1x64xf32> -> vector<1x64xf32>
    %cst_171 = arith.constant 1.250000e-01 : f32
    %221 = vector.broadcast %cst_171 : f32 to vector<1x64xf32>
    %222 = arith.mulf %220, %221 : vector<1x64xf32>
    %223 = arith.mulf %218, %218 : vector<1x64xf32>
    %224 = arith.subf %222, %223 : vector<1x64xf32>
    %c0_172 = arith.constant 0 : index
    %c0_173 = arith.constant 0 : index
    %225 = vector.load %arg17[%c0_172, %c0_173] : memref<1x64xf32, #tpu.memory_space<vmem>>, vector<1x64xf32>
    %cst_174 = arith.constant 9.99999974E-6 : f32
    %226 = vector.broadcast %cst_174 : f32 to vector<1x64xf32>
    %227 = arith.addf %224, %226 : vector<1x64xf32>
    %228 = math.rsqrt %227 : vector<1x64xf32>
    %229 = arith.mulf %225, %228 : vector<1x64xf32>
    %c0_175 = arith.constant 0 : index
    %c0_176 = arith.constant 0 : index
    %230 = vector.load %arg18[%c0_175, %c0_176] : memref<1x64xf32, #tpu.memory_space<vmem>>, vector<1x64xf32>
    %231 = arith.mulf %218, %229 : vector<1x64xf32>
    %232 = arith.subf %230, %231 : vector<1x64xf32>
    %c0_177 = arith.constant 0 : index
    %c0_178 = arith.constant 0 : index
    %233 = vector.load %arg16[%c0_177, %c0_178] : memref<64x256xf32, #tpu.memory_space<vmem>>, vector<64x256xf32>
    %cst_179 = arith.constant dense<0.000000e+00> : vector<1x256xf32>
    %234 = tpu.matmul %229, %233, %cst_179 {dimension_numbers = #tpu.dot_dimension_numbers<[1], [0], [0], [1], [0, 0, 1, 1], [], []>} : vector<1x64xf32>, vector<64x256xf32>, vector<1x256xf32> -> vector<1x256xf32>
    %c0_180 = arith.constant 0 : index
    %c0_181 = arith.constant 0 : index
    %235 = vector.load %arg16[%c0_180, %c0_181] : memref<64x256xf32, #tpu.memory_space<vmem>>, vector<64x256xf32>
    %cst_182 = arith.constant dense<0.000000e+00> : vector<1x256xf32>
    %236 = tpu.matmul %232, %235, %cst_182 {dimension_numbers = #tpu.dot_dimension_numbers<[1], [0], [0], [1], [0, 0, 1, 1], [], []>} : vector<1x64xf32>, vector<64x256xf32>, vector<1x256xf32> -> vector<1x256xf32>
    %237 = vector.broadcast %234 : vector<1x256xf32> to vector<2x256xf32>
    %238 = arith.mulf %199, %237 : vector<2x256xf32>
    %239 = vector.broadcast %236 : vector<1x256xf32> to vector<2x256xf32>
    %240 = arith.addf %238, %239 : vector<2x256xf32>
    %241 = vector.broadcast %234 : vector<1x256xf32> to vector<2x256xf32>
    %242 = arith.mulf %202, %241 : vector<2x256xf32>
    %243 = vector.broadcast %236 : vector<1x256xf32> to vector<2x256xf32>
    %244 = arith.addf %242, %243 : vector<2x256xf32>
    %245 = arith.maximumf %240, %244 : vector<2x256xf32>
    %246 = vector.extract_strided_slice %245 {offsets = [0, 0], sizes = [2, 64], strides = [1, 1]} : vector<2x256xf32> to vector<2x64xf32>
    %247 = vector.extract_strided_slice %245 {offsets = [0, 128], sizes = [2, 64], strides = [1, 1]} : vector<2x256xf32> to vector<2x64xf32>
    %248 = arith.maximumf %246, %247 : vector<2x64xf32>
    %cst_183 = arith.constant 0.000000e+00 : f32
    %249 = vector.broadcast %cst_183 : f32 to vector<2x64xf32>
    %250 = arith.maximumf %248, %249 : vector<2x64xf32>
    %c0_184 = arith.constant 0 : index
    %c0_185 = arith.constant 0 : index
    %251 = vector.load %arg26[%c0_184, %c0_185] : memref<2x64xf32, #tpu.memory_space<vmem>>, vector<2x64xf32>
    tpu.vector_store %arg26[%c0_184, %c0_185], %250 {strides = array<i32>} : memref<2x64xf32, #tpu.memory_space<vmem>>, vector<2x64xf32>,
    %c0_186 = arith.constant 0 : index
    %c0_187 = arith.constant 0 : index
    %252 = vector.load %arg26[%c0_186, %c0_187] : memref<2x64xf32, #tpu.memory_space<vmem>>, vector<2x64xf32>
    %253 = arith.truncf %252 : vector<2x64xf32> to vector<2x64xbf16>
    %c0_188 = arith.constant 0 : index
    %c0_189 = arith.constant 0 : index
    %254 = vector.load %arg19[%c0_188, %c0_189] : memref<64x128xbf16, #tpu.memory_space<vmem>>, vector<64x128xbf16>
    %cst_190 = arith.constant dense<0.000000e+00> : vector<2x128xf32>
    %255 = tpu.matmul %253, %254, %cst_190 {dimension_numbers = #tpu.dot_dimension_numbers<[1], [0], [0], [1], [0, 0, 1, 1], [], []>} : vector<2x64xbf16>, vector<64x128xbf16>, vector<2x128xf32> -> vector<2x128xf32>
    %c0_191 = arith.constant 0 : index
    %c0_192 = arith.constant 0 : index
    %256 = vector.load %arg20[%c0_191, %c0_192] : memref<1x128xf32, #tpu.memory_space<vmem>>, vector<1x128xf32>
    %257 = vector.broadcast %256 : vector<1x128xf32> to vector<2x128xf32>
    %258 = arith.addf %255, %257 : vector<2x128xf32>
    %cst_193 = arith.constant 0.000000e+00 : f32
    %259 = vector.broadcast %cst_193 : f32 to vector<2x128xf32>
    %260 = arith.maximumf %258, %259 : vector<2x128xf32>
    %261 = arith.truncf %260 : vector<2x128xf32> to vector<2x128xbf16>
    %c0_194 = arith.constant 0 : index
    %c0_195 = arith.constant 0 : index
    %262 = vector.load %arg21[%c0_194, %c0_195] : memref<128x128xbf16, #tpu.memory_space<vmem>>, vector<128x128xbf16>
    %cst_196 = arith.constant dense<0.000000e+00> : vector<2x128xf32>
    %263 = tpu.matmul %261, %262, %cst_196 {dimension_numbers = #tpu.dot_dimension_numbers<[1], [0], [0], [1], [0, 0, 1, 1], [], []>} : vector<2x128xbf16>, vector<128x128xbf16>, vector<2x128xf32> -> vector<2x128xf32>
    %c0_197 = arith.constant 0 : index
    %c0_198 = arith.constant 0 : index
    %264 = vector.load %arg22[%c0_197, %c0_198] : memref<1x128xf32, #tpu.memory_space<vmem>>, vector<1x128xf32>
    %265 = vector.broadcast %264 : vector<1x128xf32> to vector<2x128xf32>
    %266 = arith.addf %263, %265 : vector<2x128xf32>
    %c0_199 = arith.constant 0 : index
    %c0_200 = arith.constant 0 : index
    %267 = vector.load %arg23[%c0_199, %c0_200] : memref<2x128xf32, #tpu.memory_space<vmem>>, vector<2x128xf32>
    tpu.vector_store %arg23[%c0_199, %c0_200], %266 {strides = array<i32>} : memref<2x128xf32, #tpu.memory_space<vmem>>, vector<2x128xf32>,
    return
  }
}

</mosaic_0001>

<llo_original>
// kernel: forward.1
$region0: #{forward.1}
  #allocation0 [shape = 'u32[]', space=smem, size = 0x4, offset = 0x4, fixed_abs, tag = 'smem constant byte address 0x4 - core index']
  #allocation1 [shape = 'u32[144,128]{1,0:T(1,128)}', space=vmem, size = 0x12000, scoped, tag = 'internal scratch']
  #allocation2 [shape = 'f32[32,256]{1,0:T(8,128)}', space=vmem, size = 0x8000, scoped, tag = 'scratch operand']
  #allocation3 [shape = 'f32[12,192]{1,0:T(8,128)}', space=vmem, size = 0x4000, scoped, tag = 'scratch operand']
  #allocation4 [shape = 'f32[2,64]{1,0:T(2,128)}', space=vmem, size = 0x400, scoped, tag = 'scratch operand']
  %s0 = inlined_call_operand.vmem [shape: f32[72,216], index: 0, kind: input, shape index: {}]
  %s1 = inlined_call_operand.vmem [shape: bf16[5,216,512], index: 1, kind: input, shape index: {}]
  %s2 = inlined_call_operand.vmem [shape: f32[2,32,68], index: 2, kind: input, shape index: {}]
  %s3 = inlined_call_operand.vmem [shape: f32[512,16], index: 3, kind: input, shape index: {}]
  %s4 = inlined_call_operand.vmem [shape: f32[16,512], index: 4, kind: input, shape index: {}]
  %s5 = inlined_call_operand.vmem [shape: f32[1,16], index: 5, kind: input, shape index: {}]
  %s6 = inlined_call_operand.vmem [shape: f32[1,16], index: 6, kind: input, shape index: {}]
  %s7 = inlined_call_operand.vmem [shape: bf16[5,256,512], index: 7, kind: input, shape index: {}]
  %s8 = inlined_call_operand.vmem [shape: f32[2,12,28], index: 8, kind: input, shape index: {}]
  %s9 = inlined_call_operand.vmem [shape: f32[512,32], index: 9, kind: input, shape index: {}]
  %s10 = inlined_call_operand.vmem [shape: f32[32,512], index: 10, kind: input, shape index: {}]
  %s11 = inlined_call_operand.vmem [shape: f32[1,32], index: 11, kind: input, shape index: {}]
  %s12 = inlined_call_operand.vmem [shape: f32[1,32], index: 12, kind: input, shape index: {}]
  %s13 = inlined_call_operand.vmem [shape: bf16[5,192,256], index: 13, kind: input, shape index: {}]
  %s14 = inlined_call_operand.vmem [shape: f32[2,2,8], index: 14, kind: input, shape index: {}]
  %s15 = inlined_call_operand.vmem [shape: f32[256,64], index: 15, kind: input, shape index: {}]
  %s16 = inlined_call_operand.vmem [shape: f32[64,256], index: 16, kind: input, shape index: {}]
  %s17 = inlined_call_operand.vmem [shape: f32[1,64], index: 17, kind: input, shape index: {}]
  %s18 = inlined_call_operand.vmem [shape: f32[1,64], index: 18, kind: input, shape index: {}]
  %s19 = inlined_call_operand.vmem [shape: bf16[64,128], index: 19, kind: input, shape index: {}]
  %s20 = inlined_call_operand.vmem [shape: f32[1,128], index: 20, kind: input, shape index: {}]
  %s21 = inlined_call_operand.vmem [shape: bf16[128,128], index: 21, kind: input, shape index: {}]
  %s22 = inlined_call_operand.vmem [shape: f32[1,128], index: 22, kind: input, shape index: {}]
  %s23 = inlined_call_operand.hbm [shape: f32[2,128], index: 23, kind: output, shape index: {}]
  %s24 = sld [smem:[#allocation0]]
  $region102: #{forward.1} parent=0
    _
  %s26 = ssub.s32 1, %s24
  %s27 = scalar_select 0, %s26, %s24
  $region1: #{forward.1} parent=0
    #allocation5 [shape = 'u8[1024]{0}', space=vmem, size = 0x400, scoped, tag = 'output window, operand 0, single buffered']
    #allocation6 [shape = 's32[1]{0}', space=sflag, size = 0x4, scoped, tag = 'scoped memory for forward.1']
    %28 = vsyncpa [#allocation6], 0
    // Predicated region
    $region2: #{forward.1} parent=1 // pred_check
      _
    $region3: #{forward.1} parent=1 // pred_check_branch
      %30 = sbr.rel (0) target = $region5
    $region4: #{forward.1} parent=1 // pred_region
      _
    $region5: #{forward.1} parent=1 // pred_fallthru
      _
    // Predicated region
    $region6: #{forward.1} parent=1 // pred_check
      _
    $region7: #{forward.1} parent=1 // pred_check_branch
      %32 = sbr.rel (0) target = $region9
    $region8: #{forward.1} parent=1 // pred_region
      _
    $region9: #{forward.1} parent=1 // pred_fallthru
      _
    // Predicated region
    $region10: #{forward.1} parent=1 // pred_check
      _
    $region11: #{forward.1} parent=1 // pred_check_branch
      %34 = sbr.rel (0) target = $region13
    $region12: #{forward.1} parent=1 // pred_region
      _
    $region13: #{forward.1} parent=1 // pred_fallthru
      _
    // Predicated region
    $region14: #{forward.1} parent=1 // pred_check
      _
    $region15: #{forward.1} parent=1 // pred_check_branch
      %36 = sbr.rel (0) target = $region17
    $region16: #{forward.1} parent=1 // pred_region
      _
    $region17: #{forward.1} parent=1 // pred_fallthru
      _
    // Predicated region
    $region18: #{forward.1} parent=1 // pred_check
      _
    $region19: #{forward.1} parent=1 // pred_check_branch
      %38 = sbr.rel (0) target = $region21
    $region20: #{forward.1} parent=1 // pred_region
      _
    $region21: #{forward.1} parent=1 // pred_fallthru
      _
    // Predicated region
    $region22: #{forward.1} parent=1 // pred_check
      _
    $region23: #{forward.1} parent=1 // pred_check_branch
      %40 = sbr.rel (0) target = $region25
    $region24: #{forward.1} parent=1 // pred_region
      _
    $region25: #{forward.1} parent=1 // pred_fallthru
      _
    // Predicated region
    $region26: #{forward.1} parent=1 // pred_check
      _
    $region27: #{forward.1} parent=1 // pred_check_branch
      %42 = sbr.rel (0) target = $region29
    $region28: #{forward.1} parent=1 // pred_region
      _
    $region29: #{forward.1} parent=1 // pred_fallthru
      _
    // Predicated region
    $region30: #{forward.1} parent=1 // pred_check
      _
    $region31: #{forward.1} parent=1 // pred_check_branch
      %44 = sbr.rel (0) target = $region33
    $region32: #{forward.1} parent=1 // pred_region
      _
    $region33: #{forward.1} parent=1 // pred_fallthru
      _
    // Predicated region
    $region34: #{forward.1} parent=1 // pred_check
      _
    $region35: #{forward.1} parent=1 // pred_check_branch
      %46 = sbr.rel (0) target = $region37
    $region36: #{forward.1} parent=1 // pred_region
      _
    $region37: #{forward.1} parent=1 // pred_fallthru
      _
    // Predicated region
    $region38: #{forward.1} parent=1 // pred_check
      _
    $region39: #{forward.1} parent=1 // pred_check_branch
      %48 = sbr.rel (0) target = $region41
    $region40: #{forward.1} parent=1 // pred_region
      _
    $region41: #{forward.1} parent=1 // pred_fallthru
      _
    // Predicated region
    $region42: #{forward.1} parent=1 // pred_check
      _
    $region43: #{forward.1} parent=1 // pred_check_branch
      %50 = sbr.rel (0) target = $region45
    $region44: #{forward.1} parent=1 // pred_region
      _
    $region45: #{forward.1} parent=1 // pred_fallthru
      _
    // Predicated region
    $region46: #{forward.1} parent=1 // pred_check
      _
    $region47: #{forward.1} parent=1 // pred_check_branch
      %52 = sbr.rel (0) target = $region49
    $region48: #{forward.1} parent=1 // pred_region
      _
    $region49: #{forward.1} parent=1 // pred_fallthru
      _
    // Predicated region
    $region50: #{forward.1} parent=1 // pred_check
      _
    $region51: #{forward.1} parent=1 // pred_check_branch
      %54 = sbr.rel (0) target = $region53
    $region52: #{forward.1} parent=1 // pred_region
      _
    $region53: #{forward.1} parent=1 // pred_fallthru
      _
    // Predicated region
    $region54: #{forward.1} parent=1 // pred_check
      _
    $region55: #{forward.1} parent=1 // pred_check_branch
      %56 = sbr.rel (0) target = $region57
    $region56: #{forward.1} parent=1 // pred_region
      _
    $region57: #{forward.1} parent=1 // pred_fallthru
      _
    // Predicated region
    $region58: #{forward.1} parent=1 // pred_check
      _
    $region59: #{forward.1} parent=1 // pred_check_branch
      %58 = sbr.rel (0) target = $region61
    $region60: #{forward.1} parent=1 // pred_region
      _
    $region61: #{forward.1} parent=1 // pred_fallthru
      _
    // Predicated region
    $region62: #{forward.1} parent=1 // pred_check
      _
    $region63: #{forward.1} parent=1 // pred_check_branch
      %60 = sbr.rel (0) target = $region65
    $region64: #{forward.1} parent=1 // pred_region
      _
    $region65: #{forward.1} parent=1 // pred_fallthru
      _
    // Predicated region
    $region66: #{forward.1} parent=1 // pred_check
      _
    $region67: #{forward.1} parent=1 // pred_check_branch
      %62 = sbr.rel (0) target = $region69
    $region68: #{forward.1} parent=1 // pred_region
      _
    $region69: #{forward.1} parent=1 // pred_fallthru
      _
    // Predicated region
    $region70: #{forward.1} parent=1 // pred_check
      _
    $region71: #{forward.1} parent=1 // pred_check_branch
      %64 = sbr.rel (0) target = $region73
    $region72: #{forward.1} parent=1 // pred_region
      _
    $region73: #{forward.1} parent=1 // pred_fallthru
      _
    // Predicated region
    $region74: #{forward.1} parent=1 // pred_check
      _
    $region75: #{forward.1} parent=1 // pred_check_branch
      %66 = sbr.rel (0) target = $region77
    $region76: #{forward.1} parent=1 // pred_region
      _
    $region77: #{forward.1} parent=1 // pred_fallthru
      _
    // Predicated region
    $region78: #{forward.1} parent=1 // pred_check
      _
    $region79: #{forward.1} parent=1 // pred_check_branch
      %68 = sbr.rel (0) target = $region81
    $region80: #{forward.1} parent=1 // pred_region
      _
    $region81: #{forward.1} parent=1 // pred_fallthru
      _
    // Predicated region
    $region82: #{forward.1} parent=1 // pred_check
      _
    $region83: #{forward.1} parent=1 // pred_check_branch
      %70 = sbr.rel (0) target = $region85
    $region84: #{forward.1} parent=1 // pred_region
      _
    $region85: #{forward.1} parent=1 // pred_fallthru
      _
    // Predicated region
    $region86: #{forward.1} parent=1 // pred_check
      _
    $region87: #{forward.1} parent=1 // pred_check_branch
      %72 = sbr.rel (0) target = $region89
    $region88: #{forward.1} parent=1 // pred_region
      _
    $region89: #{forward.1} parent=1 // pred_fallthru
      _
    // Predicated region
    $region90: #{forward.1} parent=1 // pred_check
      _
    $region91: #{forward.1} parent=1 // pred_check_branch
      %74 = sbr.rel (0) target = $region93
    $region92: #{forward.1} parent=1 // pred_region
      _
    $region93: #{forward.1} parent=1 // pred_fallthru
      _
    %v76 = vld [vmem:[%s0] sm:$0xff]
    %v77 = vld [vmem:[%s0 + $0x8] sm:$0xff]
    %v78 = vld [vmem:[%s0 + $0x10] sm:$0xff]
    %v79 = vld [vmem:[%s0 + $0x18] sm:$0xff]
    %v80 = vld [vmem:[%s0 + $0x20] sm:$0xff]
    %v81 = vld [vmem:[%s0 + $0x28] sm:$0xff]
    %v82 = vld [vmem:[%s0 + $0x30] sm:$0xff]
    %v83 = vld [vmem:[%s0 + $0x38] sm:$0xff]
    %v84 = vld [vmem:[%s0 + $0x40] sm:$0xff]
    %v85 = vld [vmem:[%s0 + $0x48] sm:$0xff]
    %v86 = vld [vmem:[%s0 + $0x50] sm:$0xff]
    %v87 = vld [vmem:[%s0 + $0x58] sm:$0xff]
    %v88 = vld [vmem:[%s0 + $0x60] sm:$0xff]
    %v89 = vld [vmem:[%s0 + $0x68] sm:$0xff]
    %v90 = vld [vmem:[%s0 + $0x70] sm:$0xff]
    %v91 = vld [vmem:[%s0 + $0x78] sm:$0xff]
    %v92 = vld [vmem:[%s0 + $0x80] sm:$0xf]
    %v93 = vld [vmem:[%s0 + $0x88] sm:$0xf]
    %v94 = vpack.c.bf16 %v78, %v76
    %v95 = vpack.c.bf16 %v79, %v77
    %v96 = vpack.c.bf16 %v82, %v80
    %v97 = vpack.c.bf16 %v83, %v81
    %v98 = vpack.c.bf16 %v86, %v84
    %v99 = vpack.c.bf16 %v87, %v85
    %v100 = vpack.c.bf16 %v90, %v88
    %v101 = vpack.c.bf16 %v91, %v89
    %v102 = vpack.c.bf16 %v92, %v92
    %v103 = vpack.c.bf16 %v93, %v93
    %v104 = vld [vmem:[%s1] sm:$0xff]
    %v105 = vld [vmem:[%s1 + $0x8] sm:$0xff]
    %v106 = vld [vmem:[%s1 + $0x10] sm:$0xff]
    %v107 = vld [vmem:[%s1 + $0x18] sm:$0xff]
    %v108 = vld [vmem:[%s1 + $0x20] sm:$0xff]
    %v109 = vld [vmem:[%s1 + $0x28] sm:$0xff]
    %v110 = vld [vmem:[%s1 + $0x30] sm:$0xff]
    %v111 = vld [vmem:[%s1 + $0x38] sm:$0xff]
    %v112 = vld [vmem:[%s1 + $0x40] sm:$0xff]
    %v113 = vld [vmem:[%s1 + $0x48] sm:$0xff]
    %v114 = vld [vmem:[%s1 + $0x50] sm:$0xff]
    %v115 = vld [vmem:[%s1 + $0x58] sm:$0xff]
    %v116 = vld [vmem:[%s1 + $0x60] sm:$0xff]
    %v117 = vld [vmem:[%s1 + $0x68] sm:$0xff]
    %v118 = vld [vmem:[%s1 + $0x70] sm:$0xff]
    %v119 = vld [vmem:[%s1 + $0x78] sm:$0xff]
    %v120 = vld [vmem:[%s1 + $0x80] sm:$0xff]
    %v121 = vld [vmem:[%s1 + $0x88] sm:$0xff]
    %v122 = vld [vmem:[%s1 + $0x90] sm:$0xff]
    %v123 = vld [vmem:[%s1 + $0x98] sm:$0xff]
    %v124 = vld [vmem:[%s1 + $0xa0] sm:$0xff]
    %v125 = vld [vmem:[%s1 + $0xa8] sm:$0xff]
    %v126 = vld [vmem:[%s1 + $0xb0] sm:$0xff]
    %v127 = vld [vmem:[%s1 + $0xb8] sm:$0xff]
    %v128 = vld [vmem:[%s1 + $0xc0] sm:$0xff]
    %v129 = vld [vmem:[%s1 + $0xc8] sm:$0xff]
    %v130 = vld [vmem:[%s1 + $0xd0] sm:$0xff]
    %v131 = vld [vmem:[%s1 + $0xd8] sm:$0xff]
    %v132 = vld [vmem:[%s1 + $0xe0] sm:$0xff]
    %v133 = vld [vmem:[%s1 + $0xe8] sm:$0xff]
    %v134 = vld [vmem:[%s1 + $0xf0] sm:$0xff]
    %v135 = vld [vmem:[%s1 + $0xf8] sm:$0xff]
    %v136 = vld [vmem:[%s1 + $0x100] sm:$0xff]
    %v137 = vld [vmem:[%s1 + $0x108] sm:$0xff]
    %v138 = vld [vmem:[%s1 + $0x110] sm:$0xff]
    %v139 = vld [vmem:[%s1 + $0x118] sm:$0xff]
    %v140 = vld [vmem:[%s1 + $0x120] sm:$0xff]
    %v141 = vld [vmem:[%s1 + $0x128] sm:$0xff]
    %v142 = vld [vmem:[%s1 + $0x130] sm:$0xff]
    %v143 = vld [vmem:[%s1 + $0x138] sm:$0xff]
    %v144 = vld [vmem:[%s1 + $0x140] sm:$0xff]
    %v145 = vld [vmem:[%s1 + $0x148] sm:$0xff]
    %v146 = vld [vmem:[%s1 + $0x150] sm:$0xff]
    %v147 = vld [vmem:[%s1 + $0x158] sm:$0xff]
    %v148 = vld [vmem:[%s1 + $0x160] sm:$0xff]
    %v149 = vld [vmem:[%s1 + $0x168] sm:$0xff]
    %v150 = vld [vmem:[%s1 + $0x170] sm:$0xff]
    %v151 = vld [vmem:[%s1 + $0x178] sm:$0xff]
    %v152 = vld [vmem:[%s1 + $0x180] sm:$0xff]
    %v153 = vld [vmem:[%s1 + $0x188] sm:$0xff]
    %v154 = vld [vmem:[%s1 + $0x190] sm:$0xff]
    %v155 = vld [vmem:[%s1 + $0x198] sm:$0xff]
    %v156 = vld [vmem:[%s1 + $0x1a0] sm:$0xff]
    %v157 = vld [vmem:[%s1 + $0x1a8] sm:$0xff]
    %v158 = vld [vmem:[%s0] sm:$0xfe]
    %v159 = vld [vmem:[%s0 + $0x8] sm:$0xfe]
    %v160 = vld [vmem:[%s0 + $0x80] sm:$0x1f]
    %v161 = vld [vmem:[%s0 + $0x88] sm:$0x1f]
    %v162 = vpack.c.bf16 %v78, %v158
    %v163 = vpack.c.bf16 %v79, %v159
    %v164 = vpack.c.bf16 %v160, %v160
    %v165 = vpack.c.bf16 %v161, %v161
    %s166 = scalar_lea.vmem %s1, 432
    %v167 = vld [vmem:[%s166] sm:$0xff]
    %v168 = vld [vmem:[%s166 + $0x8] sm:$0xff]
    %v169 = vld [vmem:[%s166 + $0x10] sm:$0xff]
    %v170 = vld [vmem:[%s166 + $0x18] sm:$0xff]
    %v171 = vld [vmem:[%s166 + $0x20] sm:$0xff]
    %v172 = vld [vmem:[%s166 + $0x28] sm:$0xff]
    %v173 = vld [vmem:[%s166 + $0x30] sm:$0xff]
    %v174 = vld [vmem:[%s166 + $0x38] sm:$0xff]
    %v175 = vld [vmem:[%s166 + $0x40] sm:$0xff]
    %v176 = vld [vmem:[%s166 + $0x48] sm:$0xff]
    %v177 = vld [vmem:[%s166 + $0x50] sm:$0xff]
    %v178 = vld [vmem:[%s166 + $0x58] sm:$0xff]
    %v179 = vld [vmem:[%s166 + $0x60] sm:$0xff]
    %v180 = vld [vmem:[%s166 + $0x68] sm:$0xff]
    %v181 = vld [vmem:[%s166 + $0x70] sm:$0xff]
    %v182 = vld [vmem:[%s166 + $0x78] sm:$0xff]
    %v183 = vld [vmem:[%s166 + $0x80] sm:$0xff]
    %v184 = vld [vmem:[%s166 + $0x88] sm:$0xff]
    %v185 = vld [vmem:[%s166 + $0x90] sm:$0xff]
    %v186 = vld [vmem:[%s166 + $0x98] sm:$0xff]
    %v187 = vld [vmem:[%s166 + $0xa0] sm:$0xff]
    %v188 = vld [vmem:[%s166 + $0xa8] sm:$0xff]
    %v189 = vld [vmem:[%s166 + $0xb0] sm:$0xff]
    %v190 = vld [vmem:[%s166 + $0xb8] sm:$0xff]
    %v191 = vld [vmem:[%s166 + $0xc0] sm:$0xff]
    %v192 = vld [vmem:[%s166 + $0xc8] sm:$0xff]
    %v193 = vld [vmem:[%s166 + $0xd0] sm:$0xff]
    %v194 = vld [vmem:[%s166 + $0xd8] sm:$0xff]
    %v195 = vld [vmem:[%s166 + $0xe0] sm:$0xff]
    %v196 = vld [vmem:[%s166 + $0xe8] sm:$0xff]
    %v197 = vld [vmem:[%s166 + $0xf0] sm:$0xff]
    %v198 = vld [vmem:[%s166 + $0xf8] sm:$0xff]
    %v199 = vld [vmem:[%s166 + $0x100] sm:$0xff]
    %v200 = vld [vmem:[%s166 + $0x108] sm:$0xff]
    %v201 = vld [vmem:[%s166 + $0x110] sm:$0xff]
    %v202 = vld [vmem:[%s166 + $0x118] sm:$0xff]
    %v203 = vld [vmem:[%s166 + $0x120] sm:$0xff]
    %v204 = vld [vmem:[%s166 + $0x128] sm:$0xff]
    %v205 = vld [vmem:[%s166 + $0x130] sm:$0xff]
    %v206 = vld [vmem:[%s166 + $0x138] sm:$0xff]
    %v207 = vld [vmem:[%s166 + $0x140] sm:$0xff]
    %v208 = vld [vmem:[%s166 + $0x148] sm:$0xff]
    %v209 = vld [vmem:[%s166 + $0x150] sm:$0xff]
    %v210 = vld [vmem:[%s166 + $0x158] sm:$0xff]
    %v211 = vld [vmem:[%s166 + $0x160] sm:$0xff]
    %v212 = vld [vmem:[%s166 + $0x168] sm:$0xff]
    %v213 = vld [vmem:[%s166 + $0x170] sm:$0xff]
    %v214 = vld [vmem:[%s166 + $0x178] sm:$0xff]
    %v215 = vld [vmem:[%s166 + $0x180] sm:$0xff]
    %v216 = vld [vmem:[%s166 + $0x188] sm:$0xff]
    %v217 = vld [vmem:[%s166 + $0x190] sm:$0xff]
    %v218 = vld [vmem:[%s166 + $0x198] sm:$0xff]
    %v219 = vld [vmem:[%s166 + $0x1a0] sm:$0xff]
    %v220 = vld [vmem:[%s166 + $0x1a8] sm:$0xff]
    %vm221 = vsmask.f32 7424
    %v223 = vshrl.u32 %v162, 16
    %v225 = vshll.u32 %v162, 16
    %v227 = vrot.slane %v225, 1
    %v228 = vor.u32 %v223, %v227
    %v230 = vshll.u32 %v96, 16
    %v232 = vrot.slane %v230, 1
    %v233 = vsel %vm221, %v228, %v232
    %v235 = vshrl.u32 %v163, 16
    %v237 = vshll.u32 %v163, 16
    %v239 = vrot.slane %v237, 1
    %v240 = vor.u32 %v235, %v239
    %v242 = vshll.u32 %v97, 16
    %v244 = vrot.slane %v242, 1
    %v245 = vsel %vm221, %v240, %v244
    %v246 = vshrl.u32 %v96, 16
    %v248 = vor.u32 %v246, %v232
    %v250 = vshll.u32 %v98, 16
    %v252 = vrot.slane %v250, 1
    %v253 = vsel %vm221, %v248, %v252
    %v254 = vshrl.u32 %v97, 16
    %v256 = vor.u32 %v254, %v244
    %v258 = vshll.u32 %v99, 16
    %v260 = vrot.slane %v258, 1
    %v261 = vsel %vm221, %v256, %v260
    %v262 = vshrl.u32 %v98, 16
    %v264 = vor.u32 %v262, %v252
    %v266 = vshll.u32 %v100, 16
    %v268 = vrot.slane %v266, 1
    %v269 = vsel %vm221, %v264, %v268
    %v270 = vshrl.u32 %v99, 16
    %v272 = vor.u32 %v270, %v260
    %v274 = vshll.u32 %v101, 16
    %v276 = vrot.slane %v274, 1
    %v277 = vsel %vm221, %v272, %v276
    %v278 = vshrl.u32 %v100, 16
    %v280 = vor.u32 %v278, %v268
    %v282 = vshll.u32 %v164, 16
    %v284 = vrot.slane %v282, 1
    %v285 = vsel %vm221, %v280, %v284
    %v286 = vshrl.u32 %v101, 16
    %v288 = vor.u32 %v286, %v276
    %v290 = vshll.u32 %v165, 16
    %v292 = vrot.slane %v290, 1
    %v293 = vsel %vm221, %v288, %v292
    %v294 = vshrl.u32 %v164, 16
    %v296 = vor.u32 %v294, %v284
    %v297 = vshrl.u32 %v165, 16
    %v299 = vor.u32 %v297, %v292
    %v359 = vunpack.c.l.b16 %v167
    %v360 = vunpack.c.h.b16 %v167
    %v361 = vunpack.c.l.b16 %v168
    %v362 = vunpack.c.h.b16 %v168
    %v363 = vunpack.c.l.b16 %v169
    %v364 = vunpack.c.h.b16 %v169
    %v365 = vunpack.c.l.b16 %v170
    %v366 = vunpack.c.h.b16 %v170
    %v367 = vunpack.c.l.b16 %v171
    %v368 = vunpack.c.h.b16 %v171
    %v369 = vunpack.c.l.b16 %v172
    %v370 = vunpack.c.h.b16 %v172
    %v371 = vunpack.c.l.b16 %v173
    %v372 = vunpack.c.h.b16 %v173
    %v373 = vunpack.c.l.b16 %v174
    %v374 = vunpack.c.h.b16 %v174
    %v375 = vunpack.c.l.b16 %v175
    %v376 = vunpack.c.h.b16 %v175
    %v377 = vunpack.c.l.b16 %v176
    %v378 = vunpack.c.h.b16 %v176
    %v379 = vunpack.c.l.b16 %v177
    %v380 = vunpack.c.h.b16 %v177
    %v381 = vunpack.c.l.b16 %v178
    %v382 = vunpack.c.h.b16 %v178
    %v383 = vunpack.c.l.b16 %v179
    %v384 = vunpack.c.h.b16 %v179
    %v385 = vunpack.c.l.b16 %v180
    %v386 = vunpack.c.h.b16 %v180
    %v387 = vunpack.c.l.b16 %v181
    %v388 = vunpack.c.h.b16 %v181
    %v389 = vunpack.c.l.b16 %v182
    %v390 = vunpack.c.h.b16 %v182
    %v391 = vunpack.c.l.b16 %v183
    %v392 = vunpack.c.h.b16 %v183
    %v393 = vunpack.c.l.b16 %v184
    %v394 = vunpack.c.h.b16 %v184
    %v395 = vunpack.c.l.b16 %v185
    %v396 = vunpack.c.h.b16 %v185
    %v397 = vunpack.c.l.b16 %v186
    %v398 = vunpack.c.h.b16 %v186
    %v399 = vunpack.c.l.b16 %v187
    %v400 = vunpack.c.h.b16 %v187
    %v401 = vunpack.c.l.b16 %v188
    %v402 = vunpack.c.h.b16 %v188
    %v403 = vunpack.c.l.b16 %v189
    %v404 = vunpack.c.h.b16 %v189
    %v405 = vunpack.c.l.b16 %v190
    %v406 = vunpack.c.h.b16 %v190
    %v407 = vunpack.c.l.b16 %v191
    %v408 = vunpack.c.h.b16 %v191
    %v409 = vunpack.c.l.b16 %v192
    %v410 = vunpack.c.h.b16 %v192
    %v411 = vunpack.c.l.b16 %v193
    %v412 = vunpack.c.h.b16 %v193
    %v413 = vunpack.c.l.b16 %v194
    %v414 = vunpack.c.h.b16 %v194
    %v415 = vunpack.c.l.b16 %v195
    %v416 = vunpack.c.h.b16 %v195
    %v417 = vunpack.c.l.b16 %v196
    %v418 = vunpack.c.h.b16 %v196
    %v419 = vunpack.c.l.b16 %v197
    %v420 = vunpack.c.h.b16 %v197
    %v421 = vunpack.c.l.b16 %v198
    %v422 = vunpack.c.h.b16 %v198
    %v423 = vunpack.c.l.b16 %v199
    %v424 = vunpack.c.h.b16 %v199
    %v425 = vunpack.c.l.b16 %v200
    %v426 = vunpack.c.h.b16 %v200
    %v427 = vunpack.c.l.b16 %v201
    %v428 = vunpack.c.h.b16 %v201
    %v429 = vunpack.c.l.b16 %v202
    %v430 = vunpack.c.h.b16 %v202
    %v431 = vunpack.c.l.b16 %v203
    %v432 = vunpack.c.h.b16 %v203
    %v433 = vunpack.c.l.b16 %v204
    %v434 = vunpack.c.h.b16 %v204
    %v435 = vunpack.c.l.b16 %v205
    %v436 = vunpack.c.h.b16 %v205
    %v437 = vunpack.c.l.b16 %v206
    %v438 = vunpack.c.h.b16 %v206
    %v439 = vunpack.c.l.b16 %v207
    %v440 = vunpack.c.h.b16 %v207
    %v441 = vunpack.c.l.b16 %v208
    %v442 = vunpack.c.h.b16 %v208
    %v443 = vunpack.c.l.b16 %v209
    %v444 = vunpack.c.h.b16 %v209
    %v445 = vunpack.c.l.b16 %v210
    %v446 = vunpack.c.h.b16 %v210
    %v447 = vunpack.c.l.b16 %v211
    %v448 = vunpack.c.h.b16 %v211
    %v449 = vunpack.c.l.b16 %v212
    %v450 = vunpack.c.h.b16 %v212
    %v451 = vunpack.c.l.b16 %v213
    %v452 = vunpack.c.h.b16 %v213
    %v453 = vunpack.c.l.b16 %v214
    %v454 = vunpack.c.h.b16 %v214
    %v455 = vunpack.c.l.b16 %v215
    %v456 = vunpack.c.h.b16 %v215
    %v457 = vunpack.c.l.b16 %v216
    %v458 = vunpack.c.h.b16 %v216
    %v459 = vunpack.c.l.b16 %v217
    %v460 = vunpack.c.h.b16 %v217
    %v461 = vunpack.c.l.b16 %v218
    %v462 = vunpack.c.h.b16 %v218
    %v463 = vunpack.c.l.b16 %v219
    %v464 = vunpack.c.h.b16 %v219
    %v465 = vunpack.c.l.b16 %v220
    %v466 = vunpack.c.h.b16 %v220
    %v467 = vpack.c.b16 %v363, %v359
    %v468 = vpack.c.b16 %v364, %v360
    %v469 = vpack.c.b16 %v365, %v361
    %v470 = vpack.c.b16 %v366, %v362
    %v471 = vpack.c.b16 %v371, %v367
    %v472 = vpack.c.b16 %v372, %v368
    %v473 = vpack.c.b16 %v373, %v369
    %v474 = vpack.c.b16 %v374, %v370
    %v475 = vpack.c.b16 %v379, %v375
    %v476 = vpack.c.b16 %v380, %v376
    %v477 = vpack.c.b16 %v381, %v377
    %v478 = vpack.c.b16 %v382, %v378
    %v479 = vpack.c.b16 %v387, %v383
    %v480 = vpack.c.b16 %v388, %v384
    %v481 = vpack.c.b16 %v389, %v385
    %v482 = vpack.c.b16 %v390, %v386
    %v483 = vpack.c.b16 %v395, %v391
    %v484 = vpack.c.b16 %v396, %v392
    %v485 = vpack.c.b16 %v397, %v393
    %v486 = vpack.c.b16 %v398, %v394
    %v487 = vpack.c.b16 %v403, %v399
    %v488 = vpack.c.b16 %v404, %v400
    %v489 = vpack.c.b16 %v405, %v401
    %v490 = vpack.c.b16 %v406, %v402
    %v491 = vpack.c.b16 %v411, %v407
    %v492 = vpack.c.b16 %v412, %v408
    %v493 = vpack.c.b16 %v413, %v409
    %v494 = vpack.c.b16 %v414, %v410
    %v495 = vpack.c.b16 %v419, %v415
    %v496 = vpack.c.b16 %v420, %v416
    %v497 = vpack.c.b16 %v421, %v417
    %v498 = vpack.c.b16 %v422, %v418
    %v499 = vpack.c.b16 %v427, %v423
    %v500 = vpack.c.b16 %v428, %v424
    %v501 = vpack.c.b16 %v429, %v425
    %v502 = vpack.c.b16 %v430, %v426
    %v503 = vpack.c.b16 %v435, %v431
    %v504 = vpack.c.b16 %v436, %v432
    %v505 = vpack.c.b16 %v437, %v433
    %v506 = vpack.c.b16 %v438, %v434
    %v507 = vpack.c.b16 %v443, %v439
    %v508 = vpack.c.b16 %v444, %v440
    %v509 = vpack.c.b16 %v445, %v441
    %v510 = vpack.c.b16 %v446, %v442
    %v511 = vpack.c.b16 %v451, %v447
    %v512 = vpack.c.b16 %v452, %v448
    %v513 = vpack.c.b16 %v453, %v449
    %v514 = vpack.c.b16 %v454, %v450
    %v515 = vpack.c.b16 %v459, %v455
    %v516 = vpack.c.b16 %v460, %v456
    %v517 = vpack.c.b16 %v461, %v457
    %v518 = vpack.c.b16 %v462, %v458
    %v519 = vpack.c.b16 %v463, %v463
    %v520 = vpack.c.b16 %v464, %v464
    %v521 = vpack.c.b16 %v465, %v465
    %v522 = vpack.c.b16 %v466, %v466
    %vm575 = vcmask 719872
    %v577 = vsel %vm575, %v245, 0
    %v580 = vsel %vm575, %v261, 0
    %v583 = vsel %vm575, %v277, 0
    %v586 = vsel %vm575, %v293, 0
    %v589 = vsel %vm575, %v299, 0
    %vm591 = vcmask 1043456
    %v593 = vsel %vm591, %v519, 0
    %v596 = vsel %vm591, %v520, 0
    %v599 = vsel %vm591, %v521, 0
    %v602 = vsel %vm591, %v522, 0
    %604 = vmatprep.subr.bf16.mxu0 %v468
    %605 = vmatpush1.bf16.msra.mxu0 %v467
    %606 = vmatprep.subr.bf16.mxu0 %v472
    %607 = vmatpush1.bf16.msra.mxu0 %v471
    %608 = vmatprep.subr.bf16.mxu0 %v476
    %609 = vmatpush1.bf16.msra.mxu0 %v475
    %610 = vmatprep.subr.bf16.mxu0 %v480
    %611 = vmatpush1.bf16.msra.mxu0 %v479
    %612 = vmatprep.subr.bf16.mxu0 %v484
    %613 = vmatpush1.bf16.msra.mxu0 %v483
    %614 = vmatprep.subr.bf16.mxu0 %v488
    %615 = vmatpush1.bf16.msra.mxu0 %v487
    %616 = vmatprep.subr.bf16.mxu0 %v492
    %617 = vmatpush1.bf16.msra.mxu0 %v491
    %618 = vmatprep.subr.bf16.mxu0 %v496
    %619 = vmatpush1.bf16.msra.mxu0 %v495
    %620 = vmatprep.subr.bf16.mxu0 %v500
    %621 = vmatpush1.bf16.msra.mxu0 %v499
    %622 = vmatprep.subr.bf16.mxu0 %v504
    %623 = vmatpush1.bf16.msra.mxu0 %v503
    %624 = vmatprep.subr.bf16.mxu0 %v508
    %625 = vmatpush1.bf16.msra.mxu0 %v507
    %626 = vmatprep.subr.bf16.mxu0 %v512
    %627 = vmatpush1.bf16.msra.mxu0 %v511
    %628 = vmatprep.subr.bf16.mxu0 %v516
    %629 = vmatpush1.bf16.msra.mxu0 %v515
    %630 = vmatprep.subr.bf16.mxu0 %v596
    %631 = vmatpush1.bf16.msra.mxu0 %v593
    %632 = vmatprep.subr.bf16.mxu0 0
    %633 = vmatpush1.bf16.msra.mxu0 0
    %634 = vmatprep.subr.bf16.mxu0 0
    %635 = vmatpush1.bf16.msra.mxu0 0
    %636 = vmatprep.mubr.bf16.mxu0 %v577
    %637 = vmatmul.mubr.bf16.gmra.mrb[0].mxu0 %v233
    %v638 = vpop.f32.mrb[0].mxu0
    %v639 = vadd.f32 0.0, %v638
    %v640 = vpop.f32.mrb[0].mxu0
    %v641 = vadd.f32 0.0, %v640
    %v642 = vpop.f32.mrb[0].mxu0
    %v643 = vadd.f32 0.0, %v642
    %v644 = vpop.f32.mrb[0].mxu0
    %v645 = vadd.f32 0.0, %v644
    %646 = vmatprep.mubr.bf16.mxu0 %v580
    %647 = vmatmul.mubr.bf16.gmra.mrb[0].mxu0 %v253
    %v648 = vpop.f32.mrb[0].mxu0
    %v649 = vadd.f32 0.0, %v648
    %v650 = vpop.f32.mrb[0].mxu0
    %v651 = vadd.f32 0.0, %v650
    %v652 = vpop.f32.mrb[0].mxu0
    %v653 = vadd.f32 0.0, %v652
    %v654 = vpop.f32.mrb[0].mxu0
    %v655 = vadd.f32 0.0, %v654
    %656 = vmatprep.mubr.bf16.mxu0 %v583
    %657 = vmatmul.mubr.bf16.gmra.mrb[0].mxu0 %v269
    %v658 = vpop.f32.mrb[0].mxu0
    %v659 = vadd.f32 0.0, %v658
    %v660 = vpop.f32.mrb[0].mxu0
    %v661 = vadd.f32 0.0, %v660
    %v662 = vpop.f32.mrb[0].mxu0
    %v663 = vadd.f32 0.0, %v662
    %v664 = vpop.f32.mrb[0].mxu0
    %v665 = vadd.f32 0.0, %v664
    %666 = vmatprep.mubr.bf16.mxu0 %v586
    %667 = vmatmul.mubr.bf16.gmra.mrb[0].mxu0 %v285
    %v668 = vpop.f32.mrb[0].mxu0
    %v669 = vadd.f32 0.0, %v668
    %v670 = vpop.f32.mrb[0].mxu0
    %v671 = vadd.f32 0.0, %v670
    %v672 = vpop.f32.mrb[0].mxu0
    %v673 = vadd.f32 0.0, %v672
    %v674 = vpop.f32.mrb[0].mxu0
    %v675 = vadd.f32 0.0, %v674
    %676 = vmatprep.mubr.bf16.mxu0 %v589
    %677 = vmatmul.mubr.bf16.gmra.mrb[0].mxu0 %v296
    %v678 = vpop.f32.mrb[0].mxu0
    %v679 = vadd.f32 0.0, %v678
    %v680 = vpop.f32.mrb[0].mxu0
    %v681 = vadd.f32 0.0, %v680
    %v682 = vpop.f32.mrb[0].mxu0
    %v683 = vpop.f32.mrb[0].mxu0
    %684 = vdwg.mxu0
    %685 = vmatprep.subr.bf16.mxu0 %v470
    %686 = vmatpush1.bf16.msra.mxu0 %v469
    %687 = vmatprep.subr.bf16.mxu0 %v474
    %688 = vmatpush1.bf16.msra.mxu0 %v473
    %689 = vmatprep.subr.bf16.mxu0 %v478
    %690 = vmatpush1.bf16.msra.mxu0 %v477
    %691 = vmatprep.subr.bf16.mxu0 %v482
    %692 = vmatpush1.bf16.msra.mxu0 %v481
    %693 = vmatprep.subr.bf16.mxu0 %v486
    %694 = vmatpush1.bf16.msra.mxu0 %v485
    %695 = vmatprep.subr.bf16.mxu0 %v490
    %696 = vmatpush1.bf16.msra.mxu0 %v489
    %697 = vmatprep.subr.bf16.mxu0 %v494
    %698 = vmatpush1.bf16.msra.mxu0 %v493
    %699 = vmatprep.subr.bf16.mxu0 %v498
    %700 = vmatpush1.bf16.msra.mxu0 %v497
    %701 = vmatprep.subr.bf16.mxu0 %v502
    %702 = vmatpush1.bf16.msra.mxu0 %v501
    %703 = vmatprep.subr.bf16.mxu0 %v506
    %704 = vmatpush1.bf16.msra.mxu0 %v505
    %705 = vmatprep.subr.bf16.mxu0 %v510
    %706 = vmatpush1.bf16.msra.mxu0 %v509
    %707 = vmatprep.subr.bf16.mxu0 %v514
    %708 = vmatpush1.bf16.msra.mxu0 %v513
    %709 = vmatprep.subr.bf16.mxu0 %v518
    %710 = vmatpush1.bf16.msra.mxu0 %v517
    %711 = vmatprep.subr.bf16.mxu0 %v602
    %712 = vmatpush1.bf16.msra.mxu0 %v599
    %713 = vmatprep.subr.bf16.mxu0 0
    %714 = vmatpush1.bf16.msra.mxu0 0
    %715 = vmatprep.subr.bf16.mxu0 0
    %716 = vmatpush1.bf16.msra.mxu0 0
    %717 = vmatprep.mubr.bf16.mxu0 %v577
    %718 = vmatmul.mubr.bf16.gmra.mrb[0].mxu0 %v233
    %v719 = vpop.f32.mrb[0].mxu0
    %v720 = vadd.f32 0.0, %v719
    %v721 = vpop.f32.mrb[0].mxu0
    %v722 = vadd.f32 0.0, %v721
    %v723 = vpop.f32.mrb[0].mxu0
    %v724 = vadd.f32 0.0, %v723
    %v725 = vpop.f32.mrb[0].mxu0
    %v726 = vadd.f32 0.0, %v725
    %727 = vmatprep.mubr.bf16.mxu0 %v580
    %728 = vmatmul.mubr.bf16.gmra.mrb[0].mxu0 %v253
    %v729 = vpop.f32.mrb[0].mxu0
    %v730 = vadd.f32 0.0, %v729
    %v731 = vpop.f32.mrb[0].mxu0
    %v732 = vadd.f32 0.0, %v731
    %v733 = vpop.f32.mrb[0].mxu0
    %v734 = vadd.f32 0.0, %v733
    %v735 = vpop.f32.mrb[0].mxu0
    %v736 = vadd.f32 0.0, %v735
    %737 = vmatprep.mubr.bf16.mxu0 %v583
    %738 = vmatmul.mubr.bf16.gmra.mrb[0].mxu0 %v269
    %v739 = vpop.f32.mrb[0].mxu0
    %v740 = vadd.f32 0.0, %v739
    %v741 = vpop.f32.mrb[0].mxu0
    %v742 = vadd.f32 0.0, %v741
    %v743 = vpop.f32.mrb[0].mxu0
    %v744 = vadd.f32 0.0, %v743
    %v745 = vpop.f32.mrb[0].mxu0
    %v746 = vadd.f32 0.0, %v745
    %747 = vmatprep.mubr.bf16.mxu0 %v586
    %748 = vmatmul.mubr.bf16.gmra.mrb[0].mxu0 %v285
    %v749 = vpop.f32.mrb[0].mxu0
    %v750 = vadd.f32 0.0, %v749
    %v751 = vpop.f32.mrb[0].mxu0
    %v752 = vadd.f32 0.0, %v751
    %v753 = vpop.f32.mrb[0].mxu0
    %v754 = vadd.f32 0.0, %v753
    %v755 = vpop.f32.mrb[0].mxu0
    %v756 = vadd.f32 0.0, %v755
    %757 = vmatprep.mubr.bf16.mxu0 %v589
    %758 = vmatmul.mubr.bf16.gmra.mrb[0].mxu0 %v296
    %v759 = vpop.f32.mrb[0].mxu0
    %v760 = vadd.f32 0.0, %v759
    %v761 = vpop.f32.mrb[0].mxu0
    %v762 = vadd.f32 0.0, %v761
    %v763 = vpop.f32.mrb[0].mxu0
    %v764 = vpop.f32.mrb[0].mxu0
    %765 = vdwg.mxu0
    %v820 = vunpack.c.l.b16 %v104
    %v821 = vunpack.c.h.b16 %v104
    %v822 = vunpack.c.l.b16 %v105
    %v823 = vunpack.c.h.b16 %v105
    %v824 = vunpack.c.l.b16 %v106
    %v825 = vunpack.c.h.b16 %v106
    %v826 = vunpack.c.l.b16 %v107
    %v827 = vunpack.c.h.b16 %v107
    %v828 = vunpack.c.l.b16 %v108
    %v829 = vunpack.c.h.b16 %v108
    %v830 = vunpack.c.l.b16 %v109
    %v831 = vunpack.c.h.b16 %v109
    %v832 = vunpack.c.l.b16 %v110
    %v833 = vunpack.c.h.b16 %v110
    %v834 = vunpack.c.l.b16 %v111
    %v835 = vunpack.c.h.b16 %v111
    %v836 = vunpack.c.l.b16 %v112
    %v837 = vunpack.c.h.b16 %v112
    %v838 = vunpack.c.l.b16 %v113
    %v839 = vunpack.c.h.b16 %v113
    %v840 = vunpack.c.l.b16 %v114
    %v841 = vunpack.c.h.b16 %v114
    %v842 = vunpack.c.l.b16 %v115
    %v843 = vunpack.c.h.b16 %v115
    %v844 = vunpack.c.l.b16 %v116
    %v845 = vunpack.c.h.b16 %v116
    %v846 = vunpack.c.l.b16 %v117
    %v847 = vunpack.c.h.b16 %v117
    %v848 = vunpack.c.l.b16 %v118
    %v849 = vunpack.c.h.b16 %v118
    %v850 = vunpack.c.l.b16 %v119
    %v851 = vunpack.c.h.b16 %v119
    %v852 = vunpack.c.l.b16 %v120
    %v853 = vunpack.c.h.b16 %v120
    %v854 = vunpack.c.l.b16 %v121
    %v855 = vunpack.c.h.b16 %v121
    %v856 = vunpack.c.l.b16 %v122
    %v857 = vunpack.c.h.b16 %v122
    %v858 = vunpack.c.l.b16 %v123
    %v859 = vunpack.c.h.b16 %v123
    %v860 = vunpack.c.l.b16 %v124
    %v861 = vunpack.c.h.b16 %v124
    %v862 = vunpack.c.l.b16 %v125
    %v863 = vunpack.c.h.b16 %v125
    %v864 = vunpack.c.l.b16 %v126
    %v865 = vunpack.c.h.b16 %v126
    %v866 = vunpack.c.l.b16 %v127
    %v867 = vunpack.c.h.b16 %v127
    %v868 = vunpack.c.l.b16 %v128
    %v869 = vunpack.c.h.b16 %v128
    %v870 = vunpack.c.l.b16 %v129
    %v871 = vunpack.c.h.b16 %v129
    %v872 = vunpack.c.l.b16 %v130
    %v873 = vunpack.c.h.b16 %v130
    %v874 = vunpack.c.l.b16 %v131
    %v875 = vunpack.c.h.b16 %v131
    %v876 = vunpack.c.l.b16 %v132
    %v877 = vunpack.c.h.b16 %v132
    %v878 = vunpack.c.l.b16 %v133
    %v879 = vunpack.c.h.b16 %v133
    %v880 = vunpack.c.l.b16 %v134
    %v881 = vunpack.c.h.b16 %v134
    %v882 = vunpack.c.l.b16 %v135
    %v883 = vunpack.c.h.b16 %v135
    %v884 = vunpack.c.l.b16 %v136
    %v885 = vunpack.c.h.b16 %v136
    %v886 = vunpack.c.l.b16 %v137
    %v887 = vunpack.c.h.b16 %v137
    %v888 = vunpack.c.l.b16 %v138
    %v889 = vunpack.c.h.b16 %v138
    %v890 = vunpack.c.l.b16 %v139
    %v891 = vunpack.c.h.b16 %v139
    %v892 = vunpack.c.l.b16 %v140
    %v893 = vunpack.c.h.b16 %v140
    %v894 = vunpack.c.l.b16 %v141
    %v895 = vunpack.c.h.b16 %v141
    %v896 = vunpack.c.l.b16 %v142
    %v897 = vunpack.c.h.b16 %v142
    %v898 = vunpack.c.l.b16 %v143
    %v899 = vunpack.c.h.b16 %v143
    %v900 = vunpack.c.l.b16 %v144
    %v901 = vunpack.c.h.b16 %v144
    %v902 = vunpack.c.l.b16 %v145
    %v903 = vunpack.c.h.b16 %v145
    %v904 = vunpack.c.l.b16 %v146
    %v905 = vunpack.c.h.b16 %v146
    %v906 = vunpack.c.l.b16 %v147
    %v907 = vunpack.c.h.b16 %v147
    %v908 = vunpack.c.l.b16 %v148
    %v909 = vunpack.c.h.b16 %v148
    %v910 = vunpack.c.l.b16 %v149
    %v911 = vunpack.c.h.b16 %v149
    %v912 = vunpack.c.l.b16 %v150
    %v913 = vunpack.c.h.b16 %v150
    %v914 = vunpack.c.l.b16 %v151
    %v915 = vunpack.c.h.b16 %v151
    %v916 = vunpack.c.l.b16 %v152
    %v917 = vunpack.c.h.b16 %v152
    %v918 = vunpack.c.l.b16 %v153
    %v919 = vunpack.c.h.b16 %v153
    %v920 = vunpack.c.l.b16 %v154
    %v921 = vunpack.c.h.b16 %v154
    %v922 = vunpack.c.l.b16 %v155
    %v923 = vunpack.c.h.b16 %v155
    %v924 = vunpack.c.l.b16 %v156
    %v925 = vunpack.c.h.b16 %v156
    %v926 = vunpack.c.l.b16 %v157
    %v927 = vunpack.c.h.b16 %v157
    %v928 = vpack.c.b16 %v824, %v820
    %v929 = vpack.c.b16 %v825, %v821
    %v930 = vpack.c.b16 %v826, %v822
    %v931 = vpack.c.b16 %v827, %v823
    %v932 = vpack.c.b16 %v832, %v828
    %v933 = vpack.c.b16 %v833, %v829
    %v934 = vpack.c.b16 %v834, %v830
    %v935 = vpack.c.b16 %v835, %v831
    %v936 = vpack.c.b16 %v840, %v836
    %v937 = vpack.c.b16 %v841, %v837
    %v938 = vpack.c.b16 %v842, %v838
    %v939 = vpack.c.b16 %v843, %v839
    %v940 = vpack.c.b16 %v848, %v844
    %v941 = vpack.c.b16 %v849, %v845
    %v942 = vpack.c.b16 %v850, %v846
    %v943 = vpack.c.b16 %v851, %v847
    %v944 = vpack.c.b16 %v856, %v852
    %v945 = vpack.c.b16 %v857, %v853
    %v946 = vpack.c.b16 %v858, %v854
    %v947 = vpack.c.b16 %v859, %v855
    %v948 = vpack.c.b16 %v864, %v860
    %v949 = vpack.c.b16 %v865, %v861
    %v950 = vpack.c.b16 %v866, %v862
    %v951 = vpack.c.b16 %v867, %v863
    %v952 = vpack.c.b16 %v872, %v868
    %v953 = vpack.c.b16 %v873, %v869
    %v954 = vpack.c.b16 %v874, %v870
    %v955 = vpack.c.b16 %v875, %v871
    %v956 = vpack.c.b16 %v880, %v876
    %v957 = vpack.c.b16 %v881, %v877
    %v958 = vpack.c.b16 %v882, %v878
    %v959 = vpack.c.b16 %v883, %v879
    %v960 = vpack.c.b16 %v888, %v884
    %v961 = vpack.c.b16 %v889, %v885
    %v962 = vpack.c.b16 %v890, %v886
    %v963 = vpack.c.b16 %v891, %v887
    %v964 = vpack.c.b16 %v896, %v892
    %v965 = vpack.c.b16 %v897, %v893
    %v966 = vpack.c.b16 %v898, %v894
    %v967 = vpack.c.b16 %v899, %v895
    %v968 = vpack.c.b16 %v904, %v900
    %v969 = vpack.c.b16 %v905, %v901
    %v970 = vpack.c.b16 %v906, %v902
    %v971 = vpack.c.b16 %v907, %v903
    %v972 = vpack.c.b16 %v912, %v908
    %v973 = vpack.c.b16 %v913, %v909
    %v974 = vpack.c.b16 %v914, %v910
    %v975 = vpack.c.b16 %v915, %v911
    %v976 = vpack.c.b16 %v920, %v916
    %v977 = vpack.c.b16 %v921, %v917
    %v978 = vpack.c.b16 %v922, %v918
    %v979 = vpack.c.b16 %v923, %v919
    %v980 = vpack.c.b16 %v924, %v924
    %v981 = vpack.c.b16 %v925, %v925
    %v982 = vpack.c.b16 %v926, %v926
    %v983 = vpack.c.b16 %v927, %v927
    %v1037 = vsel %vm575, %v95, 0
    %v1039 = vsel %vm575, %v97, 0
    %v1041 = vsel %vm575, %v99, 0
    %v1043 = vsel %vm575, %v101, 0
    %v1046 = vsel %vm575, %v103, 0
    %v1049 = vsel %vm591, %v980, 0
    %v1052 = vsel %vm591, %v981, 0
    %v1055 = vsel %vm591, %v982, 0
    %v1058 = vsel %vm591, %v983, 0
    %1060 = vmatprep.subr.bf16.mxu0 %v929
    %1061 = vmatpush1.bf16.msra.mxu0 %v928
    %1062 = vmatprep.subr.bf16.mxu0 %v933
    %1063 = vmatpush1.bf16.msra.mxu0 %v932
    %1064 = vmatprep.subr.bf16.mxu0 %v937
    %1065 = vmatpush1.bf16.msra.mxu0 %v936
    %1066 = vmatprep.subr.bf16.mxu0 %v941
    %1067 = vmatpush1.bf16.msra.mxu0 %v940
    %1068 = vmatprep.subr.bf16.mxu0 %v945
    %1069 = vmatpush1.bf16.msra.mxu0 %v944
    %1070 = vmatprep.subr.bf16.mxu0 %v949
    %1071 = vmatpush1.bf16.msra.mxu0 %v948
    %1072 = vmatprep.subr.bf16.mxu0 %v953
    %1073 = vmatpush1.bf16.msra.mxu0 %v952
    %1074 = vmatprep.subr.bf16.mxu0 %v957
    %1075 = vmatpush1.bf16.msra.mxu0 %v956
    %1076 = vmatprep.subr.bf16.mxu0 %v961
    %1077 = vmatpush1.bf16.msra.mxu0 %v960
    %1078 = vmatprep.subr.bf16.mxu0 %v965
    %1079 = vmatpush1.bf16.msra.mxu0 %v964
    %1080 = vmatprep.subr.bf16.mxu0 %v969
    %1081 = vmatpush1.bf16.msra.mxu0 %v968
    %1082 = vmatprep.subr.bf16.mxu0 %v973
    %1083 = vmatpush1.bf16.msra.mxu0 %v972
    %1084 = vmatprep.subr.bf16.mxu0 %v977
    %1085 = vmatpush1.bf16.msra.mxu0 %v976
    %1086 = vmatprep.subr.bf16.mxu0 %v1052
    %1087 = vmatpush1.bf16.msra.mxu0 %v1049
    %1088 = vmatprep.subr.bf16.mxu0 0
    %1089 = vmatpush1.bf16.msra.mxu0 0
    %1090 = vmatprep.subr.bf16.mxu0 0
    %1091 = vmatpush1.bf16.msra.mxu0 0
    %1092 = vmatprep.mubr.bf16.mxu0 %v1037
    %1093 = vmatmul.mubr.bf16.gmra.mrb[0].mxu0 %v94
    %v1094 = vpop.f32.mrb[0].mxu0
    %v1095 = vadd.f32 %v639, %v1094
    %v1096 = vpop.f32.mrb[0].mxu0
    %v1097 = vadd.f32 %v641, %v1096
    %v1098 = vpop.f32.mrb[0].mxu0
    %v1099 = vadd.f32 %v643, %v1098
    %v1100 = vpop.f32.mrb[0].mxu0
    %v1101 = vadd.f32 %v645, %v1100
    %1102 = vmatprep.mubr.bf16.mxu0 %v1039
    %1103 = vmatmul.mubr.bf16.gmra.mrb[0].mxu0 %v96
    %v1104 = vpop.f32.mrb[0].mxu0
    %v1105 = vadd.f32 %v649, %v1104
    %v1106 = vpop.f32.mrb[0].mxu0
    %v1107 = vadd.f32 %v651, %v1106
    %v1108 = vpop.f32.mrb[0].mxu0
    %v1109 = vadd.f32 %v653, %v1108
    %v1110 = vpop.f32.mrb[0].mxu0
    %v1111 = vadd.f32 %v655, %v1110
    %1112 = vmatprep.mubr.bf16.mxu0 %v1041
    %1113 = vmatmul.mubr.bf16.gmra.mrb[0].mxu0 %v98
    %v1114 = vpop.f32.mrb[0].mxu0
    %v1115 = vadd.f32 %v659, %v1114
    %v1116 = vpop.f32.mrb[0].mxu0
    %v1117 = vadd.f32 %v661, %v1116
    %v1118 = vpop.f32.mrb[0].mxu0
    %v1119 = vadd.f32 %v663, %v1118
    %v1120 = vpop.f32.mrb[0].mxu0
    %v1121 = vadd.f32 %v665, %v1120
    %1122 = vmatprep.mubr.bf16.mxu0 %v1043
    %1123 = vmatmul.mubr.bf16.gmra.mrb[0].mxu0 %v100
    %v1124 = vpop.f32.mrb[0].mxu0
    %v1125 = vadd.f32 %v669, %v1124
    %v1126 = vpop.f32.mrb[0].mxu0
    %v1127 = vadd.f32 %v671, %v1126
    %v1128 = vpop.f32.mrb[0].mxu0
    %v1129 = vadd.f32 %v673, %v1128
    %v1130 = vpop.f32.mrb[0].mxu0
    %v1131 = vadd.f32 %v675, %v1130
    %1132 = vmatprep.mubr.bf16.mxu0 %v1046
    %1133 = vmatmul.mubr.bf16.gmra.mrb[0].mxu0 %v102
    %v1134 = vpop.f32.mrb[0].mxu0
    %v1135 = vadd.f32 %v679, %v1134
    %v1136 = vpop.f32.mrb[0].mxu0
    %v1137 = vadd.f32 %v681, %v1136
    %v1138 = vpop.f32.mrb[0].mxu0
    %v1139 = vpop.f32.mrb[0].mxu0
    %1140 = vdwg.mxu0
    %1141 = vmatprep.subr.bf16.mxu0 %v931
    %1142 = vmatpush1.bf16.msra.mxu0 %v930
    %1143 = vmatprep.subr.bf16.mxu0 %v935
    %1144 = vmatpush1.bf16.msra.mxu0 %v934
    %1145 = vmatprep.subr.bf16.mxu0 %v939
    %1146 = vmatpush1.bf16.msra.mxu0 %v938
    %1147 = vmatprep.subr.bf16.mxu0 %v943
    %1148 = vmatpush1.bf16.msra.mxu0 %v942
    %1149 = vmatprep.subr.bf16.mxu0 %v947
    %1150 = vmatpush1.bf16.msra.mxu0 %v946
    %1151 = vmatprep.subr.bf16.mxu0 %v951
    %1152 = vmatpush1.bf16.msra.mxu0 %v950
    %1153 = vmatprep.subr.bf16.mxu0 %v955
    %1154 = vmatpush1.bf16.msra.mxu0 %v954
    %1155 = vmatprep.subr.bf16.mxu0 %v959
    %1156 = vmatpush1.bf16.msra.mxu0 %v958
    %1157 = vmatprep.subr.bf16.mxu0 %v963
    %1158 = vmatpush1.bf16.msra.mxu0 %v962
    %1159 = vmatprep.subr.bf16.mxu0 %v967
    %1160 = vmatpush1.bf16.msra.mxu0 %v966
    %1161 = vmatprep.subr.bf16.mxu0 %v971
    %1162 = vmatpush1.bf16.msra.mxu0 %v970
    %1163 = vmatprep.subr.bf16.mxu0 %v975
    %1164 = vmatpush1.bf16.msra.mxu0 %v974
    %1165 = vmatprep.subr.bf16.mxu0 %v979
    %1166 = vmatpush1.bf16.msra.mxu0 %v978
    %1167 = vmatprep.subr.bf16.mxu0 %v1058
    %1168 = vmatpush1.bf16.msra.mxu0 %v1055
    %1169 = vmatprep.subr.bf16.mxu0 0
    %1170 = vmatpush1.bf16.msra.mxu0 0
    %1171 = vmatprep.subr.bf16.mxu0 0
    %1172 = vmatpush1.bf16.msra.mxu0 0
    %1173 = vmatprep.mubr.bf16.mxu0 %v1037
    %1174 = vmatmul.mubr.bf16.gmra.mrb[0].mxu0 %v94
    %v1175 = vpop.f32.mrb[0].mxu0
    %v1176 = vadd.f32 %v720, %v1175
    %v1177 = vpop.f32.mrb[0].mxu0
    %v1178 = vadd.f32 %v722, %v1177
    %v1179 = vpop.f32.mrb[0].mxu0
    %v1180 = vadd.f32 %v724, %v1179
    %v1181 = vpop.f32.mrb[0].mxu0
    %v1182 = vadd.f32 %v726, %v1181
    %1183 = vmatprep.mubr.bf16.mxu0 %v1039
    %1184 = vmatmul.mubr.bf16.gmra.mrb[0].mxu0 %v96
    %v1185 = vpop.f32.mrb[0].mxu0
    %v1186 = vadd.f32 %v730, %v1185
    %v1187 = vpop.f32.mrb[0].mxu0
    %v1188 = vadd.f32 %v732, %v1187
    %v1189 = vpop.f32.mrb[0].mxu0
    %v1190 = vadd.f32 %v734, %v1189
    %v1191 = vpop.f32.mrb[0].mxu0
    %v1192 = vadd.f32 %v736, %v1191
    %1193 = vmatprep.mubr.bf16.mxu0 %v1041
    %1194 = vmatmul.mubr.bf16.gmra.mrb[0].mxu0 %v98
    %v1195 = vpop.f32.mrb[0].mxu0
    %v1196 = vadd.f32 %v740, %v1195
    %v1197 = vpop.f32.mrb[0].mxu0
    %v1198 = vadd.f32 %v742, %v1197
    %v1199 = vpop.f32.mrb[0].mxu0
    %v1200 = vadd.f32 %v744, %v1199
    %v1201 = vpop.f32.mrb[0].mxu0
    %v1202 = vadd.f32 %v746, %v1201
    %1203 = vmatprep.mubr.bf16.mxu0 %v1043
    %1204 = vmatmul.mubr.bf16.gmra.mrb[0].mxu0 %v100
    %v1205 = vpop.f32.mrb[0].mxu0
    %v1206 = vadd.f32 %v750, %v1205
    %v1207 = vpop.f32.mrb[0].mxu0
    %v1208 = vadd.f32 %v752, %v1207
    %v1209 = vpop.f32.mrb[0].mxu0
    %v1210 = vadd.f32 %v754, %v1209
    %v1211 = vpop.f32.mrb[0].mxu0
    %v1212 = vadd.f32 %v756, %v1211
    %1213 = vmatprep.mubr.bf16.mxu0 %v1046
    %1214 = vmatmul.mubr.bf16.gmra.mrb[0].mxu0 %v102
    %v1215 = vpop.f32.mrb[0].mxu0
    %v1216 = vadd.f32 %v760, %v1215
    %v1217 = vpop.f32.mrb[0].mxu0
    %v1218 = vadd.f32 %v762, %v1217
    %v1219 = vpop.f32.mrb[0].mxu0
    %v1220 = vpop.f32.mrb[0].mxu0
    %1221 = vdwg.mxu0
    %v1222 = vld [vmem:[%s0] sm:$0xfc]
    %v1223 = vld [vmem:[%s0 + $0x8] sm:$0xfc]
    %v1224 = vld [vmem:[%s0 + $0x80] sm:$0x3f]
    %v1225 = vld [vmem:[%s0 + $0x88] sm:$0x3f]
    %v1226 = vpack.c.bf16 %v78, %v1222
    %v1227 = vpack.c.bf16 %v79, %v1223
    %v1228 = vpack.c.bf16 %v1224, %v1224
    %v1229 = vpack.c.bf16 %v1225, %v1225
    %s1230 = scalar_lea.vmem %s1, 864
    %v1231 = vld [vmem:[%s1230] sm:$0xff]
    %v1232 = vld [vmem:[%s1230 + $0x8] sm:$0xff]
    %v1233 = vld [vmem:[%s1230 + $0x10] sm:$0xff]
    %v1234 = vld [vmem:[%s1230 + $0x18] sm:$0xff]
    %v1235 = vld [vmem:[%s1230 + $0x20] sm:$0xff]
    %v1236 = vld [vmem:[%s1230 + $0x28] sm:$0xff]
    %v1237 = vld [vmem:[%s1230 + $0x30] sm:$0xff]
    %v1238 = vld [vmem:[%s1230 + $0x38] sm:$0xff]
    %v1239 = vld [vmem:[%s1230 + $0x40] sm:$0xff]
    %v1240 = vld [vmem:[%s1230 + $0x48] sm:$0xff]
    %v1241 = vld [vmem:[%s1230 + $0x50] sm:$0xff]
    %v1242 = vld [vmem:[%s1230 + $0x58] sm:$0xff]
    %v1243 = vld [vmem:[%s1230 + $0x60] sm:$0xff]
    %v1244 = vld [vmem:[%s1230 + $0x68] sm:$0xff]
    %v1245 = vld [vmem:[%s1230 + $0x70] sm:$0xff]
    %v1246 = vld [vmem:[%s1230 + $0x78] sm:$0xff]
    %v1247 = vld [vmem:[%s1230 + $0x80] sm:$0xff]
    %v1248 = vld [vmem:[%s1230 + $0x88] sm:$0xff]
    %v1249 = vld [vmem:[%s1230 + $0x90] sm:$0xff]
    %v1250 = vld [vmem:[%s1230 + $0x98] sm:$0xff]
    %v1251 = vld [vmem:[%s1230 + $0xa0] sm:$0xff]
    %v1252 = vld [vmem:[%s1230 + $0xa8] sm:$0xff]
    %v1253 = vld [vmem:[%s1230 + $0xb0] sm:$0xff]
    %v1254 = vld [vmem:[%s1230 + $0xb8] sm:$0xff]
    %v1255 = vld [vmem:[%s1230 + $0xc0] sm:$0xff]
    %v1256 = vld [vmem:[%s1230 + $0xc8] sm:$0xff]
    %v1257 = vld [vmem:[%s1230 + $0xd0] sm:$0xff]
    %v1258 = vld [vmem:[%s1230 + $0xd8] sm:$0xff]
    %v1259 = vld [vmem:[%s1230 + $0xe0] sm:$0xff]
    %v1260 = vld [vmem:[%s1230 + $0xe8] sm:$0xff]
    %v1261 = vld [vmem:[%s1230 + $0xf0] sm:$0xff]
    %v1262 = vld [vmem:[%s1230 + $0xf8] sm:$0xff]
    %v1263 = vld [vmem:[%s1230 + $0x100] sm:$0xff]
    %v1264 = vld [vmem:[%s1230 + $0x108] sm:$0xff]
    %v1265 = vld [vmem:[%s1230 + $0x110] sm:$0xff]
    %v1266 = vld [vmem:[%s1230 + $0x118] sm:$0xff]
    %v1267 = vld [vmem:[%s1230 + $0x120] sm:$0xff]
    %v1268 = vld [vmem:[%s1230 + $0x128] sm:$0xff]
    %v1269 = vld [vmem:[%s1230 + $0x130] sm:$0xff]
    %v1270 = vld [vmem:[%s1230 + $0x138] sm:$0xff]
    %v1271 = vld [vmem:[%s1230 + $0x140] sm:$0xff]
    %v1272 = vld [vmem:[%s1230 + $0x148] sm:$0xff]
    %v1273 = vld [vmem:[%s1230 + $0x150] sm:$0xff]
    %v1274 = vld [vmem:[%s1230 + $0x158] sm:$0xff]
    %v1275 = vld [vmem:[%s1230 + $0x160] sm:$0xff]
    %v1276 = vld [vmem:[%s1230 + $0x168] sm:$0xff]
    %v1277 = vld [vmem:[%s1230 + $0x170] sm:$0xff]
    %v1278 = vld [vmem:[%s1230 + $0x178] sm:$0xff]
    %v1279 = vld [vmem:[%s1230 + $0x180] sm:$0xff]
    %v1280 = vld [vmem:[%s1230 + $0x188] sm:$0xff]
    %v1281 = vld [vmem:[%s1230 + $0x190] sm:$0xff]
    %v1282 = vld [vmem:[%s1230 + $0x198] sm:$0xff]
    %v1283 = vld [vmem:[%s1230 + $0x1a0] sm:$0xff]
    %v1284 = vld [vmem:[%s1230 + $0x1a8] sm:$0xff]
    %vm1295 = vcmask 1046528
    %v1296 = vrot.slane %v1226, 1
    %v1297 = vrot.slane %v96, 1
    %v1298 = vsel %vm1295, %v1296, %v1297
    %v1299 = vrot.slane %v1227, 1
    %v1300 = vrot.slane %v97, 1
    %v1301 = vsel %vm1295, %v1299, %v1300
    %v1302 = vrot.slane %v98, 1
    %v1303 = vsel %vm1295, %v1297, %v1302
    %v1304 = vrot.slane %v99, 1
    %v1305 = vsel %vm1295, %v1300, %v1304
    %v1306 = vrot.slane %v100, 1
    %v1307 = vsel %vm1295, %v1302, %v1306
    %v1308 = vrot.slane %v101, 1
    %v1309 = vsel %vm1295, %v1304, %v1308
    %v1310 = vrot.slane %v1228, 1
    %v1311 = vsel %vm1295, %v1306, %v1310
    %v1312 = vrot.slane %v1229, 1
    %v1313 = vsel %vm1295, %v1308, %v1312
    %v1373 = vunpack.c.l.b16 %v1231
    %v1374 = vunpack.c.h.b16 %v1231
    %v1375 = vunpack.c.l.b16 %v1232
    %v1376 = vunpack.c.h.b16 %v1232
    %v1377 = vunpack.c.l.b16 %v1233
    %v1378 = vunpack.c.h.b16 %v1233
    %v1379 = vunpack.c.l.b16 %v1234
    %v1380 = vunpack.c.h.b16 %v1234
    %v1381 = vunpack.c.l.b16 %v1235
    %v1382 = vunpack.c.h.b16 %v1235
    %v1383 = vunpack.c.l.b16 %v1236
    %v1384 = vunpack.c.h.b16 %v1236
    %v1385 = vunpack.c.l.b16 %v1237
    %v1386 = vunpack.c.h.b16 %v1237
    %v1387 = vunpack.c.l.b16 %v1238
    %v1388 = vunpack.c.h.b16 %v1238
    %v1389 = vunpack.c.l.b16 %v1239
    %v1390 = vunpack.c.h.b16 %v1239
    %v1391 = vunpack.c.l.b16 %v1240
    %v1392 = vunpack.c.h.b16 %v1240
    %v1393 = vunpack.c.l.b16 %v1241
    %v1394 = vunpack.c.h.b16 %v1241
    %v1395 = vunpack.c.l.b16 %v1242
    %v1396 = vunpack.c.h.b16 %v1242
    %v1397 = vunpack.c.l.b16 %v1243
    %v1398 = vunpack.c.h.b16 %v1243
    %v1399 = vunpack.c.l.b16 %v1244
    %v1400 = vunpack.c.h.b16 %v1244
    %v1401 = vunpack.c.l.b16 %v1245
    %v1402 = vunpack.c.h.b16 %v1245
    %v1403 = vunpack.c.l.b16 %v1246
    %v1404 = vunpack.c.h.b16 %v1246
    %v1405 = vunpack.c.l.b16 %v1247
    %v1406 = vunpack.c.h.b16 %v1247
    %v1407 = vunpack.c.l.b16 %v1248
    %v1408 = vunpack.c.h.b16 %v1248
    %v1409 = vunpack.c.l.b16 %v1249
    %v1410 = vunpack.c.h.b16 %v1249
    %v1411 = vunpack.c.l.b16 %v1250
    %v1412 = vunpack.c.h.b16 %v1250
    %v1413 = vunpack.c.l.b16 %v1251
    %v1414 = vunpack.c.h.b16 %v1251
    %v1415 = vunpack.c.l.b16 %v1252
    %v1416 = vunpack.c.h.b16 %v1252
    %v1417 = vunpack.c.l.b16 %v1253
    %v1418 = vunpack.c.h.b16 %v1253
    %v1419 = vunpack.c.l.b16 %v1254
    %v1420 = vunpack.c.h.b16 %v1254
    %v1421 = vunpack.c.l.b16 %v1255
    %v1422 = vunpack.c.h.b16 %v1255
    %v1423 = vunpack.c.l.b16 %v1256
    %v1424 = vunpack.c.h.b16 %v1256
    %v1425 = vunpack.c.l.b16 %v1257
    %v1426 = vunpack.c.h.b16 %v1257
    %v1427 = vunpack.c.l.b16 %v1258
    %v1428 = vunpack.c.h.b16 %v1258
    %v1429 = vunpack.c.l.b16 %v1259
    %v1430 = vunpack.c.h.b16 %v1259
    %v1431 = vunpack.c.l.b16 %v1260
    %v1432 = vunpack.c.h.b16 %v1260
    %v1433 = vunpack.c.l.b16 %v1261
    %v1434 = vunpack.c.h.b16 %v1261
    %v1435 = vunpack.c.l.b16 %v1262
    %v1436 = vunpack.c.h.b16 %v1262
    %v1437 = vunpack.c.l.b16 %v1263
    %v1438 = vunpack.c.h.b16 %v1263
    %v1439 = vunpack.c.l.b16 %v1264
    %v1440 = vunpack.c.h.b16 %v1264
    %v1441 = vunpack.c.l.b16 %v1265
    %v1442 = vunpack.c.h.b16 %v1265
    %v1443 = vunpack.c.l.b16 %v1266
    %v1444 = vunpack.c.h.b16 %v1266
    %v1445 = vunpack.c.l.b16 %v1267
    %v1446 = vunpack.c.h.b16 %v1267
    %v1447 = vunpack.c.l.b16 %v1268
    %v1448 = vunpack.c.h.b16 %v1268
    %v1449 = vunpack.c.l.b16 %v1269
    %v1450 = vunpack.c.h.b16 %v1269
    %v1451 = vunpack.c.l.b16 %v1270
    %v1452 = vunpack.c.h.b16 %v1270
    %v1453 = vunpack.c.l.b16 %v1271
    %v1454 = vunpack.c.h.b16 %v1271
    %v1455 = vunpack.c.l.b16 %v1272
    %v1456 = vunpack.c.h.b16 %v1272
    %v1457 = vunpack.c.l.b16 %v1273
    %v1458 = vunpack.c.h.b16 %v1273
    %v1459 = vunpack.c.l.b16 %v1274
    %v1460 = vunpack.c.h.b16 %v1274
    %v1461 = vunpack.c.l.b16 %v1275
    %v1462 = vunpack.c.h.b16 %v1275
    %v1463 = vunpack.c.l.b16 %v1276
    %v1464 = vunpack.c.h.b16 %v1276
    %v1465 = vunpack.c.l.b16 %v1277
    %v1466 = vunpack.c.h.b16 %v1277
    %v1467 = vunpack.c.l.b16 %v1278
    %v1468 = vunpack.c.h.b16 %v1278
    %v1469 = vunpack.c.l.b16 %v1279
    %v1470 = vunpack.c.h.b16 %v1279
    %v1471 = vunpack.c.l.b16 %v1280
    %v1472 = vunpack.c.h.b16 %v1280
    %v1473 = vunpack.c.l.b16 %v1281
    %v1474 = vunpack.c.h.b16 %v1281
    %v1475 = vunpack.c.l.b16 %v1282
    %v1476 = vunpack.c.h.b16 %v1282
    %v1477 = vunpack.c.l.b16 %v1283
    %v1478 = vunpack.c.h.b16 %v1283
    %v1479 = vunpack.c.l.b16 %v1284
    %v1480 = vunpack.c.h.b16 %v1284
    %v1481 = vpack.c.b16 %v1377, %v1373
    %v1482 = vpack.c.b16 %v1378, %v1374
    %v1483 = vpack.c.b16 %v1379, %v1375
    %v1484 = vpack.c.b16 %v1380, %v1376
    %v1485 = vpack.c.b16 %v1385, %v1381
    %v1486 = vpack.c.b16 %v1386, %v1382
    %v1487 = vpack.c.b16 %v1387, %v1383
    %v1488 = vpack.c.b16 %v1388, %v1384
    %v1489 = vpack.c.b16 %v1393, %v1389
    %v1490 = vpack.c.b16 %v1394, %v1390
    %v1491 = vpack.c.b16 %v1395, %v1391
    %v1492 = vpack.c.b16 %v1396, %v1392
    %v1493 = vpack.c.b16 %v1401, %v1397
    %v1494 = vpack.c.b16 %v1402, %v1398
    %v1495 = vpack.c.b16 %v1403, %v1399
    %v1496 = vpack.c.b16 %v1404, %v1400
    %v1497 = vpack.c.b16 %v1409, %v1405
    %v1498 = vpack.c.b16 %v1410, %v1406
    %v1499 = vpack.c.b16 %v1411, %v1407
    %v1500 = vpack.c.b16 %v1412, %v1408
    %v1501 = vpack.c.b16 %v1417, %v1413
    %v1502 = vpack.c.b16 %v1418, %v1414
    %v1503 = vpack.c.b16 %v1419, %v1415
    %v1504 = vpack.c.b16 %v1420, %v1416
    %v1505 = vpack.c.b16 %v1425, %v1421
    %v1506 = vpack.c.b16 %v1426, %v1422
    %v1507 = vpack.c.b16 %v1427, %v1423
    %v1508 = vpack.c.b16 %v1428, %v1424
    %v1509 = vpack.c.b16 %v1433, %v1429
    %v1510 = vpack.c.b16 %v1434, %v1430
    %v1511 = vpack.c.b16 %v1435, %v1431
    %v1512 = vpack.c.b16 %v1436, %v1432
    %v1513 = vpack.c.b16 %v1441, %v1437
    %v1514 = vpack.c.b16 %v1442, %v1438
    %v1515 = vpack.c.b16 %v1443, %v1439
    %v1516 = vpack.c.b16 %v1444, %v1440
    %v1517 = vpack.c.b16 %v1449, %v1445
    %v1518 = vpack.c.b16 %v1450, %v1446
    %v1519 = vpack.c.b16 %v1451, %v1447
    %v1520 = vpack.c.b16 %v1452, %v1448
    %v1521 = vpack.c.b16 %v1457, %v1453
    %v1522 = vpack.c.b16 %v1458, %v1454
    %v1523 = vpack.c.b16 %v1459, %v1455
    %v1524 = vpack.c.b16 %v1460, %v1456
    %v1525 = vpack.c.b16 %v1465, %v1461
    %v1526 = vpack.c.b16 %v1466, %v1462
    %v1527 = vpack.c.b16 %v1467, %v1463
    %v1528 = vpack.c.b16 %v1468, %v1464
    %v1529 = vpack.c.b16 %v1473, %v1469
    %v1530 = vpack.c.b16 %v1474, %v1470
    %v1531 = vpack.c.b16 %v1475, %v1471
    %v1532 = vpack.c.b16 %v1476, %v1472
    %v1533 = vpack.c.b16 %v1477, %v1477
    %v1534 = vpack.c.b16 %v1478, %v1478
    %v1535 = vpack.c.b16 %v1479, %v1479
    %v1536 = vpack.c.b16 %v1480, %v1480
    %v1590 = vsel %vm575, %v1301, 0
    %v1593 = vsel %vm575, %v1305, 0
    %v1596 = vsel %vm575, %v1309, 0
    %v1599 = vsel %vm575, %v1313, 0
    %v1602 = vsel %vm575, %v1312, 0
    %v1605 = vsel %vm591, %v1533, 0
    %v1608 = vsel %vm591, %v1534, 0
    %v1611 = vsel %vm591, %v1535, 0
    %v1614 = vsel %vm591, %v1536, 0
    %1616 = vmatprep.subr.bf16.mxu0 %v1482
    %1617 = vmatpush1.bf16.msra.mxu0 %v1481
    %1618 = vmatprep.subr.bf16.mxu0 %v1486
    %1619 = vmatpush1.bf16.msra.mxu0 %v1485
    %1620 = vmatprep.subr.bf16.mxu0 %v1490
    %1621 = vmatpush1.bf16.msra.mxu0 %v1489
    %1622 = vmatprep.subr.bf16.mxu0 %v1494
    %1623 = vmatpush1.bf16.msra.mxu0 %v1493
    %1624 = vmatprep.subr.bf16.mxu0 %v1498
    %1625 = vmatpush1.bf16.msra.mxu0 %v1497
    %1626 = vmatprep.subr.bf16.mxu0 %v1502
    %1627 = vmatpush1.bf16.msra.mxu0 %v1501
    %1628 = vmatprep.subr.bf16.mxu0 %v1506
    %1629 = vmatpush1.bf16.msra.mxu0 %v1505
    %1630 = vmatprep.subr.bf16.mxu0 %v1510
    %1631 = vmatpush1.bf16.msra.mxu0 %v1509
    %1632 = vmatprep.subr.bf16.mxu0 %v1514
    %1633 = vmatpush1.bf16.msra.mxu0 %v1513
    %1634 = vmatprep.subr.bf16.mxu0 %v1518
    %1635 = vmatpush1.bf16.msra.mxu0 %v1517
    %1636 = vmatprep.subr.bf16.mxu0 %v1522
    %1637 = vmatpush1.bf16.msra.mxu0 %v1521
    %1638 = vmatprep.subr.bf16.mxu0 %v1526
    %1639 = vmatpush1.bf16.msra.mxu0 %v1525
    %1640 = vmatprep.subr.bf16.mxu0 %v1530
    %1641 = vmatpush1.bf16.msra.mxu0 %v1529
    %1642 = vmatprep.subr.bf16.mxu0 %v1608
    %1643 = vmatpush1.bf16.msra.mxu0 %v1605
    %1644 = vmatprep.subr.bf16.mxu0 0
    %1645 = vmatpush1.bf16.msra.mxu0 0
    %1646 = vmatprep.subr.bf16.mxu0 0
    %1647 = vmatpush1.bf16.msra.mxu0 0
    %1648 = vmatprep.mubr.bf16.mxu0 %v1590
    %1649 = vmatmul.mubr.bf16.gmra.mrb[0].mxu0 %v1298
    %v1650 = vpop.f32.mrb[0].mxu0
    %v1651 = vadd.f32 0.0, %v1650
    %v1652 = vpop.f32.mrb[0].mxu0
    %v1653 = vadd.f32 0.0, %v1652
    %v1654 = vpop.f32.mrb[0].mxu0
    %v1655 = vadd.f32 0.0, %v1654
    %v1656 = vpop.f32.mrb[0].mxu0
    %v1657 = vadd.f32 0.0, %v1656
    %1658 = vmatprep.mubr.bf16.mxu0 %v1593
    %1659 = vmatmul.mubr.bf16.gmra.mrb[0].mxu0 %v1303
    %v1660 = vpop.f32.mrb[0].mxu0
    %v1661 = vadd.f32 0.0, %v1660
    %v1662 = vpop.f32.mrb[0].mxu0
    %v1663 = vadd.f32 0.0, %v1662
    %v1664 = vpop.f32.mrb[0].mxu0
    %v1665 = vadd.f32 0.0, %v1664
    %v1666 = vpop.f32.mrb[0].mxu0
    %v1667 = vadd.f32 0.0, %v1666
    %1668 = vmatprep.mubr.bf16.mxu0 %v1596
    %1669 = vmatmul.mubr.bf16.gmra.mrb[0].mxu0 %v1307
    %v1670 = vpop.f32.mrb[0].mxu0
    %v1671 = vadd.f32 0.0, %v1670
    %v1672 = vpop.f32.mrb[0].mxu0
    %v1673 = vadd.f32 0.0, %v1672
    %v1674 = vpop.f32.mrb[0].mxu0
    %v1675 = vadd.f32 0.0, %v1674
    %v1676 = vpop.f32.mrb[0].mxu0
    %v1677 = vadd.f32 0.0, %v1676
    %1678 = vmatprep.mubr.bf16.mxu0 %v1599
    %1679 = vmatmul.mubr.bf16.gmra.mrb[0].mxu0 %v1311
    %v1680 = vpop.f32.mrb[0].mxu0
    %v1681 = vadd.f32 0.0, %v1680
    %v1682 = vpop.f32.mrb[0].mxu0
    %v1683 = vadd.f32 0.0, %v1682
    %v1684 = vpop.f32.mrb[0].mxu0
    %v1685 = vadd.f32 0.0, %v1684
    %v1686 = vpop.f32.mrb[0].mxu0
    %v1687 = vadd.f32 0.0, %v1686
    %1688 = vmatprep.mubr.bf16.mxu0 %v1602
    %1689 = vmatmul.mubr.bf16.gmra.mrb[0].mxu0 %v1310
    %v1690 = vpop.f32.mrb[0].mxu0
    %v1691 = vadd.f32 0.0, %v1690
    %v1692 = vpop.f32.mrb[0].mxu0
    %v1693 = vadd.f32 0.0, %v1692
    %v1694 = vpop.f32.mrb[0].mxu0
    %v1695 = vpop.f32.mrb[0].mxu0
    %1696 = vdwg.mxu0
    %1697 = vmatprep.subr.bf16.mxu0 %v1484
    %1698 = vmatpush1.bf16.msra.mxu0 %v1483
    %1699 = vmatprep.subr.bf16.mxu0 %v1488
    %1700 = vmatpush1.bf16.msra.mxu0 %v1487
    %1701 = vmatprep.subr.bf16.mxu0 %v1492
    %1702 = vmatpush1.bf16.msra.mxu0 %v1491
    %1703 = vmatprep.subr.bf16.mxu0 %v1496
    %1704 = vmatpush1.bf16.msra.mxu0 %v1495
    %1705 = vmatprep.subr.bf16.mxu0 %v1500
    %1706 = vmatpush1.bf16.msra.mxu0 %v1499
    %1707 = vmatprep.subr.bf16.mxu0 %v1504
    %1708 = vmatpush1.bf16.msra.mxu0 %v1503
    %1709 = vmatprep.subr.bf16.mxu0 %v1508
    %1710 = vmatpush1.bf16.msra.mxu0 %v1507
    %1711 = vmatprep.subr.bf16.mxu0 %v1512
    %1712 = vmatpush1.bf16.msra.mxu0 %v1511
    %1713 = vmatprep.subr.bf16.mxu0 %v1516
    %1714 = vmatpush1.bf16.msra.mxu0 %v1515
    %1715 = vmatprep.subr.bf16.mxu0 %v1520
    %1716 = vmatpush1.bf16.msra.mxu0 %v1519
    %1717 = vmatprep.subr.bf16.mxu0 %v1524
    %1718 = vmatpush1.bf16.msra.mxu0 %v1523
    %1719 = vmatprep.subr.bf16.mxu0 %v1528
    %1720 = vmatpush1.bf16.msra.mxu0 %v1527
    %1721 = vmatprep.subr.bf16.mxu0 %v1532
    %1722 = vmatpush1.bf16.msra.mxu0 %v1531
    %1723 = vmatprep.subr.bf16.mxu0 %v1614
    %1724 = vmatpush1.bf16.msra.mxu0 %v1611
    %1725 = vmatprep.subr.bf16.mxu0 0
    %1726 = vmatpush1.bf16.msra.mxu0 0
    %1727 = vmatprep.subr.bf16.mxu0 0
    %1728 = vmatpush1.bf16.msra.mxu0 0
    %1729 = vmatprep.mubr.bf16.mxu0 %v1590
    %1730 = vmatmul.mubr.bf16.gmra.mrb[0].mxu0 %v1298
    %v1731 = vpop.f32.mrb[0].mxu0
    %v1732 = vadd.f32 0.0, %v1731
    %v1733 = vpop.f32.mrb[0].mxu0
    %v1734 = vadd.f32 0.0, %v1733
    %v1735 = vpop.f32.mrb[0].mxu0
    %v1736 = vadd.f32 0.0, %v1735
    %v1737 = vpop.f32.mrb[0].mxu0
    %v1738 = vadd.f32 0.0, %v1737
    %1739 = vmatprep.mubr.bf16.mxu0 %v1593
    %1740 = vmatmul.mubr.bf16.gmra.mrb[0].mxu0 %v1303
    %v1741 = vpop.f32.mrb[0].mxu0
    %v1742 = vadd.f32 0.0, %v1741
    %v1743 = vpop.f32.mrb[0].mxu0
    %v1744 = vadd.f32 0.0, %v1743
    %v1745 = vpop.f32.mrb[0].mxu0
    %v1746 = vadd.f32 0.0, %v1745
    %v1747 = vpop.f32.mrb[0].mxu0
    %v1748 = vadd.f32 0.0, %v1747
    %1749 = vmatprep.mubr.bf16.mxu0 %v1596
    %1750 = vmatmul.mubr.bf16.gmra.mrb[0].mxu0 %v1307
    %v1751 = vpop.f32.mrb[0].mxu0
    %v1752 = vadd.f32 0.0, %v1751
    %v1753 = vpop.f32.mrb[0].mxu0
    %v1754 = vadd.f32 0.0, %v1753
    %v1755 = vpop.f32.mrb[0].mxu0
    %v1756 = vadd.f32 0.0, %v1755
    %v1757 = vpop.f32.mrb[0].mxu0
    %v1758 = vadd.f32 0.0, %v1757
    %1759 = vmatprep.mubr.bf16.mxu0 %v1599
    %1760 = vmatmul.mubr.bf16.gmra.mrb[0].mxu0 %v1311
    %v1761 = vpop.f32.mrb[0].mxu0
    %v1762 = vadd.f32 0.0, %v1761
    %v1763 = vpop.f32.mrb[0].mxu0
    %v1764 = vadd.f32 0.0, %v1763
    %v1765 = vpop.f32.mrb[0].mxu0
    %v1766 = vadd.f32 0.0, %v1765
    %v1767 = vpop.f32.mrb[0].mxu0
    %v1768 = vadd.f32 0.0, %v1767
    %1769 = vmatprep.mubr.bf16.mxu0 %v1602
    %1770 = vmatmul.mubr.bf16.gmra.mrb[0].mxu0 %v1310
    %v1771 = vpop.f32.mrb[0].mxu0
    %v1772 = vadd.f32 0.0, %v1771
    %v1773 = vpop.f32.mrb[0].mxu0
    %v1774 = vadd.f32 0.0, %v1773
    %v1775 = vpop.f32.mrb[0].mxu0
    %v1776 = vpop.f32.mrb[0].mxu0
    %1777 = vdwg.mxu0
    %v1778 = vadd.f32 %v1095, %v1651
    %v1779 = vadd.f32 %v1097, %v1653
    %v1780 = vadd.f32 %v1176, %v1732
    %v1781 = vadd.f32 %v1178, %v1734
    %v1782 = vadd.f32 %v1099, %v1655
    %v1783 = vadd.f32 %v1101, %v1657
    %v1784 = vadd.f32 %v1180, %v1736
    %v1785 = vadd.f32 %v1182, %v1738
    %v1786 = vadd.f32 %v1105, %v1661
    %v1787 = vadd.f32 %v1107, %v1663
    %v1788 = vadd.f32 %v1186, %v1742
    %v1789 = vadd.f32 %v1188, %v1744
    %v1790 = vadd.f32 %v1109, %v1665
    %v1791 = vadd.f32 %v1111, %v1667
    %v1792 = vadd.f32 %v1190, %v1746
    %v1793 = vadd.f32 %v1192, %v1748
    %v1794 = vadd.f32 %v1115, %v1671
    %v1795 = vadd.f32 %v1117, %v1673
    %v1796 = vadd.f32 %v1196, %v1752
    %v1797 = vadd.f32 %v1198, %v1754
    %v1798 = vadd.f32 %v1119, %v1675
    %v1799 = vadd.f32 %v1121, %v1677
    %v1800 = vadd.f32 %v1200, %v1756
    %v1801 = vadd.f32 %v1202, %v1758
    %v1802 = vadd.f32 %v1125, %v1681
    %v1803 = vadd.f32 %v1127, %v1683
    %v1804 = vadd.f32 %v1206, %v1762
    %v1805 = vadd.f32 %v1208, %v1764
    %v1806 = vadd.f32 %v1129, %v1685
    %v1807 = vadd.f32 %v1131, %v1687
    %v1808 = vadd.f32 %v1210, %v1766
    %v1809 = vadd.f32 %v1212, %v1768
    %v1810 = vadd.f32 %v1135, %v1691
    %v1811 = vadd.f32 %v1137, %v1693
    %v1812 = vadd.f32 %v1216, %v1772
    %v1813 = vadd.f32 %v1218, %v1774
    %v1814 = vld [vmem:[%s0] sm:$0xf8]
    %v1815 = vld [vmem:[%s0 + $0x8] sm:$0xf8]
    %v1816 = vld [vmem:[%s0 + $0x80] sm:$0x7f]
    %v1817 = vld [vmem:[%s0 + $0x88] sm:$0x7f]
    %v1818 = vpack.c.bf16 %v78, %v1814
    %v1819 = vpack.c.bf16 %v79, %v1815
    %v1820 = vpack.c.bf16 %v1816, %v1816
    %v1821 = vpack.c.bf16 %v1817, %v1817
    %s1822 = scalar_lea.vmem %s1, 1296
    %v1823 = vld [vmem:[%s1822] sm:$0xff]
    %v1824 = vld [vmem:[%s1822 + $0x8] sm:$0xff]
    %v1825 = vld [vmem:[%s1822 + $0x10] sm:$0xff]
    %v1826 = vld [vmem:[%s1822 + $0x18] sm:$0xff]
    %v1827 = vld [vmem:[%s1822 + $0x20] sm:$0xff]
    %v1828 = vld [vmem:[%s1822 + $0x28] sm:$0xff]
    %v1829 = vld [vmem:[%s1822 + $0x30] sm:$0xff]
    %v1830 = vld [vmem:[%s1822 + $0x38] sm:$0xff]
    %v1831 = vld [vmem:[%s1822 + $0x40] sm:$0xff]
    %v1832 = vld [vmem:[%s1822 + $0x48] sm:$0xff]
    %v1833 = vld [vmem:[%s1822 + $0x50] sm:$0xff]
    %v1834 = vld [vmem:[%s1822 + $0x58] sm:$0xff]
    %v1835 = vld [vmem:[%s1822 + $0x60] sm:$0xff]
    %v1836 = vld [vmem:[%s1822 + $0x68] sm:$0xff]
    %v1837 = vld [vmem:[%s1822 + $0x70] sm:$0xff]
    %v1838 = vld [vmem:[%s1822 + $0x78] sm:$0xff]
    %v1839 = vld [vmem:[%s1822 + $0x80] sm:$0xff]
    %v1840 = vld [vmem:[%s1822 + $0x88] sm:$0xff]
    %v1841 = vld [vmem:[%s1822 + $0x90] sm:$0xff]
    %v1842 = vld [vmem:[%s1822 + $0x98] sm:$0xff]
    %v1843 = vld [vmem:[%s1822 + $0xa0] sm:$0xff]
    %v1844 = vld [vmem:[%s1822 + $0xa8] sm:$0xff]
    %v1845 = vld [vmem:[%s1822 + $0xb0] sm:$0xff]
    %v1846 = vld [vmem:[%s1822 + $0xb8] sm:$0xff]
    %v1847 = vld [vmem:[%s1822 + $0xc0] sm:$0xff]
    %v1848 = vld [vmem:[%s1822 + $0xc8] sm:$0xff]
    %v1849 = vld [vmem:[%s1822 + $0xd0] sm:$0xff]
    %v1850 = vld [vmem:[%s1822 + $0xd8] sm:$0xff]
    %v1851 = vld [vmem:[%s1822 + $0xe0] sm:$0xff]
    %v1852 = vld [vmem:[%s1822 + $0xe8] sm:$0xff]
    %v1853 = vld [vmem:[%s1822 + $0xf0] sm:$0xff]
    %v1854 = vld [vmem:[%s1822 + $0xf8] sm:$0xff]
    %v1855 = vld [vmem:[%s1822 + $0x100] sm:$0xff]
    %v1856 = vld [vmem:[%s1822 + $0x108] sm:$0xff]
    %v1857 = vld [vmem:[%s1822 + $0x110] sm:$0xff]
    %v1858 = vld [vmem:[%s1822 + $0x118] sm:$0xff]
    %v1859 = vld [vmem:[%s1822 + $0x120] sm:$0xff]
    %v1860 = vld [vmem:[%s1822 + $0x128] sm:$0xff]
    %v1861 = vld [vmem:[%s1822 + $0x130] sm:$0xff]
    %v1862 = vld [vmem:[%s1822 + $0x138] sm:$0xff]
    %v1863 = vld [vmem:[%s1822 + $0x140] sm:$0xff]
    %v1864 = vld [vmem:[%s1822 + $0x148] sm:$0xff]
    %v1865 = vld [vmem:[%s1822 + $0x150] sm:$0xff]
    %v1866 = vld [vmem:[%s1822 + $0x158] sm:$0xff]
    %v1867 = vld [vmem:[%s1822 + $0x160] sm:$0xff]
    %v1868 = vld [vmem:[%s1822 + $0x168] sm:$0xff]
    %v1869 = vld [vmem:[%s1822 + $0x170] sm:$0xff]
    %v1870 = vld [vmem:[%s1822 + $0x178] sm:$0xff]
    %v1871 = vld [vmem:[%s1822 + $0x180] sm:$0xff]
    %v1872 = vld [vmem:[%s1822 + $0x188] sm:$0xff]
    %v1873 = vld [vmem:[%s1822 + $0x190] sm:$0xff]
    %v1874 = vld [vmem:[%s1822 + $0x198] sm:$0xff]
    %v1875 = vld [vmem:[%s1822 + $0x1a0] sm:$0xff]
    %v1876 = vld [vmem:[%s1822 + $0x1a8] sm:$0xff]
    %vm1877 = vsmask.f32 6400
    %v1879 = vshrl.u32 %v1818, 16
    %v1881 = vrot.slane %v1879, 1
    %v1882 = vshll.u32 %v1818, 16
    %v1884 = vrot.slane %v1882, 2
    %v1885 = vor.u32 %v1881, %v1884
    %v1886 = vrot.slane %v246, 1
    %v1887 = vrot.slane %v230, 2
    %v1888 = vor.u32 %v1886, %v1887
    %v1889 = vsel %vm1877, %v1885, %v1888
    %v1891 = vshrl.u32 %v1819, 16
    %v1893 = vrot.slane %v1891, 1
    %v1894 = vshll.u32 %v1819, 16
    %v1896 = vrot.slane %v1894, 2
    %v1897 = vor.u32 %v1893, %v1896
    %v1898 = vrot.slane %v254, 1
    %v1899 = vrot.slane %v242, 2
    %v1900 = vor.u32 %v1898, %v1899
    %v1901 = vsel %vm1877, %v1897, %v1900
    %v1902 = vrot.slane %v262, 1
    %v1903 = vrot.slane %v250, 2
    %v1904 = vor.u32 %v1902, %v1903
    %v1905 = vsel %vm1877, %v1888, %v1904
    %v1906 = vrot.slane %v270, 1
    %v1907 = vrot.slane %v258, 2
    %v1908 = vor.u32 %v1906, %v1907
    %v1909 = vsel %vm1877, %v1900, %v1908
    %v1910 = vrot.slane %v278, 1
    %v1911 = vrot.slane %v266, 2
    %v1912 = vor.u32 %v1910, %v1911
    %v1913 = vsel %vm1877, %v1904, %v1912
    %v1914 = vrot.slane %v286, 1
    %v1915 = vrot.slane %v274, 2
    %v1916 = vor.u32 %v1914, %v1915
    %v1917 = vsel %vm1877, %v1908, %v1916
    %v1919 = vshrl.u32 %v1820, 16
    %v1921 = vrot.slane %v1919, 1
    %v1922 = vshll.u32 %v1820, 16
    %v1924 = vrot.slane %v1922, 2
    %v1925 = vor.u32 %v1921, %v1924
    %v1926 = vsel %vm1877, %v1912, %v1925
    %v1928 = vshrl.u32 %v1821, 16
    %v1930 = vrot.slane %v1928, 1
    %v1931 = vshll.u32 %v1821, 16
    %v1933 = vrot.slane %v1931, 2
    %v1934 = vor.u32 %v1930, %v1933
    %v1935 = vsel %vm1877, %v1916, %v1934
    %v1995 = vunpack.c.l.b16 %v1823
    %v1996 = vunpack.c.h.b16 %v1823
    %v1997 = vunpack.c.l.b16 %v1824
    %v1998 = vunpack.c.h.b16 %v1824
    %v1999 = vunpack.c.l.b16 %v1825
    %v2000 = vunpack.c.h.b16 %v1825
    %v2001 = vunpack.c.l.b16 %v1826
    %v2002 = vunpack.c.h.b16 %v1826
    %v2003 = vunpack.c.l.b16 %v1827
    %v2004 = vunpack.c.h.b16 %v1827
    %v2005 = vunpack.c.l.b16 %v1828
    %v2006 = vunpack.c.h.b16 %v1828
    %v2007 = vunpack.c.l.b16 %v1829
    %v2008 = vunpack.c.h.b16 %v1829
    %v2009 = vunpack.c.l.b16 %v1830
    %v2010 = vunpack.c.h.b16 %v1830
    %v2011 = vunpack.c.l.b16 %v1831
    %v2012 = vunpack.c.h.b16 %v1831
    %v2013 = vunpack.c.l.b16 %v1832
    %v2014 = vunpack.c.h.b16 %v1832
    %v2015 = vunpack.c.l.b16 %v1833
    %v2016 = vunpack.c.h.b16 %v1833
    %v2017 = vunpack.c.l.b16 %v1834
    %v2018 = vunpack.c.h.b16 %v1834
    %v2019 = vunpack.c.l.b16 %v1835
    %v2020 = vunpack.c.h.b16 %v1835
    %v2021 = vunpack.c.l.b16 %v1836
    %v2022 = vunpack.c.h.b16 %v1836
    %v2023 = vunpack.c.l.b16 %v1837
    %v2024 = vunpack.c.h.b16 %v1837
    %v2025 = vunpack.c.l.b16 %v1838
    %v2026 = vunpack.c.h.b16 %v1838
    %v2027 = vunpack.c.l.b16 %v1839
    %v2028 = vunpack.c.h.b16 %v1839
    %v2029 = vunpack.c.l.b16 %v1840
    %v2030 = vunpack.c.h.b16 %v1840
    %v2031 = vunpack.c.l.b16 %v1841
    %v2032 = vunpack.c.h.b16 %v1841
    %v2033 = vunpack.c.l.b16 %v1842
    %v2034 = vunpack.c.h.b16 %v1842
    %v2035 = vunpack.c.l.b16 %v1843
    %v2036 = vunpack.c.h.b16 %v1843
    %v2037 = vunpack.c.l.b16 %v1844
    %v2038 = vunpack.c.h.b16 %v1844
    %v2039 = vunpack.c.l.b16 %v1845
    %v2040 = vunpack.c.h.b16 %v1845
    %v2041 = vunpack.c.l.b16 %v1846
    %v2042 = vunpack.c.h.b16 %v1846
    %v2043 = vunpack.c.l.b16 %v1847
    %v2044 = vunpack.c.h.b16 %v1847
    %v2045 = vunpack.c.l.b16 %v1848
    %v2046 = vunpack.c.h.b16 %v1848
    %v2047 = vunpack.c.l.b16 %v1849
    %v2048 = vunpack.c.h.b16 %v1849
    %v2049 = vunpack.c.l.b16 %v1850
    %v2050 = vunpack.c.h.b16 %v1850
    %v2051 = vunpack.c.l.b16 %v1851
    %v2052 = vunpack.c.h.b16 %v1851
    %v2053 = vunpack.c.l.b16 %v1852
    %v2054 = vunpack.c.h.b16 %v1852
    %v2055 = vunpack.c.l.b16 %v1853
    %v2056 = vunpack.c.h.b16 %v1853
    %v2057 = vunpack.c.l.b16 %v1854
    %v2058 = vunpack.c.h.b16 %v1854
    %v2059 = vunpack.c.l.b16 %v1855
    %v2060 = vunpack.c.h.b16 %v1855
    %v2061 = vunpack.c.l.b16 %v1856
    %v2062 = vunpack.c.h.b16 %v1856
    %v2063 = vunpack.c.l.b16 %v1857
    %v2064 = vunpack.c.h.b16 %v1857
    %v2065 = vunpack.c.l.b16 %v1858
    %v2066 = vunpack.c.h.b16 %v1858
    %v2067 = vunpack.c.l.b16 %v1859
    %v2068 = vunpack.c.h.b16 %v1859
    %v2069 = vunpack.c.l.b16 %v1860
    %v2070 = vunpack.c.h.b16 %v1860
    %v2071 = vunpack.c.l.b16 %v1861
    %v2072 = vunpack.c.h.b16 %v1861
    %v2073 = vunpack.c.l.b16 %v1862
    %v2074 = vunpack.c.h.b16 %v1862
    %v2075 = vunpack.c.l.b16 %v1863
    %v2076 = vunpack.c.h.b16 %v1863
    %v2077 = vunpack.c.l.b16 %v1864
    %v2078 = vunpack.c.h.b16 %v1864
    %v2079 = vunpack.c.l.b16 %v1865
    %v2080 = vunpack.c.h.b16 %v1865
    %v2081 = vunpack.c.l.b16 %v1866
    %v2082 = vunpack.c.h.b16 %v1866
    %v2083 = vunpack.c.l.b16 %v1867
    %v2084 = vunpack.c.h.b16 %v1867
    %v2085 = vunpack.c.l.b16 %v1868
    %v2086 = vunpack.c.h.b16 %v1868
    %v2087 = vunpack.c.l.b16 %v1869
    %v2088 = vunpack.c.h.b16 %v1869
    %v2089 = vunpack.c.l.b16 %v1870
    %v2090 = vunpack.c.h.b16 %v1870
    %v2091 = vunpack.c.l.b16 %v1871
    %v2092 = vunpack.c.h.b16 %v1871
    %v2093 = vunpack.c.l.b16 %v1872
    %v2094 = vunpack.c.h.b16 %v1872
    %v2095 = vunpack.c.l.b16 %v1873
    %v2096 = vunpack.c.h.b16 %v1873
    %v2097 = vunpack.c.l.b16 %v1874
    %v2098 = vunpack.c.h.b16 %v1874
    %v2099 = vunpack.c.l.b16 %v1875
    %v2100 = vunpack.c.h.b16 %v1875
    %v2101 = vunpack.c.l.b16 %v1876
    %v2102 = vunpack.c.h.b16 %v1876
    %v2103 = vpack.c.b16 %v1999, %v1995
    %v2104 = vpack.c.b16 %v2000, %v1996
    %v2105 = vpack.c.b16 %v2001, %v1997
    %v2106 = vpack.c.b16 %v2002, %v1998
    %v2107 = vpack.c.b16 %v2007, %v2003
    %v2108 = vpack.c.b16 %v2008, %v2004
    %v2109 = vpack.c.b16 %v2009, %v2005
    %v2110 = vpack.c.b16 %v2010, %v2006
    %v2111 = vpack.c.b16 %v2015, %v2011
    %v2112 = vpack.c.b16 %v2016, %v2012
    %v2113 = vpack.c.b16 %v2017, %v2013
    %v2114 = vpack.c.b16 %v2018, %v2014
    %v2115 = vpack.c.b16 %v2023, %v2019
    %v2116 = vpack.c.b16 %v2024, %v2020
    %v2117 = vpack.c.b16 %v2025, %v2021
    %v2118 = vpack.c.b16 %v2026, %v2022
    %v2119 = vpack.c.b16 %v2031, %v2027
    %v2120 = vpack.c.b16 %v2032, %v2028
    %v2121 = vpack.c.b16 %v2033, %v2029
    %v2122 = vpack.c.b16 %v2034, %v2030
    %v2123 = vpack.c.b16 %v2039, %v2035
    %v2124 = vpack.c.b16 %v2040, %v2036
    %v2125 = vpack.c.b16 %v2041, %v2037
    %v2126 = vpack.c.b16 %v2042, %v2038
    %v2127 = vpack.c.b16 %v2047, %v2043
    %v2128 = vpack.c.b16 %v2048, %v2044
    %v2129 = vpack.c.b16 %v2049, %v2045
    %v2130 = vpack.c.b16 %v2050, %v2046
    %v2131 = vpack.c.b16 %v2055, %v2051
    %v2132 = vpack.c.b16 %v2056, %v2052
    %v2133 = vpack.c.b16 %v2057, %v2053
    %v2134 = vpack.c.b16 %v2058, %v2054
    %v2135 = vpack.c.b16 %v2063, %v2059
    %v2136 = vpack.c.b16 %v2064, %v2060
    %v2137 = vpack.c.b16 %v2065, %v2061
    %v2138 = vpack.c.b16 %v2066, %v2062
    %v2139 = vpack.c.b16 %v2071, %v2067
    %v2140 = vpack.c.b16 %v2072, %v2068
    %v2141 = vpack.c.b16 %v2073, %v2069
    %v2142 = vpack.c.b16 %v2074, %v2070
    %v2143 = vpack.c.b16 %v2079, %v2075
    %v2144 = vpack.c.b16 %v2080, %v2076
    %v2145 = vpack.c.b16 %v2081, %v2077
    %v2146 = vpack.c.b16 %v2082, %v2078
    %v2147 = vpack.c.b16 %v2087, %v2083
    %v2148 = vpack.c.b16 %v2088, %v2084
    %v2149 = vpack.c.b16 %v2089, %v2085
    %v2150 = vpack.c.b16 %v2090, %v2086
    %v2151 = vpack.c.b16 %v2095, %v2091
    %v2152 = vpack.c.b16 %v2096, %v2092
    %v2153 = vpack.c.b16 %v2097, %v2093
    %v2154 = vpack.c.b16 %v2098, %v2094
    %v2155 = vpack.c.b16 %v2099, %v2099
    %v2156 = vpack.c.b16 %v2100, %v2100
    %v2157 = vpack.c.b16 %v2101, %v2101
    %v2158 = vpack.c.b16 %v2102, %v2102
    %v2212 = vsel %vm575, %v1901, 0
    %v2215 = vsel %vm575, %v1909, 0
    %v2218 = vsel %vm575, %v1917, 0
    %v2221 = vsel %vm575, %v1935, 0
    %v2224 = vsel %vm575, %v1934, 0
    %v2227 = vsel %vm591, %v2155, 0
    %v2230 = vsel %vm591, %v2156, 0
    %v2233 = vsel %vm591, %v2157, 0
    %v2236 = vsel %vm591, %v2158, 0
    %2238 = vmatprep.subr.bf16.mxu0 %v2104
    %2239 = vmatpush1.bf16.msra.mxu0 %v2103
    %2240 = vmatprep.subr.bf16.mxu0 %v2108
    %2241 = vmatpush1.bf16.msra.mxu0 %v2107
    %2242 = vmatprep.subr.bf16.mxu0 %v2112
    %2243 = vmatpush1.bf16.msra.mxu0 %v2111
    %2244 = vmatprep.subr.bf16.mxu0 %v2116
    %2245 = vmatpush1.bf16.msra.mxu0 %v2115
    %2246 = vmatprep.subr.bf16.mxu0 %v2120
    %2247 = vmatpush1.bf16.msra.mxu0 %v2119
    %2248 = vmatprep.subr.bf16.mxu0 %v2124
    %2249 = vmatpush1.bf16.msra.mxu0 %v2123
    %2250 = vmatprep.subr.bf16.mxu0 %v2128
    %2251 = vmatpush1.bf16.msra.mxu0 %v2127
    %2252 = vmatprep.subr.bf16.mxu0 %v2132
    %2253 = vmatpush1.bf16.msra.mxu0 %v2131
    %2254 = vmatprep.subr.bf16.mxu0 %v2136
    %2255 = vmatpush1.bf16.msra.mxu0 %v2135
    %2256 = vmatprep.subr.bf16.mxu0 %v2140
    %2257 = vmatpush1.bf16.msra.mxu0 %v2139
    %2258 = vmatprep.subr.bf16.mxu0 %v2144
    %2259 = vmatpush1.bf16.msra.mxu0 %v2143
    %2260 = vmatprep.subr.bf16.mxu0 %v2148
    %2261 = vmatpush1.bf16.msra.mxu0 %v2147
    %2262 = vmatprep.subr.bf16.mxu0 %v2152
    %2263 = vmatpush1.bf16.msra.mxu0 %v2151
    %2264 = vmatprep.subr.bf16.mxu0 %v2230
    %2265 = vmatpush1.bf16.msra.mxu0 %v2227
    %2266 = vmatprep.subr.bf16.mxu0 0
    %2267 = vmatpush1.bf16.msra.mxu0 0
    %2268 = vmatprep.subr.bf16.mxu0 0
    %2269 = vmatpush1.bf16.msra.mxu0 0
    %2270 = vmatprep.mubr.bf16.mxu0 %v2212
    %2271 = vmatmul.mubr.bf16.gmra.mrb[0].mxu0 %v1889
    %v2272 = vpop.f32.mrb[0].mxu0
    %v2273 = vadd.f32 0.0, %v2272
    %v2274 = vpop.f32.mrb[0].mxu0
    %v2275 = vadd.f32 0.0, %v2274
    %v2276 = vpop.f32.mrb[0].mxu0
    %v2277 = vadd.f32 0.0, %v2276
    %v2278 = vpop.f32.mrb[0].mxu0
    %v2279 = vadd.f32 0.0, %v2278
    %2280 = vmatprep.mubr.bf16.mxu0 %v2215
    %2281 = vmatmul.mubr.bf16.gmra.mrb[0].mxu0 %v1905
    %v2282 = vpop.f32.mrb[0].mxu0
    %v2283 = vadd.f32 0.0, %v2282
    %v2284 = vpop.f32.mrb[0].mxu0
    %v2285 = vadd.f32 0.0, %v2284
    %v2286 = vpop.f32.mrb[0].mxu0
    %v2287 = vadd.f32 0.0, %v2286
    %v2288 = vpop.f32.mrb[0].mxu0
    %v2289 = vadd.f32 0.0, %v2288
    %2290 = vmatprep.mubr.bf16.mxu0 %v2218
    %2291 = vmatmul.mubr.bf16.gmra.mrb[0].mxu0 %v1913
    %v2292 = vpop.f32.mrb[0].mxu0
    %v2293 = vadd.f32 0.0, %v2292
    %v2294 = vpop.f32.mrb[0].mxu0
    %v2295 = vadd.f32 0.0, %v2294
    %v2296 = vpop.f32.mrb[0].mxu0
    %v2297 = vadd.f32 0.0, %v2296
    %v2298 = vpop.f32.mrb[0].mxu0
    %v2299 = vadd.f32 0.0, %v2298
    %2300 = vmatprep.mubr.bf16.mxu0 %v2221
    %2301 = vmatmul.mubr.bf16.gmra.mrb[0].mxu0 %v1926
    %v2302 = vpop.f32.mrb[0].mxu0
    %v2303 = vadd.f32 0.0, %v2302
    %v2304 = vpop.f32.mrb[0].mxu0
    %v2305 = vadd.f32 0.0, %v2304
    %v2306 = vpop.f32.mrb[0].mxu0
    %v2307 = vadd.f32 0.0, %v2306
    %v2308 = vpop.f32.mrb[0].mxu0
    %v2309 = vadd.f32 0.0, %v2308
    %2310 = vmatprep.mubr.bf16.mxu0 %v2224
    %2311 = vmatmul.mubr.bf16.gmra.mrb[0].mxu0 %v1925
    %v2312 = vpop.f32.mrb[0].mxu0
    %v2313 = vadd.f32 0.0, %v2312
    %v2314 = vpop.f32.mrb[0].mxu0
    %v2315 = vadd.f32 0.0, %v2314
    %v2316 = vpop.f32.mrb[0].mxu0
    %v2317 = vpop.f32.mrb[0].mxu0
    %2318 = vdwg.mxu0
    %2319 = vmatprep.subr.bf16.mxu0 %v2106
    %2320 = vmatpush1.bf16.msra.mxu0 %v2105
    %2321 = vmatprep.subr.bf16.mxu0 %v2110
    %2322 = vmatpush1.bf16.msra.mxu0 %v2109
    %2323 = vmatprep.subr.bf16.mxu0 %v2114
    %2324 = vmatpush1.bf16.msra.mxu0 %v2113
    %2325 = vmatprep.subr.bf16.mxu0 %v2118
    %2326 = vmatpush1.bf16.msra.mxu0 %v2117
    %2327 = vmatprep.subr.bf16.mxu0 %v2122
    %2328 = vmatpush1.bf16.msra.mxu0 %v2121
    %2329 = vmatprep.subr.bf16.mxu0 %v2126
    %2330 = vmatpush1.bf16.msra.mxu0 %v2125
    %2331 = vmatprep.subr.bf16.mxu0 %v2130
    %2332 = vmatpush1.bf16.msra.mxu0 %v2129
    %2333 = vmatprep.subr.bf16.mxu0 %v2134
    %2334 = vmatpush1.bf16.msra.mxu0 %v2133
    %2335 = vmatprep.subr.bf16.mxu0 %v2138
    %2336 = vmatpush1.bf16.msra.mxu0 %v2137
    %2337 = vmatprep.subr.bf16.mxu0 %v2142
    %2338 = vmatpush1.bf16.msra.mxu0 %v2141
    %2339 = vmatprep.subr.bf16.mxu0 %v2146
    %2340 = vmatpush1.bf16.msra.mxu0 %v2145
    %2341 = vmatprep.subr.bf16.mxu0 %v2150
    %2342 = vmatpush1.bf16.msra.mxu0 %v2149
    %2343 = vmatprep.subr.bf16.mxu0 %v2154
    %2344 = vmatpush1.bf16.msra.mxu0 %v2153
    %2345 = vmatprep.subr.bf16.mxu0 %v2236
    %2346 = vmatpush1.bf16.msra.mxu0 %v2233
    %2347 = vmatprep.subr.bf16.mxu0 0
    %2348 = vmatpush1.bf16.msra.mxu0 0
    %2349 = vmatprep.subr.bf16.mxu0 0
    %2350 = vmatpush1.bf16.msra.mxu0 0
    %2351 = vmatprep.mubr.bf16.mxu0 %v2212
    %2352 = vmatmul.mubr.bf16.gmra.mrb[0].mxu0 %v1889
    %v2353 = vpop.f32.mrb[0].mxu0
    %v2354 = vadd.f32 0.0, %v2353
    %v2355 = vpop.f32.mrb[0].mxu0
    %v2356 = vadd.f32 0.0, %v2355
    %v2357 = vpop.f32.mrb[0].mxu0
    %v2358 = vadd.f32 0.0, %v2357
    %v2359 = vpop.f32.mrb[0].mxu0
    %v2360 = vadd.f32 0.0, %v2359
    %2361 = vmatprep.mubr.bf16.mxu0 %v2215
    %2362 = vmatmul.mubr.bf16.gmra.mrb[0].mxu0 %v1905
    %v2363 = vpop.f32.mrb[0].mxu0
    %v2364 = vadd.f32 0.0, %v2363
    %v2365 = vpop.f32.mrb[0].mxu0
    %v2366 = vadd.f32 0.0, %v2365
    %v2367 = vpop.f32.mrb[0].mxu0
    %v2368 = vadd.f32 0.0, %v2367
    %v2369 = vpop.f32.mrb[0].mxu0
    %v2370 = vadd.f32 0.0, %v2369
    %2371 = vmatprep.mubr.bf16.mxu0 %v2218
    %2372 = vmatmul.mubr.bf16.gmra.mrb[0].mxu0 %v1913
    %v2373 = vpop.f32.mrb[0].mxu0
    %v2374 = vadd.f32 0.0, %v2373
    %v2375 = vpop.f32.mrb[0].mxu0
    %v2376 = vadd.f32 0.0, %v2375
    %v2377 = vpop.f32.mrb[0].mxu0
    %v2378 = vadd.f32 0.0, %v2377
    %v2379 = vpop.f32.mrb[0].mxu0
    %v2380 = vadd.f32 0.0, %v2379
    %2381 = vmatprep.mubr.bf16.mxu0 %v2221
    %2382 = vmatmul.mubr.bf16.gmra.mrb[0].mxu0 %v1926
    %v2383 = vpop.f32.mrb[0].mxu0
    %v2384 = vadd.f32 0.0, %v2383
    %v2385 = vpop.f32.mrb[0].mxu0
    %v2386 = vadd.f32 0.0, %v2385
    %v2387 = vpop.f32.mrb[0].mxu0
    %v2388 = vadd.f32 0.0, %v2387
    %v2389 = vpop.f32.mrb[0].mxu0
    %v2390 = vadd.f32 0.0, %v2389
    %2391 = vmatprep.mubr.bf16.mxu0 %v2224
    %2392 = vmatmul.mubr.bf16.gmra.mrb[0].mxu0 %v1925
    %v2393 = vpop.f32.mrb[0].mxu0
    %v2394 = vadd.f32 0.0, %v2393
    %v2395 = vpop.f32.mrb[0].mxu0
    %v2396 = vadd.f32 0.0, %v2395
    %v2397 = vpop.f32.mrb[0].mxu0
    %v2398 = vpop.f32.mrb[0].mxu0
    %2399 = vdwg.mxu0
    %v2400 = vadd.f32 %v1778, %v2273
    %v2401 = vadd.f32 %v1779, %v2275
    %v2402 = vadd.f32 %v1780, %v2354
    %v2403 = vadd.f32 %v1781, %v2356
    %v2404 = vadd.f32 %v1782, %v2277
    %v2405 = vadd.f32 %v1783, %v2279
    %v2406 = vadd.f32 %v1784, %v2358
    %v2407 = vadd.f32 %v1785, %v2360
    %v2408 = vadd.f32 %v1786, %v2283
    %v2409 = vadd.f32 %v1787, %v2285
    %v2410 = vadd.f32 %v1788, %v2364
    %v2411 = vadd.f32 %v1789, %v2366
    %v2412 = vadd.f32 %v1790, %v2287
    %v2413 = vadd.f32 %v1791, %v2289
    %v2414 = vadd.f32 %v1792, %v2368
    %v2415 = vadd.f32 %v1793, %v2370
    %v2416 = vadd.f32 %v1794, %v2293
    %v2417 = vadd.f32 %v1795, %v2295
    %v2418 = vadd.f32 %v1796, %v2374
    %v2419 = vadd.f32 %v1797, %v2376
    %v2420 = vadd.f32 %v1798, %v2297
    %v2421 = vadd.f32 %v1799, %v2299
    %v2422 = vadd.f32 %v1800, %v2378
    %v2423 = vadd.f32 %v1801, %v2380
    %v2424 = vadd.f32 %v1802, %v2303
    %v2425 = vadd.f32 %v1803, %v2305
    %v2426 = vadd.f32 %v1804, %v2384
    %v2427 = vadd.f32 %v1805, %v2386
    %v2428 = vadd.f32 %v1806, %v2307
    %v2429 = vadd.f32 %v1807, %v2309
    %v2430 = vadd.f32 %v1808, %v2388
    %v2431 = vadd.f32 %v1809, %v2390
    %v2432 = vadd.f32 %v1810, %v2313
    %v2433 = vadd.f32 %v1811, %v2315
    %v2434 = vadd.f32 %v1812, %v2394
    %v2435 = vadd.f32 %v1813, %v2396
    %v2436 = vld [vmem:[%s0] sm:$0xf0]
    %v2437 = vld [vmem:[%s0 + $0x8] sm:$0xf0]
    %v2438 = vld [vmem:[%s0 + $0x80] sm:$0xff]
    %v2439 = vld [vmem:[%s0 + $0x88] sm:$0xff]
    %v2440 = vpack.c.bf16 %v78, %v2436
    %v2441 = vpack.c.bf16 %v79, %v2437
    %v2442 = vpack.c.bf16 %v2438, %v2438
    %v2443 = vpack.c.bf16 %v2439, %v2439
    %s2444 = scalar_lea.vmem %s1, 1728
    %v2445 = vld [vmem:[%s2444] sm:$0xff]
    %v2446 = vld [vmem:[%s2444 + $0x8] sm:$0xff]
    %v2447 = vld [vmem:[%s2444 + $0x10] sm:$0xff]
    %v2448 = vld [vmem:[%s2444 + $0x18] sm:$0xff]
    %v2449 = vld [vmem:[%s2444 + $0x20] sm:$0xff]
    %v2450 = vld [vmem:[%s2444 + $0x28] sm:$0xff]
    %v2451 = vld [vmem:[%s2444 + $0x30] sm:$0xff]
    %v2452 = vld [vmem:[%s2444 + $0x38] sm:$0xff]
    %v2453 = vld [vmem:[%s2444 + $0x40] sm:$0xff]
    %v2454 = vld [vmem:[%s2444 + $0x48] sm:$0xff]
    %v2455 = vld [vmem:[%s2444 + $0x50] sm:$0xff]
    %v2456 = vld [vmem:[%s2444 + $0x58] sm:$0xff]
    %v2457 = vld [vmem:[%s2444 + $0x60] sm:$0xff]
    %v2458 = vld [vmem:[%s2444 + $0x68] sm:$0xff]
    %v2459 = vld [vmem:[%s2444 + $0x70] sm:$0xff]
    %v2460 = vld [vmem:[%s2444 + $0x78] sm:$0xff]
    %v2461 = vld [vmem:[%s2444 + $0x80] sm:$0xff]
    %v2462 = vld [vmem:[%s2444 + $0x88] sm:$0xff]
    %v2463 = vld [vmem:[%s2444 + $0x90] sm:$0xff]
    %v2464 = vld [vmem:[%s2444 + $0x98] sm:$0xff]
    %v2465 = vld [vmem:[%s2444 + $0xa0] sm:$0xff]
    %v2466 = vld [vmem:[%s2444 + $0xa8] sm:$0xff]
    %v2467 = vld [vmem:[%s2444 + $0xb0] sm:$0xff]
    %v2468 = vld [vmem:[%s2444 + $0xb8] sm:$0xff]
    %v2469 = vld [vmem:[%s2444 + $0xc0] sm:$0xff]
    %v2470 = vld [vmem:[%s2444 + $0xc8] sm:$0xff]
    %v2471 = vld [vmem:[%s2444 + $0xd0] sm:$0xff]
    %v2472 = vld [vmem:[%s2444 + $0xd8] sm:$0xff]
    %v2473 = vld [vmem:[%s2444 + $0xe0] sm:$0xff]
    %v2474 = vld [vmem:[%s2444 + $0xe8] sm:$0xff]
    %v2475 = vld [vmem:[%s2444 + $0xf0] sm:$0xff]
    %v2476 = vld [vmem:[%s2444 + $0xf8] sm:$0xff]
    %v2477 = vld [vmem:[%s2444 + $0x100] sm:$0xff]
    %v2478 = vld [vmem:[%s2444 + $0x108] sm:$0xff]
    %v2479 = vld [vmem:[%s2444 + $0x110] sm:$0xff]
    %v2480 = vld [vmem:[%s2444 + $0x118] sm:$0xff]
    %v2481 = vld [vmem:[%s2444 + $0x120] sm:$0xff]
    %v2482 = vld [vmem:[%s2444 + $0x128] sm:$0xff]
    %v2483 = vld [vmem:[%s2444 + $0x130] sm:$0xff]
    %v2484 = vld [vmem:[%s2444 + $0x138] sm:$0xff]
    %v2485 = vld [vmem:[%s2444 + $0x140] sm:$0xff]
    %v2486 = vld [vmem:[%s2444 + $0x148] sm:$0xff]
    %v2487 = vld [vmem:[%s2444 + $0x150] sm:$0xff]
    %v2488 = vld [vmem:[%s2444 + $0x158] sm:$0xff]
    %v2489 = vld [vmem:[%s2444 + $0x160] sm:$0xff]
    %v2490 = vld [vmem:[%s2444 + $0x168] sm:$0xff]
    %v2491 = vld [vmem:[%s2444 + $0x170] sm:$0xff]
    %v2492 = vld [vmem:[%s2444 + $0x178] sm:$0xff]
    %v2493 = vld [vmem:[%s2444 + $0x180] sm:$0xff]
    %v2494 = vld [vmem:[%s2444 + $0x188] sm:$0xff]
    %v2495 = vld [vmem:[%s2444 + $0x190] sm:$0xff]
    %v2496 = vld [vmem:[%s2444 + $0x198] sm:$0xff]
    %v2497 = vld [vmem:[%s2444 + $0x1a0] sm:$0xff]
    %v2498 = vld [vmem:[%s2444 + $0x1a8] sm:$0xff]
    %vm2503 = vcmask 1045504
    %v2504 = vrot.slane %v2440, 2
    %v2505 = vrot.slane %v96, 2
    %v2506 = vsel %vm2503, %v2504, %v2505
    %v2507 = vrot.slane %v2441, 2
    %v2508 = vrot.slane %v97, 2
    %v2509 = vsel %vm2503, %v2507, %v2508
    %v2510 = vrot.slane %v98, 2
    %v2511 = vsel %vm2503, %v2505, %v2510
    %v2512 = vrot.slane %v99, 2
    %v2513 = vsel %vm2503, %v2508, %v2512
    %v2514 = vrot.slane %v100, 2
    %v2515 = vsel %vm2503, %v2510, %v2514
    %v2516 = vrot.slane %v101, 2
    %v2517 = vsel %vm2503, %v2512, %v2516
    %v2518 = vrot.slane %v2442, 2
    %v2519 = vsel %vm2503, %v2514, %v2518
    %v2520 = vrot.slane %v2443, 2
    %v2521 = vsel %vm2503, %v2516, %v2520
    %v2581 = vunpack.c.l.b16 %v2445
    %v2582 = vunpack.c.h.b16 %v2445
    %v2583 = vunpack.c.l.b16 %v2446
    %v2584 = vunpack.c.h.b16 %v2446
    %v2585 = vunpack.c.l.b16 %v2447
    %v2586 = vunpack.c.h.b16 %v2447
    %v2587 = vunpack.c.l.b16 %v2448
    %v2588 = vunpack.c.h.b16 %v2448
    %v2589 = vunpack.c.l.b16 %v2449
    %v2590 = vunpack.c.h.b16 %v2449
    %v2591 = vunpack.c.l.b16 %v2450
    %v2592 = vunpack.c.h.b16 %v2450
    %v2593 = vunpack.c.l.b16 %v2451
    %v2594 = vunpack.c.h.b16 %v2451
    %v2595 = vunpack.c.l.b16 %v2452
    %v2596 = vunpack.c.h.b16 %v2452
    %v2597 = vunpack.c.l.b16 %v2453
    %v2598 = vunpack.c.h.b16 %v2453
    %v2599 = vunpack.c.l.b16 %v2454
    %v2600 = vunpack.c.h.b16 %v2454
    %v2601 = vunpack.c.l.b16 %v2455
    %v2602 = vunpack.c.h.b16 %v2455
    %v2603 = vunpack.c.l.b16 %v2456
    %v2604 = vunpack.c.h.b16 %v2456
    %v2605 = vunpack.c.l.b16 %v2457
    %v2606 = vunpack.c.h.b16 %v2457
    %v2607 = vunpack.c.l.b16 %v2458
    %v2608 = vunpack.c.h.b16 %v2458
    %v2609 = vunpack.c.l.b16 %v2459
    %v2610 = vunpack.c.h.b16 %v2459
    %v2611 = vunpack.c.l.b16 %v2460
    %v2612 = vunpack.c.h.b16 %v2460
    %v2613 = vunpack.c.l.b16 %v2461
    %v2614 = vunpack.c.h.b16 %v2461
    %v2615 = vunpack.c.l.b16 %v2462
    %v2616 = vunpack.c.h.b16 %v2462
    %v2617 = vunpack.c.l.b16 %v2463
    %v2618 = vunpack.c.h.b16 %v2463
    %v2619 = vunpack.c.l.b16 %v2464
    %v2620 = vunpack.c.h.b16 %v2464
    %v2621 = vunpack.c.l.b16 %v2465
    %v2622 = vunpack.c.h.b16 %v2465
    %v2623 = vunpack.c.l.b16 %v2466
    %v2624 = vunpack.c.h.b16 %v2466
    %v2625 = vunpack.c.l.b16 %v2467
    %v2626 = vunpack.c.h.b16 %v2467
    %v2627 = vunpack.c.l.b16 %v2468
    %v2628 = vunpack.c.h.b16 %v2468
    %v2629 = vunpack.c.l.b16 %v2469
    %v2630 = vunpack.c.h.b16 %v2469
    %v2631 = vunpack.c.l.b16 %v2470
    %v2632 = vunpack.c.h.b16 %v2470
    %v2633 = vunpack.c.l.b16 %v2471
    %v2634 = vunpack.c.h.b16 %v2471
    %v2635 = vunpack.c.l.b16 %v2472
    %v2636 = vunpack.c.h.b16 %v2472
    %v2637 = vunpack.c.l.b16 %v2473
    %v2638 = vunpack.c.h.b16 %v2473
    %v2639 = vunpack.c.l.b16 %v2474
    %v2640 = vunpack.c.h.b16 %v2474
    %v2641 = vunpack.c.l.b16 %v2475
    %v2642 = vunpack.c.h.b16 %v2475
    %v2643 = vunpack.c.l.b16 %v2476
    %v2644 = vunpack.c.h.b16 %v2476
    %v2645 = vunpack.c.l.b16 %v2477
    %v2646 = vunpack.c.h.b16 %v2477
    %v2647 = vunpack.c.l.b16 %v2478
    %v2648 = vunpack.c.h.b16 %v2478
    %v2649 = vunpack.c.l.b16 %v2479
    %v2650 = vunpack.c.h.b16 %v2479
    %v2651 = vunpack.c.l.b16 %v2480
    %v2652 = vunpack.c.h.b16 %v2480
    %v2653 = vunpack.c.l.b16 %v2481
    %v2654 = vunpack.c.h.b16 %v2481
    %v2655 = vunpack.c.l.b16 %v2482
    %v2656 = vunpack.c.h.b16 %v2482
    %v2657 = vunpack.c.l.b16 %v2483
    %v2658 = vunpack.c.h.b16 %v2483
    %v2659 = vunpack.c.l.b16 %v2484
    %v2660 = vunpack.c.h.b16 %v2484
    %v2661 = vunpack.c.l.b16 %v2485
    %v2662 = vunpack.c.h.b16 %v2485
    %v2663 = vunpack.c.l.b16 %v2486
    %v2664 = vunpack.c.h.b16 %v2486
    %v2665 = vunpack.c.l.b16 %v2487
    %v2666 = vunpack.c.h.b16 %v2487
    %v2667 = vunpack.c.l.b16 %v2488
    %v2668 = vunpack.c.h.b16 %v2488
    %v2669 = vunpack.c.l.b16 %v2489
    %v2670 = vunpack.c.h.b16 %v2489
    %v2671 = vunpack.c.l.b16 %v2490
    %v2672 = vunpack.c.h.b16 %v2490
    %v2673 = vunpack.c.l.b16 %v2491
    %v2674 = vunpack.c.h.b16 %v2491
    %v2675 = vunpack.c.l.b16 %v2492
    %v2676 = vunpack.c.h.b16 %v2492
    %v2677 = vunpack.c.l.b16 %v2493
    %v2678 = vunpack.c.h.b16 %v2493
    %v2679 = vunpack.c.l.b16 %v2494
    %v2680 = vunpack.c.h.b16 %v2494
    %v2681 = vunpack.c.l.b16 %v2495
    %v2682 = vunpack.c.h.b16 %v2495
    %v2683 = vunpack.c.l.b16 %v2496
    %v2684 = vunpack.c.h.b16 %v2496
    %v2685 = vunpack.c.l.b16 %v2497
    %v2686 = vunpack.c.h.b16 %v2497
    %v2687 = vunpack.c.l.b16 %v2498
    %v2688 = vunpack.c.h.b16 %v2498
    %v2689 = vpack.c.b16 %v2585, %v2581
    %v2690 = vpack.c.b16 %v2586, %v2582
    %v2691 = vpack.c.b16 %v2587, %v2583
    %v2692 = vpack.c.b16 %v2588, %v2584
    %v2693 = vpack.c.b16 %v2593, %v2589
    %v2694 = vpack.c.b16 %v2594, %v2590
    %v2695 = vpack.c.b16 %v2595, %v2591
    %v2696 = vpack.c.b16 %v2596, %v2592
    %v2697 = vpack.c.b16 %v2601, %v2597
    %v2698 = vpack.c.b16 %v2602, %v2598
    %v2699 = vpack.c.b16 %v2603, %v2599
    %v2700 = vpack.c.b16 %v2604, %v2600
    %v2701 = vpack.c.b16 %v2609, %v2605
    %v2702 = vpack.c.b16 %v2610, %v2606
    %v2703 = vpack.c.b16 %v2611, %v2607
    %v2704 = vpack.c.b16 %v2612, %v2608
    %v2705 = vpack.c.b16 %v2617, %v2613
    %v2706 = vpack.c.b16 %v2618, %v2614
    %v2707 = vpack.c.b16 %v2619, %v2615
    %v2708 = vpack.c.b16 %v2620, %v2616
    %v2709 = vpack.c.b16 %v2625, %v2621
    %v2710 = vpack.c.b16 %v2626, %v2622
    %v2711 = vpack.c.b16 %v2627, %v2623
    %v2712 = vpack.c.b16 %v2628, %v2624
    %v2713 = vpack.c.b16 %v2633, %v2629
    %v2714 = vpack.c.b16 %v2634, %v2630
    %v2715 = vpack.c.b16 %v2635, %v2631
    %v2716 = vpack.c.b16 %v2636, %v2632
    %v2717 = vpack.c.b16 %v2641, %v2637
    %v2718 = vpack.c.b16 %v2642, %v2638
    %v2719 = vpack.c.b16 %v2643, %v2639
    %v2720 = vpack.c.b16 %v2644, %v2640
    %v2721 = vpack.c.b16 %v2649, %v2645
    %v2722 = vpack.c.b16 %v2650, %v2646
    %v2723 = vpack.c.b16 %v2651, %v2647
    %v2724 = vpack.c.b16 %v2652, %v2648
    %v2725 = vpack.c.b16 %v2657, %v2653
    %v2726 = vpack.c.b16 %v2658, %v2654
    %v2727 = vpack.c.b16 %v2659, %v2655
    %v2728 = vpack.c.b16 %v2660, %v2656
    %v2729 = vpack.c.b16 %v2665, %v2661
    %v2730 = vpack.c.b16 %v2666, %v2662
    %v2731 = vpack.c.b16 %v2667, %v2663
    %v2732 = vpack.c.b16 %v2668, %v2664
    %v2733 = vpack.c.b16 %v2673, %v2669
    %v2734 = vpack.c.b16 %v2674, %v2670
    %v2735 = vpack.c.b16 %v2675, %v2671
    %v2736 = vpack.c.b16 %v2676, %v2672
    %v2737 = vpack.c.b16 %v2681, %v2677
    %v2738 = vpack.c.b16 %v2682, %v2678
    %v2739 = vpack.c.b16 %v2683, %v2679
    %v2740 = vpack.c.b16 %v2684, %v2680
    %v2741 = vpack.c.b16 %v2685, %v2685
    %v2742 = vpack.c.b16 %v2686, %v2686
    %v2743 = vpack.c.b16 %v2687, %v2687
    %v2744 = vpack.c.b16 %v2688, %v2688
    %v2798 = vsel %vm575, %v2509, 0
    %v2801 = vsel %vm575, %v2513, 0
    %v2804 = vsel %vm575, %v2517, 0
    %v2807 = vsel %vm575, %v2521, 0
    %v2810 = vsel %vm575, %v2520, 0
    %v2813 = vsel %vm591, %v2741, 0
    %v2816 = vsel %vm591, %v2742, 0
    %v2819 = vsel %vm591, %v2743, 0
    %v2822 = vsel %vm591, %v2744, 0
    %2824 = vmatprep.subr.bf16.mxu0 %v2690
    %2825 = vmatpush1.bf16.msra.mxu0 %v2689
    %2826 = vmatprep.subr.bf16.mxu0 %v2694
    %2827 = vmatpush1.bf16.msra.mxu0 %v2693
    %2828 = vmatprep.subr.bf16.mxu0 %v2698
    %2829 = vmatpush1.bf16.msra.mxu0 %v2697
    %2830 = vmatprep.subr.bf16.mxu0 %v2702
    %2831 = vmatpush1.bf16.msra.mxu0 %v2701
    %2832 = vmatprep.subr.bf16.mxu0 %v2706
    %2833 = vmatpush1.bf16.msra.mxu0 %v2705
    %2834 = vmatprep.subr.bf16.mxu0 %v2710
    %2835 = vmatpush1.bf16.msra.mxu0 %v2709
    %2836 = vmatprep.subr.bf16.mxu0 %v2714
    %2837 = vmatpush1.bf16.msra.mxu0 %v2713
    %2838 = vmatprep.subr.bf16.mxu0 %v2718
    %2839 = vmatpush1.bf16.msra.mxu0 %v2717
    %2840 = vmatprep.subr.bf16.mxu0 %v2722
    %2841 = vmatpush1.bf16.msra.mxu0 %v2721
    %2842 = vmatprep.subr.bf16.mxu0 %v2726
    %2843 = vmatpush1.bf16.msra.mxu0 %v2725
    %2844 = vmatprep.subr.bf16.mxu0 %v2730
    %2845 = vmatpush1.bf16.msra.mxu0 %v2729
    %2846 = vmatprep.subr.bf16.mxu0 %v2734
    %2847 = vmatpush1.bf16.msra.mxu0 %v2733
    %2848 = vmatprep.subr.bf16.mxu0 %v2738
    %2849 = vmatpush1.bf16.msra.mxu0 %v2737
    %2850 = vmatprep.subr.bf16.mxu0 %v2816
    %2851 = vmatpush1.bf16.msra.mxu0 %v2813
    %2852 = vmatprep.subr.bf16.mxu0 0
    %2853 = vmatpush1.bf16.msra.mxu0 0
    %2854 = vmatprep.subr.bf16.mxu0 0
    %2855 = vmatpush1.bf16.msra.mxu0 0
    %2856 = vmatprep.mubr.bf16.mxu0 %v2798
    %2857 = vmatmul.mubr.bf16.gmra.mrb[0].mxu0 %v2506
    %v2858 = vpop.f32.mrb[0].mxu0
    %v2859 = vadd.f32 0.0, %v2858
    %v2860 = vpop.f32.mrb[0].mxu0
    %v2861 = vadd.f32 0.0, %v2860
    %v2862 = vpop.f32.mrb[0].mxu0
    %v2863 = vadd.f32 0.0, %v2862
    %v2864 = vpop.f32.mrb[0].mxu0
    %v2865 = vadd.f32 0.0, %v2864
    %2866 = vmatprep.mubr.bf16.mxu0 %v2801
    %2867 = vmatmul.mubr.bf16.gmra.mrb[0].mxu0 %v2511
    %v2868 = vpop.f32.mrb[0].mxu0
    %v2869 = vadd.f32 0.0, %v2868
    %v2870 = vpop.f32.mrb[0].mxu0
    %v2871 = vadd.f32 0.0, %v2870
    %v2872 = vpop.f32.mrb[0].mxu0
    %v2873 = vadd.f32 0.0, %v2872
    %v2874 = vpop.f32.mrb[0].mxu0
    %v2875 = vadd.f32 0.0, %v2874
    %2876 = vmatprep.mubr.bf16.mxu0 %v2804
    %2877 = vmatmul.mubr.bf16.gmra.mrb[0].mxu0 %v2515
    %v2878 = vpop.f32.mrb[0].mxu0
    %v2879 = vadd.f32 0.0, %v2878
    %v2880 = vpop.f32.mrb[0].mxu0
    %v2881 = vadd.f32 0.0, %v2880
    %v2882 = vpop.f32.mrb[0].mxu0
    %v2883 = vadd.f32 0.0, %v2882
    %v2884 = vpop.f32.mrb[0].mxu0
    %v2885 = vadd.f32 0.0, %v2884
    %2886 = vmatprep.mubr.bf16.mxu0 %v2807
    %2887 = vmatmul.mubr.bf16.gmra.mrb[0].mxu0 %v2519
    %v2888 = vpop.f32.mrb[0].mxu0
    %v2889 = vadd.f32 0.0, %v2888
    %v2890 = vpop.f32.mrb[0].mxu0
    %v2891 = vadd.f32 0.0, %v2890
    %v2892 = vpop.f32.mrb[0].mxu0
    %v2893 = vadd.f32 0.0, %v2892
    %v2894 = vpop.f32.mrb[0].mxu0
    %v2895 = vadd.f32 0.0, %v2894
    %2896 = vmatprep.mubr.bf16.mxu0 %v2810
    %2897 = vmatmul.mubr.bf16.gmra.mrb[0].mxu0 %v2518
    %v2898 = vpop.f32.mrb[0].mxu0
    %v2899 = vadd.f32 0.0, %v2898
    %v2900 = vpop.f32.mrb[0].mxu0
    %v2901 = vadd.f32 0.0, %v2900
    %v2902 = vpop.f32.mrb[0].mxu0
    %v2903 = vpop.f32.mrb[0].mxu0
    %2904 = vdwg.mxu0
    %2905 = vmatprep.subr.bf16.mxu0 %v2692
    %2906 = vmatpush1.bf16.msra.mxu0 %v2691
    %2907 = vmatprep.subr.bf16.mxu0 %v2696
    %2908 = vmatpush1.bf16.msra.mxu0 %v2695
    %2909 = vmatprep.subr.bf16.mxu0 %v2700
    %2910 = vmatpush1.bf16.msra.mxu0 %v2699
    %2911 = vmatprep.subr.bf16.mxu0 %v2704
    %2912 = vmatpush1.bf16.msra.mxu0 %v2703
    %2913 = vmatprep.subr.bf16.mxu0 %v2708
    %2914 = vmatpush1.bf16.msra.mxu0 %v2707
    %2915 = vmatprep.subr.bf16.mxu0 %v2712
    %2916 = vmatpush1.bf16.msra.mxu0 %v2711
    %2917 = vmatprep.subr.bf16.mxu0 %v2716
    %2918 = vmatpush1.bf16.msra.mxu0 %v2715
    %2919 = vmatprep.subr.bf16.mxu0 %v2720
    %2920 = vmatpush1.bf16.msra.mxu0 %v2719
    %2921 = vmatprep.subr.bf16.mxu0 %v2724
    %2922 = vmatpush1.bf16.msra.mxu0 %v2723
    %2923 = vmatprep.subr.bf16.mxu0 %v2728
    %2924 = vmatpush1.bf16.msra.mxu0 %v2727
    %2925 = vmatprep.subr.bf16.mxu0 %v2732
    %2926 = vmatpush1.bf16.msra.mxu0 %v2731
    %2927 = vmatprep.subr.bf16.mxu0 %v2736
    %2928 = vmatpush1.bf16.msra.mxu0 %v2735
    %2929 = vmatprep.subr.bf16.mxu0 %v2740
    %2930 = vmatpush1.bf16.msra.mxu0 %v2739
    %2931 = vmatprep.subr.bf16.mxu0 %v2822
    %2932 = vmatpush1.bf16.msra.mxu0 %v2819
    %2933 = vmatprep.subr.bf16.mxu0 0
    %2934 = vmatpush1.bf16.msra.mxu0 0
    %2935 = vmatprep.subr.bf16.mxu0 0
    %2936 = vmatpush1.bf16.msra.mxu0 0
    %2937 = vmatprep.mubr.bf16.mxu0 %v2798
    %2938 = vmatmul.mubr.bf16.gmra.mrb[0].mxu0 %v2506
    %v2939 = vpop.f32.mrb[0].mxu0
    %v2940 = vadd.f32 0.0, %v2939
    %v2941 = vpop.f32.mrb[0].mxu0
    %v2942 = vadd.f32 0.0, %v2941
    %v2943 = vpop.f32.mrb[0].mxu0
    %v2944 = vadd.f32 0.0, %v2943
    %v2945 = vpop.f32.mrb[0].mxu0
    %v2946 = vadd.f32 0.0, %v2945
    %2947 = vmatprep.mubr.bf16.mxu0 %v2801
    %2948 = vmatmul.mubr.bf16.gmra.mrb[0].mxu0 %v2511
    %v2949 = vpop.f32.mrb[0].mxu0
    %v2950 = vadd.f32 0.0, %v2949
    %v2951 = vpop.f32.mrb[0].mxu0
    %v2952 = vadd.f32 0.0, %v2951
    %v2953 = vpop.f32.mrb[0].mxu0
    %v2954 = vadd.f32 0.0, %v2953
    %v2955 = vpop.f32.mrb[0].mxu0
    %v2956 = vadd.f32 0.0, %v2955
    %2957 = vmatprep.mubr.bf16.mxu0 %v2804
    %2958 = vmatmul.mubr.bf16.gmra.mrb[0].mxu0 %v2515
    %v2959 = vpop.f32.mrb[0].mxu0
    %v2960 = vadd.f32 0.0, %v2959
    %v2961 = vpop.f32.mrb[0].mxu0
    %v2962 = vadd.f32 0.0, %v2961
    %v2963 = vpop.f32.mrb[0].mxu0
    %v2964 = vadd.f32 0.0, %v2963
    %v2965 = vpop.f32.mrb[0].mxu0
    %v2966 = vadd.f32 0.0, %v2965
    %2967 = vmatprep.mubr.bf16.mxu0 %v2807
    %2968 = vmatmul.mubr.bf16.gmra.mrb[0].mxu0 %v2519
    %v2969 = vpop.f32.mrb[0].mxu0
    %v2970 = vadd.f32 0.0, %v2969
    %v2971 = vpop.f32.mrb[0].mxu0
    %v2972 = vadd.f32 0.0, %v2971
    %v2973 = vpop.f32.mrb[0].mxu0
    %v2974 = vadd.f32 0.0, %v2973
    %v2975 = vpop.f32.mrb[0].mxu0
    %v2976 = vadd.f32 0.0, %v2975
    %2977 = vmatprep.mubr.bf16.mxu0 %v2810
    %2978 = vmatmul.mubr.bf16.gmra.mrb[0].mxu0 %v2518
    %v2979 = vpop.f32.mrb[0].mxu0
    %v2980 = vadd.f32 0.0, %v2979
    %v2981 = vpop.f32.mrb[0].mxu0
    %v2982 = vadd.f32 0.0, %v2981
    %v2983 = vpop.f32.mrb[0].mxu0
    %v2984 = vpop.f32.mrb[0].mxu0
    %2985 = vdwg.mxu0
    %v2986 = vadd.f32 %v2400, %v2859
    %v2987 = vadd.f32 %v2401, %v2861
    %v2988 = vadd.f32 %v2402, %v2940
    %v2989 = vadd.f32 %v2403, %v2942
    %v2990 = vadd.f32 %v2404, %v2863
    %v2991 = vadd.f32 %v2405, %v2865
    %v2992 = vadd.f32 %v2406, %v2944
    %v2993 = vadd.f32 %v2407, %v2946
    %v2994 = vadd.f32 %v2408, %v2869
    %v2995 = vadd.f32 %v2409, %v2871
    %v2996 = vadd.f32 %v2410, %v2950
    %v2997 = vadd.f32 %v2411, %v2952
    %v2998 = vadd.f32 %v2412, %v2873
    %v2999 = vadd.f32 %v2413, %v2875
    %v3000 = vadd.f32 %v2414, %v2954
    %v3001 = vadd.f32 %v2415, %v2956
    %v3002 = vadd.f32 %v2416, %v2879
    %v3003 = vadd.f32 %v2417, %v2881
    %v3004 = vadd.f32 %v2418, %v2960
    %v3005 = vadd.f32 %v2419, %v2962
    %v3006 = vadd.f32 %v2420, %v2883
    %v3007 = vadd.f32 %v2421, %v2885
    %v3008 = vadd.f32 %v2422, %v2964
    %v3009 = vadd.f32 %v2423, %v2966
    %v3010 = vadd.f32 %v2424, %v2889
    %v3011 = vadd.f32 %v2425, %v2891
    %v3012 = vadd.f32 %v2426, %v2970
    %v3013 = vadd.f32 %v2427, %v2972
    %v3014 = vadd.f32 %v2428, %v2893
    %v3015 = vadd.f32 %v2429, %v2895
    %v3016 = vadd.f32 %v2430, %v2974
    %v3017 = vadd.f32 %v2431, %v2976
    %v3018 = vadd.f32 %v2432, %v2899
    %v3019 = vadd.f32 %v2433, %v2901
    %v3020 = vadd.f32 %v2434, %v2980
    %v3021 = vadd.f32 %v2435, %v2982
    %v3022 = vld [vmem:[%s2] sm:$0xff]
    %v3023 = vld [vmem:[%s2 + $0x8] sm:$0xff]
    %v3024 = vld [vmem:[%s2 + $0x10] sm:$0xff]
    %v3025 = vld [vmem:[%s2 + $0x18] sm:$0xff]
    %vm3026 = vcmask 556032
    %v3028 = vsel %vm3026, %v3022, 0
    %v3031 = vsel %vm3026, %v3023, 0
    %v3034 = vsel %vm3026, %v3024, 0
    %v3037 = vsel %vm3026, %v3025, 0
    %v3040 = vsel %vm591, %v3018, 0
    %v3043 = vsel %vm591, %v3019, 0
    %v3046 = vsel %vm591, %v3020, 0
    %v3049 = vsel %vm591, %v3021, 0
    %3051 = vmatprep.subr.mxu0 %v2987
    %3052 = vmatpush1.msra.mxu0 %v2986
    %3053 = vmatprep.subr.mxu0 %v2991
    %3054 = vmatpush1.msra.mxu0 %v2990
    %3055 = vmatprep.subr.mxu0 %v2995
    %3056 = vmatpush1.msra.mxu0 %v2994
    %3057 = vmatprep.subr.mxu0 %v2999
    %3058 = vmatpush1.msra.mxu0 %v2998
    %3059 = vmatprep.subr.mxu0 %v3003
    %3060 = vmatpush1.msra.mxu0 %v3002
    %3061 = vmatprep.subr.mxu0 %v3007
    %3062 = vmatpush1.msra.mxu0 %v3006
    %3063 = vmatprep.subr.mxu0 %v3011
    %3064 = vmatpush1.msra.mxu0 %v3010
    %3065 = vmatprep.subr.mxu0 %v3015
    %3066 = vmatpush1.msra.mxu0 %v3014
    %3067 = vmatprep.subr.mxu0 %v3043
    %3068 = vmatpush1.msra.mxu0 %v3040
    %3069 = vmatprep.subr.mxu0 0.0
    %3070 = vmatpush1.msra.mxu0 0.0
    %3071 = vmatprep.subr.mxu0 0.0
    %3072 = vmatpush1.msra.mxu0 0.0
    %3073 = vmatprep.subr.mxu0 0.0
    %3074 = vmatpush1.msra.mxu0 0.0
    %3075 = vmatprep.subr.mxu0 0.0
    %3076 = vmatpush1.msra.mxu0 0.0
    %3077 = vmatprep.subr.mxu0 0.0
    %3078 = vmatpush1.msra.mxu0 0.0
    %3079 = vmatprep.subr.mxu0 0.0
    %3080 = vmatpush1.msra.mxu0 0.0
    %3081 = vmatprep.subr.mxu0 0.0
    %3082 = vmatpush1.msra.mxu0 0.0
    %3083 = vmatprep.subr.mxu0 0.0
    %3084 = vmatpush1.msra.mxu0 0.0
    %3085 = vmatprep.subr.mxu0 0.0
    %3086 = vmatpush1.msra.mxu0 0.0
    %3087 = vmatprep.subr.mxu0 0.0
    %3088 = vmatpush1.msra.mxu0 0.0
    %3089 = vmatprep.subr.mxu0 0.0
    %3090 = vmatpush1.msra.mxu0 0.0
    %3091 = vmatprep.subr.mxu0 0.0
    %3092 = vmatpush1.msra.mxu0 0.0
    %3093 = vmatprep.subr.mxu0 0.0
    %3094 = vmatpush1.msra.mxu0 0.0
    %3095 = vmatprep.subr.mxu0 0.0
    %3096 = vmatpush1.msra.mxu0 0.0
    %3097 = vmatprep.subr.mxu0 0.0
    %3098 = vmatpush1.msra.mxu0 0.0
    %3099 = vmatprep.subr.mxu0 0.0
    %3100 = vmatpush1.msra.mxu0 0.0
    %3101 = vmatprep.subr.mxu0 0.0
    %3102 = vmatpush1.msra.mxu0 0.0
    %3103 = vmatprep.subr.mxu0 0.0
    %3104 = vmatpush1.msra.mxu0 0.0
    %3105 = vmatprep.subr.mxu0 0.0
    %3106 = vmatpush1.msra.mxu0 0.0
    %3107 = vmatprep.subr.mxu0 0.0
    %3108 = vmatpush1.msra.mxu0 0.0
    %3109 = vmatprep.subr.mxu0 0.0
    %3110 = vmatpush1.msra.mxu0 0.0
    %3111 = vmatprep.subr.mxu0 0.0
    %3112 = vmatpush1.msra.mxu0 0.0
    %3113 = vmatprep.subr.mxu0 0.0
    %3114 = vmatpush1.msra.mxu0 0.0
    %3115 = vmatprep.mubr.f32.mxu0 0.0
    %3116 = vmatmul.mubr.f32.gmra.mrb[0].mxu0 %v3028
    %v3117 = vpop.f32.mrb[0].mxu0
    %v3118 = vadd.f32 0.0, %v3117
    %v3119 = vpop.f32.mrb[0].mxu0
    %v3120 = vadd.f32 0.0, %v3119
    %3121 = vmatprep.mubr.f32.mxu0 0.0
    %3122 = vmatmul.mubr.f32.gmra.mrb[0].mxu0 %v3031
    %v3123 = vpop.f32.mrb[0].mxu0
    %v3124 = vadd.f32 0.0, %v3123
    %v3125 = vpop.f32.mrb[0].mxu0
    %v3126 = vadd.f32 0.0, %v3125
    %3127 = vmatprep.mubr.f32.mxu0 0.0
    %3128 = vmatmul.mubr.f32.gmra.mrb[0].mxu0 %v3034
    %v3129 = vpop.f32.mrb[0].mxu0
    %v3130 = vadd.f32 0.0, %v3129
    %v3131 = vpop.f32.mrb[0].mxu0
    %v3132 = vadd.f32 0.0, %v3131
    %3133 = vmatprep.mubr.f32.mxu0 0.0
    %3134 = vmatmul.mubr.f32.gmra.mrb[0].mxu0 %v3037
    %v3135 = vpop.f32.mrb[0].mxu0
    %v3136 = vadd.f32 0.0, %v3135
    %v3137 = vpop.f32.mrb[0].mxu0
    %v3138 = vadd.f32 0.0, %v3137
    %3139 = vdwg.mxu0
    %3140 = vmatprep.subr.mxu0 %v2989
    %3141 = vmatpush1.msra.mxu0 %v2988
    %3142 = vmatprep.subr.mxu0 %v2993
    %3143 = vmatpush1.msra.mxu0 %v2992
    %3144 = vmatprep.subr.mxu0 %v2997
    %3145 = vmatpush1.msra.mxu0 %v2996
    %3146 = vmatprep.subr.mxu0 %v3001
    %3147 = vmatpush1.msra.mxu0 %v3000
    %3148 = vmatprep.subr.mxu0 %v3005
    %3149 = vmatpush1.msra.mxu0 %v3004
    %3150 = vmatprep.subr.mxu0 %v3009
    %3151 = vmatpush1.msra.mxu0 %v3008
    %3152 = vmatprep.subr.mxu0 %v3013
    %3153 = vmatpush1.msra.mxu0 %v3012
    %3154 = vmatprep.subr.mxu0 %v3017
    %3155 = vmatpush1.msra.mxu0 %v3016
    %3156 = vmatprep.subr.mxu0 %v3049
    %3157 = vmatpush1.msra.mxu0 %v3046
    %3158 = vmatprep.subr.mxu0 0.0
    %3159 = vmatpush1.msra.mxu0 0.0
    %3160 = vmatprep.subr.mxu0 0.0
    %3161 = vmatpush1.msra.mxu0 0.0
    %3162 = vmatprep.subr.mxu0 0.0
    %3163 = vmatpush1.msra.mxu0 0.0
    %3164 = vmatprep.subr.mxu0 0.0
    %3165 = vmatpush1.msra.mxu0 0.0
    %3166 = vmatprep.subr.mxu0 0.0
    %3167 = vmatpush1.msra.mxu0 0.0
    %3168 = vmatprep.subr.mxu0 0.0
    %3169 = vmatpush1.msra.mxu0 0.0
    %3170 = vmatprep.subr.mxu0 0.0
    %3171 = vmatpush1.msra.mxu0 0.0
    %3172 = vmatprep.subr.mxu0 0.0
    %3173 = vmatpush1.msra.mxu0 0.0
    %3174 = vmatprep.subr.mxu0 0.0
    %3175 = vmatpush1.msra.mxu0 0.0
    %3176 = vmatprep.subr.mxu0 0.0
    %3177 = vmatpush1.msra.mxu0 0.0
    %3178 = vmatprep.subr.mxu0 0.0
    %3179 = vmatpush1.msra.mxu0 0.0
    %3180 = vmatprep.subr.mxu0 0.0
    %3181 = vmatpush1.msra.mxu0 0.0
    %3182 = vmatprep.subr.mxu0 0.0
    %3183 = vmatpush1.msra.mxu0 0.0
    %3184 = vmatprep.subr.mxu0 0.0
    %3185 = vmatpush1.msra.mxu0 0.0
    %3186 = vmatprep.subr.mxu0 0.0
    %3187 = vmatpush1.msra.mxu0 0.0
    %3188 = vmatprep.subr.mxu0 0.0
    %3189 = vmatpush1.msra.mxu0 0.0
    %3190 = vmatprep.subr.mxu0 0.0
    %3191 = vmatpush1.msra.mxu0 0.0
    %3192 = vmatprep.subr.mxu0 0.0
    %3193 = vmatpush1.msra.mxu0 0.0
    %3194 = vmatprep.subr.mxu0 0.0
    %3195 = vmatpush1.msra.mxu0 0.0
    %3196 = vmatprep.subr.mxu0 0.0
    %3197 = vmatpush1.msra.mxu0 0.0
    %3198 = vmatprep.subr.mxu0 0.0
    %3199 = vmatpush1.msra.mxu0 0.0
    %3200 = vmatprep.subr.mxu0 0.0
    %3201 = vmatpush1.msra.mxu0 0.0
    %3202 = vmatprep.subr.mxu0 0.0
    %3203 = vmatpush1.msra.mxu0 0.0
    %3204 = vmatprep.mubr.f32.mxu0 0.0
    %3205 = vmatmul.mubr.f32.gmra.mrb[0].mxu0 %v3028
    %v3206 = vpop.f32.mrb[0].mxu0
    %v3207 = vadd.f32 0.0, %v3206
    %v3208 = vpop.f32.mrb[0].mxu0
    %v3209 = vadd.f32 0.0, %v3208
    %3210 = vmatprep.mubr.f32.mxu0 0.0
    %3211 = vmatmul.mubr.f32.gmra.mrb[0].mxu0 %v3031
    %v3212 = vpop.f32.mrb[0].mxu0
    %v3213 = vadd.f32 0.0, %v3212
    %v3214 = vpop.f32.mrb[0].mxu0
    %v3215 = vadd.f32 0.0, %v3214
    %3216 = vmatprep.mubr.f32.mxu0 0.0
    %3217 = vmatmul.mubr.f32.gmra.mrb[0].mxu0 %v3034
    %v3218 = vpop.f32.mrb[0].mxu0
    %v3219 = vadd.f32 0.0, %v3218
    %v3220 = vpop.f32.mrb[0].mxu0
    %v3221 = vadd.f32 0.0, %v3220
    %3222 = vmatprep.mubr.f32.mxu0 0.0
    %3223 = vmatmul.mubr.f32.gmra.mrb[0].mxu0 %v3037
    %v3224 = vpop.f32.mrb[0].mxu0
    %v3225 = vadd.f32 0.0, %v3224
    %v3226 = vpop.f32.mrb[0].mxu0
    %v3227 = vadd.f32 0.0, %v3226
    %3228 = vdwg.mxu0
    %s3229 = scalar_lea.vmem %s2, 32
    %v3230 = vld [vmem:[%s3229] sm:$0xff]
    %v3231 = vld [vmem:[%s3229 + $0x8] sm:$0xff]
    %v3232 = vld [vmem:[%s3229 + $0x10] sm:$0xff]
    %v3233 = vld [vmem:[%s3229 + $0x18] sm:$0xff]
    %v3235 = vsel %vm3026, %v3230, 0
    %v3238 = vsel %vm3026, %v3231, 0
    %v3241 = vsel %vm3026, %v3232, 0
    %v3244 = vsel %vm3026, %v3233, 0
    %3246 = vmatprep.subr.mxu0 %v2987
    %3247 = vmatpush1.msra.mxu0 %v2986
    %3248 = vmatprep.subr.mxu0 %v2991
    %3249 = vmatpush1.msra.mxu0 %v2990
    %3250 = vmatprep.subr.mxu0 %v2995
    %3251 = vmatpush1.msra.mxu0 %v2994
    %3252 = vmatprep.subr.mxu0 %v2999
    %3253 = vmatpush1.msra.mxu0 %v2998
    %3254 = vmatprep.subr.mxu0 %v3003
    %3255 = vmatpush1.msra.mxu0 %v3002
    %3256 = vmatprep.subr.mxu0 %v3007
    %3257 = vmatpush1.msra.mxu0 %v3006
    %3258 = vmatprep.subr.mxu0 %v3011
    %3259 = vmatpush1.msra.mxu0 %v3010
    %3260 = vmatprep.subr.mxu0 %v3015
    %3261 = vmatpush1.msra.mxu0 %v3014
    %3262 = vmatprep.subr.mxu0 %v3043
    %3263 = vmatpush1.msra.mxu0 %v3040
    %3264 = vmatprep.subr.mxu0 0.0
    %3265 = vmatpush1.msra.mxu0 0.0
    %3266 = vmatprep.subr.mxu0 0.0
    %3267 = vmatpush1.msra.mxu0 0.0
    %3268 = vmatprep.subr.mxu0 0.0
    %3269 = vmatpush1.msra.mxu0 0.0
    %3270 = vmatprep.subr.mxu0 0.0
    %3271 = vmatpush1.msra.mxu0 0.0
    %3272 = vmatprep.subr.mxu0 0.0
    %3273 = vmatpush1.msra.mxu0 0.0
    %3274 = vmatprep.subr.mxu0 0.0
    %3275 = vmatpush1.msra.mxu0 0.0
    %3276 = vmatprep.subr.mxu0 0.0
    %3277 = vmatpush1.msra.mxu0 0.0
    %3278 = vmatprep.subr.mxu0 0.0
    %3279 = vmatpush1.msra.mxu0 0.0
    %3280 = vmatprep.subr.mxu0 0.0
    %3281 = vmatpush1.msra.mxu0 0.0
    %3282 = vmatprep.subr.mxu0 0.0
    %3283 = vmatpush1.msra.mxu0 0.0
    %3284 = vmatprep.subr.mxu0 0.0
    %3285 = vmatpush1.msra.mxu0 0.0
    %3286 = vmatprep.subr.mxu0 0.0
    %3287 = vmatpush1.msra.mxu0 0.0
    %3288 = vmatprep.subr.mxu0 0.0
    %3289 = vmatpush1.msra.mxu0 0.0
    %3290 = vmatprep.subr.mxu0 0.0
    %3291 = vmatpush1.msra.mxu0 0.0
    %3292 = vmatprep.subr.mxu0 0.0
    %3293 = vmatpush1.msra.mxu0 0.0
    %3294 = vmatprep.subr.mxu0 0.0
    %3295 = vmatpush1.msra.mxu0 0.0
    %3296 = vmatprep.subr.mxu0 0.0
    %3297 = vmatpush1.msra.mxu0 0.0
    %3298 = vmatprep.subr.mxu0 0.0
    %3299 = vmatpush1.msra.mxu0 0.0
    %3300 = vmatprep.subr.mxu0 0.0
    %3301 = vmatpush1.msra.mxu0 0.0
    %3302 = vmatprep.subr.mxu0 0.0
    %3303 = vmatpush1.msra.mxu0 0.0
    %3304 = vmatprep.subr.mxu0 0.0
    %3305 = vmatpush1.msra.mxu0 0.0
    %3306 = vmatprep.subr.mxu0 0.0
    %3307 = vmatpush1.msra.mxu0 0.0
    %3308 = vmatprep.subr.mxu0 0.0
    %3309 = vmatpush1.msra.mxu0 0.0
    %3310 = vmatprep.mubr.f32.mxu0 0.0
    %3311 = vmatmul.mubr.f32.gmra.mrb[0].mxu0 %v3235
    %v3312 = vpop.f32.mrb[0].mxu0
    %v3313 = vadd.f32 0.0, %v3312
    %v3314 = vpop.f32.mrb[0].mxu0
    %v3315 = vadd.f32 0.0, %v3314
    %3316 = vmatprep.mubr.f32.mxu0 0.0
    %3317 = vmatmul.mubr.f32.gmra.mrb[0].mxu0 %v3238
    %v3318 = vpop.f32.mrb[0].mxu0
    %v3319 = vadd.f32 0.0, %v3318
    %v3320 = vpop.f32.mrb[0].mxu0
    %v3321 = vadd.f32 0.0, %v3320
    %3322 = vmatprep.mubr.f32.mxu0 0.0
    %3323 = vmatmul.mubr.f32.gmra.mrb[0].mxu0 %v3241
    %v3324 = vpop.f32.mrb[0].mxu0
    %v3325 = vadd.f32 0.0, %v3324
    %v3326 = vpop.f32.mrb[0].mxu0
    %v3327 = vadd.f32 0.0, %v3326
    %3328 = vmatprep.mubr.f32.mxu0 0.0
    %3329 = vmatmul.mubr.f32.gmra.mrb[0].mxu0 %v3244
    %v3330 = vpop.f32.mrb[0].mxu0
    %v3331 = vadd.f32 0.0, %v3330
    %v3332 = vpop.f32.mrb[0].mxu0
    %v3333 = vadd.f32 0.0, %v3332
    %3334 = vdwg.mxu0
    %3335 = vmatprep.subr.mxu0 %v2989
    %3336 = vmatpush1.msra.mxu0 %v2988
    %3337 = vmatprep.subr.mxu0 %v2993
    %3338 = vmatpush1.msra.mxu0 %v2992
    %3339 = vmatprep.subr.mxu0 %v2997
    %3340 = vmatpush1.msra.mxu0 %v2996
    %3341 = vmatprep.subr.mxu0 %v3001
    %3342 = vmatpush1.msra.mxu0 %v3000
    %3343 = vmatprep.subr.mxu0 %v3005
    %3344 = vmatpush1.msra.mxu0 %v3004
    %3345 = vmatprep.subr.mxu0 %v3009
    %3346 = vmatpush1.msra.mxu0 %v3008
    %3347 = vmatprep.subr.mxu0 %v3013
    %3348 = vmatpush1.msra.mxu0 %v3012
    %3349 = vmatprep.subr.mxu0 %v3017
    %3350 = vmatpush1.msra.mxu0 %v3016
    %3351 = vmatprep.subr.mxu0 %v3049
    %3352 = vmatpush1.msra.mxu0 %v3046
    %3353 = vmatprep.subr.mxu0 0.0
    %3354 = vmatpush1.msra.mxu0 0.0
    %3355 = vmatprep.subr.mxu0 0.0
    %3356 = vmatpush1.msra.mxu0 0.0
    %3357 = vmatprep.subr.mxu0 0.0
    %3358 = vmatpush1.msra.mxu0 0.0
    %3359 = vmatprep.subr.mxu0 0.0
    %3360 = vmatpush1.msra.mxu0 0.0
    %3361 = vmatprep.subr.mxu0 0.0
    %3362 = vmatpush1.msra.mxu0 0.0
    %3363 = vmatprep.subr.mxu0 0.0
    %3364 = vmatpush1.msra.mxu0 0.0
    %3365 = vmatprep.subr.mxu0 0.0
    %3366 = vmatpush1.msra.mxu0 0.0
    %3367 = vmatprep.subr.mxu0 0.0
    %3368 = vmatpush1.msra.mxu0 0.0
    %3369 = vmatprep.subr.mxu0 0.0
    %3370 = vmatpush1.msra.mxu0 0.0
    %3371 = vmatprep.subr.mxu0 0.0
    %3372 = vmatpush1.msra.mxu0 0.0
    %3373 = vmatprep.subr.mxu0 0.0
    %3374 = vmatpush1.msra.mxu0 0.0
    %3375 = vmatprep.subr.mxu0 0.0
    %3376 = vmatpush1.msra.mxu0 0.0
    %3377 = vmatprep.subr.mxu0 0.0
    %3378 = vmatpush1.msra.mxu0 0.0
    %3379 = vmatprep.subr.mxu0 0.0
    %3380 = vmatpush1.msra.mxu0 0.0
    %3381 = vmatprep.subr.mxu0 0.0
    %3382 = vmatpush1.msra.mxu0 0.0
    %3383 = vmatprep.subr.mxu0 0.0
    %3384 = vmatpush1.msra.mxu0 0.0
    %3385 = vmatprep.subr.mxu0 0.0
    %3386 = vmatpush1.msra.mxu0 0.0
    %3387 = vmatprep.subr.mxu0 0.0
    %3388 = vmatpush1.msra.mxu0 0.0
    %3389 = vmatprep.subr.mxu0 0.0
    %3390 = vmatpush1.msra.mxu0 0.0
    %3391 = vmatprep.subr.mxu0 0.0
    %3392 = vmatpush1.msra.mxu0 0.0
    %3393 = vmatprep.subr.mxu0 0.0
    %3394 = vmatpush1.msra.mxu0 0.0
    %3395 = vmatprep.subr.mxu0 0.0
    %3396 = vmatpush1.msra.mxu0 0.0
    %3397 = vmatprep.subr.mxu0 0.0
    %3398 = vmatpush1.msra.mxu0 0.0
    %3399 = vmatprep.mubr.f32.mxu0 0.0
    %3400 = vmatmul.mubr.f32.gmra.mrb[0].mxu0 %v3235
    %v3401 = vpop.f32.mrb[0].mxu0
    %v3402 = vadd.f32 0.0, %v3401
    %v3403 = vpop.f32.mrb[0].mxu0
    %v3404 = vadd.f32 0.0, %v3403
    %3405 = vmatprep.mubr.f32.mxu0 0.0
    %3406 = vmatmul.mubr.f32.gmra.mrb[0].mxu0 %v3238
    %v3407 = vpop.f32.mrb[0].mxu0
    %v3408 = vadd.f32 0.0, %v3407
    %v3409 = vpop.f32.mrb[0].mxu0
    %v3410 = vadd.f32 0.0, %v3409
    %3411 = vmatprep.mubr.f32.mxu0 0.0
    %3412 = vmatmul.mubr.f32.gmra.mrb[0].mxu0 %v3241
    %v3413 = vpop.f32.mrb[0].mxu0
    %v3414 = vadd.f32 0.0, %v3413
    %v3415 = vpop.f32.mrb[0].mxu0
    %v3416 = vadd.f32 0.0, %v3415
    %3417 = vmatprep.mubr.f32.mxu0 0.0
    %3418 = vmatmul.mubr.f32.gmra.mrb[0].mxu0 %v3244
    %v3419 = vpop.f32.mrb[0].mxu0
    %v3420 = vadd.f32 0.0, %v3419
    %v3421 = vpop.f32.mrb[0].mxu0
    %v3422 = vadd.f32 0.0, %v3421
    %3423 = vdwg.mxu0
    %v3424 = vadd.f32 %v3118, %v3124
    %v3425 = vadd.f32 %v3424, %v3130
    %v3426 = vadd.f32 %v3425, %v3136
    %v3427 = vrot.slane %v3426, 4
    %v3428 = vadd.f32 %v3426, %v3427
    %v3429 = vrot.slane %v3428, 2
    %v3430 = vadd.f32 %v3428, %v3429
    %v3431 = vrot.slane %v3430, 1
    %v3432 = vadd.f32 %v3430, %v3431
    %v3433 = vadd.f32 %v3120, %v3126
    %v3434 = vadd.f32 %v3433, %v3132
    %v3435 = vadd.f32 %v3434, %v3138
    %v3436 = vrot.slane %v3435, 4
    %v3437 = vadd.f32 %v3435, %v3436
    %v3438 = vrot.slane %v3437, 2
    %v3439 = vadd.f32 %v3437, %v3438
    %v3440 = vrot.slane %v3439, 1
    %v3441 = vadd.f32 %v3439, %v3440
    %v3442 = vadd.f32 %v3207, %v3213
    %v3443 = vadd.f32 %v3442, %v3219
    %v3444 = vadd.f32 %v3443, %v3225
    %v3445 = vrot.slane %v3444, 4
    %v3446 = vadd.f32 %v3444, %v3445
    %v3447 = vrot.slane %v3446, 2
    %v3448 = vadd.f32 %v3446, %v3447
    %v3449 = vrot.slane %v3448, 1
    %v3450 = vadd.f32 %v3448, %v3449
    %v3451 = vadd.f32 %v3209, %v3215
    %v3452 = vadd.f32 %v3451, %v3221
    %v3453 = vadd.f32 %v3452, %v3227
    %v3454 = vrot.slane %v3453, 4
    %v3455 = vadd.f32 %v3453, %v3454
    %v3456 = vrot.slane %v3455, 2
    %v3457 = vadd.f32 %v3455, %v3456
    %v3458 = vrot.slane %v3457, 1
    %v3459 = vadd.f32 %v3457, %v3458
    %v3460 = vadd.f32 %v3313, %v3319
    %v3461 = vadd.f32 %v3460, %v3325
    %v3462 = vadd.f32 %v3461, %v3331
    %v3463 = vrot.slane %v3462, 4
    %v3464 = vadd.f32 %v3462, %v3463
    %v3465 = vrot.slane %v3464, 2
    %v3466 = vadd.f32 %v3464, %v3465
    %v3467 = vrot.slane %v3466, 1
    %v3468 = vadd.f32 %v3466, %v3467
    %v3469 = vadd.f32 %v3315, %v3321
    %v3470 = vadd.f32 %v3469, %v3327
    %v3471 = vadd.f32 %v3470, %v3333
    %v3472 = vrot.slane %v3471, 4
    %v3473 = vadd.f32 %v3471, %v3472
    %v3474 = vrot.slane %v3473, 2
    %v3475 = vadd.f32 %v3473, %v3474
    %v3476 = vrot.slane %v3475, 1
    %v3477 = vadd.f32 %v3475, %v3476
    %v3478 = vadd.f32 %v3402, %v3408
    %v3479 = vadd.f32 %v3478, %v3414
    %v3480 = vadd.f32 %v3479, %v3420
    %v3481 = vrot.slane %v3480, 4
    %v3482 = vadd.f32 %v3480, %v3481
    %v3483 = vrot.slane %v3482, 2
    %v3484 = vadd.f32 %v3482, %v3483
    %v3485 = vrot.slane %v3484, 1
    %v3486 = vadd.f32 %v3484, %v3485
    %v3487 = vadd.f32 %v3404, %v3410
    %v3488 = vadd.f32 %v3487, %v3416
    %v3489 = vadd.f32 %v3488, %v3422
    %v3490 = vrot.slane %v3489, 4
    %v3491 = vadd.f32 %v3489, %v3490
    %v3492 = vrot.slane %v3491, 2
    %v3493 = vadd.f32 %v3491, %v3492
    %v3494 = vrot.slane %v3493, 1
    %v3495 = vadd.f32 %v3493, %v3494
    %v3496 = vadd.f32 %v3432, %v3468
    %v3497 = vadd.f32 %v3441, %v3477
    %v3498 = vadd.f32 %v3450, %v3486
    %v3499 = vadd.f32 %v3459, %v3495
    %v3500 = vmul.f32 %v3118, %v3118
    %v3501 = vmul.f32 %v3120, %v3120
    %v3502 = vmul.f32 %v3207, %v3207
    %v3503 = vmul.f32 %v3209, %v3209
    %v3504 = vmul.f32 %v3124, %v3124
    %v3505 = vmul.f32 %v3126, %v3126
    %v3506 = vmul.f32 %v3213, %v3213
    %v3507 = vmul.f32 %v3215, %v3215
    %v3508 = vmul.f32 %v3130, %v3130
    %v3509 = vmul.f32 %v3132, %v3132
    %v3510 = vmul.f32 %v3219, %v3219
    %v3511 = vmul.f32 %v3221, %v3221
    %v3512 = vmul.f32 %v3136, %v3136
    %v3513 = vmul.f32 %v3138, %v3138
    %v3514 = vmul.f32 %v3225, %v3225
    %v3515 = vmul.f32 %v3227, %v3227
    %v3516 = vadd.f32 %v3500, %v3504
    %v3517 = vadd.f32 %v3516, %v3508
    %v3518 = vadd.f32 %v3517, %v3512
    %v3519 = vrot.slane %v3518, 4
    %v3520 = vadd.f32 %v3518, %v3519
    %v3521 = vrot.slane %v3520, 2
    %v3522 = vadd.f32 %v3520, %v3521
    %v3523 = vrot.slane %v3522, 1
    %v3524 = vadd.f32 %v3522, %v3523
    %v3525 = vadd.f32 %v3501, %v3505
    %v3526 = vadd.f32 %v3525, %v3509
    %v3527 = vadd.f32 %v3526, %v3513
    %v3528 = vrot.slane %v3527, 4
    %v3529 = vadd.f32 %v3527, %v3528
    %v3530 = vrot.slane %v3529, 2
    %v3531 = vadd.f32 %v3529, %v3530
    %v3532 = vrot.slane %v3531, 1
    %v3533 = vadd.f32 %v3531, %v3532
    %v3534 = vadd.f32 %v3502, %v3506
    %v3535 = vadd.f32 %v3534, %v3510
    %v3536 = vadd.f32 %v3535, %v3514
    %v3537 = vrot.slane %v3536, 4
    %v3538 = vadd.f32 %v3536, %v3537
    %v3539 = vrot.slane %v3538, 2
    %v3540 = vadd.f32 %v3538, %v3539
    %v3541 = vrot.slane %v3540, 1
    %v3542 = vadd.f32 %v3540, %v3541
    %v3543 = vadd.f32 %v3503, %v3507
    %v3544 = vadd.f32 %v3543, %v3511
    %v3545 = vadd.f32 %v3544, %v3515
    %v3546 = vrot.slane %v3545, 4
    %v3547 = vadd.f32 %v3545, %v3546
    %v3548 = vrot.slane %v3547, 2
    %v3549 = vadd.f32 %v3547, %v3548
    %v3550 = vrot.slane %v3549, 1
    %v3551 = vadd.f32 %v3549, %v3550
    %v3552 = vmul.f32 %v3313, %v3313
    %v3553 = vmul.f32 %v3315, %v3315
    %v3554 = vmul.f32 %v3402, %v3402
    %v3555 = vmul.f32 %v3404, %v3404
    %v3556 = vmul.f32 %v3319, %v3319
    %v3557 = vmul.f32 %v3321, %v3321
    %v3558 = vmul.f32 %v3408, %v3408
    %v3559 = vmul.f32 %v3410, %v3410
    %v3560 = vmul.f32 %v3325, %v3325
    %v3561 = vmul.f32 %v3327, %v3327
    %v3562 = vmul.f32 %v3414, %v3414
    %v3563 = vmul.f32 %v3416, %v3416
    %v3564 = vmul.f32 %v3331, %v3331
    %v3565 = vmul.f32 %v3333, %v3333
    %v3566 = vmul.f32 %v3420, %v3420
    %v3567 = vmul.f32 %v3422, %v3422
    %v3568 = vadd.f32 %v3552, %v3556
    %v3569 = vadd.f32 %v3568, %v3560
    %v3570 = vadd.f32 %v3569, %v3564
    %v3571 = vrot.slane %v3570, 4
    %v3572 = vadd.f32 %v3570, %v3571
    %v3573 = vrot.slane %v3572, 2
    %v3574 = vadd.f32 %v3572, %v3573
    %v3575 = vrot.slane %v3574, 1
    %v3576 = vadd.f32 %v3574, %v3575
    %v3577 = vadd.f32 %v3553, %v3557
    %v3578 = vadd.f32 %v3577, %v3561
    %v3579 = vadd.f32 %v3578, %v3565
    %v3580 = vrot.slane %v3579, 4
    %v3581 = vadd.f32 %v3579, %v3580
    %v3582 = vrot.slane %v3581, 2
    %v3583 = vadd.f32 %v3581, %v3582
    %v3584 = vrot.slane %v3583, 1
    %v3585 = vadd.f32 %v3583, %v3584
    %v3586 = vadd.f32 %v3554, %v3558
    %v3587 = vadd.f32 %v3586, %v3562
    %v3588 = vadd.f32 %v3587, %v3566
    %v3589 = vrot.slane %v3588, 4
    %v3590 = vadd.f32 %v3588, %v3589
    %v3591 = vrot.slane %v3590, 2
    %v3592 = vadd.f32 %v3590, %v3591
    %v3593 = vrot.slane %v3592, 1
    %v3594 = vadd.f32 %v3592, %v3593
    %v3595 = vadd.f32 %v3555, %v3559
    %v3596 = vadd.f32 %v3595, %v3563
    %v3597 = vadd.f32 %v3596, %v3567
    %v3598 = vrot.slane %v3597, 4
    %v3599 = vadd.f32 %v3597, %v3598
    %v3600 = vrot.slane %v3599, 2
    %v3601 = vadd.f32 %v3599, %v3600
    %v3602 = vrot.slane %v3601, 1
    %v3603 = vadd.f32 %v3601, %v3602
    %v3604 = vadd.f32 %v3524, %v3576
    %v3605 = vadd.f32 %v3533, %v3585
    %v3606 = vadd.f32 %v3542, %v3594
    %v3607 = vadd.f32 %v3551, %v3603
    %v3608 = vld [vmem:[%s3] sm:$0xff]
    %v3609 = vld [vmem:[%s3 + $0x8] sm:$0xff]
    %v3610 = vld [vmem:[%s3 + $0x10] sm:$0xff]
    %v3611 = vld [vmem:[%s3 + $0x18] sm:$0xff]
    %v3612 = vld [vmem:[%s3 + $0x20] sm:$0xff]
    %v3613 = vld [vmem:[%s3 + $0x28] sm:$0xff]
    %v3614 = vld [vmem:[%s3 + $0x30] sm:$0xff]
    %v3615 = vld [vmem:[%s3 + $0x38] sm:$0xff]
    %v3616 = vld [vmem:[%s3 + $0x40] sm:$0xff]
    %v3617 = vld [vmem:[%s3 + $0x48] sm:$0xff]
    %v3618 = vld [vmem:[%s3 + $0x50] sm:$0xff]
    %v3619 = vld [vmem:[%s3 + $0x58] sm:$0xff]
    %v3620 = vld [vmem:[%s3 + $0x60] sm:$0xff]
    %v3621 = vld [vmem:[%s3 + $0x68] sm:$0xff]
    %v3622 = vld [vmem:[%s3 + $0x70] sm:$0xff]
    %v3623 = vld [vmem:[%s3 + $0x78] sm:$0xff]
    %v3624 = vld [vmem:[%s3 + $0x80] sm:$0xff]
    %v3625 = vld [vmem:[%s3 + $0x88] sm:$0xff]
    %v3626 = vld [vmem:[%s3 + $0x90] sm:$0xff]
    %v3627 = vld [vmem:[%s3 + $0x98] sm:$0xff]
    %v3628 = vld [vmem:[%s3 + $0xa0] sm:$0xff]
    %v3629 = vld [vmem:[%s3 + $0xa8] sm:$0xff]
    %v3630 = vld [vmem:[%s3 + $0xb0] sm:$0xff]
    %v3631 = vld [vmem:[%s3 + $0xb8] sm:$0xff]
    %v3632 = vld [vmem:[%s3 + $0xc0] sm:$0xff]
    %v3633 = vld [vmem:[%s3 + $0xc8] sm:$0xff]
    %v3634 = vld [vmem:[%s3 + $0xd0] sm:$0xff]
    %v3635 = vld [vmem:[%s3 + $0xd8] sm:$0xff]
    %v3636 = vld [vmem:[%s3 + $0xe0] sm:$0xff]
    %v3637 = vld [vmem:[%s3 + $0xe8] sm:$0xff]
    %v3638 = vld [vmem:[%s3 + $0xf0] sm:$0xff]
    %v3639 = vld [vmem:[%s3 + $0xf8] sm:$0xff]
    %v3640 = vld [vmem:[%s3 + $0x100] sm:$0xff]
    %v3641 = vld [vmem:[%s3 + $0x108] sm:$0xff]
    %v3642 = vld [vmem:[%s3 + $0x110] sm:$0xff]
    %v3643 = vld [vmem:[%s3 + $0x118] sm:$0xff]
    %v3644 = vld [vmem:[%s3 + $0x120] sm:$0xff]
    %v3645 = vld [vmem:[%s3 + $0x128] sm:$0xff]
    %v3646 = vld [vmem:[%s3 + $0x130] sm:$0xff]
    %v3647 = vld [vmem:[%s3 + $0x138] sm:$0xff]
    %v3648 = vld [vmem:[%s3 + $0x140] sm:$0xff]
    %v3649 = vld [vmem:[%s3 + $0x148] sm:$0xff]
    %v3650 = vld [vmem:[%s3 + $0x150] sm:$0xff]
    %v3651 = vld [vmem:[%s3 + $0x158] sm:$0xff]
    %v3652 = vld [vmem:[%s3 + $0x160] sm:$0xff]
    %v3653 = vld [vmem:[%s3 + $0x168] sm:$0xff]
    %v3654 = vld [vmem:[%s3 + $0x170] sm:$0xff]
    %v3655 = vld [vmem:[%s3 + $0x178] sm:$0xff]
    %v3656 = vld [vmem:[%s3 + $0x180] sm:$0xff]
    %v3657 = vld [vmem:[%s3 + $0x188] sm:$0xff]
    %v3658 = vld [vmem:[%s3 + $0x190] sm:$0xff]
    %v3659 = vld [vmem:[%s3 + $0x198] sm:$0xff]
    %v3660 = vld [vmem:[%s3 + $0x1a0] sm:$0xff]
    %v3661 = vld [vmem:[%s3 + $0x1a8] sm:$0xff]
    %v3662 = vld [vmem:[%s3 + $0x1b0] sm:$0xff]
    %v3663 = vld [vmem:[%s3 + $0x1b8] sm:$0xff]
    %v3664 = vld [vmem:[%s3 + $0x1c0] sm:$0xff]
    %v3665 = vld [vmem:[%s3 + $0x1c8] sm:$0xff]
    %v3666 = vld [vmem:[%s3 + $0x1d0] sm:$0xff]
    %v3667 = vld [vmem:[%s3 + $0x1d8] sm:$0xff]
    %v3668 = vld [vmem:[%s3 + $0x1e0] sm:$0xff]
    %v3669 = vld [vmem:[%s3 + $0x1e8] sm:$0xff]
    %v3670 = vld [vmem:[%s3 + $0x1f0] sm:$0xff]
    %v3671 = vld [vmem:[%s3 + $0x1f8] sm:$0xff]
    %3672 = vmatprep.subr.mxu0 0.0
    %3673 = vmatpush1.msra.mxu0 %v3608
    %3674 = vmatprep.subr.mxu0 0.0
    %3675 = vmatpush1.msra.mxu0 %v3609
    %3676 = vmatprep.subr.mxu0 0.0
    %3677 = vmatpush1.msra.mxu0 %v3610
    %3678 = vmatprep.subr.mxu0 0.0
    %3679 = vmatpush1.msra.mxu0 %v3611
    %3680 = vmatprep.subr.mxu0 0.0
    %3681 = vmatpush1.msra.mxu0 %v3612
    %3682 = vmatprep.subr.mxu0 0.0
    %3683 = vmatpush1.msra.mxu0 %v3613
    %3684 = vmatprep.subr.mxu0 0.0
    %3685 = vmatpush1.msra.mxu0 %v3614
    %3686 = vmatprep.subr.mxu0 0.0
    %3687 = vmatpush1.msra.mxu0 %v3615
    %3688 = vmatprep.subr.mxu0 0.0
    %3689 = vmatpush1.msra.mxu0 %v3616
    %3690 = vmatprep.subr.mxu0 0.0
    %3691 = vmatpush1.msra.mxu0 %v3617
    %3692 = vmatprep.subr.mxu0 0.0
    %3693 = vmatpush1.msra.mxu0 %v3618
    %3694 = vmatprep.subr.mxu0 0.0
    %3695 = vmatpush1.msra.mxu0 %v3619
    %3696 = vmatprep.subr.mxu0 0.0
    %3697 = vmatpush1.msra.mxu0 %v3620
    %3698 = vmatprep.subr.mxu0 0.0
    %3699 = vmatpush1.msra.mxu0 %v3621
    %3700 = vmatprep.subr.mxu0 0.0
    %3701 = vmatpush1.msra.mxu0 %v3622
    %3702 = vmatprep.subr.mxu0 0.0
    %3703 = vmatpush1.msra.mxu0 %v3623
    %3704 = vmatprep.subr.mxu0 0.0
    %3705 = vmatpush1.msra.mxu0 %v3624
    %3706 = vmatprep.subr.mxu0 0.0
    %3707 = vmatpush1.msra.mxu0 %v3625
    %3708 = vmatprep.subr.mxu0 0.0
    %3709 = vmatpush1.msra.mxu0 %v3626
    %3710 = vmatprep.subr.mxu0 0.0
    %3711 = vmatpush1.msra.mxu0 %v3627
    %3712 = vmatprep.subr.mxu0 0.0
    %3713 = vmatpush1.msra.mxu0 %v3628
    %3714 = vmatprep.subr.mxu0 0.0
    %3715 = vmatpush1.msra.mxu0 %v3629
    %3716 = vmatprep.subr.mxu0 0.0
    %3717 = vmatpush1.msra.mxu0 %v3630
    %3718 = vmatprep.subr.mxu0 0.0
    %3719 = vmatpush1.msra.mxu0 %v3631
    %3720 = vmatprep.subr.mxu0 0.0
    %3721 = vmatpush1.msra.mxu0 %v3632
    %3722 = vmatprep.subr.mxu0 0.0
    %3723 = vmatpush1.msra.mxu0 %v3633
    %3724 = vmatprep.subr.mxu0 0.0
    %3725 = vmatpush1.msra.mxu0 %v3634
    %3726 = vmatprep.subr.mxu0 0.0
    %3727 = vmatpush1.msra.mxu0 %v3635
    %3728 = vmatprep.subr.mxu0 0.0
    %3729 = vmatpush1.msra.mxu0 %v3636
    %3730 = vmatprep.subr.mxu0 0.0
    %3731 = vmatpush1.msra.mxu0 %v3637
    %3732 = vmatprep.subr.mxu0 0.0
    %3733 = vmatpush1.msra.mxu0 %v3638
    %3734 = vmatprep.subr.mxu0 0.0
    %3735 = vmatpush1.msra.mxu0 %v3639
    %3736 = vmatprep.mubr.f32.mxu0 %v3497
    %3737 = vmatmul.mubr.f32.gmra.mrb[0].mxu0 %v3496
    %v3738 = vpop.f32.mrb[0].mxu0
    %v3739 = vadd.f32 0.0, %v3738
    %v3740 = vpop.f32.mrb[0].mxu0
    %3741 = vdwg.mxu0
    %3742 = vmatprep.subr.mxu0 0.0
    %3743 = vmatpush1.msra.mxu0 %v3640
    %3744 = vmatprep.subr.mxu0 0.0
    %3745 = vmatpush1.msra.mxu0 %v3641
    %3746 = vmatprep.subr.mxu0 0.0
    %3747 = vmatpush1.msra.mxu0 %v3642
    %3748 = vmatprep.subr.mxu0 0.0
    %3749 = vmatpush1.msra.mxu0 %v3643
    %3750 = vmatprep.subr.mxu0 0.0
    %3751 = vmatpush1.msra.mxu0 %v3644
    %3752 = vmatprep.subr.mxu0 0.0
    %3753 = vmatpush1.msra.mxu0 %v3645
    %3754 = vmatprep.subr.mxu0 0.0
    %3755 = vmatpush1.msra.mxu0 %v3646
    %3756 = vmatprep.subr.mxu0 0.0
    %3757 = vmatpush1.msra.mxu0 %v3647
    %3758 = vmatprep.subr.mxu0 0.0
    %3759 = vmatpush1.msra.mxu0 %v3648
    %3760 = vmatprep.subr.mxu0 0.0
    %3761 = vmatpush1.msra.mxu0 %v3649
    %3762 = vmatprep.subr.mxu0 0.0
    %3763 = vmatpush1.msra.mxu0 %v3650
    %3764 = vmatprep.subr.mxu0 0.0
    %3765 = vmatpush1.msra.mxu0 %v3651
    %3766 = vmatprep.subr.mxu0 0.0
    %3767 = vmatpush1.msra.mxu0 %v3652
    %3768 = vmatprep.subr.mxu0 0.0
    %3769 = vmatpush1.msra.mxu0 %v3653
    %3770 = vmatprep.subr.mxu0 0.0
    %3771 = vmatpush1.msra.mxu0 %v3654
    %3772 = vmatprep.subr.mxu0 0.0
    %3773 = vmatpush1.msra.mxu0 %v3655
    %3774 = vmatprep.subr.mxu0 0.0
    %3775 = vmatpush1.msra.mxu0 %v3656
    %3776 = vmatprep.subr.mxu0 0.0
    %3777 = vmatpush1.msra.mxu0 %v3657
    %3778 = vmatprep.subr.mxu0 0.0
    %3779 = vmatpush1.msra.mxu0 %v3658
    %3780 = vmatprep.subr.mxu0 0.0
    %3781 = vmatpush1.msra.mxu0 %v3659
    %3782 = vmatprep.subr.mxu0 0.0
    %3783 = vmatpush1.msra.mxu0 %v3660
    %3784 = vmatprep.subr.mxu0 0.0
    %3785 = vmatpush1.msra.mxu0 %v3661
    %3786 = vmatprep.subr.mxu0 0.0
    %3787 = vmatpush1.msra.mxu0 %v3662
    %3788 = vmatprep.subr.mxu0 0.0
    %3789 = vmatpush1.msra.mxu0 %v3663
    %3790 = vmatprep.subr.mxu0 0.0
    %3791 = vmatpush1.msra.mxu0 %v3664
    %3792 = vmatprep.subr.mxu0 0.0
    %3793 = vmatpush1.msra.mxu0 %v3665
    %3794 = vmatprep.subr.mxu0 0.0
    %3795 = vmatpush1.msra.mxu0 %v3666
    %3796 = vmatprep.subr.mxu0 0.0
    %3797 = vmatpush1.msra.mxu0 %v3667
    %3798 = vmatprep.subr.mxu0 0.0
    %3799 = vmatpush1.msra.mxu0 %v3668
    %3800 = vmatprep.subr.mxu0 0.0
    %3801 = vmatpush1.msra.mxu0 %v3669
    %3802 = vmatprep.subr.mxu0 0.0
    %3803 = vmatpush1.msra.mxu0 %v3670
    %3804 = vmatprep.subr.mxu0 0.0
    %3805 = vmatpush1.msra.mxu0 %v3671
    %3806 = vmatprep.mubr.f32.mxu0 %v3499
    %3807 = vmatmul.mubr.f32.gmra.mrb[0].mxu0 %v3498
    %v3808 = vpop.f32.mrb[0].mxu0
    %v3809 = vadd.f32 %v3739, %v3808
    %v3810 = vpop.f32.mrb[0].mxu0
    %3811 = vdwg.mxu0
    %v3812 = vmul.f32 %v3809, 0.00048828125
    %3813 = vmatprep.subr.mxu0 0.0
    %3814 = vmatpush1.msra.mxu0 %v3608
    %3815 = vmatprep.subr.mxu0 0.0
    %3816 = vmatpush1.msra.mxu0 %v3609
    %3817 = vmatprep.subr.mxu0 0.0
    %3818 = vmatpush1.msra.mxu0 %v3610
    %3819 = vmatprep.subr.mxu0 0.0
    %3820 = vmatpush1.msra.mxu0 %v3611
    %3821 = vmatprep.subr.mxu0 0.0
    %3822 = vmatpush1.msra.mxu0 %v3612
    %3823 = vmatprep.subr.mxu0 0.0
    %3824 = vmatpush1.msra.mxu0 %v3613
    %3825 = vmatprep.subr.mxu0 0.0
    %3826 = vmatpush1.msra.mxu0 %v3614
    %3827 = vmatprep.subr.mxu0 0.0
    %3828 = vmatpush1.msra.mxu0 %v3615
    %3829 = vmatprep.subr.mxu0 0.0
    %3830 = vmatpush1.msra.mxu0 %v3616
    %3831 = vmatprep.subr.mxu0 0.0
    %3832 = vmatpush1.msra.mxu0 %v3617
    %3833 = vmatprep.subr.mxu0 0.0
    %3834 = vmatpush1.msra.mxu0 %v3618
    %3835 = vmatprep.subr.mxu0 0.0
    %3836 = vmatpush1.msra.mxu0 %v3619
    %3837 = vmatprep.subr.mxu0 0.0
    %3838 = vmatpush1.msra.mxu0 %v3620
    %3839 = vmatprep.subr.mxu0 0.0
    %3840 = vmatpush1.msra.mxu0 %v3621
    %3841 = vmatprep.subr.mxu0 0.0
    %3842 = vmatpush1.msra.mxu0 %v3622
    %3843 = vmatprep.subr.mxu0 0.0
    %3844 = vmatpush1.msra.mxu0 %v3623
    %3845 = vmatprep.subr.mxu0 0.0
    %3846 = vmatpush1.msra.mxu0 %v3624
    %3847 = vmatprep.subr.mxu0 0.0
    %3848 = vmatpush1.msra.mxu0 %v3625
    %3849 = vmatprep.subr.mxu0 0.0
    %3850 = vmatpush1.msra.mxu0 %v3626
    %3851 = vmatprep.subr.mxu0 0.0
    %3852 = vmatpush1.msra.mxu0 %v3627
    %3853 = vmatprep.subr.mxu0 0.0
    %3854 = vmatpush1.msra.mxu0 %v3628
    %3855 = vmatprep.subr.mxu0 0.0
    %3856 = vmatpush1.msra.mxu0 %v3629
    %3857 = vmatprep.subr.mxu0 0.0
    %3858 = vmatpush1.msra.mxu0 %v3630
    %3859 = vmatprep.subr.mxu0 0.0
    %3860 = vmatpush1.msra.mxu0 %v3631
    %3861 = vmatprep.subr.mxu0 0.0
    %3862 = vmatpush1.msra.mxu0 %v3632
    %3863 = vmatprep.subr.mxu0 0.0
    %3864 = vmatpush1.msra.mxu0 %v3633
    %3865 = vmatprep.subr.mxu0 0.0
    %3866 = vmatpush1.msra.mxu0 %v3634
    %3867 = vmatprep.subr.mxu0 0.0
    %3868 = vmatpush1.msra.mxu0 %v3635
    %3869 = vmatprep.subr.mxu0 0.0
    %3870 = vmatpush1.msra.mxu0 %v3636
    %3871 = vmatprep.subr.mxu0 0.0
    %3872 = vmatpush1.msra.mxu0 %v3637
    %3873 = vmatprep.subr.mxu0 0.0
    %3874 = vmatpush1.msra.mxu0 %v3638
    %3875 = vmatprep.subr.mxu0 0.0
    %3876 = vmatpush1.msra.mxu0 %v3639
    %3877 = vmatprep.mubr.f32.mxu0 %v3605
    %3878 = vmatmul.mubr.f32.gmra.mrb[0].mxu0 %v3604
    %v3879 = vpop.f32.mrb[0].mxu0
    %v3880 = vadd.f32 0.0, %v3879
    %v3881 = vpop.f32.mrb[0].mxu0
    %3882 = vdwg.mxu0
    %3883 = vmatprep.subr.mxu0 0.0
    %3884 = vmatpush1.msra.mxu0 %v3640
    %3885 = vmatprep.subr.mxu0 0.0
    %3886 = vmatpush1.msra.mxu0 %v3641
    %3887 = vmatprep.subr.mxu0 0.0
    %3888 = vmatpush1.msra.mxu0 %v3642
    %3889 = vmatprep.subr.mxu0 0.0
    %3890 = vmatpush1.msra.mxu0 %v3643
    %3891 = vmatprep.subr.mxu0 0.0
    %3892 = vmatpush1.msra.mxu0 %v3644
    %3893 = vmatprep.subr.mxu0 0.0
    %3894 = vmatpush1.msra.mxu0 %v3645
    %3895 = vmatprep.subr.mxu0 0.0
    %3896 = vmatpush1.msra.mxu0 %v3646
    %3897 = vmatprep.subr.mxu0 0.0
    %3898 = vmatpush1.msra.mxu0 %v3647
    %3899 = vmatprep.subr.mxu0 0.0
    %3900 = vmatpush1.msra.mxu0 %v3648
    %3901 = vmatprep.subr.mxu0 0.0
    %3902 = vmatpush1.msra.mxu0 %v3649
    %3903 = vmatprep.subr.mxu0 0.0
    %3904 = vmatpush1.msra.mxu0 %v3650
    %3905 = vmatprep.subr.mxu0 0.0
    %3906 = vmatpush1.msra.mxu0 %v3651
    %3907 = vmatprep.subr.mxu0 0.0
    %3908 = vmatpush1.msra.mxu0 %v3652
    %3909 = vmatprep.subr.mxu0 0.0
    %3910 = vmatpush1.msra.mxu0 %v3653
    %3911 = vmatprep.subr.mxu0 0.0
    %3912 = vmatpush1.msra.mxu0 %v3654
    %3913 = vmatprep.subr.mxu0 0.0
    %3914 = vmatpush1.msra.mxu0 %v3655
    %3915 = vmatprep.subr.mxu0 0.0
    %3916 = vmatpush1.msra.mxu0 %v3656
    %3917 = vmatprep.subr.mxu0 0.0
    %3918 = vmatpush1.msra.mxu0 %v3657
    %3919 = vmatprep.subr.mxu0 0.0
    %3920 = vmatpush1.msra.mxu0 %v3658
    %3921 = vmatprep.subr.mxu0 0.0
    %3922 = vmatpush1.msra.mxu0 %v3659
    %3923 = vmatprep.subr.mxu0 0.0
    %3924 = vmatpush1.msra.mxu0 %v3660
    %3925 = vmatprep.subr.mxu0 0.0
    %3926 = vmatpush1.msra.mxu0 %v3661
    %3927 = vmatprep.subr.mxu0 0.0
    %3928 = vmatpush1.msra.mxu0 %v3662
    %3929 = vmatprep.subr.mxu0 0.0
    %3930 = vmatpush1.msra.mxu0 %v3663
    %3931 = vmatprep.subr.mxu0 0.0
    %3932 = vmatpush1.msra.mxu0 %v3664
    %3933 = vmatprep.subr.mxu0 0.0
    %3934 = vmatpush1.msra.mxu0 %v3665
    %3935 = vmatprep.subr.mxu0 0.0
    %3936 = vmatpush1.msra.mxu0 %v3666
    %3937 = vmatprep.subr.mxu0 0.0
    %3938 = vmatpush1.msra.mxu0 %v3667
    %3939 = vmatprep.subr.mxu0 0.0
    %3940 = vmatpush1.msra.mxu0 %v3668
    %3941 = vmatprep.subr.mxu0 0.0
    %3942 = vmatpush1.msra.mxu0 %v3669
    %3943 = vmatprep.subr.mxu0 0.0
    %3944 = vmatpush1.msra.mxu0 %v3670
    %3945 = vmatprep.subr.mxu0 0.0
    %3946 = vmatpush1.msra.mxu0 %v3671
    %3947 = vmatprep.mubr.f32.mxu0 %v3607
    %3948 = vmatmul.mubr.f32.gmra.mrb[0].mxu0 %v3606
    %v3949 = vpop.f32.mrb[0].mxu0
    %v3950 = vadd.f32 %v3880, %v3949
    %v3951 = vpop.f32.mrb[0].mxu0
    %3952 = vdwg.mxu0
    %v3953 = vmul.f32 %v3950, 0.00048828125
    %v3954 = vmul.f32 %v3812, %v3812
    %v3955 = vsub.f32 %v3953, %v3954
    %v3956 = vld [vmem:[%s5] sm:$0x1]
    %v3957 = vadd.f32 %v3955, 1e-05
    %v3958 = vrsqrt.pop %v3957
    %v3959 = vmul.f32 %v3956, %v3958
    %v3960 = vld [vmem:[%s6] sm:$0x1]
    %v3961 = vmul.f32 %v3812, %v3959
    %v3962 = vsub.f32 %v3960, %v3961
    %v3963 = vld [vmem:[%s4] sm:$0xff]
    %v3964 = vld [vmem:[%s4 + $0x8] sm:$0xff]
    %v3965 = vld [vmem:[%s4 + $0x10] sm:$0xff]
    %v3966 = vld [vmem:[%s4 + $0x18] sm:$0xff]
    %v3967 = vld [vmem:[%s4 + $0x20] sm:$0xff]
    %v3968 = vld [vmem:[%s4 + $0x28] sm:$0xff]
    %v3969 = vld [vmem:[%s4 + $0x30] sm:$0xff]
    %v3970 = vld [vmem:[%s4 + $0x38] sm:$0xff]
    %vm3971 = vcmask 130048
    %v3973 = vsel %vm3971, %v3959, 0
    %3975 = vmatprep.subr.mxu0 %v3964
    %3976 = vmatpush1.msra.mxu0 %v3963
    %3977 = vmatprep.subr.mxu0 %v3968
    %3978 = vmatpush1.msra.mxu0 %v3967
    %3979 = vmatprep.subr.mxu0 0.0
    %3980 = vmatpush1.msra.mxu0 0.0
    %3981 = vmatprep.subr.mxu0 0.0
    %3982 = vmatpush1.msra.mxu0 0.0
    %3983 = vmatprep.subr.mxu0 0.0
    %3984 = vmatpush1.msra.mxu0 0.0
    %3985 = vmatprep.subr.mxu0 0.0
    %3986 = vmatpush1.msra.mxu0 0.0
    %3987 = vmatprep.subr.mxu0 0.0
    %3988 = vmatpush1.msra.mxu0 0.0
    %3989 = vmatprep.subr.mxu0 0.0
    %3990 = vmatpush1.msra.mxu0 0.0
    %3991 = vmatprep.subr.mxu0 0.0
    %3992 = vmatpush1.msra.mxu0 0.0
    %3993 = vmatprep.subr.mxu0 0.0
    %3994 = vmatpush1.msra.mxu0 0.0
    %3995 = vmatprep.subr.mxu0 0.0
    %3996 = vmatpush1.msra.mxu0 0.0
    %3997 = vmatprep.subr.mxu0 0.0
    %3998 = vmatpush1.msra.mxu0 0.0
    %3999 = vmatprep.subr.mxu0 0.0
    %4000 = vmatpush1.msra.mxu0 0.0
    %4001 = vmatprep.subr.mxu0 0.0
    %4002 = vmatpush1.msra.mxu0 0.0
    %4003 = vmatprep.subr.mxu0 0.0
    %4004 = vmatpush1.msra.mxu0 0.0
    %4005 = vmatprep.subr.mxu0 0.0
    %4006 = vmatpush1.msra.mxu0 0.0
    %4007 = vmatprep.subr.mxu0 0.0
    %4008 = vmatpush1.msra.mxu0 0.0
    %4009 = vmatprep.subr.mxu0 0.0
    %4010 = vmatpush1.msra.mxu0 0.0
    %4011 = vmatprep.subr.mxu0 0.0
    %4012 = vmatpush1.msra.mxu0 0.0
    %4013 = vmatprep.subr.mxu0 0.0
    %4014 = vmatpush1.msra.mxu0 0.0
    %4015 = vmatprep.subr.mxu0 0.0
    %4016 = vmatpush1.msra.mxu0 0.0
    %4017 = vmatprep.subr.mxu0 0.0
    %4018 = vmatpush1.msra.mxu0 0.0
    %4019 = vmatprep.subr.mxu0 0.0
    %4020 = vmatpush1.msra.mxu0 0.0
    %4021 = vmatprep.subr.mxu0 0.0
    %4022 = vmatpush1.msra.mxu0 0.0
    %4023 = vmatprep.subr.mxu0 0.0
    %4024 = vmatpush1.msra.mxu0 0.0
    %4025 = vmatprep.subr.mxu0 0.0
    %4026 = vmatpush1.msra.mxu0 0.0
    %4027 = vmatprep.subr.mxu0 0.0
    %4028 = vmatpush1.msra.mxu0 0.0
    %4029 = vmatprep.subr.mxu0 0.0
    %4030 = vmatpush1.msra.mxu0 0.0
    %4031 = vmatprep.subr.mxu0 0.0
    %4032 = vmatpush1.msra.mxu0 0.0
    %4033 = vmatprep.subr.mxu0 0.0
    %4034 = vmatpush1.msra.mxu0 0.0
    %4035 = vmatprep.subr.mxu0 0.0
    %4036 = vmatpush1.msra.mxu0 0.0
    %4037 = vmatprep.subr.mxu0 0.0
    %4038 = vmatpush1.msra.mxu0 0.0
    %4039 = vmatprep.mubr.f32.mxu0 0.0
    %4040 = vmatmul.mubr.f32.gmra.mrb[0].mxu0 %v3973
    %v4041 = vpop.f32.mrb[0].mxu0
    %v4042 = vadd.f32 0.0, %v4041
    %v4043 = vpop.f32.mrb[0].mxu0
    %v4044 = vadd.f32 0.0, %v4043
    %4045 = vdwg.mxu0
    %4046 = vmatprep.subr.mxu0 %v3966
    %4047 = vmatpush1.msra.mxu0 %v3965
    %4048 = vmatprep.subr.mxu0 %v3970
    %4049 = vmatpush1.msra.mxu0 %v3969
    %4050 = vmatprep.subr.mxu0 0.0
    %4051 = vmatpush1.msra.mxu0 0.0
    %4052 = vmatprep.subr.mxu0 0.0
    %4053 = vmatpush1.msra.mxu0 0.0
    %4054 = vmatprep.subr.mxu0 0.0
    %4055 = vmatpush1.msra.mxu0 0.0
    %4056 = vmatprep.subr.mxu0 0.0
    %4057 = vmatpush1.msra.mxu0 0.0
    %4058 = vmatprep.subr.mxu0 0.0
    %4059 = vmatpush1.msra.mxu0 0.0
    %4060 = vmatprep.subr.mxu0 0.0
    %4061 = vmatpush1.msra.mxu0 0.0
    %4062 = vmatprep.subr.mxu0 0.0
    %4063 = vmatpush1.msra.mxu0 0.0
    %4064 = vmatprep.subr.mxu0 0.0
    %4065 = vmatpush1.msra.mxu0 0.0
    %4066 = vmatprep.subr.mxu0 0.0
    %4067 = vmatpush1.msra.mxu0 0.0
    %4068 = vmatprep.subr.mxu0 0.0
    %4069 = vmatpush1.msra.mxu0 0.0
    %4070 = vmatprep.subr.mxu0 0.0
    %4071 = vmatpush1.msra.mxu0 0.0
    %4072 = vmatprep.subr.mxu0 0.0
    %4073 = vmatpush1.msra.mxu0 0.0
    %4074 = vmatprep.subr.mxu0 0.0
    %4075 = vmatpush1.msra.mxu0 0.0
    %4076 = vmatprep.subr.mxu0 0.0
    %4077 = vmatpush1.msra.mxu0 0.0
    %4078 = vmatprep.subr.mxu0 0.0
    %4079 = vmatpush1.msra.mxu0 0.0
    %4080 = vmatprep.subr.mxu0 0.0
    %4081 = vmatpush1.msra.mxu0 0.0
    %4082 = vmatprep.subr.mxu0 0.0
    %4083 = vmatpush1.msra.mxu0 0.0
    %4084 = vmatprep.subr.mxu0 0.0
    %4085 = vmatpush1.msra.mxu0 0.0
    %4086 = vmatprep.subr.mxu0 0.0
    %4087 = vmatpush1.msra.mxu0 0.0
    %4088 = vmatprep.subr.mxu0 0.0
    %4089 = vmatpush1.msra.mxu0 0.0
    %4090 = vmatprep.subr.mxu0 0.0
    %4091 = vmatpush1.msra.mxu0 0.0
    %4092 = vmatprep.subr.mxu0 0.0
    %4093 = vmatpush1.msra.mxu0 0.0
    %4094 = vmatprep.subr.mxu0 0.0
    %4095 = vmatpush1.msra.mxu0 0.0
    %4096 = vmatprep.subr.mxu0 0.0
    %4097 = vmatpush1.msra.mxu0 0.0
    %4098 = vmatprep.subr.mxu0 0.0
    %4099 = vmatpush1.msra.mxu0 0.0
    %4100 = vmatprep.subr.mxu0 0.0
    %4101 = vmatpush1.msra.mxu0 0.0
    %4102 = vmatprep.subr.mxu0 0.0
    %4103 = vmatpush1.msra.mxu0 0.0
    %4104 = vmatprep.subr.mxu0 0.0
    %4105 = vmatpush1.msra.mxu0 0.0
    %4106 = vmatprep.subr.mxu0 0.0
    %4107 = vmatpush1.msra.mxu0 0.0
    %4108 = vmatprep.subr.mxu0 0.0
    %4109 = vmatpush1.msra.mxu0 0.0
    %4110 = vmatprep.mubr.f32.mxu0 0.0
    %4111 = vmatmul.mubr.f32.gmra.mrb[0].mxu0 %v3973
    %v4112 = vpop.f32.mrb[0].mxu0
    %v4113 = vadd.f32 0.0, %v4112
    %v4114 = vpop.f32.mrb[0].mxu0
    %v4115 = vadd.f32 0.0, %v4114
    %4116 = vdwg.mxu0
    %v4118 = vsel %vm3971, %v3962, 0
    %4120 = vmatprep.subr.mxu0 %v3964
    %4121 = vmatpush1.msra.mxu0 %v3963
    %4122 = vmatprep.subr.mxu0 %v3968
    %4123 = vmatpush1.msra.mxu0 %v3967
    %4124 = vmatprep.subr.mxu0 0.0
    %4125 = vmatpush1.msra.mxu0 0.0
    %4126 = vmatprep.subr.mxu0 0.0
    %4127 = vmatpush1.msra.mxu0 0.0
    %4128 = vmatprep.subr.mxu0 0.0
    %4129 = vmatpush1.msra.mxu0 0.0
    %4130 = vmatprep.subr.mxu0 0.0
    %4131 = vmatpush1.msra.mxu0 0.0
    %4132 = vmatprep.subr.mxu0 0.0
    %4133 = vmatpush1.msra.mxu0 0.0
    %4134 = vmatprep.subr.mxu0 0.0
    %4135 = vmatpush1.msra.mxu0 0.0
    %4136 = vmatprep.subr.mxu0 0.0
    %4137 = vmatpush1.msra.mxu0 0.0
    %4138 = vmatprep.subr.mxu0 0.0
    %4139 = vmatpush1.msra.mxu0 0.0
    %4140 = vmatprep.subr.mxu0 0.0
    %4141 = vmatpush1.msra.mxu0 0.0
    %4142 = vmatprep.subr.mxu0 0.0
    %4143 = vmatpush1.msra.mxu0 0.0
    %4144 = vmatprep.subr.mxu0 0.0
    %4145 = vmatpush1.msra.mxu0 0.0
    %4146 = vmatprep.subr.mxu0 0.0
    %4147 = vmatpush1.msra.mxu0 0.0
    %4148 = vmatprep.subr.mxu0 0.0
    %4149 = vmatpush1.msra.mxu0 0.0
    %4150 = vmatprep.subr.mxu0 0.0
    %4151 = vmatpush1.msra.mxu0 0.0
    %4152 = vmatprep.subr.mxu0 0.0
    %4153 = vmatpush1.msra.mxu0 0.0
    %4154 = vmatprep.subr.mxu0 0.0
    %4155 = vmatpush1.msra.mxu0 0.0
    %4156 = vmatprep.subr.mxu0 0.0
    %4157 = vmatpush1.msra.mxu0 0.0
    %4158 = vmatprep.subr.mxu0 0.0
    %4159 = vmatpush1.msra.mxu0 0.0
    %4160 = vmatprep.subr.mxu0 0.0
    %4161 = vmatpush1.msra.mxu0 0.0
    %4162 = vmatprep.subr.mxu0 0.0
    %4163 = vmatpush1.msra.mxu0 0.0
    %4164 = vmatprep.subr.mxu0 0.0
    %4165 = vmatpush1.msra.mxu0 0.0
    %4166 = vmatprep.subr.mxu0 0.0
    %4167 = vmatpush1.msra.mxu0 0.0
    %4168 = vmatprep.subr.mxu0 0.0
    %4169 = vmatpush1.msra.mxu0 0.0
    %4170 = vmatprep.subr.mxu0 0.0
    %4171 = vmatpush1.msra.mxu0 0.0
    %4172 = vmatprep.subr.mxu0 0.0
    %4173 = vmatpush1.msra.mxu0 0.0
    %4174 = vmatprep.subr.mxu0 0.0
    %4175 = vmatpush1.msra.mxu0 0.0
    %4176 = vmatprep.subr.mxu0 0.0
    %4177 = vmatpush1.msra.mxu0 0.0
    %4178 = vmatprep.subr.mxu0 0.0
    %4179 = vmatpush1.msra.mxu0 0.0
    %4180 = vmatprep.subr.mxu0 0.0
    %4181 = vmatpush1.msra.mxu0 0.0
    %4182 = vmatprep.subr.mxu0 0.0
    %4183 = vmatpush1.msra.mxu0 0.0
    %4184 = vmatprep.mubr.f32.mxu0 0.0
    %4185 = vmatmul.mubr.f32.gmra.mrb[0].mxu0 %v4118
    %v4186 = vpop.f32.mrb[0].mxu0
    %v4187 = vadd.f32 0.0, %v4186
    %v4188 = vpop.f32.mrb[0].mxu0
    %v4189 = vadd.f32 0.0, %v4188
    %4190 = vdwg.mxu0
    %4191 = vmatprep.subr.mxu0 %v3966
    %4192 = vmatpush1.msra.mxu0 %v3965
    %4193 = vmatprep.subr.mxu0 %v3970
    %4194 = vmatpush1.msra.mxu0 %v3969
    %4195 = vmatprep.subr.mxu0 0.0
    %4196 = vmatpush1.msra.mxu0 0.0
    %4197 = vmatprep.subr.mxu0 0.0
    %4198 = vmatpush1.msra.mxu0 0.0
    %4199 = vmatprep.subr.mxu0 0.0
    %4200 = vmatpush1.msra.mxu0 0.0
    %4201 = vmatprep.subr.mxu0 0.0
    %4202 = vmatpush1.msra.mxu0 0.0
    %4203 = vmatprep.subr.mxu0 0.0
    %4204 = vmatpush1.msra.mxu0 0.0
    %4205 = vmatprep.subr.mxu0 0.0
    %4206 = vmatpush1.msra.mxu0 0.0
    %4207 = vmatprep.subr.mxu0 0.0
    %4208 = vmatpush1.msra.mxu0 0.0
    %4209 = vmatprep.subr.mxu0 0.0
    %4210 = vmatpush1.msra.mxu0 0.0
    %4211 = vmatprep.subr.mxu0 0.0
    %4212 = vmatpush1.msra.mxu0 0.0
    %4213 = vmatprep.subr.mxu0 0.0
    %4214 = vmatpush1.msra.mxu0 0.0
    %4215 = vmatprep.subr.mxu0 0.0
    %4216 = vmatpush1.msra.mxu0 0.0
    %4217 = vmatprep.subr.mxu0 0.0
    %4218 = vmatpush1.msra.mxu0 0.0
    %4219 = vmatprep.subr.mxu0 0.0
    %4220 = vmatpush1.msra.mxu0 0.0
    %4221 = vmatprep.subr.mxu0 0.0
    %4222 = vmatpush1.msra.mxu0 0.0
    %4223 = vmatprep.subr.mxu0 0.0
    %4224 = vmatpush1.msra.mxu0 0.0
    %4225 = vmatprep.subr.mxu0 0.0
    %4226 = vmatpush1.msra.mxu0 0.0
    %4227 = vmatprep.subr.mxu0 0.0
    %4228 = vmatpush1.msra.mxu0 0.0
    %4229 = vmatprep.subr.mxu0 0.0
    %4230 = vmatpush1.msra.mxu0 0.0
    %4231 = vmatprep.subr.mxu0 0.0
    %4232 = vmatpush1.msra.mxu0 0.0
    %4233 = vmatprep.subr.mxu0 0.0
    %4234 = vmatpush1.msra.mxu0 0.0
    %4235 = vmatprep.subr.mxu0 0.0
    %4236 = vmatpush1.msra.mxu0 0.0
    %4237 = vmatprep.subr.mxu0 0.0
    %4238 = vmatpush1.msra.mxu0 0.0
    %4239 = vmatprep.subr.mxu0 0.0
    %4240 = vmatpush1.msra.mxu0 0.0
    %4241 = vmatprep.subr.mxu0 0.0
    %4242 = vmatpush1.msra.mxu0 0.0
    %4243 = vmatprep.subr.mxu0 0.0
    %4244 = vmatpush1.msra.mxu0 0.0
    %4245 = vmatprep.subr.mxu0 0.0
    %4246 = vmatpush1.msra.mxu0 0.0
    %4247 = vmatprep.subr.mxu0 0.0
    %4248 = vmatpush1.msra.mxu0 0.0
    %4249 = vmatprep.subr.mxu0 0.0
    %4250 = vmatpush1.msra.mxu0 0.0
    %4251 = vmatprep.subr.mxu0 0.0
    %4252 = vmatpush1.msra.mxu0 0.0
    %4253 = vmatprep.subr.mxu0 0.0
    %4254 = vmatpush1.msra.mxu0 0.0
    %4255 = vmatprep.mubr.f32.mxu0 0.0
    %4256 = vmatmul.mubr.f32.gmra.mrb[0].mxu0 %v4118
    %v4257 = vpop.f32.mrb[0].mxu0
    %v4258 = vadd.f32 0.0, %v4257
    %v4259 = vpop.f32.mrb[0].mxu0
    %v4260 = vadd.f32 0.0, %v4259
    %4261 = vdwg.mxu0
    %v4262 = vlaneseq
    %v4263 = vshrl.u32 %v4262, 7
    %v4264 = vsub.s32 0, %v4263
    %v4265 = vrot.slane %v4042, %v4264
    %v4266 = vlaneseq
    %v4267 = vshrl.u32 %v4266, 7
    %v4268 = vsub.s32 0, %v4267
    %v4269 = vrot.slane %v4044, %v4268
    %v4270 = vlaneseq
    %v4271 = vshrl.u32 %v4270, 7
    %v4272 = vsub.s32 0, %v4271
    %v4273 = vrot.slane %v4113, %v4272
    %v4274 = vlaneseq
    %v4275 = vshrl.u32 %v4274, 7
    %v4276 = vsub.s32 0, %v4275
    %v4277 = vrot.slane %v4115, %v4276
    %v4278 = vmul.f32 %v3118, %v4265
    %v4279 = vmul.f32 %v3120, %v4269
    %v4280 = vmul.f32 %v3207, %v4273
    %v4281 = vmul.f32 %v3209, %v4277
    %v4282 = vmul.f32 %v3124, %v4265
    %v4283 = vmul.f32 %v3126, %v4269
    %v4284 = vmul.f32 %v3213, %v4273
    %v4285 = vmul.f32 %v3215, %v4277
    %v4286 = vmul.f32 %v3130, %v4265
    %v4287 = vmul.f32 %v3132, %v4269
    %v4288 = vmul.f32 %v3219, %v4273
    %v4289 = vmul.f32 %v3221, %v4277
    %v4290 = vmul.f32 %v3136, %v4265
    %v4291 = vmul.f32 %v3138, %v4269
    %v4292 = vmul.f32 %v3225, %v4273
    %v4293 = vmul.f32 %v3227, %v4277
    %v4294 = vlaneseq
    %v4295 = vshrl.u32 %v4294, 7
    %v4296 = vsub.s32 0, %v4295
    %v4297 = vrot.slane %v4187, %v4296
    %v4298 = vlaneseq
    %v4299 = vshrl.u32 %v4298, 7
    %v4300 = vsub.s32 0, %v4299
    %v4301 = vrot.slane %v4189, %v4300
    %v4302 = vlaneseq
    %v4303 = vshrl.u32 %v4302, 7
    %v4304 = vsub.s32 0, %v4303
    %v4305 = vrot.slane %v4258, %v4304
    %v4306 = vlaneseq
    %v4307 = vshrl.u32 %v4306, 7
    %v4308 = vsub.s32 0, %v4307
    %v4309 = vrot.slane %v4260, %v4308
    %v4310 = vadd.f32 %v4278, %v4297
    %v4311 = vadd.f32 %v4279, %v4301
    %v4312 = vadd.f32 %v4280, %v4305
    %v4313 = vadd.f32 %v4281, %v4309
    %v4314 = vadd.f32 %v4282, %v4297
    %v4315 = vadd.f32 %v4283, %v4301
    %v4316 = vadd.f32 %v4284, %v4305
    %v4317 = vadd.f32 %v4285, %v4309
    %v4318 = vadd.f32 %v4286, %v4297
    %v4319 = vadd.f32 %v4287, %v4301
    %v4320 = vadd.f32 %v4288, %v4305
    %v4321 = vadd.f32 %v4289, %v4309
    %v4322 = vadd.f32 %v4290, %v4297
    %v4323 = vadd.f32 %v4291, %v4301
    %v4324 = vadd.f32 %v4292, %v4305
    %v4325 = vadd.f32 %v4293, %v4309
    %v4326 = vmul.f32 %v3313, %v4265
    %v4327 = vmul.f32 %v3315, %v4269
    %v4328 = vmul.f32 %v3402, %v4273
    %v4329 = vmul.f32 %v3404, %v4277
    %v4330 = vmul.f32 %v3319, %v4265
    %v4331 = vmul.f32 %v3321, %v4269
    %v4332 = vmul.f32 %v3408, %v4273
    %v4333 = vmul.f32 %v3410, %v4277
    %v4334 = vmul.f32 %v3325, %v4265
    %v4335 = vmul.f32 %v3327, %v4269
    %v4336 = vmul.f32 %v3414, %v4273
    %v4337 = vmul.f32 %v3416, %v4277
    %v4338 = vmul.f32 %v3331, %v4265
    %v4339 = vmul.f32 %v3333, %v4269
    %v4340 = vmul.f32 %v3420, %v4273
    %v4341 = vmul.f32 %v3422, %v4277
    %v4342 = vadd.f32 %v4326, %v4297
    %v4343 = vadd.f32 %v4327, %v4301
    %v4344 = vadd.f32 %v4328, %v4305
    %v4345 = vadd.f32 %v4329, %v4309
    %v4346 = vadd.f32 %v4330, %v4297
    %v4347 = vadd.f32 %v4331, %v4301
    %v4348 = vadd.f32 %v4332, %v4305
    %v4349 = vadd.f32 %v4333, %v4309
    %v4350 = vadd.f32 %v4334, %v4297
    %v4351 = vadd.f32 %v4335, %v4301
    %v4352 = vadd.f32 %v4336, %v4305
    %v4353 = vadd.f32 %v4337, %v4309
    %v4354 = vadd.f32 %v4338, %v4297
    %v4355 = vadd.f32 %v4339, %v4301
    %v4356 = vadd.f32 %v4340, %v4305
    %v4357 = vadd.f32 %v4341, %v4309
    %v4358 = vmax.f32 %v4310, %v4342
    %v4359 = vmax.f32 %v4311, %v4343
    %v4360 = vmax.f32 %v4312, %v4344
    %v4361 = vmax.f32 %v4313, %v4345
    %v4362 = vmax.f32 %v4314, %v4346
    %v4363 = vmax.f32 %v4315, %v4347
    %v4364 = vmax.f32 %v4316, %v4348
    %v4365 = vmax.f32 %v4317, %v4349
    %v4366 = vmax.f32 %v4318, %v4350
    %v4367 = vmax.f32 %v4319, %v4351
    %v4368 = vmax.f32 %v4320, %v4352
    %v4369 = vmax.f32 %v4321, %v4353
    %v4370 = vmax.f32 %v4322, %v4354
    %v4371 = vmax.f32 %v4323, %v4355
    %v4372 = vmax.f32 %v4324, %v4356
    %v4373 = vmax.f32 %v4325, %v4357
    %v4374 = vmax.f32 %v4358, %v4360
    %v4375 = vmax.f32 %v4359, %v4361
    %v4376 = vmax.f32 %v4362, %v4364
    %v4377 = vmax.f32 %v4363, %v4365
    %v4378 = vmax.f32 %v4366, %v4368
    %v4379 = vmax.f32 %v4367, %v4369
    %v4380 = vmax.f32 %v4370, %v4372
    %v4381 = vmax.f32 %v4371, %v4373
    %v4382 = vmax.f32 %v4374, 0.0
    %v4383 = vmax.f32 %v4375, 0.0
    %v4384 = vmax.f32 %v4376, 0.0
    %v4385 = vmax.f32 %v4377, 0.0
    %v4386 = vmax.f32 %v4378, 0.0
    %v4387 = vmax.f32 %v4379, 0.0
    %v4388 = vmax.f32 %v4380, 0.0
    %v4389 = vmax.f32 %v4381, 0.0
    %4390 = vst [vmem:[#allocation2] sm:$0xff] %v4382
    %4391 = vst [vmem:[#allocation2 + $0x8] sm:$0xff] %v4383
    %4392 = vst [vmem:[#allocation2 + $0x10] sm:$0xff] %v4384
    %4393 = vst [vmem:[#allocation2 + $0x18] sm:$0xff] %v4385
    %4394 = vst [vmem:[#allocation2 + $0x20] sm:$0xff] %v4386
    %4395 = vst [vmem:[#allocation2 + $0x28] sm:$0xff] %v4387
    %4396 = vst [vmem:[#allocation2 + $0x30] sm:$0xff] %v4388
    %4397 = vst [vmem:[#allocation2 + $0x38] sm:$0xff] %v4389
    %v4398 = vld [vmem:[#allocation2] sm:$0xff]
    %v4399 = vld [vmem:[#allocation2 + $0x8] sm:$0xff]
    %v4400 = vld [vmem:[#allocation2 + $0x10] sm:$0xff]
    %v4401 = vld [vmem:[#allocation2 + $0x18] sm:$0xff]
    %v4402 = vld [vmem:[#allocation2 + $0x20] sm:$0xff]
    %v4403 = vld [vmem:[#allocation2 + $0x28] sm:$0xff]
    %v4404 = vld [vmem:[#allocation2 + $0x30] sm:$0xf]
    %v4405 = vld [vmem:[#allocation2 + $0x38] sm:$0xf]
    %v4406 = vpack.c.bf16 %v4400, %v4398
    %v4407 = vpack.c.bf16 %v4401, %v4399
    %v4408 = vpack.c.bf16 %v4404, %v4402
    %v4409 = vpack.c.bf16 %v4405, %v4403
    %v4410 = vld [vmem:[%s7] sm:$0xff]
    %v4411 = vld [vmem:[%s7 + $0x8] sm:$0xff]
    %v4412 = vld [vmem:[%s7 + $0x10] sm:$0xff]
    %v4413 = vld [vmem:[%s7 + $0x18] sm:$0xff]
    %v4414 = vld [vmem:[%s7 + $0x20] sm:$0xff]
    %v4415 = vld [vmem:[%s7 + $0x28] sm:$0xff]
    %v4416 = vld [vmem:[%s7 + $0x30] sm:$0xff]
    %v4417 = vld [vmem:[%s7 + $0x38] sm:$0xff]
    %v4418 = vld [vmem:[%s7 + $0x40] sm:$0xff]
    %v4419 = vld [vmem:[%s7 + $0x48] sm:$0xff]
    %v4420 = vld [vmem:[%s7 + $0x50] sm:$0xff]
    %v4421 = vld [vmem:[%s7 + $0x58] sm:$0xff]
    %v4422 = vld [vmem:[%s7 + $0x60] sm:$0xff]
    %v4423 = vld [vmem:[%s7 + $0x68] sm:$0xff]
    %v4424 = vld [vmem:[%s7 + $0x70] sm:$0xff]
    %v4425 = vld [vmem:[%s7 + $0x78] sm:$0xff]
    %v4426 = vld [vmem:[%s7 + $0x80] sm:$0xff]
    %v4427 = vld [vmem:[%s7 + $0x88] sm:$0xff]
    %v4428 = vld [vmem:[%s7 + $0x90] sm:$0xff]
    %v4429 = vld [vmem:[%s7 + $0x98] sm:$0xff]
    %v4430 = vld [vmem:[%s7 + $0xa0] sm:$0xff]
    %v4431 = vld [vmem:[%s7 + $0xa8] sm:$0xff]
    %v4432 = vld [vmem:[%s7 + $0xb0] sm:$0xff]
    %v4433 = vld [vmem:[%s7 + $0xb8] sm:$0xff]
    %v4434 = vld [vmem:[%s7 + $0xc0] sm:$0xff]
    %v4435 = vld [vmem:[%s7 + $0xc8] sm:$0xff]
    %v4436 = vld [vmem:[%s7 + $0xd0] sm:$0xff]
    %v4437 = vld [vmem:[%s7 + $0xd8] sm:$0xff]
    %v4438 = vld [vmem:[%s7 + $0xe0] sm:$0xff]
    %v4439 = vld [vmem:[%s7 + $0xe8] sm:$0xff]
    %v4440 = vld [vmem:[%s7 + $0xf0] sm:$0xff]
    %v4441 = vld [vmem:[%s7 + $0xf8] sm:$0xff]
    %v4442 = vld [vmem:[%s7 + $0x100] sm:$0xff]
    %v4443 = vld [vmem:[%s7 + $0x108] sm:$0xff]
    %v4444 = vld [vmem:[%s7 + $0x110] sm:$0xff]
    %v4445 = vld [vmem:[%s7 + $0x118] sm:$0xff]
    %v4446 = vld [vmem:[%s7 + $0x120] sm:$0xff]
    %v4447 = vld [vmem:[%s7 + $0x128] sm:$0xff]
    %v4448 = vld [vmem:[%s7 + $0x130] sm:$0xff]
    %v4449 = vld [vmem:[%s7 + $0x138] sm:$0xff]
    %v4450 = vld [vmem:[%s7 + $0x140] sm:$0xff]
    %v4451 = vld [vmem:[%s7 + $0x148] sm:$0xff]
    %v4452 = vld [vmem:[%s7 + $0x150] sm:$0xff]
    %v4453 = vld [vmem:[%s7 + $0x158] sm:$0xff]
    %v4454 = vld [vmem:[%s7 + $0x160] sm:$0xff]
    %v4455 = vld [vmem:[%s7 + $0x168] sm:$0xff]
    %v4456 = vld [vmem:[%s7 + $0x170] sm:$0xff]
    %v4457 = vld [vmem:[%s7 + $0x178] sm:$0xff]
    %v4458 = vld [vmem:[%s7 + $0x180] sm:$0xff]
    %v4459 = vld [vmem:[%s7 + $0x188] sm:$0xff]
    %v4460 = vld [vmem:[%s7 + $0x190] sm:$0xff]
    %v4461 = vld [vmem:[%s7 + $0x198] sm:$0xff]
    %v4462 = vld [vmem:[%s7 + $0x1a0] sm:$0xff]
    %v4463 = vld [vmem:[%s7 + $0x1a8] sm:$0xff]
    %v4464 = vld [vmem:[%s7 + $0x1b0] sm:$0xff]
    %v4465 = vld [vmem:[%s7 + $0x1b8] sm:$0xff]
    %v4466 = vld [vmem:[%s7 + $0x1c0] sm:$0xff]
    %v4467 = vld [vmem:[%s7 + $0x1c8] sm:$0xff]
    %v4468 = vld [vmem:[%s7 + $0x1d0] sm:$0xff]
    %v4469 = vld [vmem:[%s7 + $0x1d8] sm:$0xff]
    %v4470 = vld [vmem:[%s7 + $0x1e0] sm:$0xff]
    %v4471 = vld [vmem:[%s7 + $0x1e8] sm:$0xff]
    %v4472 = vld [vmem:[%s7 + $0x1f0] sm:$0xff]
    %v4473 = vld [vmem:[%s7 + $0x1f8] sm:$0xff]
    %v4474 = vld [vmem:[#allocation2] sm:$0xfe]
    %v4475 = vld [vmem:[#allocation2 + $0x8] sm:$0xfe]
    %v4476 = vld [vmem:[#allocation2 + $0x30] sm:$0x1f]
    %v4477 = vld [vmem:[#allocation2 + $0x38] sm:$0x1f]
    %v4478 = vpack.c.bf16 %v4400, %v4474
    %v4479 = vpack.c.bf16 %v4401, %v4475
    %v4480 = vpack.c.bf16 %v4476, %v4402
    %v4481 = vpack.c.bf16 %v4477, %v4403
    %s4482 = scalar_lea.vmem %s7, 512
    %v4483 = vld [vmem:[%s4482] sm:$0xff]
    %v4484 = vld [vmem:[%s4482 + $0x8] sm:$0xff]
    %v4485 = vld [vmem:[%s4482 + $0x10] sm:$0xff]
    %v4486 = vld [vmem:[%s4482 + $0x18] sm:$0xff]
    %v4487 = vld [vmem:[%s4482 + $0x20] sm:$0xff]
    %v4488 = vld [vmem:[%s4482 + $0x28] sm:$0xff]
    %v4489 = vld [vmem:[%s4482 + $0x30] sm:$0xff]
    %v4490 = vld [vmem:[%s4482 + $0x38] sm:$0xff]
    %v4491 = vld [vmem:[%s4482 + $0x40] sm:$0xff]
    %v4492 = vld [vmem:[%s4482 + $0x48] sm:$0xff]
    %v4493 = vld [vmem:[%s4482 + $0x50] sm:$0xff]
    %v4494 = vld [vmem:[%s4482 + $0x58] sm:$0xff]
    %v4495 = vld [vmem:[%s4482 + $0x60] sm:$0xff]
    %v4496 = vld [vmem:[%s4482 + $0x68] sm:$0xff]
    %v4497 = vld [vmem:[%s4482 + $0x70] sm:$0xff]
    %v4498 = vld [vmem:[%s4482 + $0x78] sm:$0xff]
    %v4499 = vld [vmem:[%s4482 + $0x80] sm:$0xff]
    %v4500 = vld [vmem:[%s4482 + $0x88] sm:$0xff]
    %v4501 = vld [vmem:[%s4482 + $0x90] sm:$0xff]
    %v4502 = vld [vmem:[%s4482 + $0x98] sm:$0xff]
    %v4503 = vld [vmem:[%s4482 + $0xa0] sm:$0xff]
    %v4504 = vld [vmem:[%s4482 + $0xa8] sm:$0xff]
    %v4505 = vld [vmem:[%s4482 + $0xb0] sm:$0xff]
    %v4506 = vld [vmem:[%s4482 + $0xb8] sm:$0xff]
    %v4507 = vld [vmem:[%s4482 + $0xc0] sm:$0xff]
    %v4508 = vld [vmem:[%s4482 + $0xc8] sm:$0xff]
    %v4509 = vld [vmem:[%s4482 + $0xd0] sm:$0xff]
    %v4510 = vld [vmem:[%s4482 + $0xd8] sm:$0xff]
    %v4511 = vld [vmem:[%s4482 + $0xe0] sm:$0xff]
    %v4512 = vld [vmem:[%s4482 + $0xe8] sm:$0xff]
    %v4513 = vld [vmem:[%s4482 + $0xf0] sm:$0xff]
    %v4514 = vld [vmem:[%s4482 + $0xf8] sm:$0xff]
    %v4515 = vld [vmem:[%s4482 + $0x100] sm:$0xff]
    %v4516 = vld [vmem:[%s4482 + $0x108] sm:$0xff]
    %v4517 = vld [vmem:[%s4482 + $0x110] sm:$0xff]
    %v4518 = vld [vmem:[%s4482 + $0x118] sm:$0xff]
    %v4519 = vld [vmem:[%s4482 + $0x120] sm:$0xff]
    %v4520 = vld [vmem:[%s4482 + $0x128] sm:$0xff]
    %v4521 = vld [vmem:[%s4482 + $0x130] sm:$0xff]
    %v4522 = vld [vmem:[%s4482 + $0x138] sm:$0xff]
    %v4523 = vld [vmem:[%s4482 + $0x140] sm:$0xff]
    %v4524 = vld [vmem:[%s4482 + $0x148] sm:$0xff]
    %v4525 = vld [vmem:[%s4482 + $0x150] sm:$0xff]
    %v4526 = vld [vmem:[%s4482 + $0x158] sm:$0xff]
    %v4527 = vld [vmem:[%s4482 + $0x160] sm:$0xff]
    %v4528 = vld [vmem:[%s4482 + $0x168] sm:$0xff]
    %v4529 = vld [vmem:[%s4482 + $0x170] sm:$0xff]
    %v4530 = vld [vmem:[%s4482 + $0x178] sm:$0xff]
    %v4531 = vld [vmem:[%s4482 + $0x180] sm:$0xff]
    %v4532 = vld [vmem:[%s4482 + $0x188] sm:$0xff]
    %v4533 = vld [vmem:[%s4482 + $0x190] sm:$0xff]
    %v4534 = vld [vmem:[%s4482 + $0x198] sm:$0xff]
    %v4535 = vld [vmem:[%s4482 + $0x1a0] sm:$0xff]
    %v4536 = vld [vmem:[%s4482 + $0x1a8] sm:$0xff]
    %v4537 = vld [vmem:[%s4482 + $0x1b0] sm:$0xff]
    %v4538 = vld [vmem:[%s4482 + $0x1b8] sm:$0xff]
    %v4539 = vld [vmem:[%s4482 + $0x1c0] sm:$0xff]
    %v4540 = vld [vmem:[%s4482 + $0x1c8] sm:$0xff]
    %v4541 = vld [vmem:[%s4482 + $0x1d0] sm:$0xff]
    %v4542 = vld [vmem:[%s4482 + $0x1d8] sm:$0xff]
    %v4543 = vld [vmem:[%s4482 + $0x1e0] sm:$0xff]
    %v4544 = vld [vmem:[%s4482 + $0x1e8] sm:$0xff]
    %v4545 = vld [vmem:[%s4482 + $0x1f0] sm:$0xff]
    %v4546 = vld [vmem:[%s4482 + $0x1f8] sm:$0xff]
    %v4548 = vshrl.u32 %v4478, 16
    %v4550 = vshll.u32 %v4478, 16
    %v4552 = vrot.slane %v4550, 1
    %v4553 = vor.u32 %v4548, %v4552
    %v4555 = vshll.u32 %v4480, 16
    %v4557 = vrot.slane %v4555, 1
    %v4558 = vsel %vm221, %v4553, %v4557
    %v4560 = vshrl.u32 %v4479, 16
    %v4562 = vshll.u32 %v4479, 16
    %v4564 = vrot.slane %v4562, 1
    %v4565 = vor.u32 %v4560, %v4564
    %v4567 = vshll.u32 %v4481, 16
    %v4569 = vrot.slane %v4567, 1
    %v4570 = vsel %vm221, %v4565, %v4569
    %v4571 = vshrl.u32 %v4480, 16
    %v4573 = vor.u32 %v4571, %v4557
    %v4574 = vshrl.u32 %v4481, 16
    %v4576 = vor.u32 %v4574, %v4569
    %v4645 = vunpack.c.l.b16 %v4483
    %v4646 = vunpack.c.h.b16 %v4483
    %v4647 = vunpack.c.l.b16 %v4484
    %v4648 = vunpack.c.h.b16 %v4484
    %v4649 = vunpack.c.l.b16 %v4485
    %v4650 = vunpack.c.h.b16 %v4485
    %v4651 = vunpack.c.l.b16 %v4486
    %v4652 = vunpack.c.h.b16 %v4486
    %v4653 = vunpack.c.l.b16 %v4487
    %v4654 = vunpack.c.h.b16 %v4487
    %v4655 = vunpack.c.l.b16 %v4488
    %v4656 = vunpack.c.h.b16 %v4488
    %v4657 = vunpack.c.l.b16 %v4489
    %v4658 = vunpack.c.h.b16 %v4489
    %v4659 = vunpack.c.l.b16 %v4490
    %v4660 = vunpack.c.h.b16 %v4490
    %v4661 = vunpack.c.l.b16 %v4491
    %v4662 = vunpack.c.h.b16 %v4491
    %v4663 = vunpack.c.l.b16 %v4492
    %v4664 = vunpack.c.h.b16 %v4492
    %v4665 = vunpack.c.l.b16 %v4493
    %v4666 = vunpack.c.h.b16 %v4493
    %v4667 = vunpack.c.l.b16 %v4494
    %v4668 = vunpack.c.h.b16 %v4494
    %v4669 = vunpack.c.l.b16 %v4495
    %v4670 = vunpack.c.h.b16 %v4495
    %v4671 = vunpack.c.l.b16 %v4496
    %v4672 = vunpack.c.h.b16 %v4496
    %v4673 = vunpack.c.l.b16 %v4497
    %v4674 = vunpack.c.h.b16 %v4497
    %v4675 = vunpack.c.l.b16 %v4498
    %v4676 = vunpack.c.h.b16 %v4498
    %v4677 = vunpack.c.l.b16 %v4499
    %v4678 = vunpack.c.h.b16 %v4499
    %v4679 = vunpack.c.l.b16 %v4500
    %v4680 = vunpack.c.h.b16 %v4500
    %v4681 = vunpack.c.l.b16 %v4501
    %v4682 = vunpack.c.h.b16 %v4501
    %v4683 = vunpack.c.l.b16 %v4502
    %v4684 = vunpack.c.h.b16 %v4502
    %v4685 = vunpack.c.l.b16 %v4503
    %v4686 = vunpack.c.h.b16 %v4503
    %v4687 = vunpack.c.l.b16 %v4504
    %v4688 = vunpack.c.h.b16 %v4504
    %v4689 = vunpack.c.l.b16 %v4505
    %v4690 = vunpack.c.h.b16 %v4505
    %v4691 = vunpack.c.l.b16 %v4506
    %v4692 = vunpack.c.h.b16 %v4506
    %v4693 = vunpack.c.l.b16 %v4507
    %v4694 = vunpack.c.h.b16 %v4507
    %v4695 = vunpack.c.l.b16 %v4508
    %v4696 = vunpack.c.h.b16 %v4508
    %v4697 = vunpack.c.l.b16 %v4509
    %v4698 = vunpack.c.h.b16 %v4509
    %v4699 = vunpack.c.l.b16 %v4510
    %v4700 = vunpack.c.h.b16 %v4510
    %v4701 = vunpack.c.l.b16 %v4511
    %v4702 = vunpack.c.h.b16 %v4511
    %v4703 = vunpack.c.l.b16 %v4512
    %v4704 = vunpack.c.h.b16 %v4512
    %v4705 = vunpack.c.l.b16 %v4513
    %v4706 = vunpack.c.h.b16 %v4513
    %v4707 = vunpack.c.l.b16 %v4514
    %v4708 = vunpack.c.h.b16 %v4514
    %v4709 = vunpack.c.l.b16 %v4515
    %v4710 = vunpack.c.h.b16 %v4515
    %v4711 = vunpack.c.l.b16 %v4516
    %v4712 = vunpack.c.h.b16 %v4516
    %v4713 = vunpack.c.l.b16 %v4517
    %v4714 = vunpack.c.h.b16 %v4517
    %v4715 = vunpack.c.l.b16 %v4518
    %v4716 = vunpack.c.h.b16 %v4518
    %v4717 = vunpack.c.l.b16 %v4519
    %v4718 = vunpack.c.h.b16 %v4519
    %v4719 = vunpack.c.l.b16 %v4520
    %v4720 = vunpack.c.h.b16 %v4520
    %v4721 = vunpack.c.l.b16 %v4521
    %v4722 = vunpack.c.h.b16 %v4521
    %v4723 = vunpack.c.l.b16 %v4522
    %v4724 = vunpack.c.h.b16 %v4522
    %v4725 = vunpack.c.l.b16 %v4523
    %v4726 = vunpack.c.h.b16 %v4523
    %v4727 = vunpack.c.l.b16 %v4524
    %v4728 = vunpack.c.h.b16 %v4524
    %v4729 = vunpack.c.l.b16 %v4525
    %v4730 = vunpack.c.h.b16 %v4525
    %v4731 = vunpack.c.l.b16 %v4526
    %v4732 = vunpack.c.h.b16 %v4526
    %v4733 = vunpack.c.l.b16 %v4527
    %v4734 = vunpack.c.h.b16 %v4527
    %v4735 = vunpack.c.l.b16 %v4528
    %v4736 = vunpack.c.h.b16 %v4528
    %v4737 = vunpack.c.l.b16 %v4529
    %v4738 = vunpack.c.h.b16 %v4529
    %v4739 = vunpack.c.l.b16 %v4530
    %v4740 = vunpack.c.h.b16 %v4530
    %v4741 = vunpack.c.l.b16 %v4531
    %v4742 = vunpack.c.h.b16 %v4531
    %v4743 = vunpack.c.l.b16 %v4532
    %v4744 = vunpack.c.h.b16 %v4532
    %v4745 = vunpack.c.l.b16 %v4533
    %v4746 = vunpack.c.h.b16 %v4533
    %v4747 = vunpack.c.l.b16 %v4534
    %v4748 = vunpack.c.h.b16 %v4534
    %v4749 = vunpack.c.l.b16 %v4535
    %v4750 = vunpack.c.h.b16 %v4535
    %v4751 = vunpack.c.l.b16 %v4536
    %v4752 = vunpack.c.h.b16 %v4536
    %v4753 = vunpack.c.l.b16 %v4537
    %v4754 = vunpack.c.h.b16 %v4537
    %v4755 = vunpack.c.l.b16 %v4538
    %v4756 = vunpack.c.h.b16 %v4538
    %v4757 = vunpack.c.l.b16 %v4539
    %v4758 = vunpack.c.h.b16 %v4539
    %v4759 = vunpack.c.l.b16 %v4540
    %v4760 = vunpack.c.h.b16 %v4540
    %v4761 = vunpack.c.l.b16 %v4541
    %v4762 = vunpack.c.h.b16 %v4541
    %v4763 = vunpack.c.l.b16 %v4542
    %v4764 = vunpack.c.h.b16 %v4542
    %v4765 = vunpack.c.l.b16 %v4543
    %v4766 = vunpack.c.h.b16 %v4543
    %v4767 = vunpack.c.l.b16 %v4544
    %v4768 = vunpack.c.h.b16 %v4544
    %v4769 = vunpack.c.l.b16 %v4545
    %v4770 = vunpack.c.h.b16 %v4545
    %v4771 = vunpack.c.l.b16 %v4546
    %v4772 = vunpack.c.h.b16 %v4546
    %v4773 = vpack.c.b16 %v4649, %v4645
    %v4774 = vpack.c.b16 %v4650, %v4646
    %v4775 = vpack.c.b16 %v4651, %v4647
    %v4776 = vpack.c.b16 %v4652, %v4648
    %v4777 = vpack.c.b16 %v4657, %v4653
    %v4778 = vpack.c.b16 %v4658, %v4654
    %v4779 = vpack.c.b16 %v4659, %v4655
    %v4780 = vpack.c.b16 %v4660, %v4656
    %v4781 = vpack.c.b16 %v4665, %v4661
    %v4782 = vpack.c.b16 %v4666, %v4662
    %v4783 = vpack.c.b16 %v4667, %v4663
    %v4784 = vpack.c.b16 %v4668, %v4664
    %v4785 = vpack.c.b16 %v4673, %v4669
    %v4786 = vpack.c.b16 %v4674, %v4670
    %v4787 = vpack.c.b16 %v4675, %v4671
    %v4788 = vpack.c.b16 %v4676, %v4672
    %v4789 = vpack.c.b16 %v4681, %v4677
    %v4790 = vpack.c.b16 %v4682, %v4678
    %v4791 = vpack.c.b16 %v4683, %v4679
    %v4792 = vpack.c.b16 %v4684, %v4680
    %v4793 = vpack.c.b16 %v4689, %v4685
    %v4794 = vpack.c.b16 %v4690, %v4686
    %v4795 = vpack.c.b16 %v4691, %v4687
    %v4796 = vpack.c.b16 %v4692, %v4688
    %v4797 = vpack.c.b16 %v4697, %v4693
    %v4798 = vpack.c.b16 %v4698, %v4694
    %v4799 = vpack.c.b16 %v4699, %v4695
    %v4800 = vpack.c.b16 %v4700, %v4696
    %v4801 = vpack.c.b16 %v4705, %v4701
    %v4802 = vpack.c.b16 %v4706, %v4702
    %v4803 = vpack.c.b16 %v4707, %v4703
    %v4804 = vpack.c.b16 %v4708, %v4704
    %v4805 = vpack.c.b16 %v4713, %v4709
    %v4806 = vpack.c.b16 %v4714, %v4710
    %v4807 = vpack.c.b16 %v4715, %v4711
    %v4808 = vpack.c.b16 %v4716, %v4712
    %v4809 = vpack.c.b16 %v4721, %v4717
    %v4810 = vpack.c.b16 %v4722, %v4718
    %v4811 = vpack.c.b16 %v4723, %v4719
    %v4812 = vpack.c.b16 %v4724, %v4720
    %v4813 = vpack.c.b16 %v4729, %v4725
    %v4814 = vpack.c.b16 %v4730, %v4726
    %v4815 = vpack.c.b16 %v4731, %v4727
    %v4816 = vpack.c.b16 %v4732, %v4728
    %v4817 = vpack.c.b16 %v4737, %v4733
    %v4818 = vpack.c.b16 %v4738, %v4734
    %v4819 = vpack.c.b16 %v4739, %v4735
    %v4820 = vpack.c.b16 %v4740, %v4736
    %v4821 = vpack.c.b16 %v4745, %v4741
    %v4822 = vpack.c.b16 %v4746, %v4742
    %v4823 = vpack.c.b16 %v4747, %v4743
    %v4824 = vpack.c.b16 %v4748, %v4744
    %v4825 = vpack.c.b16 %v4753, %v4749
    %v4826 = vpack.c.b16 %v4754, %v4750
    %v4827 = vpack.c.b16 %v4755, %v4751
    %v4828 = vpack.c.b16 %v4756, %v4752
    %v4829 = vpack.c.b16 %v4761, %v4757
    %v4830 = vpack.c.b16 %v4762, %v4758
    %v4831 = vpack.c.b16 %v4763, %v4759
    %v4832 = vpack.c.b16 %v4764, %v4760
    %v4833 = vpack.c.b16 %v4769, %v4765
    %v4834 = vpack.c.b16 %v4770, %v4766
    %v4835 = vpack.c.b16 %v4771, %v4767
    %v4836 = vpack.c.b16 %v4772, %v4768
    %4901 = vmatprep.subr.bf16.mxu0 %v4774
    %4902 = vmatpush1.bf16.msra.mxu0 %v4773
    %4903 = vmatprep.subr.bf16.mxu0 %v4778
    %4904 = vmatpush1.bf16.msra.mxu0 %v4777
    %4905 = vmatprep.subr.bf16.mxu0 %v4782
    %4906 = vmatpush1.bf16.msra.mxu0 %v4781
    %4907 = vmatprep.subr.bf16.mxu0 %v4786
    %4908 = vmatpush1.bf16.msra.mxu0 %v4785
    %4909 = vmatprep.subr.bf16.mxu0 %v4790
    %4910 = vmatpush1.bf16.msra.mxu0 %v4789
    %4911 = vmatprep.subr.bf16.mxu0 %v4794
    %4912 = vmatpush1.bf16.msra.mxu0 %v4793
    %4913 = vmatprep.subr.bf16.mxu0 %v4798
    %4914 = vmatpush1.bf16.msra.mxu0 %v4797
    %4915 = vmatprep.subr.bf16.mxu0 %v4802
    %4916 = vmatpush1.bf16.msra.mxu0 %v4801
    %4917 = vmatprep.subr.bf16.mxu0 %v4806
    %4918 = vmatpush1.bf16.msra.mxu0 %v4805
    %4919 = vmatprep.subr.bf16.mxu0 %v4810
    %4920 = vmatpush1.bf16.msra.mxu0 %v4809
    %4921 = vmatprep.subr.bf16.mxu0 %v4814
    %4922 = vmatpush1.bf16.msra.mxu0 %v4813
    %4923 = vmatprep.subr.bf16.mxu0 %v4818
    %4924 = vmatpush1.bf16.msra.mxu0 %v4817
    %4925 = vmatprep.subr.bf16.mxu0 %v4822
    %4926 = vmatpush1.bf16.msra.mxu0 %v4821
    %4927 = vmatprep.subr.bf16.mxu0 %v4826
    %4928 = vmatpush1.bf16.msra.mxu0 %v4825
    %4929 = vmatprep.subr.bf16.mxu0 %v4830
    %4930 = vmatpush1.bf16.msra.mxu0 %v4829
    %4931 = vmatprep.subr.bf16.mxu0 %v4834
    %4932 = vmatpush1.bf16.msra.mxu0 %v4833
    %4933 = vmatprep.mubr.bf16.mxu0 %v4570
    %4934 = vmatmul.mubr.bf16.gmra.mrb[0].mxu0 %v4558
    %v4935 = vpop.f32.mrb[0].mxu0
    %v4936 = vadd.f32 0.0, %v4935
    %v4937 = vpop.f32.mrb[0].mxu0
    %v4938 = vadd.f32 0.0, %v4937
    %v4939 = vpop.f32.mrb[0].mxu0
    %v4940 = vadd.f32 0.0, %v4939
    %v4941 = vpop.f32.mrb[0].mxu0
    %v4942 = vadd.f32 0.0, %v4941
    %4943 = vmatprep.mubr.bf16.mxu0 %v4576
    %4944 = vmatmul.mubr.bf16.gmra.mrb[0].mxu0 %v4573
    %v4945 = vpop.f32.mrb[0].mxu0
    %v4946 = vadd.f32 0.0, %v4945
    %v4947 = vpop.f32.mrb[0].mxu0
    %v4948 = vadd.f32 0.0, %v4947
    %v4949 = vpop.f32.mrb[0].mxu0
    %v4950 = vadd.f32 0.0, %v4949
    %v4951 = vpop.f32.mrb[0].mxu0
    %v4952 = vadd.f32 0.0, %v4951
    %4953 = vdwg.mxu0
    %4954 = vmatprep.subr.bf16.mxu0 %v4776
    %4955 = vmatpush1.bf16.msra.mxu0 %v4775
    %4956 = vmatprep.subr.bf16.mxu0 %v4780
    %4957 = vmatpush1.bf16.msra.mxu0 %v4779
    %4958 = vmatprep.subr.bf16.mxu0 %v4784
    %4959 = vmatpush1.bf16.msra.mxu0 %v4783
    %4960 = vmatprep.subr.bf16.mxu0 %v4788
    %4961 = vmatpush1.bf16.msra.mxu0 %v4787
    %4962 = vmatprep.subr.bf16.mxu0 %v4792
    %4963 = vmatpush1.bf16.msra.mxu0 %v4791
    %4964 = vmatprep.subr.bf16.mxu0 %v4796
    %4965 = vmatpush1.bf16.msra.mxu0 %v4795
    %4966 = vmatprep.subr.bf16.mxu0 %v4800
    %4967 = vmatpush1.bf16.msra.mxu0 %v4799
    %4968 = vmatprep.subr.bf16.mxu0 %v4804
    %4969 = vmatpush1.bf16.msra.mxu0 %v4803
    %4970 = vmatprep.subr.bf16.mxu0 %v4808
    %4971 = vmatpush1.bf16.msra.mxu0 %v4807
    %4972 = vmatprep.subr.bf16.mxu0 %v4812
    %4973 = vmatpush1.bf16.msra.mxu0 %v4811
    %4974 = vmatprep.subr.bf16.mxu0 %v4816
    %4975 = vmatpush1.bf16.msra.mxu0 %v4815
    %4976 = vmatprep.subr.bf16.mxu0 %v4820
    %4977 = vmatpush1.bf16.msra.mxu0 %v4819
    %4978 = vmatprep.subr.bf16.mxu0 %v4824
    %4979 = vmatpush1.bf16.msra.mxu0 %v4823
    %4980 = vmatprep.subr.bf16.mxu0 %v4828
    %4981 = vmatpush1.bf16.msra.mxu0 %v4827
    %4982 = vmatprep.subr.bf16.mxu0 %v4832
    %4983 = vmatpush1.bf16.msra.mxu0 %v4831
    %4984 = vmatprep.subr.bf16.mxu0 %v4836
    %4985 = vmatpush1.bf16.msra.mxu0 %v4835
    %4986 = vmatprep.mubr.bf16.mxu0 %v4570
    %4987 = vmatmul.mubr.bf16.gmra.mrb[0].mxu0 %v4558
    %v4988 = vpop.f32.mrb[0].mxu0
    %v4989 = vadd.f32 0.0, %v4988
    %v4990 = vpop.f32.mrb[0].mxu0
    %v4991 = vadd.f32 0.0, %v4990
    %v4992 = vpop.f32.mrb[0].mxu0
    %v4993 = vadd.f32 0.0, %v4992
    %v4994 = vpop.f32.mrb[0].mxu0
    %v4995 = vadd.f32 0.0, %v4994
    %4996 = vmatprep.mubr.bf16.mxu0 %v4576
    %4997 = vmatmul.mubr.bf16.gmra.mrb[0].mxu0 %v4573
    %v4998 = vpop.f32.mrb[0].mxu0
    %v4999 = vadd.f32 0.0, %v4998
    %v5000 = vpop.f32.mrb[0].mxu0
    %v5001 = vadd.f32 0.0, %v5000
    %v5002 = vpop.f32.mrb[0].mxu0
    %v5003 = vadd.f32 0.0, %v5002
    %v5004 = vpop.f32.mrb[0].mxu0
    %v5005 = vadd.f32 0.0, %v5004
    %5006 = vdwg.mxu0
    %v5071 = vunpack.c.l.b16 %v4410
    %v5072 = vunpack.c.h.b16 %v4410
    %v5073 = vunpack.c.l.b16 %v4411
    %v5074 = vunpack.c.h.b16 %v4411
    %v5075 = vunpack.c.l.b16 %v4412
    %v5076 = vunpack.c.h.b16 %v4412
    %v5077 = vunpack.c.l.b16 %v4413
    %v5078 = vunpack.c.h.b16 %v4413
    %v5079 = vunpack.c.l.b16 %v4414
    %v5080 = vunpack.c.h.b16 %v4414
    %v5081 = vunpack.c.l.b16 %v4415
    %v5082 = vunpack.c.h.b16 %v4415
    %v5083 = vunpack.c.l.b16 %v4416
    %v5084 = vunpack.c.h.b16 %v4416
    %v5085 = vunpack.c.l.b16 %v4417
    %v5086 = vunpack.c.h.b16 %v4417
    %v5087 = vunpack.c.l.b16 %v4418
    %v5088 = vunpack.c.h.b16 %v4418
    %v5089 = vunpack.c.l.b16 %v4419
    %v5090 = vunpack.c.h.b16 %v4419
    %v5091 = vunpack.c.l.b16 %v4420
    %v5092 = vunpack.c.h.b16 %v4420
    %v5093 = vunpack.c.l.b16 %v4421
    %v5094 = vunpack.c.h.b16 %v4421
    %v5095 = vunpack.c.l.b16 %v4422
    %v5096 = vunpack.c.h.b16 %v4422
    %v5097 = vunpack.c.l.b16 %v4423
    %v5098 = vunpack.c.h.b16 %v4423
    %v5099 = vunpack.c.l.b16 %v4424
    %v5100 = vunpack.c.h.b16 %v4424
    %v5101 = vunpack.c.l.b16 %v4425
    %v5102 = vunpack.c.h.b16 %v4425
    %v5103 = vunpack.c.l.b16 %v4426
    %v5104 = vunpack.c.h.b16 %v4426
    %v5105 = vunpack.c.l.b16 %v4427
    %v5106 = vunpack.c.h.b16 %v4427
    %v5107 = vunpack.c.l.b16 %v4428
    %v5108 = vunpack.c.h.b16 %v4428
    %v5109 = vunpack.c.l.b16 %v4429
    %v5110 = vunpack.c.h.b16 %v4429
    %v5111 = vunpack.c.l.b16 %v4430
    %v5112 = vunpack.c.h.b16 %v4430
    %v5113 = vunpack.c.l.b16 %v4431
    %v5114 = vunpack.c.h.b16 %v4431
    %v5115 = vunpack.c.l.b16 %v4432
    %v5116 = vunpack.c.h.b16 %v4432
    %v5117 = vunpack.c.l.b16 %v4433
    %v5118 = vunpack.c.h.b16 %v4433
    %v5119 = vunpack.c.l.b16 %v4434
    %v5120 = vunpack.c.h.b16 %v4434
    %v5121 = vunpack.c.l.b16 %v4435
    %v5122 = vunpack.c.h.b16 %v4435
    %v5123 = vunpack.c.l.b16 %v4436
    %v5124 = vunpack.c.h.b16 %v4436
    %v5125 = vunpack.c.l.b16 %v4437
    %v5126 = vunpack.c.h.b16 %v4437
    %v5127 = vunpack.c.l.b16 %v4438
    %v5128 = vunpack.c.h.b16 %v4438
    %v5129 = vunpack.c.l.b16 %v4439
    %v5130 = vunpack.c.h.b16 %v4439
    %v5131 = vunpack.c.l.b16 %v4440
    %v5132 = vunpack.c.h.b16 %v4440
    %v5133 = vunpack.c.l.b16 %v4441
    %v5134 = vunpack.c.h.b16 %v4441
    %v5135 = vunpack.c.l.b16 %v4442
    %v5136 = vunpack.c.h.b16 %v4442
    %v5137 = vunpack.c.l.b16 %v4443
    %v5138 = vunpack.c.h.b16 %v4443
    %v5139 = vunpack.c.l.b16 %v4444
    %v5140 = vunpack.c.h.b16 %v4444
    %v5141 = vunpack.c.l.b16 %v4445
    %v5142 = vunpack.c.h.b16 %v4445
    %v5143 = vunpack.c.l.b16 %v4446
    %v5144 = vunpack.c.h.b16 %v4446
    %v5145 = vunpack.c.l.b16 %v4447
    %v5146 = vunpack.c.h.b16 %v4447
    %v5147 = vunpack.c.l.b16 %v4448
    %v5148 = vunpack.c.h.b16 %v4448
    %v5149 = vunpack.c.l.b16 %v4449
    %v5150 = vunpack.c.h.b16 %v4449
    %v5151 = vunpack.c.l.b16 %v4450
    %v5152 = vunpack.c.h.b16 %v4450
    %v5153 = vunpack.c.l.b16 %v4451
    %v5154 = vunpack.c.h.b16 %v4451
    %v5155 = vunpack.c.l.b16 %v4452
    %v5156 = vunpack.c.h.b16 %v4452
    %v5157 = vunpack.c.l.b16 %v4453
    %v5158 = vunpack.c.h.b16 %v4453
    %v5159 = vunpack.c.l.b16 %v4454
    %v5160 = vunpack.c.h.b16 %v4454
    %v5161 = vunpack.c.l.b16 %v4455
    %v5162 = vunpack.c.h.b16 %v4455
    %v5163 = vunpack.c.l.b16 %v4456
    %v5164 = vunpack.c.h.b16 %v4456
    %v5165 = vunpack.c.l.b16 %v4457
    %v5166 = vunpack.c.h.b16 %v4457
    %v5167 = vunpack.c.l.b16 %v4458
    %v5168 = vunpack.c.h.b16 %v4458
    %v5169 = vunpack.c.l.b16 %v4459
    %v5170 = vunpack.c.h.b16 %v4459
    %v5171 = vunpack.c.l.b16 %v4460
    %v5172 = vunpack.c.h.b16 %v4460
    %v5173 = vunpack.c.l.b16 %v4461
    %v5174 = vunpack.c.h.b16 %v4461
    %v5175 = vunpack.c.l.b16 %v4462
    %v5176 = vunpack.c.h.b16 %v4462
    %v5177 = vunpack.c.l.b16 %v4463
    %v5178 = vunpack.c.h.b16 %v4463
    %v5179 = vunpack.c.l.b16 %v4464
    %v5180 = vunpack.c.h.b16 %v4464
    %v5181 = vunpack.c.l.b16 %v4465
    %v5182 = vunpack.c.h.b16 %v4465
    %v5183 = vunpack.c.l.b16 %v4466
    %v5184 = vunpack.c.h.b16 %v4466
    %v5185 = vunpack.c.l.b16 %v4467
    %v5186 = vunpack.c.h.b16 %v4467
    %v5187 = vunpack.c.l.b16 %v4468
    %v5188 = vunpack.c.h.b16 %v4468
    %v5189 = vunpack.c.l.b16 %v4469
    %v5190 = vunpack.c.h.b16 %v4469
    %v5191 = vunpack.c.l.b16 %v4470
    %v5192 = vunpack.c.h.b16 %v4470
    %v5193 = vunpack.c.l.b16 %v4471
    %v5194 = vunpack.c.h.b16 %v4471
    %v5195 = vunpack.c.l.b16 %v4472
    %v5196 = vunpack.c.h.b16 %v4472
    %v5197 = vunpack.c.l.b16 %v4473
    %v5198 = vunpack.c.h.b16 %v4473
    %v5199 = vpack.c.b16 %v5075, %v5071
    %v5200 = vpack.c.b16 %v5076, %v5072
    %v5201 = vpack.c.b16 %v5077, %v5073
    %v5202 = vpack.c.b16 %v5078, %v5074
    %v5203 = vpack.c.b16 %v5083, %v5079
    %v5204 = vpack.c.b16 %v5084, %v5080
    %v5205 = vpack.c.b16 %v5085, %v5081
    %v5206 = vpack.c.b16 %v5086, %v5082
    %v5207 = vpack.c.b16 %v5091, %v5087
    %v5208 = vpack.c.b16 %v5092, %v5088
    %v5209 = vpack.c.b16 %v5093, %v5089
    %v5210 = vpack.c.b16 %v5094, %v5090
    %v5211 = vpack.c.b16 %v5099, %v5095
    %v5212 = vpack.c.b16 %v5100, %v5096
    %v5213 = vpack.c.b16 %v5101, %v5097
    %v5214 = vpack.c.b16 %v5102, %v5098
    %v5215 = vpack.c.b16 %v5107, %v5103
    %v5216 = vpack.c.b16 %v5108, %v5104
    %v5217 = vpack.c.b16 %v5109, %v5105
    %v5218 = vpack.c.b16 %v5110, %v5106
    %v5219 = vpack.c.b16 %v5115, %v5111
    %v5220 = vpack.c.b16 %v5116, %v5112
    %v5221 = vpack.c.b16 %v5117, %v5113
    %v5222 = vpack.c.b16 %v5118, %v5114
    %v5223 = vpack.c.b16 %v5123, %v5119
    %v5224 = vpack.c.b16 %v5124, %v5120
    %v5225 = vpack.c.b16 %v5125, %v5121
    %v5226 = vpack.c.b16 %v5126, %v5122
    %v5227 = vpack.c.b16 %v5131, %v5127
    %v5228 = vpack.c.b16 %v5132, %v5128
    %v5229 = vpack.c.b16 %v5133, %v5129
    %v5230 = vpack.c.b16 %v5134, %v5130
    %v5231 = vpack.c.b16 %v5139, %v5135
    %v5232 = vpack.c.b16 %v5140, %v5136
    %v5233 = vpack.c.b16 %v5141, %v5137
    %v5234 = vpack.c.b16 %v5142, %v5138
    %v5235 = vpack.c.b16 %v5147, %v5143
    %v5236 = vpack.c.b16 %v5148, %v5144
    %v5237 = vpack.c.b16 %v5149, %v5145
    %v5238 = vpack.c.b16 %v5150, %v5146
    %v5239 = vpack.c.b16 %v5155, %v5151
    %v5240 = vpack.c.b16 %v5156, %v5152
    %v5241 = vpack.c.b16 %v5157, %v5153
    %v5242 = vpack.c.b16 %v5158, %v5154
    %v5243 = vpack.c.b16 %v5163, %v5159
    %v5244 = vpack.c.b16 %v5164, %v5160
    %v5245 = vpack.c.b16 %v5165, %v5161
    %v5246 = vpack.c.b16 %v5166, %v5162
    %v5247 = vpack.c.b16 %v5171, %v5167
    %v5248 = vpack.c.b16 %v5172, %v5168
    %v5249 = vpack.c.b16 %v5173, %v5169
    %v5250 = vpack.c.b16 %v5174, %v5170
    %v5251 = vpack.c.b16 %v5179, %v5175
    %v5252 = vpack.c.b16 %v5180, %v5176
    %v5253 = vpack.c.b16 %v5181, %v5177
    %v5254 = vpack.c.b16 %v5182, %v5178
    %v5255 = vpack.c.b16 %v5187, %v5183
    %v5256 = vpack.c.b16 %v5188, %v5184
    %v5257 = vpack.c.b16 %v5189, %v5185
    %v5258 = vpack.c.b16 %v5190, %v5186
    %v5259 = vpack.c.b16 %v5195, %v5191
    %v5260 = vpack.c.b16 %v5196, %v5192
    %v5261 = vpack.c.b16 %v5197, %v5193
    %v5262 = vpack.c.b16 %v5198, %v5194
    %5327 = vmatprep.subr.bf16.mxu0 %v5200
    %5328 = vmatpush1.bf16.msra.mxu0 %v5199
    %5329 = vmatprep.subr.bf16.mxu0 %v5204
    %5330 = vmatpush1.bf16.msra.mxu0 %v5203
    %5331 = vmatprep.subr.bf16.mxu0 %v5208
    %5332 = vmatpush1.bf16.msra.mxu0 %v5207
    %5333 = vmatprep.subr.bf16.mxu0 %v5212
    %5334 = vmatpush1.bf16.msra.mxu0 %v5211
    %5335 = vmatprep.subr.bf16.mxu0 %v5216
    %5336 = vmatpush1.bf16.msra.mxu0 %v5215
    %5337 = vmatprep.subr.bf16.mxu0 %v5220
    %5338 = vmatpush1.bf16.msra.mxu0 %v5219
    %5339 = vmatprep.subr.bf16.mxu0 %v5224
    %5340 = vmatpush1.bf16.msra.mxu0 %v5223
    %5341 = vmatprep.subr.bf16.mxu0 %v5228
    %5342 = vmatpush1.bf16.msra.mxu0 %v5227
    %5343 = vmatprep.subr.bf16.mxu0 %v5232
    %5344 = vmatpush1.bf16.msra.mxu0 %v5231
    %5345 = vmatprep.subr.bf16.mxu0 %v5236
    %5346 = vmatpush1.bf16.msra.mxu0 %v5235
    %5347 = vmatprep.subr.bf16.mxu0 %v5240
    %5348 = vmatpush1.bf16.msra.mxu0 %v5239
    %5349 = vmatprep.subr.bf16.mxu0 %v5244
    %5350 = vmatpush1.bf16.msra.mxu0 %v5243
    %5351 = vmatprep.subr.bf16.mxu0 %v5248
    %5352 = vmatpush1.bf16.msra.mxu0 %v5247
    %5353 = vmatprep.subr.bf16.mxu0 %v5252
    %5354 = vmatpush1.bf16.msra.mxu0 %v5251
    %5355 = vmatprep.subr.bf16.mxu0 %v5256
    %5356 = vmatpush1.bf16.msra.mxu0 %v5255
    %5357 = vmatprep.subr.bf16.mxu0 %v5260
    %5358 = vmatpush1.bf16.msra.mxu0 %v5259
    %5359 = vmatprep.mubr.bf16.mxu0 %v4407
    %5360 = vmatmul.mubr.bf16.gmra.mrb[0].mxu0 %v4406
    %v5361 = vpop.f32.mrb[0].mxu0
    %v5362 = vadd.f32 %v4936, %v5361
    %v5363 = vpop.f32.mrb[0].mxu0
    %v5364 = vadd.f32 %v4938, %v5363
    %v5365 = vpop.f32.mrb[0].mxu0
    %v5366 = vadd.f32 %v4940, %v5365
    %v5367 = vpop.f32.mrb[0].mxu0
    %v5368 = vadd.f32 %v4942, %v5367
    %5369 = vmatprep.mubr.bf16.mxu0 %v4409
    %5370 = vmatmul.mubr.bf16.gmra.mrb[0].mxu0 %v4408
    %v5371 = vpop.f32.mrb[0].mxu0
    %v5372 = vadd.f32 %v4946, %v5371
    %v5373 = vpop.f32.mrb[0].mxu0
    %v5374 = vadd.f32 %v4948, %v5373
    %v5375 = vpop.f32.mrb[0].mxu0
    %v5376 = vadd.f32 %v4950, %v5375
    %v5377 = vpop.f32.mrb[0].mxu0
    %v5378 = vadd.f32 %v4952, %v5377
    %5379 = vdwg.mxu0
    %5380 = vmatprep.subr.bf16.mxu0 %v5202
    %5381 = vmatpush1.bf16.msra.mxu0 %v5201
    %5382 = vmatprep.subr.bf16.mxu0 %v5206
    %5383 = vmatpush1.bf16.msra.mxu0 %v5205
    %5384 = vmatprep.subr.bf16.mxu0 %v5210
    %5385 = vmatpush1.bf16.msra.mxu0 %v5209
    %5386 = vmatprep.subr.bf16.mxu0 %v5214
    %5387 = vmatpush1.bf16.msra.mxu0 %v5213
    %5388 = vmatprep.subr.bf16.mxu0 %v5218
    %5389 = vmatpush1.bf16.msra.mxu0 %v5217
    %5390 = vmatprep.subr.bf16.mxu0 %v5222
    %5391 = vmatpush1.bf16.msra.mxu0 %v5221
    %5392 = vmatprep.subr.bf16.mxu0 %v5226
    %5393 = vmatpush1.bf16.msra.mxu0 %v5225
    %5394 = vmatprep.subr.bf16.mxu0 %v5230
    %5395 = vmatpush1.bf16.msra.mxu0 %v5229
    %5396 = vmatprep.subr.bf16.mxu0 %v5234
    %5397 = vmatpush1.bf16.msra.mxu0 %v5233
    %5398 = vmatprep.subr.bf16.mxu0 %v5238
    %5399 = vmatpush1.bf16.msra.mxu0 %v5237
    %5400 = vmatprep.subr.bf16.mxu0 %v5242
    %5401 = vmatpush1.bf16.msra.mxu0 %v5241
    %5402 = vmatprep.subr.bf16.mxu0 %v5246
    %5403 = vmatpush1.bf16.msra.mxu0 %v5245
    %5404 = vmatprep.subr.bf16.mxu0 %v5250
    %5405 = vmatpush1.bf16.msra.mxu0 %v5249
    %5406 = vmatprep.subr.bf16.mxu0 %v5254
    %5407 = vmatpush1.bf16.msra.mxu0 %v5253
    %5408 = vmatprep.subr.bf16.mxu0 %v5258
    %5409 = vmatpush1.bf16.msra.mxu0 %v5257
    %5410 = vmatprep.subr.bf16.mxu0 %v5262
    %5411 = vmatpush1.bf16.msra.mxu0 %v5261
    %5412 = vmatprep.mubr.bf16.mxu0 %v4407
    %5413 = vmatmul.mubr.bf16.gmra.mrb[0].mxu0 %v4406
    %v5414 = vpop.f32.mrb[0].mxu0
    %v5415 = vadd.f32 %v4989, %v5414
    %v5416 = vpop.f32.mrb[0].mxu0
    %v5417 = vadd.f32 %v4991, %v5416
    %v5418 = vpop.f32.mrb[0].mxu0
    %v5419 = vadd.f32 %v4993, %v5418
    %v5420 = vpop.f32.mrb[0].mxu0
    %v5421 = vadd.f32 %v4995, %v5420
    %5422 = vmatprep.mubr.bf16.mxu0 %v4409
    %5423 = vmatmul.mubr.bf16.gmra.mrb[0].mxu0 %v4408
    %v5424 = vpop.f32.mrb[0].mxu0
    %v5425 = vadd.f32 %v4999, %v5424
    %v5426 = vpop.f32.mrb[0].mxu0
    %v5427 = vadd.f32 %v5001, %v5426
    %v5428 = vpop.f32.mrb[0].mxu0
    %v5429 = vadd.f32 %v5003, %v5428
    %v5430 = vpop.f32.mrb[0].mxu0
    %v5431 = vadd.f32 %v5005, %v5430
    %5432 = vdwg.mxu0
    %v5433 = vld [vmem:[#allocation2] sm:$0xfc]
    %v5434 = vld [vmem:[#allocation2 + $0x8] sm:$0xfc]
    %v5435 = vld [vmem:[#allocation2 + $0x30] sm:$0x3f]
    %v5436 = vld [vmem:[#allocation2 + $0x38] sm:$0x3f]
    %v5437 = vpack.c.bf16 %v4400, %v5433
    %v5438 = vpack.c.bf16 %v4401, %v5434
    %v5439 = vpack.c.bf16 %v5435, %v4402
    %v5440 = vpack.c.bf16 %v5436, %v4403
    %s5441 = scalar_lea.vmem %s7, 1024
    %v5442 = vld [vmem:[%s5441] sm:$0xff]
    %v5443 = vld [vmem:[%s5441 + $0x8] sm:$0xff]
    %v5444 = vld [vmem:[%s5441 + $0x10] sm:$0xff]
    %v5445 = vld [vmem:[%s5441 + $0x18] sm:$0xff]
    %v5446 = vld [vmem:[%s5441 + $0x20] sm:$0xff]
    %v5447 = vld [vmem:[%s5441 + $0x28] sm:$0xff]
    %v5448 = vld [vmem:[%s5441 + $0x30] sm:$0xff]
    %v5449 = vld [vmem:[%s5441 + $0x38] sm:$0xff]
    %v5450 = vld [vmem:[%s5441 + $0x40] sm:$0xff]
    %v5451 = vld [vmem:[%s5441 + $0x48] sm:$0xff]
    %v5452 = vld [vmem:[%s5441 + $0x50] sm:$0xff]
    %v5453 = vld [vmem:[%s5441 + $0x58] sm:$0xff]
    %v5454 = vld [vmem:[%s5441 + $0x60] sm:$0xff]
    %v5455 = vld [vmem:[%s5441 + $0x68] sm:$0xff]
    %v5456 = vld [vmem:[%s5441 + $0x70] sm:$0xff]
    %v5457 = vld [vmem:[%s5441 + $0x78] sm:$0xff]
    %v5458 = vld [vmem:[%s5441 + $0x80] sm:$0xff]
    %v5459 = vld [vmem:[%s5441 + $0x88] sm:$0xff]
    %v5460 = vld [vmem:[%s5441 + $0x90] sm:$0xff]
    %v5461 = vld [vmem:[%s5441 + $0x98] sm:$0xff]
    %v5462 = vld [vmem:[%s5441 + $0xa0] sm:$0xff]
    %v5463 = vld [vmem:[%s5441 + $0xa8] sm:$0xff]
    %v5464 = vld [vmem:[%s5441 + $0xb0] sm:$0xff]
    %v5465 = vld [vmem:[%s5441 + $0xb8] sm:$0xff]
    %v5466 = vld [vmem:[%s5441 + $0xc0] sm:$0xff]
    %v5467 = vld [vmem:[%s5441 + $0xc8] sm:$0xff]
    %v5468 = vld [vmem:[%s5441 + $0xd0] sm:$0xff]
    %v5469 = vld [vmem:[%s5441 + $0xd8] sm:$0xff]
    %v5470 = vld [vmem:[%s5441 + $0xe0] sm:$0xff]
    %v5471 = vld [vmem:[%s5441 + $0xe8] sm:$0xff]
    %v5472 = vld [vmem:[%s5441 + $0xf0] sm:$0xff]
    %v5473 = vld [vmem:[%s5441 + $0xf8] sm:$0xff]
    %v5474 = vld [vmem:[%s5441 + $0x100] sm:$0xff]
    %v5475 = vld [vmem:[%s5441 + $0x108] sm:$0xff]
    %v5476 = vld [vmem:[%s5441 + $0x110] sm:$0xff]
    %v5477 = vld [vmem:[%s5441 + $0x118] sm:$0xff]
    %v5478 = vld [vmem:[%s5441 + $0x120] sm:$0xff]
    %v5479 = vld [vmem:[%s5441 + $0x128] sm:$0xff]
    %v5480 = vld [vmem:[%s5441 + $0x130] sm:$0xff]
    %v5481 = vld [vmem:[%s5441 + $0x138] sm:$0xff]
    %v5482 = vld [vmem:[%s5441 + $0x140] sm:$0xff]
    %v5483 = vld [vmem:[%s5441 + $0x148] sm:$0xff]
    %v5484 = vld [vmem:[%s5441 + $0x150] sm:$0xff]
    %v5485 = vld [vmem:[%s5441 + $0x158] sm:$0xff]
    %v5486 = vld [vmem:[%s5441 + $0x160] sm:$0xff]
    %v5487 = vld [vmem:[%s5441 + $0x168] sm:$0xff]
    %v5488 = vld [vmem:[%s5441 + $0x170] sm:$0xff]
    %v5489 = vld [vmem:[%s5441 + $0x178] sm:$0xff]
    %v5490 = vld [vmem:[%s5441 + $0x180] sm:$0xff]
    %v5491 = vld [vmem:[%s5441 + $0x188] sm:$0xff]
    %v5492 = vld [vmem:[%s5441 + $0x190] sm:$0xff]
    %v5493 = vld [vmem:[%s5441 + $0x198] sm:$0xff]
    %v5494 = vld [vmem:[%s5441 + $0x1a0] sm:$0xff]
    %v5495 = vld [vmem:[%s5441 + $0x1a8] sm:$0xff]
    %v5496 = vld [vmem:[%s5441 + $0x1b0] sm:$0xff]
    %v5497 = vld [vmem:[%s5441 + $0x1b8] sm:$0xff]
    %v5498 = vld [vmem:[%s5441 + $0x1c0] sm:$0xff]
    %v5499 = vld [vmem:[%s5441 + $0x1c8] sm:$0xff]
    %v5500 = vld [vmem:[%s5441 + $0x1d0] sm:$0xff]
    %v5501 = vld [vmem:[%s5441 + $0x1d8] sm:$0xff]
    %v5502 = vld [vmem:[%s5441 + $0x1e0] sm:$0xff]
    %v5503 = vld [vmem:[%s5441 + $0x1e8] sm:$0xff]
    %v5504 = vld [vmem:[%s5441 + $0x1f0] sm:$0xff]
    %v5505 = vld [vmem:[%s5441 + $0x1f8] sm:$0xff]
    %v5510 = vrot.slane %v5437, 1
    %v5511 = vrot.slane %v5439, 1
    %v5512 = vsel %vm1295, %v5510, %v5511
    %v5513 = vrot.slane %v5438, 1
    %v5514 = vrot.slane %v5440, 1
    %v5515 = vsel %vm1295, %v5513, %v5514
    %v5584 = vunpack.c.l.b16 %v5442
    %v5585 = vunpack.c.h.b16 %v5442
    %v5586 = vunpack.c.l.b16 %v5443
    %v5587 = vunpack.c.h.b16 %v5443
    %v5588 = vunpack.c.l.b16 %v5444
    %v5589 = vunpack.c.h.b16 %v5444
    %v5590 = vunpack.c.l.b16 %v5445
    %v5591 = vunpack.c.h.b16 %v5445
    %v5592 = vunpack.c.l.b16 %v5446
    %v5593 = vunpack.c.h.b16 %v5446
    %v5594 = vunpack.c.l.b16 %v5447
    %v5595 = vunpack.c.h.b16 %v5447
    %v5596 = vunpack.c.l.b16 %v5448
    %v5597 = vunpack.c.h.b16 %v5448
    %v5598 = vunpack.c.l.b16 %v5449
    %v5599 = vunpack.c.h.b16 %v5449
    %v5600 = vunpack.c.l.b16 %v5450
    %v5601 = vunpack.c.h.b16 %v5450
    %v5602 = vunpack.c.l.b16 %v5451
    %v5603 = vunpack.c.h.b16 %v5451
    %v5604 = vunpack.c.l.b16 %v5452
    %v5605 = vunpack.c.h.b16 %v5452
    %v5606 = vunpack.c.l.b16 %v5453
    %v5607 = vunpack.c.h.b16 %v5453
    %v5608 = vunpack.c.l.b16 %v5454
    %v5609 = vunpack.c.h.b16 %v5454
    %v5610 = vunpack.c.l.b16 %v5455
    %v5611 = vunpack.c.h.b16 %v5455
    %v5612 = vunpack.c.l.b16 %v5456
    %v5613 = vunpack.c.h.b16 %v5456
    %v5614 = vunpack.c.l.b16 %v5457
    %v5615 = vunpack.c.h.b16 %v5457
    %v5616 = vunpack.c.l.b16 %v5458
    %v5617 = vunpack.c.h.b16 %v5458
    %v5618 = vunpack.c.l.b16 %v5459
    %v5619 = vunpack.c.h.b16 %v5459
    %v5620 = vunpack.c.l.b16 %v5460
    %v5621 = vunpack.c.h.b16 %v5460
    %v5622 = vunpack.c.l.b16 %v5461
    %v5623 = vunpack.c.h.b16 %v5461
    %v5624 = vunpack.c.l.b16 %v5462
    %v5625 = vunpack.c.h.b16 %v5462
    %v5626 = vunpack.c.l.b16 %v5463
    %v5627 = vunpack.c.h.b16 %v5463
    %v5628 = vunpack.c.l.b16 %v5464
    %v5629 = vunpack.c.h.b16 %v5464
    %v5630 = vunpack.c.l.b16 %v5465
    %v5631 = vunpack.c.h.b16 %v5465
    %v5632 = vunpack.c.l.b16 %v5466
    %v5633 = vunpack.c.h.b16 %v5466
    %v5634 = vunpack.c.l.b16 %v5467
    %v5635 = vunpack.c.h.b16 %v5467
    %v5636 = vunpack.c.l.b16 %v5468
    %v5637 = vunpack.c.h.b16 %v5468
    %v5638 = vunpack.c.l.b16 %v5469
    %v5639 = vunpack.c.h.b16 %v5469
    %v5640 = vunpack.c.l.b16 %v5470
    %v5641 = vunpack.c.h.b16 %v5470
    %v5642 = vunpack.c.l.b16 %v5471
    %v5643 = vunpack.c.h.b16 %v5471
    %v5644 = vunpack.c.l.b16 %v5472
    %v5645 = vunpack.c.h.b16 %v5472
    %v5646 = vunpack.c.l.b16 %v5473
    %v5647 = vunpack.c.h.b16 %v5473
    %v5648 = vunpack.c.l.b16 %v5474
    %v5649 = vunpack.c.h.b16 %v5474
    %v5650 = vunpack.c.l.b16 %v5475
    %v5651 = vunpack.c.h.b16 %v5475
    %v5652 = vunpack.c.l.b16 %v5476
    %v5653 = vunpack.c.h.b16 %v5476
    %v5654 = vunpack.c.l.b16 %v5477
    %v5655 = vunpack.c.h.b16 %v5477
    %v5656 = vunpack.c.l.b16 %v5478
    %v5657 = vunpack.c.h.b16 %v5478
    %v5658 = vunpack.c.l.b16 %v5479
    %v5659 = vunpack.c.h.b16 %v5479
    %v5660 = vunpack.c.l.b16 %v5480
    %v5661 = vunpack.c.h.b16 %v5480
    %v5662 = vunpack.c.l.b16 %v5481
    %v5663 = vunpack.c.h.b16 %v5481
    %v5664 = vunpack.c.l.b16 %v5482
    %v5665 = vunpack.c.h.b16 %v5482
    %v5666 = vunpack.c.l.b16 %v5483
    %v5667 = vunpack.c.h.b16 %v5483
    %v5668 = vunpack.c.l.b16 %v5484
    %v5669 = vunpack.c.h.b16 %v5484
    %v5670 = vunpack.c.l.b16 %v5485
    %v5671 = vunpack.c.h.b16 %v5485
    %v5672 = vunpack.c.l.b16 %v5486
    %v5673 = vunpack.c.h.b16 %v5486
    %v5674 = vunpack.c.l.b16 %v5487
    %v5675 = vunpack.c.h.b16 %v5487
    %v5676 = vunpack.c.l.b16 %v5488
    %v5677 = vunpack.c.h.b16 %v5488
    %v5678 = vunpack.c.l.b16 %v5489
    %v5679 = vunpack.c.h.b16 %v5489
    %v5680 = vunpack.c.l.b16 %v5490
    %v5681 = vunpack.c.h.b16 %v5490
    %v5682 = vunpack.c.l.b16 %v5491
    %v5683 = vunpack.c.h.b16 %v5491
    %v5684 = vunpack.c.l.b16 %v5492
    %v5685 = vunpack.c.h.b16 %v5492
    %v5686 = vunpack.c.l.b16 %v5493
    %v5687 = vunpack.c.h.b16 %v5493
    %v5688 = vunpack.c.l.b16 %v5494
    %v5689 = vunpack.c.h.b16 %v5494
    %v5690 = vunpack.c.l.b16 %v5495
    %v5691 = vunpack.c.h.b16 %v5495
    %v5692 = vunpack.c.l.b16 %v5496
    %v5693 = vunpack.c.h.b16 %v5496
    %v5694 = vunpack.c.l.b16 %v5497
    %v5695 = vunpack.c.h.b16 %v5497
    %v5696 = vunpack.c.l.b16 %v5498
    %v5697 = vunpack.c.h.b16 %v5498
    %v5698 = vunpack.c.l.b16 %v5499
    %v5699 = vunpack.c.h.b16 %v5499
    %v5700 = vunpack.c.l.b16 %v5500
    %v5701 = vunpack.c.h.b16 %v5500
    %v5702 = vunpack.c.l.b16 %v5501
    %v5703 = vunpack.c.h.b16 %v5501
    %v5704 = vunpack.c.l.b16 %v5502
    %v5705 = vunpack.c.h.b16 %v5502
    %v5706 = vunpack.c.l.b16 %v5503
    %v5707 = vunpack.c.h.b16 %v5503
    %v5708 = vunpack.c.l.b16 %v5504
    %v5709 = vunpack.c.h.b16 %v5504
    %v5710 = vunpack.c.l.b16 %v5505
    %v5711 = vunpack.c.h.b16 %v5505
    %v5712 = vpack.c.b16 %v5588, %v5584
    %v5713 = vpack.c.b16 %v5589, %v5585
    %v5714 = vpack.c.b16 %v5590, %v5586
    %v5715 = vpack.c.b16 %v5591, %v5587
    %v5716 = vpack.c.b16 %v5596, %v5592
    %v5717 = vpack.c.b16 %v5597, %v5593
    %v5718 = vpack.c.b16 %v5598, %v5594
    %v5719 = vpack.c.b16 %v5599, %v5595
    %v5720 = vpack.c.b16 %v5604, %v5600
    %v5721 = vpack.c.b16 %v5605, %v5601
    %v5722 = vpack.c.b16 %v5606, %v5602
    %v5723 = vpack.c.b16 %v5607, %v5603
    %v5724 = vpack.c.b16 %v5612, %v5608
    %v5725 = vpack.c.b16 %v5613, %v5609
    %v5726 = vpack.c.b16 %v5614, %v5610
    %v5727 = vpack.c.b16 %v5615, %v5611
    %v5728 = vpack.c.b16 %v5620, %v5616
    %v5729 = vpack.c.b16 %v5621, %v5617
    %v5730 = vpack.c.b16 %v5622, %v5618
    %v5731 = vpack.c.b16 %v5623, %v5619
    %v5732 = vpack.c.b16 %v5628, %v5624
    %v5733 = vpack.c.b16 %v5629, %v5625
    %v5734 = vpack.c.b16 %v5630, %v5626
    %v5735 = vpack.c.b16 %v5631, %v5627
    %v5736 = vpack.c.b16 %v5636, %v5632
    %v5737 = vpack.c.b16 %v5637, %v5633
    %v5738 = vpack.c.b16 %v5638, %v5634
    %v5739 = vpack.c.b16 %v5639, %v5635
    %v5740 = vpack.c.b16 %v5644, %v5640
    %v5741 = vpack.c.b16 %v5645, %v5641
    %v5742 = vpack.c.b16 %v5646, %v5642
    %v5743 = vpack.c.b16 %v5647, %v5643
    %v5744 = vpack.c.b16 %v5652, %v5648
    %v5745 = vpack.c.b16 %v5653, %v5649
    %v5746 = vpack.c.b16 %v5654, %v5650
    %v5747 = vpack.c.b16 %v5655, %v5651
    %v5748 = vpack.c.b16 %v5660, %v5656
    %v5749 = vpack.c.b16 %v5661, %v5657
    %v5750 = vpack.c.b16 %v5662, %v5658
    %v5751 = vpack.c.b16 %v5663, %v5659
    %v5752 = vpack.c.b16 %v5668, %v5664
    %v5753 = vpack.c.b16 %v5669, %v5665
    %v5754 = vpack.c.b16 %v5670, %v5666
    %v5755 = vpack.c.b16 %v5671, %v5667
    %v5756 = vpack.c.b16 %v5676, %v5672
    %v5757 = vpack.c.b16 %v5677, %v5673
    %v5758 = vpack.c.b16 %v5678, %v5674
    %v5759 = vpack.c.b16 %v5679, %v5675
    %v5760 = vpack.c.b16 %v5684, %v5680
    %v5761 = vpack.c.b16 %v5685, %v5681
    %v5762 = vpack.c.b16 %v5686, %v5682
    %v5763 = vpack.c.b16 %v5687, %v5683
    %v5764 = vpack.c.b16 %v5692, %v5688
    %v5765 = vpack.c.b16 %v5693, %v5689
    %v5766 = vpack.c.b16 %v5694, %v5690
    %v5767 = vpack.c.b16 %v5695, %v5691
    %v5768 = vpack.c.b16 %v5700, %v5696
    %v5769 = vpack.c.b16 %v5701, %v5697
    %v5770 = vpack.c.b16 %v5702, %v5698
    %v5771 = vpack.c.b16 %v5703, %v5699
    %v5772 = vpack.c.b16 %v5708, %v5704
    %v5773 = vpack.c.b16 %v5709, %v5705
    %v5774 = vpack.c.b16 %v5710, %v5706
    %v5775 = vpack.c.b16 %v5711, %v5707
    %5840 = vmatprep.subr.bf16.mxu0 %v5713
    %5841 = vmatpush1.bf16.msra.mxu0 %v5712
    %5842 = vmatprep.subr.bf16.mxu0 %v5717
    %5843 = vmatpush1.bf16.msra.mxu0 %v5716
    %5844 = vmatprep.subr.bf16.mxu0 %v5721
    %5845 = vmatpush1.bf16.msra.mxu0 %v5720
    %5846 = vmatprep.subr.bf16.mxu0 %v5725
    %5847 = vmatpush1.bf16.msra.mxu0 %v5724
    %5848 = vmatprep.subr.bf16.mxu0 %v5729
    %5849 = vmatpush1.bf16.msra.mxu0 %v5728
    %5850 = vmatprep.subr.bf16.mxu0 %v5733
    %5851 = vmatpush1.bf16.msra.mxu0 %v5732
    %5852 = vmatprep.subr.bf16.mxu0 %v5737
    %5853 = vmatpush1.bf16.msra.mxu0 %v5736
    %5854 = vmatprep.subr.bf16.mxu0 %v5741
    %5855 = vmatpush1.bf16.msra.mxu0 %v5740
    %5856 = vmatprep.subr.bf16.mxu0 %v5745
    %5857 = vmatpush1.bf16.msra.mxu0 %v5744
    %5858 = vmatprep.subr.bf16.mxu0 %v5749
    %5859 = vmatpush1.bf16.msra.mxu0 %v5748
    %5860 = vmatprep.subr.bf16.mxu0 %v5753
    %5861 = vmatpush1.bf16.msra.mxu0 %v5752
    %5862 = vmatprep.subr.bf16.mxu0 %v5757
    %5863 = vmatpush1.bf16.msra.mxu0 %v5756
    %5864 = vmatprep.subr.bf16.mxu0 %v5761
    %5865 = vmatpush1.bf16.msra.mxu0 %v5760
    %5866 = vmatprep.subr.bf16.mxu0 %v5765
    %5867 = vmatpush1.bf16.msra.mxu0 %v5764
    %5868 = vmatprep.subr.bf16.mxu0 %v5769
    %5869 = vmatpush1.bf16.msra.mxu0 %v5768
    %5870 = vmatprep.subr.bf16.mxu0 %v5773
    %5871 = vmatpush1.bf16.msra.mxu0 %v5772
    %5872 = vmatprep.mubr.bf16.mxu0 %v5515
    %5873 = vmatmul.mubr.bf16.gmra.mrb[0].mxu0 %v5512
    %v5874 = vpop.f32.mrb[0].mxu0
    %v5875 = vadd.f32 0.0, %v5874
    %v5876 = vpop.f32.mrb[0].mxu0
    %v5877 = vadd.f32 0.0, %v5876
    %v5878 = vpop.f32.mrb[0].mxu0
    %v5879 = vadd.f32 0.0, %v5878
    %v5880 = vpop.f32.mrb[0].mxu0
    %v5881 = vadd.f32 0.0, %v5880
    %5882 = vmatprep.mubr.bf16.mxu0 %v5514
    %5883 = vmatmul.mubr.bf16.gmra.mrb[0].mxu0 %v5511
    %v5884 = vpop.f32.mrb[0].mxu0
    %v5885 = vadd.f32 0.0, %v5884
    %v5886 = vpop.f32.mrb[0].mxu0
    %v5887 = vadd.f32 0.0, %v5886
    %v5888 = vpop.f32.mrb[0].mxu0
    %v5889 = vadd.f32 0.0, %v5888
    %v5890 = vpop.f32.mrb[0].mxu0
    %v5891 = vadd.f32 0.0, %v5890
    %5892 = vdwg.mxu0
    %5893 = vmatprep.subr.bf16.mxu0 %v5715
    %5894 = vmatpush1.bf16.msra.mxu0 %v5714
    %5895 = vmatprep.subr.bf16.mxu0 %v5719
    %5896 = vmatpush1.bf16.msra.mxu0 %v5718
    %5897 = vmatprep.subr.bf16.mxu0 %v5723
    %5898 = vmatpush1.bf16.msra.mxu0 %v5722
    %5899 = vmatprep.subr.bf16.mxu0 %v5727
    %5900 = vmatpush1.bf16.msra.mxu0 %v5726
    %5901 = vmatprep.subr.bf16.mxu0 %v5731
    %5902 = vmatpush1.bf16.msra.mxu0 %v5730
    %5903 = vmatprep.subr.bf16.mxu0 %v5735
    %5904 = vmatpush1.bf16.msra.mxu0 %v5734
    %5905 = vmatprep.subr.bf16.mxu0 %v5739
    %5906 = vmatpush1.bf16.msra.mxu0 %v5738
    %5907 = vmatprep.subr.bf16.mxu0 %v5743
    %5908 = vmatpush1.bf16.msra.mxu0 %v5742
    %5909 = vmatprep.subr.bf16.mxu0 %v5747
    %5910 = vmatpush1.bf16.msra.mxu0 %v5746
    %5911 = vmatprep.subr.bf16.mxu0 %v5751
    %5912 = vmatpush1.bf16.msra.mxu0 %v5750
    %5913 = vmatprep.subr.bf16.mxu0 %v5755
    %5914 = vmatpush1.bf16.msra.mxu0 %v5754
    %5915 = vmatprep.subr.bf16.mxu0 %v5759
    %5916 = vmatpush1.bf16.msra.mxu0 %v5758
    %5917 = vmatprep.subr.bf16.mxu0 %v5763
    %5918 = vmatpush1.bf16.msra.mxu0 %v5762
    %5919 = vmatprep.subr.bf16.mxu0 %v5767
    %5920 = vmatpush1.bf16.msra.mxu0 %v5766
    %5921 = vmatprep.subr.bf16.mxu0 %v5771
    %5922 = vmatpush1.bf16.msra.mxu0 %v5770
    %5923 = vmatprep.subr.bf16.mxu0 %v5775
    %5924 = vmatpush1.bf16.msra.mxu0 %v5774
    %5925 = vmatprep.mubr.bf16.mxu0 %v5515
    %5926 = vmatmul.mubr.bf16.gmra.mrb[0].mxu0 %v5512
    %v5927 = vpop.f32.mrb[0].mxu0
    %v5928 = vadd.f32 0.0, %v5927
    %v5929 = vpop.f32.mrb[0].mxu0
    %v5930 = vadd.f32 0.0, %v5929
    %v5931 = vpop.f32.mrb[0].mxu0
    %v5932 = vadd.f32 0.0, %v5931
    %v5933 = vpop.f32.mrb[0].mxu0
    %v5934 = vadd.f32 0.0, %v5933
    %5935 = vmatprep.mubr.bf16.mxu0 %v5514
    %5936 = vmatmul.mubr.bf16.gmra.mrb[0].mxu0 %v5511
    %v5937 = vpop.f32.mrb[0].mxu0
    %v5938 = vadd.f32 0.0, %v5937
    %v5939 = vpop.f32.mrb[0].mxu0
    %v5940 = vadd.f32 0.0, %v5939
    %v5941 = vpop.f32.mrb[0].mxu0
    %v5942 = vadd.f32 0.0, %v5941
    %v5943 = vpop.f32.mrb[0].mxu0
    %v5944 = vadd.f32 0.0, %v5943
    %5945 = vdwg.mxu0
    %v5946 = vadd.f32 %v5362, %v5875
    %v5947 = vadd.f32 %v5364, %v5877
    %v5948 = vadd.f32 %v5415, %v5928
    %v5949 = vadd.f32 %v5417, %v5930
    %v5950 = vadd.f32 %v5366, %v5879
    %v5951 = vadd.f32 %v5368, %v5881
    %v5952 = vadd.f32 %v5419, %v5932
    %v5953 = vadd.f32 %v5421, %v5934
    %v5954 = vadd.f32 %v5372, %v5885
    %v5955 = vadd.f32 %v5374, %v5887
    %v5956 = vadd.f32 %v5425, %v5938
    %v5957 = vadd.f32 %v5427, %v5940
    %v5958 = vadd.f32 %v5376, %v5889
    %v5959 = vadd.f32 %v5378, %v5891
    %v5960 = vadd.f32 %v5429, %v5942
    %v5961 = vadd.f32 %v5431, %v5944
    %v5962 = vld [vmem:[#allocation2] sm:$0xf8]
    %v5963 = vld [vmem:[#allocation2 + $0x8] sm:$0xf8]
    %v5964 = vld [vmem:[#allocation2 + $0x30] sm:$0x7f]
    %v5965 = vld [vmem:[#allocation2 + $0x38] sm:$0x7f]
    %v5966 = vpack.c.bf16 %v4400, %v5962
    %v5967 = vpack.c.bf16 %v4401, %v5963
    %v5968 = vpack.c.bf16 %v5964, %v4402
    %v5969 = vpack.c.bf16 %v5965, %v4403
    %s5970 = scalar_lea.vmem %s7, 1536
    %v5971 = vld [vmem:[%s5970] sm:$0xff]
    %v5972 = vld [vmem:[%s5970 + $0x8] sm:$0xff]
    %v5973 = vld [vmem:[%s5970 + $0x10] sm:$0xff]
    %v5974 = vld [vmem:[%s5970 + $0x18] sm:$0xff]
    %v5975 = vld [vmem:[%s5970 + $0x20] sm:$0xff]
    %v5976 = vld [vmem:[%s5970 + $0x28] sm:$0xff]
    %v5977 = vld [vmem:[%s5970 + $0x30] sm:$0xff]
    %v5978 = vld [vmem:[%s5970 + $0x38] sm:$0xff]
    %v5979 = vld [vmem:[%s5970 + $0x40] sm:$0xff]
    %v5980 = vld [vmem:[%s5970 + $0x48] sm:$0xff]
    %v5981 = vld [vmem:[%s5970 + $0x50] sm:$0xff]
    %v5982 = vld [vmem:[%s5970 + $0x58] sm:$0xff]
    %v5983 = vld [vmem:[%s5970 + $0x60] sm:$0xff]
    %v5984 = vld [vmem:[%s5970 + $0x68] sm:$0xff]
    %v5985 = vld [vmem:[%s5970 + $0x70] sm:$0xff]
    %v5986 = vld [vmem:[%s5970 + $0x78] sm:$0xff]
    %v5987 = vld [vmem:[%s5970 + $0x80] sm:$0xff]
    %v5988 = vld [vmem:[%s5970 + $0x88] sm:$0xff]
    %v5989 = vld [vmem:[%s5970 + $0x90] sm:$0xff]
    %v5990 = vld [vmem:[%s5970 + $0x98] sm:$0xff]
    %v5991 = vld [vmem:[%s5970 + $0xa0] sm:$0xff]
    %v5992 = vld [vmem:[%s5970 + $0xa8] sm:$0xff]
    %v5993 = vld [vmem:[%s5970 + $0xb0] sm:$0xff]
    %v5994 = vld [vmem:[%s5970 + $0xb8] sm:$0xff]
    %v5995 = vld [vmem:[%s5970 + $0xc0] sm:$0xff]
    %v5996 = vld [vmem:[%s5970 + $0xc8] sm:$0xff]
    %v5997 = vld [vmem:[%s5970 + $0xd0] sm:$0xff]
    %v5998 = vld [vmem:[%s5970 + $0xd8] sm:$0xff]
    %v5999 = vld [vmem:[%s5970 + $0xe0] sm:$0xff]
    %v6000 = vld [vmem:[%s5970 + $0xe8] sm:$0xff]
    %v6001 = vld [vmem:[%s5970 + $0xf0] sm:$0xff]
    %v6002 = vld [vmem:[%s5970 + $0xf8] sm:$0xff]
    %v6003 = vld [vmem:[%s5970 + $0x100] sm:$0xff]
    %v6004 = vld [vmem:[%s5970 + $0x108] sm:$0xff]
    %v6005 = vld [vmem:[%s5970 + $0x110] sm:$0xff]
    %v6006 = vld [vmem:[%s5970 + $0x118] sm:$0xff]
    %v6007 = vld [vmem:[%s5970 + $0x120] sm:$0xff]
    %v6008 = vld [vmem:[%s5970 + $0x128] sm:$0xff]
    %v6009 = vld [vmem:[%s5970 + $0x130] sm:$0xff]
    %v6010 = vld [vmem:[%s5970 + $0x138] sm:$0xff]
    %v6011 = vld [vmem:[%s5970 + $0x140] sm:$0xff]
    %v6012 = vld [vmem:[%s5970 + $0x148] sm:$0xff]
    %v6013 = vld [vmem:[%s5970 + $0x150] sm:$0xff]
    %v6014 = vld [vmem:[%s5970 + $0x158] sm:$0xff]
    %v6015 = vld [vmem:[%s5970 + $0x160] sm:$0xff]
    %v6016 = vld [vmem:[%s5970 + $0x168] sm:$0xff]
    %v6017 = vld [vmem:[%s5970 + $0x170] sm:$0xff]
    %v6018 = vld [vmem:[%s5970 + $0x178] sm:$0xff]
    %v6019 = vld [vmem:[%s5970 + $0x180] sm:$0xff]
    %v6020 = vld [vmem:[%s5970 + $0x188] sm:$0xff]
    %v6021 = vld [vmem:[%s5970 + $0x190] sm:$0xff]
    %v6022 = vld [vmem:[%s5970 + $0x198] sm:$0xff]
    %v6023 = vld [vmem:[%s5970 + $0x1a0] sm:$0xff]
    %v6024 = vld [vmem:[%s5970 + $0x1a8] sm:$0xff]
    %v6025 = vld [vmem:[%s5970 + $0x1b0] sm:$0xff]
    %v6026 = vld [vmem:[%s5970 + $0x1b8] sm:$0xff]
    %v6027 = vld [vmem:[%s5970 + $0x1c0] sm:$0xff]
    %v6028 = vld [vmem:[%s5970 + $0x1c8] sm:$0xff]
    %v6029 = vld [vmem:[%s5970 + $0x1d0] sm:$0xff]
    %v6030 = vld [vmem:[%s5970 + $0x1d8] sm:$0xff]
    %v6031 = vld [vmem:[%s5970 + $0x1e0] sm:$0xff]
    %v6032 = vld [vmem:[%s5970 + $0x1e8] sm:$0xff]
    %v6033 = vld [vmem:[%s5970 + $0x1f0] sm:$0xff]
    %v6034 = vld [vmem:[%s5970 + $0x1f8] sm:$0xff]
    %v6036 = vshrl.u32 %v5966, 16
    %v6038 = vrot.slane %v6036, 1
    %v6039 = vshll.u32 %v5966, 16
    %v6041 = vrot.slane %v6039, 2
    %v6042 = vor.u32 %v6038, %v6041
    %v6044 = vshrl.u32 %v5968, 16
    %v6046 = vrot.slane %v6044, 1
    %v6047 = vshll.u32 %v5968, 16
    %v6049 = vrot.slane %v6047, 2
    %v6050 = vor.u32 %v6046, %v6049
    %v6051 = vsel %vm1877, %v6042, %v6050
    %v6053 = vshrl.u32 %v5967, 16
    %v6055 = vrot.slane %v6053, 1
    %v6056 = vshll.u32 %v5967, 16
    %v6058 = vrot.slane %v6056, 2
    %v6059 = vor.u32 %v6055, %v6058
    %v6061 = vshrl.u32 %v5969, 16
    %v6063 = vrot.slane %v6061, 1
    %v6064 = vshll.u32 %v5969, 16
    %v6066 = vrot.slane %v6064, 2
    %v6067 = vor.u32 %v6063, %v6066
    %v6068 = vsel %vm1877, %v6059, %v6067
    %v6137 = vunpack.c.l.b16 %v5971
    %v6138 = vunpack.c.h.b16 %v5971
    %v6139 = vunpack.c.l.b16 %v5972
    %v6140 = vunpack.c.h.b16 %v5972
    %v6141 = vunpack.c.l.b16 %v5973
    %v6142 = vunpack.c.h.b16 %v5973
    %v6143 = vunpack.c.l.b16 %v5974
    %v6144 = vunpack.c.h.b16 %v5974
    %v6145 = vunpack.c.l.b16 %v5975
    %v6146 = vunpack.c.h.b16 %v5975
    %v6147 = vunpack.c.l.b16 %v5976
    %v6148 = vunpack.c.h.b16 %v5976
    %v6149 = vunpack.c.l.b16 %v5977
    %v6150 = vunpack.c.h.b16 %v5977
    %v6151 = vunpack.c.l.b16 %v5978
    %v6152 = vunpack.c.h.b16 %v5978
    %v6153 = vunpack.c.l.b16 %v5979
    %v6154 = vunpack.c.h.b16 %v5979
    %v6155 = vunpack.c.l.b16 %v5980
    %v6156 = vunpack.c.h.b16 %v5980
    %v6157 = vunpack.c.l.b16 %v5981
    %v6158 = vunpack.c.h.b16 %v5981
    %v6159 = vunpack.c.l.b16 %v5982
    %v6160 = vunpack.c.h.b16 %v5982
    %v6161 = vunpack.c.l.b16 %v5983
    %v6162 = vunpack.c.h.b16 %v5983
    %v6163 = vunpack.c.l.b16 %v5984
    %v6164 = vunpack.c.h.b16 %v5984
    %v6165 = vunpack.c.l.b16 %v5985
    %v6166 = vunpack.c.h.b16 %v5985
    %v6167 = vunpack.c.l.b16 %v5986
    %v6168 = vunpack.c.h.b16 %v5986
    %v6169 = vunpack.c.l.b16 %v5987
    %v6170 = vunpack.c.h.b16 %v5987
    %v6171 = vunpack.c.l.b16 %v5988
    %v6172 = vunpack.c.h.b16 %v5988
    %v6173 = vunpack.c.l.b16 %v5989
    %v6174 = vunpack.c.h.b16 %v5989
    %v6175 = vunpack.c.l.b16 %v5990
    %v6176 = vunpack.c.h.b16 %v5990
    %v6177 = vunpack.c.l.b16 %v5991
    %v6178 = vunpack.c.h.b16 %v5991
    %v6179 = vunpack.c.l.b16 %v5992
    %v6180 = vunpack.c.h.b16 %v5992
    %v6181 = vunpack.c.l.b16 %v5993
    %v6182 = vunpack.c.h.b16 %v5993
    %v6183 = vunpack.c.l.b16 %v5994
    %v6184 = vunpack.c.h.b16 %v5994
    %v6185 = vunpack.c.l.b16 %v5995
    %v6186 = vunpack.c.h.b16 %v5995
    %v6187 = vunpack.c.l.b16 %v5996
    %v6188 = vunpack.c.h.b16 %v5996
    %v6189 = vunpack.c.l.b16 %v5997
    %v6190 = vunpack.c.h.b16 %v5997
    %v6191 = vunpack.c.l.b16 %v5998
    %v6192 = vunpack.c.h.b16 %v5998
    %v6193 = vunpack.c.l.b16 %v5999
    %v6194 = vunpack.c.h.b16 %v5999
    %v6195 = vunpack.c.l.b16 %v6000
    %v6196 = vunpack.c.h.b16 %v6000
    %v6197 = vunpack.c.l.b16 %v6001
    %v6198 = vunpack.c.h.b16 %v6001
    %v6199 = vunpack.c.l.b16 %v6002
    %v6200 = vunpack.c.h.b16 %v6002
    %v6201 = vunpack.c.l.b16 %v6003
    %v6202 = vunpack.c.h.b16 %v6003
    %v6203 = vunpack.c.l.b16 %v6004
    %v6204 = vunpack.c.h.b16 %v6004
    %v6205 = vunpack.c.l.b16 %v6005
    %v6206 = vunpack.c.h.b16 %v6005
    %v6207 = vunpack.c.l.b16 %v6006
    %v6208 = vunpack.c.h.b16 %v6006
    %v6209 = vunpack.c.l.b16 %v6007
    %v6210 = vunpack.c.h.b16 %v6007
    %v6211 = vunpack.c.l.b16 %v6008
    %v6212 = vunpack.c.h.b16 %v6008
    %v6213 = vunpack.c.l.b16 %v6009
    %v6214 = vunpack.c.h.b16 %v6009
    %v6215 = vunpack.c.l.b16 %v6010
    %v6216 = vunpack.c.h.b16 %v6010
    %v6217 = vunpack.c.l.b16 %v6011
    %v6218 = vunpack.c.h.b16 %v6011
    %v6219 = vunpack.c.l.b16 %v6012
    %v6220 = vunpack.c.h.b16 %v6012
    %v6221 = vunpack.c.l.b16 %v6013
    %v6222 = vunpack.c.h.b16 %v6013
    %v6223 = vunpack.c.l.b16 %v6014
    %v6224 = vunpack.c.h.b16 %v6014
    %v6225 = vunpack.c.l.b16 %v6015
    %v6226 = vunpack.c.h.b16 %v6015
    %v6227 = vunpack.c.l.b16 %v6016
    %v6228 = vunpack.c.h.b16 %v6016
    %v6229 = vunpack.c.l.b16 %v6017
    %v6230 = vunpack.c.h.b16 %v6017
    %v6231 = vunpack.c.l.b16 %v6018
    %v6232 = vunpack.c.h.b16 %v6018
    %v6233 = vunpack.c.l.b16 %v6019
    %v6234 = vunpack.c.h.b16 %v6019
    %v6235 = vunpack.c.l.b16 %v6020
    %v6236 = vunpack.c.h.b16 %v6020
    %v6237 = vunpack.c.l.b16 %v6021
    %v6238 = vunpack.c.h.b16 %v6021
    %v6239 = vunpack.c.l.b16 %v6022
    %v6240 = vunpack.c.h.b16 %v6022
    %v6241 = vunpack.c.l.b16 %v6023
    %v6242 = vunpack.c.h.b16 %v6023
    %v6243 = vunpack.c.l.b16 %v6024
    %v6244 = vunpack.c.h.b16 %v6024
    %v6245 = vunpack.c.l.b16 %v6025
    %v6246 = vunpack.c.h.b16 %v6025
    %v6247 = vunpack.c.l.b16 %v6026
    %v6248 = vunpack.c.h.b16 %v6026
    %v6249 = vunpack.c.l.b16 %v6027
    %v6250 = vunpack.c.h.b16 %v6027
    %v6251 = vunpack.c.l.b16 %v6028
    %v6252 = vunpack.c.h.b16 %v6028
    %v6253 = vunpack.c.l.b16 %v6029
    %v6254 = vunpack.c.h.b16 %v6029
    %v6255 = vunpack.c.l.b16 %v6030
    %v6256 = vunpack.c.h.b16 %v6030
    %v6257 = vunpack.c.l.b16 %v6031
    %v6258 = vunpack.c.h.b16 %v6031
    %v6259 = vunpack.c.l.b16 %v6032
    %v6260 = vunpack.c.h.b16 %v6032
    %v6261 = vunpack.c.l.b16 %v6033
    %v6262 = vunpack.c.h.b16 %v6033
    %v6263 = vunpack.c.l.b16 %v6034
    %v6264 = vunpack.c.h.b16 %v6034
    %v6265 = vpack.c.b16 %v6141, %v6137
    %v6266 = vpack.c.b16 %v6142, %v6138
    %v6267 = vpack.c.b16 %v6143, %v6139
    %v6268 = vpack.c.b16 %v6144, %v6140
    %v6269 = vpack.c.b16 %v6149, %v6145
    %v6270 = vpack.c.b16 %v6150, %v6146
    %v6271 = vpack.c.b16 %v6151, %v6147
    %v6272 = vpack.c.b16 %v6152, %v6148
    %v6273 = vpack.c.b16 %v6157, %v6153
    %v6274 = vpack.c.b16 %v6158, %v6154
    %v6275 = vpack.c.b16 %v6159, %v6155
    %v6276 = vpack.c.b16 %v6160, %v6156
    %v6277 = vpack.c.b16 %v6165, %v6161
    %v6278 = vpack.c.b16 %v6166, %v6162
    %v6279 = vpack.c.b16 %v6167, %v6163
    %v6280 = vpack.c.b16 %v6168, %v6164
    %v6281 = vpack.c.b16 %v6173, %v6169
    %v6282 = vpack.c.b16 %v6174, %v6170
    %v6283 = vpack.c.b16 %v6175, %v6171
    %v6284 = vpack.c.b16 %v6176, %v6172
    %v6285 = vpack.c.b16 %v6181, %v6177
    %v6286 = vpack.c.b16 %v6182, %v6178
    %v6287 = vpack.c.b16 %v6183, %v6179
    %v6288 = vpack.c.b16 %v6184, %v6180
    %v6289 = vpack.c.b16 %v6189, %v6185
    %v6290 = vpack.c.b16 %v6190, %v6186
    %v6291 = vpack.c.b16 %v6191, %v6187
    %v6292 = vpack.c.b16 %v6192, %v6188
    %v6293 = vpack.c.b16 %v6197, %v6193
    %v6294 = vpack.c.b16 %v6198, %v6194
    %v6295 = vpack.c.b16 %v6199, %v6195
    %v6296 = vpack.c.b16 %v6200, %v6196
    %v6297 = vpack.c.b16 %v6205, %v6201
    %v6298 = vpack.c.b16 %v6206, %v6202
    %v6299 = vpack.c.b16 %v6207, %v6203
    %v6300 = vpack.c.b16 %v6208, %v6204
    %v6301 = vpack.c.b16 %v6213, %v6209
    %v6302 = vpack.c.b16 %v6214, %v6210
    %v6303 = vpack.c.b16 %v6215, %v6211
    %v6304 = vpack.c.b16 %v6216, %v6212
    %v6305 = vpack.c.b16 %v6221, %v6217
    %v6306 = vpack.c.b16 %v6222, %v6218
    %v6307 = vpack.c.b16 %v6223, %v6219
    %v6308 = vpack.c.b16 %v6224, %v6220
    %v6309 = vpack.c.b16 %v6229, %v6225
    %v6310 = vpack.c.b16 %v6230, %v6226
    %v6311 = vpack.c.b16 %v6231, %v6227
    %v6312 = vpack.c.b16 %v6232, %v6228
    %v6313 = vpack.c.b16 %v6237, %v6233
    %v6314 = vpack.c.b16 %v6238, %v6234
    %v6315 = vpack.c.b16 %v6239, %v6235
    %v6316 = vpack.c.b16 %v6240, %v6236
    %v6317 = vpack.c.b16 %v6245, %v6241
    %v6318 = vpack.c.b16 %v6246, %v6242
    %v6319 = vpack.c.b16 %v6247, %v6243
    %v6320 = vpack.c.b16 %v6248, %v6244
    %v6321 = vpack.c.b16 %v6253, %v6249
    %v6322 = vpack.c.b16 %v6254, %v6250
    %v6323 = vpack.c.b16 %v6255, %v6251
    %v6324 = vpack.c.b16 %v6256, %v6252
    %v6325 = vpack.c.b16 %v6261, %v6257
    %v6326 = vpack.c.b16 %v6262, %v6258
    %v6327 = vpack.c.b16 %v6263, %v6259
    %v6328 = vpack.c.b16 %v6264, %v6260
    %6393 = vmatprep.subr.bf16.mxu0 %v6266
    %6394 = vmatpush1.bf16.msra.mxu0 %v6265
    %6395 = vmatprep.subr.bf16.mxu0 %v6270
    %6396 = vmatpush1.bf16.msra.mxu0 %v6269
    %6397 = vmatprep.subr.bf16.mxu0 %v6274
    %6398 = vmatpush1.bf16.msra.mxu0 %v6273
    %6399 = vmatprep.subr.bf16.mxu0 %v6278
    %6400 = vmatpush1.bf16.msra.mxu0 %v6277
    %6401 = vmatprep.subr.bf16.mxu0 %v6282
    %6402 = vmatpush1.bf16.msra.mxu0 %v6281
    %6403 = vmatprep.subr.bf16.mxu0 %v6286
    %6404 = vmatpush1.bf16.msra.mxu0 %v6285
    %6405 = vmatprep.subr.bf16.mxu0 %v6290
    %6406 = vmatpush1.bf16.msra.mxu0 %v6289
    %6407 = vmatprep.subr.bf16.mxu0 %v6294
    %6408 = vmatpush1.bf16.msra.mxu0 %v6293
    %6409 = vmatprep.subr.bf16.mxu0 %v6298
    %6410 = vmatpush1.bf16.msra.mxu0 %v6297
    %6411 = vmatprep.subr.bf16.mxu0 %v6302
    %6412 = vmatpush1.bf16.msra.mxu0 %v6301
    %6413 = vmatprep.subr.bf16.mxu0 %v6306
    %6414 = vmatpush1.bf16.msra.mxu0 %v6305
    %6415 = vmatprep.subr.bf16.mxu0 %v6310
    %6416 = vmatpush1.bf16.msra.mxu0 %v6309
    %6417 = vmatprep.subr.bf16.mxu0 %v6314
    %6418 = vmatpush1.bf16.msra.mxu0 %v6313
    %6419 = vmatprep.subr.bf16.mxu0 %v6318
    %6420 = vmatpush1.bf16.msra.mxu0 %v6317
    %6421 = vmatprep.subr.bf16.mxu0 %v6322
    %6422 = vmatpush1.bf16.msra.mxu0 %v6321
    %6423 = vmatprep.subr.bf16.mxu0 %v6326
    %6424 = vmatpush1.bf16.msra.mxu0 %v6325
    %6425 = vmatprep.mubr.bf16.mxu0 %v6068
    %6426 = vmatmul.mubr.bf16.gmra.mrb[0].mxu0 %v6051
    %v6427 = vpop.f32.mrb[0].mxu0
    %v6428 = vadd.f32 0.0, %v6427
    %v6429 = vpop.f32.mrb[0].mxu0
    %v6430 = vadd.f32 0.0, %v6429
    %v6431 = vpop.f32.mrb[0].mxu0
    %v6432 = vadd.f32 0.0, %v6431
    %v6433 = vpop.f32.mrb[0].mxu0
    %v6434 = vadd.f32 0.0, %v6433
    %6435 = vmatprep.mubr.bf16.mxu0 %v6067
    %6436 = vmatmul.mubr.bf16.gmra.mrb[0].mxu0 %v6050
    %v6437 = vpop.f32.mrb[0].mxu0
    %v6438 = vadd.f32 0.0, %v6437
    %v6439 = vpop.f32.mrb[0].mxu0
    %v6440 = vadd.f32 0.0, %v6439
    %v6441 = vpop.f32.mrb[0].mxu0
    %v6442 = vadd.f32 0.0, %v6441
    %v6443 = vpop.f32.mrb[0].mxu0
    %v6444 = vadd.f32 0.0, %v6443
    %6445 = vdwg.mxu0
    %6446 = vmatprep.subr.bf16.mxu0 %v6268
    %6447 = vmatpush1.bf16.msra.mxu0 %v6267
    %6448 = vmatprep.subr.bf16.mxu0 %v6272
    %6449 = vmatpush1.bf16.msra.mxu0 %v6271
    %6450 = vmatprep.subr.bf16.mxu0 %v6276
    %6451 = vmatpush1.bf16.msra.mxu0 %v6275
    %6452 = vmatprep.subr.bf16.mxu0 %v6280
    %6453 = vmatpush1.bf16.msra.mxu0 %v6279
    %6454 = vmatprep.subr.bf16.mxu0 %v6284
    %6455 = vmatpush1.bf16.msra.mxu0 %v6283
    %6456 = vmatprep.subr.bf16.mxu0 %v6288
    %6457 = vmatpush1.bf16.msra.mxu0 %v6287
    %6458 = vmatprep.subr.bf16.mxu0 %v6292
    %6459 = vmatpush1.bf16.msra.mxu0 %v6291
    %6460 = vmatprep.subr.bf16.mxu0 %v6296
    %6461 = vmatpush1.bf16.msra.mxu0 %v6295
    %6462 = vmatprep.subr.bf16.mxu0 %v6300
    %6463 = vmatpush1.bf16.msra.mxu0 %v6299
    %6464 = vmatprep.subr.bf16.mxu0 %v6304
    %6465 = vmatpush1.bf16.msra.mxu0 %v6303
    %6466 = vmatprep.subr.bf16.mxu0 %v6308
    %6467 = vmatpush1.bf16.msra.mxu0 %v6307
    %6468 = vmatprep.subr.bf16.mxu0 %v6312
    %6469 = vmatpush1.bf16.msra.mxu0 %v6311
    %6470 = vmatprep.subr.bf16.mxu0 %v6316
    %6471 = vmatpush1.bf16.msra.mxu0 %v6315
    %6472 = vmatprep.subr.bf16.mxu0 %v6320
    %6473 = vmatpush1.bf16.msra.mxu0 %v6319
    %6474 = vmatprep.subr.bf16.mxu0 %v6324
    %6475 = vmatpush1.bf16.msra.mxu0 %v6323
    %6476 = vmatprep.subr.bf16.mxu0 %v6328
    %6477 = vmatpush1.bf16.msra.mxu0 %v6327
    %6478 = vmatprep.mubr.bf16.mxu0 %v6068
    %6479 = vmatmul.mubr.bf16.gmra.mrb[0].mxu0 %v6051
    %v6480 = vpop.f32.mrb[0].mxu0
    %v6481 = vadd.f32 0.0, %v6480
    %v6482 = vpop.f32.mrb[0].mxu0
    %v6483 = vadd.f32 0.0, %v6482
    %v6484 = vpop.f32.mrb[0].mxu0
    %v6485 = vadd.f32 0.0, %v6484
    %v6486 = vpop.f32.mrb[0].mxu0
    %v6487 = vadd.f32 0.0, %v6486
    %6488 = vmatprep.mubr.bf16.mxu0 %v6067
    %6489 = vmatmul.mubr.bf16.gmra.mrb[0].mxu0 %v6050
    %v6490 = vpop.f32.mrb[0].mxu0
    %v6491 = vadd.f32 0.0, %v6490
    %v6492 = vpop.f32.mrb[0].mxu0
    %v6493 = vadd.f32 0.0, %v6492
    %v6494 = vpop.f32.mrb[0].mxu0
    %v6495 = vadd.f32 0.0, %v6494
    %v6496 = vpop.f32.mrb[0].mxu0
    %v6497 = vadd.f32 0.0, %v6496
    %6498 = vdwg.mxu0
    %v6499 = vadd.f32 %v5946, %v6428
    %v6500 = vadd.f32 %v5947, %v6430
    %v6501 = vadd.f32 %v5948, %v6481
    %v6502 = vadd.f32 %v5949, %v6483
    %v6503 = vadd.f32 %v5950, %v6432
    %v6504 = vadd.f32 %v5951, %v6434
    %v6505 = vadd.f32 %v5952, %v6485
    %v6506 = vadd.f32 %v5953, %v6487
    %v6507 = vadd.f32 %v5954, %v6438
    %v6508 = vadd.f32 %v5955, %v6440
    %v6509 = vadd.f32 %v5956, %v6491
    %v6510 = vadd.f32 %v5957, %v6493
    %v6511 = vadd.f32 %v5958, %v6442
    %v6512 = vadd.f32 %v5959, %v6444
    %v6513 = vadd.f32 %v5960, %v6495
    %v6514 = vadd.f32 %v5961, %v6497
    %v6515 = vld [vmem:[#allocation2] sm:$0xf0]
    %v6516 = vld [vmem:[#allocation2 + $0x8] sm:$0xf0]
    %v6517 = vld [vmem:[#allocation2 + $0x30] sm:$0xff]
    %v6518 = vld [vmem:[#allocation2 + $0x38] sm:$0xff]
    %v6519 = vpack.c.bf16 %v4400, %v6515
    %v6520 = vpack.c.bf16 %v4401, %v6516
    %v6521 = vpack.c.bf16 %v6517, %v4402
    %v6522 = vpack.c.bf16 %v6518, %v4403
    %s6523 = scalar_lea.vmem %s7, 2048
    %v6524 = vld [vmem:[%s6523] sm:$0xff]
    %v6525 = vld [vmem:[%s6523 + $0x8] sm:$0xff]
    %v6526 = vld [vmem:[%s6523 + $0x10] sm:$0xff]
    %v6527 = vld [vmem:[%s6523 + $0x18] sm:$0xff]
    %v6528 = vld [vmem:[%s6523 + $0x20] sm:$0xff]
    %v6529 = vld [vmem:[%s6523 + $0x28] sm:$0xff]
    %v6530 = vld [vmem:[%s6523 + $0x30] sm:$0xff]
    %v6531 = vld [vmem:[%s6523 + $0x38] sm:$0xff]
    %v6532 = vld [vmem:[%s6523 + $0x40] sm:$0xff]
    %v6533 = vld [vmem:[%s6523 + $0x48] sm:$0xff]
    %v6534 = vld [vmem:[%s6523 + $0x50] sm:$0xff]
    %v6535 = vld [vmem:[%s6523 + $0x58] sm:$0xff]
    %v6536 = vld [vmem:[%s6523 + $0x60] sm:$0xff]
    %v6537 = vld [vmem:[%s6523 + $0x68] sm:$0xff]
    %v6538 = vld [vmem:[%s6523 + $0x70] sm:$0xff]
    %v6539 = vld [vmem:[%s6523 + $0x78] sm:$0xff]
    %v6540 = vld [vmem:[%s6523 + $0x80] sm:$0xff]
    %v6541 = vld [vmem:[%s6523 + $0x88] sm:$0xff]
    %v6542 = vld [vmem:[%s6523 + $0x90] sm:$0xff]
    %v6543 = vld [vmem:[%s6523 + $0x98] sm:$0xff]
    %v6544 = vld [vmem:[%s6523 + $0xa0] sm:$0xff]
    %v6545 = vld [vmem:[%s6523 + $0xa8] sm:$0xff]
    %v6546 = vld [vmem:[%s6523 + $0xb0] sm:$0xff]
    %v6547 = vld [vmem:[%s6523 + $0xb8] sm:$0xff]
    %v6548 = vld [vmem:[%s6523 + $0xc0] sm:$0xff]
    %v6549 = vld [vmem:[%s6523 + $0xc8] sm:$0xff]
    %v6550 = vld [vmem:[%s6523 + $0xd0] sm:$0xff]
    %v6551 = vld [vmem:[%s6523 + $0xd8] sm:$0xff]
    %v6552 = vld [vmem:[%s6523 + $0xe0] sm:$0xff]
    %v6553 = vld [vmem:[%s6523 + $0xe8] sm:$0xff]
    %v6554 = vld [vmem:[%s6523 + $0xf0] sm:$0xff]
    %v6555 = vld [vmem:[%s6523 + $0xf8] sm:$0xff]
    %v6556 = vld [vmem:[%s6523 + $0x100] sm:$0xff]
    %v6557 = vld [vmem:[%s6523 + $0x108] sm:$0xff]
    %v6558 = vld [vmem:[%s6523 + $0x110] sm:$0xff]
    %v6559 = vld [vmem:[%s6523 + $0x118] sm:$0xff]
    %v6560 = vld [vmem:[%s6523 + $0x120] sm:$0xff]
    %v6561 = vld [vmem:[%s6523 + $0x128] sm:$0xff]
    %v6562 = vld [vmem:[%s6523 + $0x130] sm:$0xff]
    %v6563 = vld [vmem:[%s6523 + $0x138] sm:$0xff]
    %v6564 = vld [vmem:[%s6523 + $0x140] sm:$0xff]
    %v6565 = vld [vmem:[%s6523 + $0x148] sm:$0xff]
    %v6566 = vld [vmem:[%s6523 + $0x150] sm:$0xff]
    %v6567 = vld [vmem:[%s6523 + $0x158] sm:$0xff]
    %v6568 = vld [vmem:[%s6523 + $0x160] sm:$0xff]
    %v6569 = vld [vmem:[%s6523 + $0x168] sm:$0xff]
    %v6570 = vld [vmem:[%s6523 + $0x170] sm:$0xff]
    %v6571 = vld [vmem:[%s6523 + $0x178] sm:$0xff]
    %v6572 = vld [vmem:[%s6523 + $0x180] sm:$0xff]
    %v6573 = vld [vmem:[%s6523 + $0x188] sm:$0xff]
    %v6574 = vld [vmem:[%s6523 + $0x190] sm:$0xff]
    %v6575 = vld [vmem:[%s6523 + $0x198] sm:$0xff]
    %v6576 = vld [vmem:[%s6523 + $0x1a0] sm:$0xff]
    %v6577 = vld [vmem:[%s6523 + $0x1a8] sm:$0xff]
    %v6578 = vld [vmem:[%s6523 + $0x1b0] sm:$0xff]
    %v6579 = vld [vmem:[%s6523 + $0x1b8] sm:$0xff]
    %v6580 = vld [vmem:[%s6523 + $0x1c0] sm:$0xff]
    %v6581 = vld [vmem:[%s6523 + $0x1c8] sm:$0xff]
    %v6582 = vld [vmem:[%s6523 + $0x1d0] sm:$0xff]
    %v6583 = vld [vmem:[%s6523 + $0x1d8] sm:$0xff]
    %v6584 = vld [vmem:[%s6523 + $0x1e0] sm:$0xff]
    %v6585 = vld [vmem:[%s6523 + $0x1e8] sm:$0xff]
    %v6586 = vld [vmem:[%s6523 + $0x1f0] sm:$0xff]
    %v6587 = vld [vmem:[%s6523 + $0x1f8] sm:$0xff]
    %v6592 = vrot.slane %v6519, 2
    %v6593 = vrot.slane %v6521, 2
    %v6594 = vsel %vm2503, %v6592, %v6593
    %v6595 = vrot.slane %v6520, 2
    %v6596 = vrot.slane %v6522, 2
    %v6597 = vsel %vm2503, %v6595, %v6596
    %v6666 = vunpack.c.l.b16 %v6524
    %v6667 = vunpack.c.h.b16 %v6524
    %v6668 = vunpack.c.l.b16 %v6525
    %v6669 = vunpack.c.h.b16 %v6525
    %v6670 = vunpack.c.l.b16 %v6526
    %v6671 = vunpack.c.h.b16 %v6526
    %v6672 = vunpack.c.l.b16 %v6527
    %v6673 = vunpack.c.h.b16 %v6527
    %v6674 = vunpack.c.l.b16 %v6528
    %v6675 = vunpack.c.h.b16 %v6528
    %v6676 = vunpack.c.l.b16 %v6529
    %v6677 = vunpack.c.h.b16 %v6529
    %v6678 = vunpack.c.l.b16 %v6530
    %v6679 = vunpack.c.h.b16 %v6530
    %v6680 = vunpack.c.l.b16 %v6531
    %v6681 = vunpack.c.h.b16 %v6531
    %v6682 = vunpack.c.l.b16 %v6532
    %v6683 = vunpack.c.h.b16 %v6532
    %v6684 = vunpack.c.l.b16 %v6533
    %v6685 = vunpack.c.h.b16 %v6533
    %v6686 = vunpack.c.l.b16 %v6534
    %v6687 = vunpack.c.h.b16 %v6534
    %v6688 = vunpack.c.l.b16 %v6535
    %v6689 = vunpack.c.h.b16 %v6535
    %v6690 = vunpack.c.l.b16 %v6536
    %v6691 = vunpack.c.h.b16 %v6536
    %v6692 = vunpack.c.l.b16 %v6537
    %v6693 = vunpack.c.h.b16 %v6537
    %v6694 = vunpack.c.l.b16 %v6538
    %v6695 = vunpack.c.h.b16 %v6538
    %v6696 = vunpack.c.l.b16 %v6539
    %v6697 = vunpack.c.h.b16 %v6539
    %v6698 = vunpack.c.l.b16 %v6540
    %v6699 = vunpack.c.h.b16 %v6540
    %v6700 = vunpack.c.l.b16 %v6541
    %v6701 = vunpack.c.h.b16 %v6541
    %v6702 = vunpack.c.l.b16 %v6542
    %v6703 = vunpack.c.h.b16 %v6542
    %v6704 = vunpack.c.l.b16 %v6543
    %v6705 = vunpack.c.h.b16 %v6543
    %v6706 = vunpack.c.l.b16 %v6544
    %v6707 = vunpack.c.h.b16 %v6544
    %v6708 = vunpack.c.l.b16 %v6545
    %v6709 = vunpack.c.h.b16 %v6545
    %v6710 = vunpack.c.l.b16 %v6546
    %v6711 = vunpack.c.h.b16 %v6546
    %v6712 = vunpack.c.l.b16 %v6547
    %v6713 = vunpack.c.h.b16 %v6547
    %v6714 = vunpack.c.l.b16 %v6548
    %v6715 = vunpack.c.h.b16 %v6548
    %v6716 = vunpack.c.l.b16 %v6549
    %v6717 = vunpack.c.h.b16 %v6549
    %v6718 = vunpack.c.l.b16 %v6550
    %v6719 = vunpack.c.h.b16 %v6550
    %v6720 = vunpack.c.l.b16 %v6551
    %v6721 = vunpack.c.h.b16 %v6551
    %v6722 = vunpack.c.l.b16 %v6552
    %v6723 = vunpack.c.h.b16 %v6552
    %v6724 = vunpack.c.l.b16 %v6553
    %v6725 = vunpack.c.h.b16 %v6553
    %v6726 = vunpack.c.l.b16 %v6554
    %v6727 = vunpack.c.h.b16 %v6554
    %v6728 = vunpack.c.l.b16 %v6555
    %v6729 = vunpack.c.h.b16 %v6555
    %v6730 = vunpack.c.l.b16 %v6556
    %v6731 = vunpack.c.h.b16 %v6556
    %v6732 = vunpack.c.l.b16 %v6557
    %v6733 = vunpack.c.h.b16 %v6557
    %v6734 = vunpack.c.l.b16 %v6558
    %v6735 = vunpack.c.h.b16 %v6558
    %v6736 = vunpack.c.l.b16 %v6559
    %v6737 = vunpack.c.h.b16 %v6559
    %v6738 = vunpack.c.l.b16 %v6560
    %v6739 = vunpack.c.h.b16 %v6560
    %v6740 = vunpack.c.l.b16 %v6561
    %v6741 = vunpack.c.h.b16 %v6561
    %v6742 = vunpack.c.l.b16 %v6562
    %v6743 = vunpack.c.h.b16 %v6562
    %v6744 = vunpack.c.l.b16 %v6563
    %v6745 = vunpack.c.h.b16 %v6563
    %v6746 = vunpack.c.l.b16 %v6564
    %v6747 = vunpack.c.h.b16 %v6564
    %v6748 = vunpack.c.l.b16 %v6565
    %v6749 = vunpack.c.h.b16 %v6565
    %v6750 = vunpack.c.l.b16 %v6566
    %v6751 = vunpack.c.h.b16 %v6566
    %v6752 = vunpack.c.l.b16 %v6567
    %v6753 = vunpack.c.h.b16 %v6567
    %v6754 = vunpack.c.l.b16 %v6568
    %v6755 = vunpack.c.h.b16 %v6568
    %v6756 = vunpack.c.l.b16 %v6569
    %v6757 = vunpack.c.h.b16 %v6569
    %v6758 = vunpack.c.l.b16 %v6570
    %v6759 = vunpack.c.h.b16 %v6570
    %v6760 = vunpack.c.l.b16 %v6571
    %v6761 = vunpack.c.h.b16 %v6571
    %v6762 = vunpack.c.l.b16 %v6572
    %v6763 = vunpack.c.h.b16 %v6572
    %v6764 = vunpack.c.l.b16 %v6573
    %v6765 = vunpack.c.h.b16 %v6573
    %v6766 = vunpack.c.l.b16 %v6574
    %v6767 = vunpack.c.h.b16 %v6574
    %v6768 = vunpack.c.l.b16 %v6575
    %v6769 = vunpack.c.h.b16 %v6575
    %v6770 = vunpack.c.l.b16 %v6576
    %v6771 = vunpack.c.h.b16 %v6576
    %v6772 = vunpack.c.l.b16 %v6577
    %v6773 = vunpack.c.h.b16 %v6577
    %v6774 = vunpack.c.l.b16 %v6578
    %v6775 = vunpack.c.h.b16 %v6578
    %v6776 = vunpack.c.l.b16 %v6579
    %v6777 = vunpack.c.h.b16 %v6579
    %v6778 = vunpack.c.l.b16 %v6580
    %v6779 = vunpack.c.h.b16 %v6580
    %v6780 = vunpack.c.l.b16 %v6581
    %v6781 = vunpack.c.h.b16 %v6581
    %v6782 = vunpack.c.l.b16 %v6582
    %v6783 = vunpack.c.h.b16 %v6582
    %v6784 = vunpack.c.l.b16 %v6583
    %v6785 = vunpack.c.h.b16 %v6583
    %v6786 = vunpack.c.l.b16 %v6584
    %v6787 = vunpack.c.h.b16 %v6584
    %v6788 = vunpack.c.l.b16 %v6585
    %v6789 = vunpack.c.h.b16 %v6585
    %v6790 = vunpack.c.l.b16 %v6586
    %v6791 = vunpack.c.h.b16 %v6586
    %v6792 = vunpack.c.l.b16 %v6587
    %v6793 = vunpack.c.h.b16 %v6587
    %v6794 = vpack.c.b16 %v6670, %v6666
    %v6795 = vpack.c.b16 %v6671, %v6667
    %v6796 = vpack.c.b16 %v6672, %v6668
    %v6797 = vpack.c.b16 %v6673, %v6669
    %v6798 = vpack.c.b16 %v6678, %v6674
    %v6799 = vpack.c.b16 %v6679, %v6675
    %v6800 = vpack.c.b16 %v6680, %v6676
    %v6801 = vpack.c.b16 %v6681, %v6677
    %v6802 = vpack.c.b16 %v6686, %v6682
    %v6803 = vpack.c.b16 %v6687, %v6683
    %v6804 = vpack.c.b16 %v6688, %v6684
    %v6805 = vpack.c.b16 %v6689, %v6685
    %v6806 = vpack.c.b16 %v6694, %v6690
    %v6807 = vpack.c.b16 %v6695, %v6691
    %v6808 = vpack.c.b16 %v6696, %v6692
    %v6809 = vpack.c.b16 %v6697, %v6693
    %v6810 = vpack.c.b16 %v6702, %v6698
    %v6811 = vpack.c.b16 %v6703, %v6699
    %v6812 = vpack.c.b16 %v6704, %v6700
    %v6813 = vpack.c.b16 %v6705, %v6701
    %v6814 = vpack.c.b16 %v6710, %v6706
    %v6815 = vpack.c.b16 %v6711, %v6707
    %v6816 = vpack.c.b16 %v6712, %v6708
    %v6817 = vpack.c.b16 %v6713, %v6709
    %v6818 = vpack.c.b16 %v6718, %v6714
    %v6819 = vpack.c.b16 %v6719, %v6715
    %v6820 = vpack.c.b16 %v6720, %v6716
    %v6821 = vpack.c.b16 %v6721, %v6717
    %v6822 = vpack.c.b16 %v6726, %v6722
    %v6823 = vpack.c.b16 %v6727, %v6723
    %v6824 = vpack.c.b16 %v6728, %v6724
    %v6825 = vpack.c.b16 %v6729, %v6725
    %v6826 = vpack.c.b16 %v6734, %v6730
    %v6827 = vpack.c.b16 %v6735, %v6731
    %v6828 = vpack.c.b16 %v6736, %v6732
    %v6829 = vpack.c.b16 %v6737, %v6733
    %v6830 = vpack.c.b16 %v6742, %v6738
    %v6831 = vpack.c.b16 %v6743, %v6739
    %v6832 = vpack.c.b16 %v6744, %v6740
    %v6833 = vpack.c.b16 %v6745, %v6741
    %v6834 = vpack.c.b16 %v6750, %v6746
    %v6835 = vpack.c.b16 %v6751, %v6747
    %v6836 = vpack.c.b16 %v6752, %v6748
    %v6837 = vpack.c.b16 %v6753, %v6749
    %v6838 = vpack.c.b16 %v6758, %v6754
    %v6839 = vpack.c.b16 %v6759, %v6755
    %v6840 = vpack.c.b16 %v6760, %v6756
    %v6841 = vpack.c.b16 %v6761, %v6757
    %v6842 = vpack.c.b16 %v6766, %v6762
    %v6843 = vpack.c.b16 %v6767, %v6763
    %v6844 = vpack.c.b16 %v6768, %v6764
    %v6845 = vpack.c.b16 %v6769, %v6765
    %v6846 = vpack.c.b16 %v6774, %v6770
    %v6847 = vpack.c.b16 %v6775, %v6771
    %v6848 = vpack.c.b16 %v6776, %v6772
    %v6849 = vpack.c.b16 %v6777, %v6773
    %v6850 = vpack.c.b16 %v6782, %v6778
    %v6851 = vpack.c.b16 %v6783, %v6779
    %v6852 = vpack.c.b16 %v6784, %v6780
    %v6853 = vpack.c.b16 %v6785, %v6781
    %v6854 = vpack.c.b16 %v6790, %v6786
    %v6855 = vpack.c.b16 %v6791, %v6787
    %v6856 = vpack.c.b16 %v6792, %v6788
    %v6857 = vpack.c.b16 %v6793, %v6789
    %6922 = vmatprep.subr.bf16.mxu0 %v6795
    %6923 = vmatpush1.bf16.msra.mxu0 %v6794
    %6924 = vmatprep.subr.bf16.mxu0 %v6799
    %6925 = vmatpush1.bf16.msra.mxu0 %v6798
    %6926 = vmatprep.subr.bf16.mxu0 %v6803
    %6927 = vmatpush1.bf16.msra.mxu0 %v6802
    %6928 = vmatprep.subr.bf16.mxu0 %v6807
    %6929 = vmatpush1.bf16.msra.mxu0 %v6806
    %6930 = vmatprep.subr.bf16.mxu0 %v6811
    %6931 = vmatpush1.bf16.msra.mxu0 %v6810
    %6932 = vmatprep.subr.bf16.mxu0 %v6815
    %6933 = vmatpush1.bf16.msra.mxu0 %v6814
    %6934 = vmatprep.subr.bf16.mxu0 %v6819
    %6935 = vmatpush1.bf16.msra.mxu0 %v6818
    %6936 = vmatprep.subr.bf16.mxu0 %v6823
    %6937 = vmatpush1.bf16.msra.mxu0 %v6822
    %6938 = vmatprep.subr.bf16.mxu0 %v6827
    %6939 = vmatpush1.bf16.msra.mxu0 %v6826
    %6940 = vmatprep.subr.bf16.mxu0 %v6831
    %6941 = vmatpush1.bf16.msra.mxu0 %v6830
    %6942 = vmatprep.subr.bf16.mxu0 %v6835
    %6943 = vmatpush1.bf16.msra.mxu0 %v6834
    %6944 = vmatprep.subr.bf16.mxu0 %v6839
    %6945 = vmatpush1.bf16.msra.mxu0 %v6838
    %6946 = vmatprep.subr.bf16.mxu0 %v6843
    %6947 = vmatpush1.bf16.msra.mxu0 %v6842
    %6948 = vmatprep.subr.bf16.mxu0 %v6847
    %6949 = vmatpush1.bf16.msra.mxu0 %v6846
    %6950 = vmatprep.subr.bf16.mxu0 %v6851
    %6951 = vmatpush1.bf16.msra.mxu0 %v6850
    %6952 = vmatprep.subr.bf16.mxu0 %v6855
    %6953 = vmatpush1.bf16.msra.mxu0 %v6854
    %6954 = vmatprep.mubr.bf16.mxu0 %v6597
    %6955 = vmatmul.mubr.bf16.gmra.mrb[0].mxu0 %v6594
    %v6956 = vpop.f32.mrb[0].mxu0
    %v6957 = vadd.f32 0.0, %v6956
    %v6958 = vpop.f32.mrb[0].mxu0
    %v6959 = vadd.f32 0.0, %v6958
    %v6960 = vpop.f32.mrb[0].mxu0
    %v6961 = vadd.f32 0.0, %v6960
    %v6962 = vpop.f32.mrb[0].mxu0
    %v6963 = vadd.f32 0.0, %v6962
    %6964 = vmatprep.mubr.bf16.mxu0 %v6596
    %6965 = vmatmul.mubr.bf16.gmra.mrb[0].mxu0 %v6593
    %v6966 = vpop.f32.mrb[0].mxu0
    %v6967 = vadd.f32 0.0, %v6966
    %v6968 = vpop.f32.mrb[0].mxu0
    %v6969 = vadd.f32 0.0, %v6968
    %v6970 = vpop.f32.mrb[0].mxu0
    %v6971 = vadd.f32 0.0, %v6970
    %v6972 = vpop.f32.mrb[0].mxu0
    %v6973 = vadd.f32 0.0, %v6972
    %6974 = vdwg.mxu0
    %6975 = vmatprep.subr.bf16.mxu0 %v6797
    %6976 = vmatpush1.bf16.msra.mxu0 %v6796
    %6977 = vmatprep.subr.bf16.mxu0 %v6801
    %6978 = vmatpush1.bf16.msra.mxu0 %v6800
    %6979 = vmatprep.subr.bf16.mxu0 %v6805
    %6980 = vmatpush1.bf16.msra.mxu0 %v6804
    %6981 = vmatprep.subr.bf16.mxu0 %v6809
    %6982 = vmatpush1.bf16.msra.mxu0 %v6808
    %6983 = vmatprep.subr.bf16.mxu0 %v6813
    %6984 = vmatpush1.bf16.msra.mxu0 %v6812
    %6985 = vmatprep.subr.bf16.mxu0 %v6817
    %6986 = vmatpush1.bf16.msra.mxu0 %v6816
    %6987 = vmatprep.subr.bf16.mxu0 %v6821
    %6988 = vmatpush1.bf16.msra.mxu0 %v6820
    %6989 = vmatprep.subr.bf16.mxu0 %v6825
    %6990 = vmatpush1.bf16.msra.mxu0 %v6824
    %6991 = vmatprep.subr.bf16.mxu0 %v6829
    %6992 = vmatpush1.bf16.msra.mxu0 %v6828
    %6993 = vmatprep.subr.bf16.mxu0 %v6833
    %6994 = vmatpush1.bf16.msra.mxu0 %v6832
    %6995 = vmatprep.subr.bf16.mxu0 %v6837
    %6996 = vmatpush1.bf16.msra.mxu0 %v6836
    %6997 = vmatprep.subr.bf16.mxu0 %v6841
    %6998 = vmatpush1.bf16.msra.mxu0 %v6840
    %6999 = vmatprep.subr.bf16.mxu0 %v6845
    %7000 = vmatpush1.bf16.msra.mxu0 %v6844
    %7001 = vmatprep.subr.bf16.mxu0 %v6849
    %7002 = vmatpush1.bf16.msra.mxu0 %v6848
    %7003 = vmatprep.subr.bf16.mxu0 %v6853
    %7004 = vmatpush1.bf16.msra.mxu0 %v6852
    %7005 = vmatprep.subr.bf16.mxu0 %v6857
    %7006 = vmatpush1.bf16.msra.mxu0 %v6856
    %7007 = vmatprep.mubr.bf16.mxu0 %v6597
    %7008 = vmatmul.mubr.bf16.gmra.mrb[0].mxu0 %v6594
    %v7009 = vpop.f32.mrb[0].mxu0
    %v7010 = vadd.f32 0.0, %v7009
    %v7011 = vpop.f32.mrb[0].mxu0
    %v7012 = vadd.f32 0.0, %v7011
    %v7013 = vpop.f32.mrb[0].mxu0
    %v7014 = vadd.f32 0.0, %v7013
    %v7015 = vpop.f32.mrb[0].mxu0
    %v7016 = vadd.f32 0.0, %v7015
    %7017 = vmatprep.mubr.bf16.mxu0 %v6596
    %7018 = vmatmul.mubr.bf16.gmra.mrb[0].mxu0 %v6593
    %v7019 = vpop.f32.mrb[0].mxu0
    %v7020 = vadd.f32 0.0, %v7019
    %v7021 = vpop.f32.mrb[0].mxu0
    %v7022 = vadd.f32 0.0, %v7021
    %v7023 = vpop.f32.mrb[0].mxu0
    %v7024 = vadd.f32 0.0, %v7023
    %v7025 = vpop.f32.mrb[0].mxu0
    %v7026 = vadd.f32 0.0, %v7025
    %7027 = vdwg.mxu0
    %v7028 = vadd.f32 %v6499, %v6957
    %v7029 = vadd.f32 %v6500, %v6959
    %v7030 = vadd.f32 %v6501, %v7010
    %v7031 = vadd.f32 %v6502, %v7012
    %v7032 = vadd.f32 %v6503, %v6961
    %v7033 = vadd.f32 %v6504, %v6963
    %v7034 = vadd.f32 %v6505, %v7014
    %v7035 = vadd.f32 %v6506, %v7016
    %v7036 = vadd.f32 %v6507, %v6967
    %v7037 = vadd.f32 %v6508, %v6969
    %v7038 = vadd.f32 %v6509, %v7020
    %v7039 = vadd.f32 %v6510, %v7022
    %v7040 = vadd.f32 %v6511, %v6971
    %v7041 = vadd.f32 %v6512, %v6973
    %v7042 = vadd.f32 %v6513, %v7024
    %v7043 = vadd.f32 %v6514, %v7026
    %v7044 = vld [vmem:[%s8] sm:$0xff]
    %v7045 = vld [vmem:[%s8 + $0x8] sm:$0xf]
    %vm7046 = vcmask 228352
    %v7048 = vsel %vm7046, %v7044, 0
    %v7051 = vsel %vm7046, %v7045, 0
    %v7054 = vsel %vm591, %v7040, 0
    %v7057 = vsel %vm591, %v7041, 0
    %v7060 = vsel %vm591, %v7042, 0
    %v7063 = vsel %vm591, %v7043, 0
    %7065 = vmatprep.subr.mxu0 %v7029
    %7066 = vmatpush1.msra.mxu0 %v7028
    %7067 = vmatprep.subr.mxu0 %v7033
    %7068 = vmatpush1.msra.mxu0 %v7032
    %7069 = vmatprep.subr.mxu0 %v7037
    %7070 = vmatpush1.msra.mxu0 %v7036
    %7071 = vmatprep.subr.mxu0 %v7057
    %7072 = vmatpush1.msra.mxu0 %v7054
    %7073 = vmatprep.subr.mxu0 0.0
    %7074 = vmatpush1.msra.mxu0 0.0
    %7075 = vmatprep.subr.mxu0 0.0
    %7076 = vmatpush1.msra.mxu0 0.0
    %7077 = vmatprep.subr.mxu0 0.0
    %7078 = vmatpush1.msra.mxu0 0.0
    %7079 = vmatprep.subr.mxu0 0.0
    %7080 = vmatpush1.msra.mxu0 0.0
    %7081 = vmatprep.subr.mxu0 0.0
    %7082 = vmatpush1.msra.mxu0 0.0
    %7083 = vmatprep.subr.mxu0 0.0
    %7084 = vmatpush1.msra.mxu0 0.0
    %7085 = vmatprep.subr.mxu0 0.0
    %7086 = vmatpush1.msra.mxu0 0.0
    %7087 = vmatprep.subr.mxu0 0.0
    %7088 = vmatpush1.msra.mxu0 0.0
    %7089 = vmatprep.subr.mxu0 0.0
    %7090 = vmatpush1.msra.mxu0 0.0
    %7091 = vmatprep.subr.mxu0 0.0
    %7092 = vmatpush1.msra.mxu0 0.0
    %7093 = vmatprep.subr.mxu0 0.0
    %7094 = vmatpush1.msra.mxu0 0.0
    %7095 = vmatprep.subr.mxu0 0.0
    %7096 = vmatpush1.msra.mxu0 0.0
    %7097 = vmatprep.subr.mxu0 0.0
    %7098 = vmatpush1.msra.mxu0 0.0
    %7099 = vmatprep.subr.mxu0 0.0
    %7100 = vmatpush1.msra.mxu0 0.0
    %7101 = vmatprep.subr.mxu0 0.0
    %7102 = vmatpush1.msra.mxu0 0.0
    %7103 = vmatprep.subr.mxu0 0.0
    %7104 = vmatpush1.msra.mxu0 0.0
    %7105 = vmatprep.subr.mxu0 0.0
    %7106 = vmatpush1.msra.mxu0 0.0
    %7107 = vmatprep.subr.mxu0 0.0
    %7108 = vmatpush1.msra.mxu0 0.0
    %7109 = vmatprep.subr.mxu0 0.0
    %7110 = vmatpush1.msra.mxu0 0.0
    %7111 = vmatprep.subr.mxu0 0.0
    %7112 = vmatpush1.msra.mxu0 0.0
    %7113 = vmatprep.subr.mxu0 0.0
    %7114 = vmatpush1.msra.mxu0 0.0
    %7115 = vmatprep.subr.mxu0 0.0
    %7116 = vmatpush1.msra.mxu0 0.0
    %7117 = vmatprep.subr.mxu0 0.0
    %7118 = vmatpush1.msra.mxu0 0.0
    %7119 = vmatprep.subr.mxu0 0.0
    %7120 = vmatpush1.msra.mxu0 0.0
    %7121 = vmatprep.subr.mxu0 0.0
    %7122 = vmatpush1.msra.mxu0 0.0
    %7123 = vmatprep.subr.mxu0 0.0
    %7124 = vmatpush1.msra.mxu0 0.0
    %7125 = vmatprep.subr.mxu0 0.0
    %7126 = vmatpush1.msra.mxu0 0.0
    %7127 = vmatprep.subr.mxu0 0.0
    %7128 = vmatpush1.msra.mxu0 0.0
    %7129 = vmatprep.mubr.f32.mxu0 0.0
    %7130 = vmatmul.mubr.f32.gmra.mrb[0].mxu0 %v7048
    %v7131 = vpop.f32.mrb[0].mxu0
    %v7132 = vadd.f32 0.0, %v7131
    %v7133 = vpop.f32.mrb[0].mxu0
    %v7134 = vadd.f32 0.0, %v7133
    %7135 = vmatprep.mubr.f32.mxu0 0.0
    %7136 = vmatmul.mubr.f32.gmra.mrb[0].mxu0 %v7051
    %v7137 = vpop.f32.mrb[0].mxu0
    %v7138 = vadd.f32 0.0, %v7137
    %v7139 = vpop.f32.mrb[0].mxu0
    %v7140 = vadd.f32 0.0, %v7139
    %7141 = vdwg.mxu0
    %7142 = vmatprep.subr.mxu0 %v7031
    %7143 = vmatpush1.msra.mxu0 %v7030
    %7144 = vmatprep.subr.mxu0 %v7035
    %7145 = vmatpush1.msra.mxu0 %v7034
    %7146 = vmatprep.subr.mxu0 %v7039
    %7147 = vmatpush1.msra.mxu0 %v7038
    %7148 = vmatprep.subr.mxu0 %v7063
    %7149 = vmatpush1.msra.mxu0 %v7060
    %7150 = vmatprep.subr.mxu0 0.0
    %7151 = vmatpush1.msra.mxu0 0.0
    %7152 = vmatprep.subr.mxu0 0.0
    %7153 = vmatpush1.msra.mxu0 0.0
    %7154 = vmatprep.subr.mxu0 0.0
    %7155 = vmatpush1.msra.mxu0 0.0
    %7156 = vmatprep.subr.mxu0 0.0
    %7157 = vmatpush1.msra.mxu0 0.0
    %7158 = vmatprep.subr.mxu0 0.0
    %7159 = vmatpush1.msra.mxu0 0.0
    %7160 = vmatprep.subr.mxu0 0.0
    %7161 = vmatpush1.msra.mxu0 0.0
    %7162 = vmatprep.subr.mxu0 0.0
    %7163 = vmatpush1.msra.mxu0 0.0
    %7164 = vmatprep.subr.mxu0 0.0
    %7165 = vmatpush1.msra.mxu0 0.0
    %7166 = vmatprep.subr.mxu0 0.0
    %7167 = vmatpush1.msra.mxu0 0.0
    %7168 = vmatprep.subr.mxu0 0.0
    %7169 = vmatpush1.msra.mxu0 0.0
    %7170 = vmatprep.subr.mxu0 0.0
    %7171 = vmatpush1.msra.mxu0 0.0
    %7172 = vmatprep.subr.mxu0 0.0
    %7173 = vmatpush1.msra.mxu0 0.0
    %7174 = vmatprep.subr.mxu0 0.0
    %7175 = vmatpush1.msra.mxu0 0.0
    %7176 = vmatprep.subr.mxu0 0.0
    %7177 = vmatpush1.msra.mxu0 0.0
    %7178 = vmatprep.subr.mxu0 0.0
    %7179 = vmatpush1.msra.mxu0 0.0
    %7180 = vmatprep.subr.mxu0 0.0
    %7181 = vmatpush1.msra.mxu0 0.0
    %7182 = vmatprep.subr.mxu0 0.0
    %7183 = vmatpush1.msra.mxu0 0.0
    %7184 = vmatprep.subr.mxu0 0.0
    %7185 = vmatpush1.msra.mxu0 0.0
    %7186 = vmatprep.subr.mxu0 0.0
    %7187 = vmatpush1.msra.mxu0 0.0
    %7188 = vmatprep.subr.mxu0 0.0
    %7189 = vmatpush1.msra.mxu0 0.0
    %7190 = vmatprep.subr.mxu0 0.0
    %7191 = vmatpush1.msra.mxu0 0.0
    %7192 = vmatprep.subr.mxu0 0.0
    %7193 = vmatpush1.msra.mxu0 0.0
    %7194 = vmatprep.subr.mxu0 0.0
    %7195 = vmatpush1.msra.mxu0 0.0
    %7196 = vmatprep.subr.mxu0 0.0
    %7197 = vmatpush1.msra.mxu0 0.0
    %7198 = vmatprep.subr.mxu0 0.0
    %7199 = vmatpush1.msra.mxu0 0.0
    %7200 = vmatprep.subr.mxu0 0.0
    %7201 = vmatpush1.msra.mxu0 0.0
    %7202 = vmatprep.subr.mxu0 0.0
    %7203 = vmatpush1.msra.mxu0 0.0
    %7204 = vmatprep.subr.mxu0 0.0
    %7205 = vmatpush1.msra.mxu0 0.0
    %7206 = vmatprep.mubr.f32.mxu0 0.0
    %7207 = vmatmul.mubr.f32.gmra.mrb[0].mxu0 %v7048
    %v7208 = vpop.f32.mrb[0].mxu0
    %v7209 = vadd.f32 0.0, %v7208
    %v7210 = vpop.f32.mrb[0].mxu0
    %v7211 = vadd.f32 0.0, %v7210
    %7212 = vmatprep.mubr.f32.mxu0 0.0
    %7213 = vmatmul.mubr.f32.gmra.mrb[0].mxu0 %v7051
    %v7214 = vpop.f32.mrb[0].mxu0
    %v7215 = vadd.f32 0.0, %v7214
    %v7216 = vpop.f32.mrb[0].mxu0
    %v7217 = vadd.f32 0.0, %v7216
    %7218 = vdwg.mxu0
    %s7219 = scalar_lea.vmem %s8, 16
    %v7220 = vld [vmem:[%s7219] sm:$0xff]
    %v7221 = vld [vmem:[%s7219 + $0x8] sm:$0xf]
    %v7223 = vsel %vm7046, %v7220, 0
    %v7226 = vsel %vm7046, %v7221, 0
    %7228 = vmatprep.subr.mxu0 %v7029
    %7229 = vmatpush1.msra.mxu0 %v7028
    %7230 = vmatprep.subr.mxu0 %v7033
    %7231 = vmatpush1.msra.mxu0 %v7032
    %7232 = vmatprep.subr.mxu0 %v7037
    %7233 = vmatpush1.msra.mxu0 %v7036
    %7234 = vmatprep.subr.mxu0 %v7057
    %7235 = vmatpush1.msra.mxu0 %v7054
    %7236 = vmatprep.subr.mxu0 0.0
    %7237 = vmatpush1.msra.mxu0 0.0
    %7238 = vmatprep.subr.mxu0 0.0
    %7239 = vmatpush1.msra.mxu0 0.0
    %7240 = vmatprep.subr.mxu0 0.0
    %7241 = vmatpush1.msra.mxu0 0.0
    %7242 = vmatprep.subr.mxu0 0.0
    %7243 = vmatpush1.msra.mxu0 0.0
    %7244 = vmatprep.subr.mxu0 0.0
    %7245 = vmatpush1.msra.mxu0 0.0
    %7246 = vmatprep.subr.mxu0 0.0
    %7247 = vmatpush1.msra.mxu0 0.0
    %7248 = vmatprep.subr.mxu0 0.0
    %7249 = vmatpush1.msra.mxu0 0.0
    %7250 = vmatprep.subr.mxu0 0.0
    %7251 = vmatpush1.msra.mxu0 0.0
    %7252 = vmatprep.subr.mxu0 0.0
    %7253 = vmatpush1.msra.mxu0 0.0
    %7254 = vmatprep.subr.mxu0 0.0
    %7255 = vmatpush1.msra.mxu0 0.0
    %7256 = vmatprep.subr.mxu0 0.0
    %7257 = vmatpush1.msra.mxu0 0.0
    %7258 = vmatprep.subr.mxu0 0.0
    %7259 = vmatpush1.msra.mxu0 0.0
    %7260 = vmatprep.subr.mxu0 0.0
    %7261 = vmatpush1.msra.mxu0 0.0
    %7262 = vmatprep.subr.mxu0 0.0
    %7263 = vmatpush1.msra.mxu0 0.0
    %7264 = vmatprep.subr.mxu0 0.0
    %7265 = vmatpush1.msra.mxu0 0.0
    %7266 = vmatprep.subr.mxu0 0.0
    %7267 = vmatpush1.msra.mxu0 0.0
    %7268 = vmatprep.subr.mxu0 0.0
    %7269 = vmatpush1.msra.mxu0 0.0
    %7270 = vmatprep.subr.mxu0 0.0
    %7271 = vmatpush1.msra.mxu0 0.0
    %7272 = vmatprep.subr.mxu0 0.0
    %7273 = vmatpush1.msra.mxu0 0.0
    %7274 = vmatprep.subr.mxu0 0.0
    %7275 = vmatpush1.msra.mxu0 0.0
    %7276 = vmatprep.subr.mxu0 0.0
    %7277 = vmatpush1.msra.mxu0 0.0
    %7278 = vmatprep.subr.mxu0 0.0
    %7279 = vmatpush1.msra.mxu0 0.0
    %7280 = vmatprep.subr.mxu0 0.0
    %7281 = vmatpush1.msra.mxu0 0.0
    %7282 = vmatprep.subr.mxu0 0.0
    %7283 = vmatpush1.msra.mxu0 0.0
    %7284 = vmatprep.subr.mxu0 0.0
    %7285 = vmatpush1.msra.mxu0 0.0
    %7286 = vmatprep.subr.mxu0 0.0
    %7287 = vmatpush1.msra.mxu0 0.0
    %7288 = vmatprep.subr.mxu0 0.0
    %7289 = vmatpush1.msra.mxu0 0.0
    %7290 = vmatprep.subr.mxu0 0.0
    %7291 = vmatpush1.msra.mxu0 0.0
    %7292 = vmatprep.mubr.f32.mxu0 0.0
    %7293 = vmatmul.mubr.f32.gmra.mrb[0].mxu0 %v7223
    %v7294 = vpop.f32.mrb[0].mxu0
    %v7295 = vadd.f32 0.0, %v7294
    %v7296 = vpop.f32.mrb[0].mxu0
    %v7297 = vadd.f32 0.0, %v7296
    %7298 = vmatprep.mubr.f32.mxu0 0.0
    %7299 = vmatmul.mubr.f32.gmra.mrb[0].mxu0 %v7226
    %v7300 = vpop.f32.mrb[0].mxu0
    %v7301 = vadd.f32 0.0, %v7300
    %v7302 = vpop.f32.mrb[0].mxu0
    %v7303 = vadd.f32 0.0, %v7302
    %7304 = vdwg.mxu0
    %7305 = vmatprep.subr.mxu0 %v7031
    %7306 = vmatpush1.msra.mxu0 %v7030
    %7307 = vmatprep.subr.mxu0 %v7035
    %7308 = vmatpush1.msra.mxu0 %v7034
    %7309 = vmatprep.subr.mxu0 %v7039
    %7310 = vmatpush1.msra.mxu0 %v7038
    %7311 = vmatprep.subr.mxu0 %v7063
    %7312 = vmatpush1.msra.mxu0 %v7060
    %7313 = vmatprep.subr.mxu0 0.0
    %7314 = vmatpush1.msra.mxu0 0.0
    %7315 = vmatprep.subr.mxu0 0.0
    %7316 = vmatpush1.msra.mxu0 0.0
    %7317 = vmatprep.subr.mxu0 0.0
    %7318 = vmatpush1.msra.mxu0 0.0
    %7319 = vmatprep.subr.mxu0 0.0
    %7320 = vmatpush1.msra.mxu0 0.0
    %7321 = vmatprep.subr.mxu0 0.0
    %7322 = vmatpush1.msra.mxu0 0.0
    %7323 = vmatprep.subr.mxu0 0.0
    %7324 = vmatpush1.msra.mxu0 0.0
    %7325 = vmatprep.subr.mxu0 0.0
    %7326 = vmatpush1.msra.mxu0 0.0
    %7327 = vmatprep.subr.mxu0 0.0
    %7328 = vmatpush1.msra.mxu0 0.0
    %7329 = vmatprep.subr.mxu0 0.0
    %7330 = vmatpush1.msra.mxu0 0.0
    %7331 = vmatprep.subr.mxu0 0.0
    %7332 = vmatpush1.msra.mxu0 0.0
    %7333 = vmatprep.subr.mxu0 0.0
    %7334 = vmatpush1.msra.mxu0 0.0
    %7335 = vmatprep.subr.mxu0 0.0
    %7336 = vmatpush1.msra.mxu0 0.0
    %7337 = vmatprep.subr.mxu0 0.0
    %7338 = vmatpush1.msra.mxu0 0.0
    %7339 = vmatprep.subr.mxu0 0.0
    %7340 = vmatpush1.msra.mxu0 0.0
    %7341 = vmatprep.subr.mxu0 0.0
    %7342 = vmatpush1.msra.mxu0 0.0
    %7343 = vmatprep.subr.mxu0 0.0
    %7344 = vmatpush1.msra.mxu0 0.0
    %7345 = vmatprep.subr.mxu0 0.0
    %7346 = vmatpush1.msra.mxu0 0.0
    %7347 = vmatprep.subr.mxu0 0.0
    %7348 = vmatpush1.msra.mxu0 0.0
    %7349 = vmatprep.subr.mxu0 0.0
    %7350 = vmatpush1.msra.mxu0 0.0
    %7351 = vmatprep.subr.mxu0 0.0
    %7352 = vmatpush1.msra.mxu0 0.0
    %7353 = vmatprep.subr.mxu0 0.0
    %7354 = vmatpush1.msra.mxu0 0.0
    %7355 = vmatprep.subr.mxu0 0.0
    %7356 = vmatpush1.msra.mxu0 0.0
    %7357 = vmatprep.subr.mxu0 0.0
    %7358 = vmatpush1.msra.mxu0 0.0
    %7359 = vmatprep.subr.mxu0 0.0
    %7360 = vmatpush1.msra.mxu0 0.0
    %7361 = vmatprep.subr.mxu0 0.0
    %7362 = vmatpush1.msra.mxu0 0.0
    %7363 = vmatprep.subr.mxu0 0.0
    %7364 = vmatpush1.msra.mxu0 0.0
    %7365 = vmatprep.subr.mxu0 0.0
    %7366 = vmatpush1.msra.mxu0 0.0
    %7367 = vmatprep.subr.mxu0 0.0
    %7368 = vmatpush1.msra.mxu0 0.0
    %7369 = vmatprep.mubr.f32.mxu0 0.0
    %7370 = vmatmul.mubr.f32.gmra.mrb[0].mxu0 %v7223
    %v7371 = vpop.f32.mrb[0].mxu0
    %v7372 = vadd.f32 0.0, %v7371
    %v7373 = vpop.f32.mrb[0].mxu0
    %v7374 = vadd.f32 0.0, %v7373
    %7375 = vmatprep.mubr.f32.mxu0 0.0
    %7376 = vmatmul.mubr.f32.gmra.mrb[0].mxu0 %v7226
    %v7377 = vpop.f32.mrb[0].mxu0
    %v7378 = vadd.f32 0.0, %v7377
    %v7379 = vpop.f32.mrb[0].mxu0
    %v7380 = vadd.f32 0.0, %v7379
    %7381 = vdwg.mxu0
    %v7382 = vsel %vm591, %v7138, 0.0
    %v7383 = vadd.f32 %v7132, %v7382
    %v7384 = vrot.slane %v7383, 4
    %v7385 = vadd.f32 %v7383, %v7384
    %v7386 = vrot.slane %v7385, 2
    %v7387 = vadd.f32 %v7385, %v7386
    %v7388 = vrot.slane %v7387, 1
    %v7389 = vadd.f32 %v7387, %v7388
    %v7390 = vsel %vm591, %v7140, 0.0
    %v7391 = vadd.f32 %v7134, %v7390
    %v7392 = vrot.slane %v7391, 4
    %v7393 = vadd.f32 %v7391, %v7392
    %v7394 = vrot.slane %v7393, 2
    %v7395 = vadd.f32 %v7393, %v7394
    %v7396 = vrot.slane %v7395, 1
    %v7397 = vadd.f32 %v7395, %v7396
    %v7398 = vsel %vm591, %v7215, 0.0
    %v7399 = vadd.f32 %v7209, %v7398
    %v7400 = vrot.slane %v7399, 4
    %v7401 = vadd.f32 %v7399, %v7400
    %v7402 = vrot.slane %v7401, 2
    %v7403 = vadd.f32 %v7401, %v7402
    %v7404 = vrot.slane %v7403, 1
    %v7405 = vadd.f32 %v7403, %v7404
    %v7406 = vsel %vm591, %v7217, 0.0
    %v7407 = vadd.f32 %v7211, %v7406
    %v7408 = vrot.slane %v7407, 4
    %v7409 = vadd.f32 %v7407, %v7408
    %v7410 = vrot.slane %v7409, 2
    %v7411 = vadd.f32 %v7409, %v7410
    %v7412 = vrot.slane %v7411, 1
    %v7413 = vadd.f32 %v7411, %v7412
    %v7414 = vsel %vm591, %v7301, 0.0
    %v7415 = vadd.f32 %v7295, %v7414
    %v7416 = vrot.slane %v7415, 4
    %v7417 = vadd.f32 %v7415, %v7416
    %v7418 = vrot.slane %v7417, 2
    %v7419 = vadd.f32 %v7417, %v7418
    %v7420 = vrot.slane %v7419, 1
    %v7421 = vadd.f32 %v7419, %v7420
    %v7422 = vsel %vm591, %v7303, 0.0
    %v7423 = vadd.f32 %v7297, %v7422
    %v7424 = vrot.slane %v7423, 4
    %v7425 = vadd.f32 %v7423, %v7424
    %v7426 = vrot.slane %v7425, 2
    %v7427 = vadd.f32 %v7425, %v7426
    %v7428 = vrot.slane %v7427, 1
    %v7429 = vadd.f32 %v7427, %v7428
    %v7430 = vsel %vm591, %v7378, 0.0
    %v7431 = vadd.f32 %v7372, %v7430
    %v7432 = vrot.slane %v7431, 4
    %v7433 = vadd.f32 %v7431, %v7432
    %v7434 = vrot.slane %v7433, 2
    %v7435 = vadd.f32 %v7433, %v7434
    %v7436 = vrot.slane %v7435, 1
    %v7437 = vadd.f32 %v7435, %v7436
    %v7438 = vsel %vm591, %v7380, 0.0
    %v7439 = vadd.f32 %v7374, %v7438
    %v7440 = vrot.slane %v7439, 4
    %v7441 = vadd.f32 %v7439, %v7440
    %v7442 = vrot.slane %v7441, 2
    %v7443 = vadd.f32 %v7441, %v7442
    %v7444 = vrot.slane %v7443, 1
    %v7445 = vadd.f32 %v7443, %v7444
    %v7446 = vadd.f32 %v7389, %v7421
    %v7447 = vadd.f32 %v7397, %v7429
    %v7448 = vadd.f32 %v7405, %v7437
    %v7449 = vadd.f32 %v7413, %v7445
    %v7450 = vmul.f32 %v7132, %v7132
    %v7451 = vmul.f32 %v7134, %v7134
    %v7452 = vmul.f32 %v7209, %v7209
    %v7453 = vmul.f32 %v7211, %v7211
    %v7454 = vmul.f32 %v7138, %v7138
    %v7455 = vmul.f32 %v7140, %v7140
    %v7456 = vmul.f32 %v7215, %v7215
    %v7457 = vmul.f32 %v7217, %v7217
    %v7458 = vsel %vm591, %v7454, 0.0
    %v7459 = vadd.f32 %v7450, %v7458
    %v7460 = vrot.slane %v7459, 4
    %v7461 = vadd.f32 %v7459, %v7460
    %v7462 = vrot.slane %v7461, 2
    %v7463 = vadd.f32 %v7461, %v7462
    %v7464 = vrot.slane %v7463, 1
    %v7465 = vadd.f32 %v7463, %v7464
    %v7466 = vsel %vm591, %v7455, 0.0
    %v7467 = vadd.f32 %v7451, %v7466
    %v7468 = vrot.slane %v7467, 4
    %v7469 = vadd.f32 %v7467, %v7468
    %v7470 = vrot.slane %v7469, 2
    %v7471 = vadd.f32 %v7469, %v7470
    %v7472 = vrot.slane %v7471, 1
    %v7473 = vadd.f32 %v7471, %v7472
    %v7474 = vsel %vm591, %v7456, 0.0
    %v7475 = vadd.f32 %v7452, %v7474
    %v7476 = vrot.slane %v7475, 4
    %v7477 = vadd.f32 %v7475, %v7476
    %v7478 = vrot.slane %v7477, 2
    %v7479 = vadd.f32 %v7477, %v7478
    %v7480 = vrot.slane %v7479, 1
    %v7481 = vadd.f32 %v7479, %v7480
    %v7482 = vsel %vm591, %v7457, 0.0
    %v7483 = vadd.f32 %v7453, %v7482
    %v7484 = vrot.slane %v7483, 4
    %v7485 = vadd.f32 %v7483, %v7484
    %v7486 = vrot.slane %v7485, 2
    %v7487 = vadd.f32 %v7485, %v7486
    %v7488 = vrot.slane %v7487, 1
    %v7489 = vadd.f32 %v7487, %v7488
    %v7490 = vmul.f32 %v7295, %v7295
    %v7491 = vmul.f32 %v7297, %v7297
    %v7492 = vmul.f32 %v7372, %v7372
    %v7493 = vmul.f32 %v7374, %v7374
    %v7494 = vmul.f32 %v7301, %v7301
    %v7495 = vmul.f32 %v7303, %v7303
    %v7496 = vmul.f32 %v7378, %v7378
    %v7497 = vmul.f32 %v7380, %v7380
    %v7498 = vsel %vm591, %v7494, 0.0
    %v7499 = vadd.f32 %v7490, %v7498
    %v7500 = vrot.slane %v7499, 4
    %v7501 = vadd.f32 %v7499, %v7500
    %v7502 = vrot.slane %v7501, 2
    %v7503 = vadd.f32 %v7501, %v7502
    %v7504 = vrot.slane %v7503, 1
    %v7505 = vadd.f32 %v7503, %v7504
    %v7506 = vsel %vm591, %v7495, 0.0
    %v7507 = vadd.f32 %v7491, %v7506
    %v7508 = vrot.slane %v7507, 4
    %v7509 = vadd.f32 %v7507, %v7508
    %v7510 = vrot.slane %v7509, 2
    %v7511 = vadd.f32 %v7509, %v7510
    %v7512 = vrot.slane %v7511, 1
    %v7513 = vadd.f32 %v7511, %v7512
    %v7514 = vsel %vm591, %v7496, 0.0
    %v7515 = vadd.f32 %v7492, %v7514
    %v7516 = vrot.slane %v7515, 4
    %v7517 = vadd.f32 %v7515, %v7516
    %v7518 = vrot.slane %v7517, 2
    %v7519 = vadd.f32 %v7517, %v7518
    %v7520 = vrot.slane %v7519, 1
    %v7521 = vadd.f32 %v7519, %v7520
    %v7522 = vsel %vm591, %v7497, 0.0
    %v7523 = vadd.f32 %v7493, %v7522
    %v7524 = vrot.slane %v7523, 4
    %v7525 = vadd.f32 %v7523, %v7524
    %v7526 = vrot.slane %v7525, 2
    %v7527 = vadd.f32 %v7525, %v7526
    %v7528 = vrot.slane %v7527, 1
    %v7529 = vadd.f32 %v7527, %v7528
    %v7530 = vadd.f32 %v7465, %v7505
    %v7531 = vadd.f32 %v7473, %v7513
    %v7532 = vadd.f32 %v7481, %v7521
    %v7533 = vadd.f32 %v7489, %v7529
    %v7534 = vld [vmem:[%s9] sm:$0xff]
    %v7535 = vld [vmem:[%s9 + $0x8] sm:$0xff]
    %v7536 = vld [vmem:[%s9 + $0x10] sm:$0xff]
    %v7537 = vld [vmem:[%s9 + $0x18] sm:$0xff]
    %v7538 = vld [vmem:[%s9 + $0x20] sm:$0xff]
    %v7539 = vld [vmem:[%s9 + $0x28] sm:$0xff]
    %v7540 = vld [vmem:[%s9 + $0x30] sm:$0xff]
    %v7541 = vld [vmem:[%s9 + $0x38] sm:$0xff]
    %v7542 = vld [vmem:[%s9 + $0x40] sm:$0xff]
    %v7543 = vld [vmem:[%s9 + $0x48] sm:$0xff]
    %v7544 = vld [vmem:[%s9 + $0x50] sm:$0xff]
    %v7545 = vld [vmem:[%s9 + $0x58] sm:$0xff]
    %v7546 = vld [vmem:[%s9 + $0x60] sm:$0xff]
    %v7547 = vld [vmem:[%s9 + $0x68] sm:$0xff]
    %v7548 = vld [vmem:[%s9 + $0x70] sm:$0xff]
    %v7549 = vld [vmem:[%s9 + $0x78] sm:$0xff]
    %v7550 = vld [vmem:[%s9 + $0x80] sm:$0xff]
    %v7551 = vld [vmem:[%s9 + $0x88] sm:$0xff]
    %v7552 = vld [vmem:[%s9 + $0x90] sm:$0xff]
    %v7553 = vld [vmem:[%s9 + $0x98] sm:$0xff]
    %v7554 = vld [vmem:[%s9 + $0xa0] sm:$0xff]
    %v7555 = vld [vmem:[%s9 + $0xa8] sm:$0xff]
    %v7556 = vld [vmem:[%s9 + $0xb0] sm:$0xff]
    %v7557 = vld [vmem:[%s9 + $0xb8] sm:$0xff]
    %v7558 = vld [vmem:[%s9 + $0xc0] sm:$0xff]
    %v7559 = vld [vmem:[%s9 + $0xc8] sm:$0xff]
    %v7560 = vld [vmem:[%s9 + $0xd0] sm:$0xff]
    %v7561 = vld [vmem:[%s9 + $0xd8] sm:$0xff]
    %v7562 = vld [vmem:[%s9 + $0xe0] sm:$0xff]
    %v7563 = vld [vmem:[%s9 + $0xe8] sm:$0xff]
    %v7564 = vld [vmem:[%s9 + $0xf0] sm:$0xff]
    %v7565 = vld [vmem:[%s9 + $0xf8] sm:$0xff]
    %v7566 = vld [vmem:[%s9 + $0x100] sm:$0xff]
    %v7567 = vld [vmem:[%s9 + $0x108] sm:$0xff]
    %v7568 = vld [vmem:[%s9 + $0x110] sm:$0xff]
    %v7569 = vld [vmem:[%s9 + $0x118] sm:$0xff]
    %v7570 = vld [vmem:[%s9 + $0x120] sm:$0xff]
    %v7571 = vld [vmem:[%s9 + $0x128] sm:$0xff]
    %v7572 = vld [vmem:[%s9 + $0x130] sm:$0xff]
    %v7573 = vld [vmem:[%s9 + $0x138] sm:$0xff]
    %v7574 = vld [vmem:[%s9 + $0x140] sm:$0xff]
    %v7575 = vld [vmem:[%s9 + $0x148] sm:$0xff]
    %v7576 = vld [vmem:[%s9 + $0x150] sm:$0xff]
    %v7577 = vld [vmem:[%s9 + $0x158] sm:$0xff]
    %v7578 = vld [vmem:[%s9 + $0x160] sm:$0xff]
    %v7579 = vld [vmem:[%s9 + $0x168] sm:$0xff]
    %v7580 = vld [vmem:[%s9 + $0x170] sm:$0xff]
    %v7581 = vld [vmem:[%s9 + $0x178] sm:$0xff]
    %v7582 = vld [vmem:[%s9 + $0x180] sm:$0xff]
    %v7583 = vld [vmem:[%s9 + $0x188] sm:$0xff]
    %v7584 = vld [vmem:[%s9 + $0x190] sm:$0xff]
    %v7585 = vld [vmem:[%s9 + $0x198] sm:$0xff]
    %v7586 = vld [vmem:[%s9 + $0x1a0] sm:$0xff]
    %v7587 = vld [vmem:[%s9 + $0x1a8] sm:$0xff]
    %v7588 = vld [vmem:[%s9 + $0x1b0] sm:$0xff]
    %v7589 = vld [vmem:[%s9 + $0x1b8] sm:$0xff]
    %v7590 = vld [vmem:[%s9 + $0x1c0] sm:$0xff]
    %v7591 = vld [vmem:[%s9 + $0x1c8] sm:$0xff]
    %v7592 = vld [vmem:[%s9 + $0x1d0] sm:$0xff]
    %v7593 = vld [vmem:[%s9 + $0x1d8] sm:$0xff]
    %v7594 = vld [vmem:[%s9 + $0x1e0] sm:$0xff]
    %v7595 = vld [vmem:[%s9 + $0x1e8] sm:$0xff]
    %v7596 = vld [vmem:[%s9 + $0x1f0] sm:$0xff]
    %v7597 = vld [vmem:[%s9 + $0x1f8] sm:$0xff]
    %7598 = vmatprep.subr.mxu0 0.0
    %7599 = vmatpush1.msra.mxu0 %v7534
    %7600 = vmatprep.subr.mxu0 0.0
    %7601 = vmatpush1.msra.mxu0 %v7535
    %7602 = vmatprep.subr.mxu0 0.0
    %7603 = vmatpush1.msra.mxu0 %v7536
    %7604 = vmatprep.subr.mxu0 0.0
    %7605 = vmatpush1.msra.mxu0 %v7537
    %7606 = vmatprep.subr.mxu0 0.0
    %7607 = vmatpush1.msra.mxu0 %v7538
    %7608 = vmatprep.subr.mxu0 0.0
    %7609 = vmatpush1.msra.mxu0 %v7539
    %7610 = vmatprep.subr.mxu0 0.0
    %7611 = vmatpush1.msra.mxu0 %v7540
    %7612 = vmatprep.subr.mxu0 0.0
    %7613 = vmatpush1.msra.mxu0 %v7541
    %7614 = vmatprep.subr.mxu0 0.0
    %7615 = vmatpush1.msra.mxu0 %v7542
    %7616 = vmatprep.subr.mxu0 0.0
    %7617 = vmatpush1.msra.mxu0 %v7543
    %7618 = vmatprep.subr.mxu0 0.0
    %7619 = vmatpush1.msra.mxu0 %v7544
    %7620 = vmatprep.subr.mxu0 0.0
    %7621 = vmatpush1.msra.mxu0 %v7545
    %7622 = vmatprep.subr.mxu0 0.0
    %7623 = vmatpush1.msra.mxu0 %v7546
    %7624 = vmatprep.subr.mxu0 0.0
    %7625 = vmatpush1.msra.mxu0 %v7547
    %7626 = vmatprep.subr.mxu0 0.0
    %7627 = vmatpush1.msra.mxu0 %v7548
    %7628 = vmatprep.subr.mxu0 0.0
    %7629 = vmatpush1.msra.mxu0 %v7549
    %7630 = vmatprep.subr.mxu0 0.0
    %7631 = vmatpush1.msra.mxu0 %v7550
    %7632 = vmatprep.subr.mxu0 0.0
    %7633 = vmatpush1.msra.mxu0 %v7551
    %7634 = vmatprep.subr.mxu0 0.0
    %7635 = vmatpush1.msra.mxu0 %v7552
    %7636 = vmatprep.subr.mxu0 0.0
    %7637 = vmatpush1.msra.mxu0 %v7553
    %7638 = vmatprep.subr.mxu0 0.0
    %7639 = vmatpush1.msra.mxu0 %v7554
    %7640 = vmatprep.subr.mxu0 0.0
    %7641 = vmatpush1.msra.mxu0 %v7555
    %7642 = vmatprep.subr.mxu0 0.0
    %7643 = vmatpush1.msra.mxu0 %v7556
    %7644 = vmatprep.subr.mxu0 0.0
    %7645 = vmatpush1.msra.mxu0 %v7557
    %7646 = vmatprep.subr.mxu0 0.0
    %7647 = vmatpush1.msra.mxu0 %v7558
    %7648 = vmatprep.subr.mxu0 0.0
    %7649 = vmatpush1.msra.mxu0 %v7559
    %7650 = vmatprep.subr.mxu0 0.0
    %7651 = vmatpush1.msra.mxu0 %v7560
    %7652 = vmatprep.subr.mxu0 0.0
    %7653 = vmatpush1.msra.mxu0 %v7561
    %7654 = vmatprep.subr.mxu0 0.0
    %7655 = vmatpush1.msra.mxu0 %v7562
    %7656 = vmatprep.subr.mxu0 0.0
    %7657 = vmatpush1.msra.mxu0 %v7563
    %7658 = vmatprep.subr.mxu0 0.0
    %7659 = vmatpush1.msra.mxu0 %v7564
    %7660 = vmatprep.subr.mxu0 0.0
    %7661 = vmatpush1.msra.mxu0 %v7565
    %7662 = vmatprep.mubr.f32.mxu0 %v7447
    %7663 = vmatmul.mubr.f32.gmra.mrb[0].mxu0 %v7446
    %v7664 = vpop.f32.mrb[0].mxu0
    %v7665 = vadd.f32 0.0, %v7664
    %v7666 = vpop.f32.mrb[0].mxu0
    %7667 = vdwg.mxu0
    %7668 = vmatprep.subr.mxu0 0.0
    %7669 = vmatpush1.msra.mxu0 %v7566
    %7670 = vmatprep.subr.mxu0 0.0
    %7671 = vmatpush1.msra.mxu0 %v7567
    %7672 = vmatprep.subr.mxu0 0.0
    %7673 = vmatpush1.msra.mxu0 %v7568
    %7674 = vmatprep.subr.mxu0 0.0
    %7675 = vmatpush1.msra.mxu0 %v7569
    %7676 = vmatprep.subr.mxu0 0.0
    %7677 = vmatpush1.msra.mxu0 %v7570
    %7678 = vmatprep.subr.mxu0 0.0
    %7679 = vmatpush1.msra.mxu0 %v7571
    %7680 = vmatprep.subr.mxu0 0.0
    %7681 = vmatpush1.msra.mxu0 %v7572
    %7682 = vmatprep.subr.mxu0 0.0
    %7683 = vmatpush1.msra.mxu0 %v7573
    %7684 = vmatprep.subr.mxu0 0.0
    %7685 = vmatpush1.msra.mxu0 %v7574
    %7686 = vmatprep.subr.mxu0 0.0
    %7687 = vmatpush1.msra.mxu0 %v7575
    %7688 = vmatprep.subr.mxu0 0.0
    %7689 = vmatpush1.msra.mxu0 %v7576
    %7690 = vmatprep.subr.mxu0 0.0
    %7691 = vmatpush1.msra.mxu0 %v7577
    %7692 = vmatprep.subr.mxu0 0.0
    %7693 = vmatpush1.msra.mxu0 %v7578
    %7694 = vmatprep.subr.mxu0 0.0
    %7695 = vmatpush1.msra.mxu0 %v7579
    %7696 = vmatprep.subr.mxu0 0.0
    %7697 = vmatpush1.msra.mxu0 %v7580
    %7698 = vmatprep.subr.mxu0 0.0
    %7699 = vmatpush1.msra.mxu0 %v7581
    %7700 = vmatprep.subr.mxu0 0.0
    %7701 = vmatpush1.msra.mxu0 %v7582
    %7702 = vmatprep.subr.mxu0 0.0
    %7703 = vmatpush1.msra.mxu0 %v7583
    %7704 = vmatprep.subr.mxu0 0.0
    %7705 = vmatpush1.msra.mxu0 %v7584
    %7706 = vmatprep.subr.mxu0 0.0
    %7707 = vmatpush1.msra.mxu0 %v7585
    %7708 = vmatprep.subr.mxu0 0.0
    %7709 = vmatpush1.msra.mxu0 %v7586
    %7710 = vmatprep.subr.mxu0 0.0
    %7711 = vmatpush1.msra.mxu0 %v7587
    %7712 = vmatprep.subr.mxu0 0.0
    %7713 = vmatpush1.msra.mxu0 %v7588
    %7714 = vmatprep.subr.mxu0 0.0
    %7715 = vmatpush1.msra.mxu0 %v7589
    %7716 = vmatprep.subr.mxu0 0.0
    %7717 = vmatpush1.msra.mxu0 %v7590
    %7718 = vmatprep.subr.mxu0 0.0
    %7719 = vmatpush1.msra.mxu0 %v7591
    %7720 = vmatprep.subr.mxu0 0.0
    %7721 = vmatpush1.msra.mxu0 %v7592
    %7722 = vmatprep.subr.mxu0 0.0
    %7723 = vmatpush1.msra.mxu0 %v7593
    %7724 = vmatprep.subr.mxu0 0.0
    %7725 = vmatpush1.msra.mxu0 %v7594
    %7726 = vmatprep.subr.mxu0 0.0
    %7727 = vmatpush1.msra.mxu0 %v7595
    %7728 = vmatprep.subr.mxu0 0.0
    %7729 = vmatpush1.msra.mxu0 %v7596
    %7730 = vmatprep.subr.mxu0 0.0
    %7731 = vmatpush1.msra.mxu0 %v7597
    %7732 = vmatprep.mubr.f32.mxu0 %v7449
    %7733 = vmatmul.mubr.f32.gmra.mrb[0].mxu0 %v7448
    %v7734 = vpop.f32.mrb[0].mxu0
    %v7735 = vadd.f32 %v7665, %v7734
    %v7736 = vpop.f32.mrb[0].mxu0
    %7737 = vdwg.mxu0
    %v7738 = vmul.f32 %v7735, 0.0034722222
    %7739 = vmatprep.subr.mxu0 0.0
    %7740 = vmatpush1.msra.mxu0 %v7534
    %7741 = vmatprep.subr.mxu0 0.0
    %7742 = vmatpush1.msra.mxu0 %v7535
    %7743 = vmatprep.subr.mxu0 0.0
    %7744 = vmatpush1.msra.mxu0 %v7536
    %7745 = vmatprep.subr.mxu0 0.0
    %7746 = vmatpush1.msra.mxu0 %v7537
    %7747 = vmatprep.subr.mxu0 0.0
    %7748 = vmatpush1.msra.mxu0 %v7538
    %7749 = vmatprep.subr.mxu0 0.0
    %7750 = vmatpush1.msra.mxu0 %v7539
    %7751 = vmatprep.subr.mxu0 0.0
    %7752 = vmatpush1.msra.mxu0 %v7540
    %7753 = vmatprep.subr.mxu0 0.0
    %7754 = vmatpush1.msra.mxu0 %v7541
    %7755 = vmatprep.subr.mxu0 0.0
    %7756 = vmatpush1.msra.mxu0 %v7542
    %7757 = vmatprep.subr.mxu0 0.0
    %7758 = vmatpush1.msra.mxu0 %v7543
    %7759 = vmatprep.subr.mxu0 0.0
    %7760 = vmatpush1.msra.mxu0 %v7544
    %7761 = vmatprep.subr.mxu0 0.0
    %7762 = vmatpush1.msra.mxu0 %v7545
    %7763 = vmatprep.subr.mxu0 0.0
    %7764 = vmatpush1.msra.mxu0 %v7546
    %7765 = vmatprep.subr.mxu0 0.0
    %7766 = vmatpush1.msra.mxu0 %v7547
    %7767 = vmatprep.subr.mxu0 0.0
    %7768 = vmatpush1.msra.mxu0 %v7548
    %7769 = vmatprep.subr.mxu0 0.0
    %7770 = vmatpush1.msra.mxu0 %v7549
    %7771 = vmatprep.subr.mxu0 0.0
    %7772 = vmatpush1.msra.mxu0 %v7550
    %7773 = vmatprep.subr.mxu0 0.0
    %7774 = vmatpush1.msra.mxu0 %v7551
    %7775 = vmatprep.subr.mxu0 0.0
    %7776 = vmatpush1.msra.mxu0 %v7552
    %7777 = vmatprep.subr.mxu0 0.0
    %7778 = vmatpush1.msra.mxu0 %v7553
    %7779 = vmatprep.subr.mxu0 0.0
    %7780 = vmatpush1.msra.mxu0 %v7554
    %7781 = vmatprep.subr.mxu0 0.0
    %7782 = vmatpush1.msra.mxu0 %v7555
    %7783 = vmatprep.subr.mxu0 0.0
    %7784 = vmatpush1.msra.mxu0 %v7556
    %7785 = vmatprep.subr.mxu0 0.0
    %7786 = vmatpush1.msra.mxu0 %v7557
    %7787 = vmatprep.subr.mxu0 0.0
    %7788 = vmatpush1.msra.mxu0 %v7558
    %7789 = vmatprep.subr.mxu0 0.0
    %7790 = vmatpush1.msra.mxu0 %v7559
    %7791 = vmatprep.subr.mxu0 0.0
    %7792 = vmatpush1.msra.mxu0 %v7560
    %7793 = vmatprep.subr.mxu0 0.0
    %7794 = vmatpush1.msra.mxu0 %v7561
    %7795 = vmatprep.subr.mxu0 0.0
    %7796 = vmatpush1.msra.mxu0 %v7562
    %7797 = vmatprep.subr.mxu0 0.0
    %7798 = vmatpush1.msra.mxu0 %v7563
    %7799 = vmatprep.subr.mxu0 0.0
    %7800 = vmatpush1.msra.mxu0 %v7564
    %7801 = vmatprep.subr.mxu0 0.0
    %7802 = vmatpush1.msra.mxu0 %v7565
    %7803 = vmatprep.mubr.f32.mxu0 %v7531
    %7804 = vmatmul.mubr.f32.gmra.mrb[0].mxu0 %v7530
    %v7805 = vpop.f32.mrb[0].mxu0
    %v7806 = vadd.f32 0.0, %v7805
    %v7807 = vpop.f32.mrb[0].mxu0
    %7808 = vdwg.mxu0
    %7809 = vmatprep.subr.mxu0 0.0
    %7810 = vmatpush1.msra.mxu0 %v7566
    %7811 = vmatprep.subr.mxu0 0.0
    %7812 = vmatpush1.msra.mxu0 %v7567
    %7813 = vmatprep.subr.mxu0 0.0
    %7814 = vmatpush1.msra.mxu0 %v7568
    %7815 = vmatprep.subr.mxu0 0.0
    %7816 = vmatpush1.msra.mxu0 %v7569
    %7817 = vmatprep.subr.mxu0 0.0
    %7818 = vmatpush1.msra.mxu0 %v7570
    %7819 = vmatprep.subr.mxu0 0.0
    %7820 = vmatpush1.msra.mxu0 %v7571
    %7821 = vmatprep.subr.mxu0 0.0
    %7822 = vmatpush1.msra.mxu0 %v7572
    %7823 = vmatprep.subr.mxu0 0.0
    %7824 = vmatpush1.msra.mxu0 %v7573
    %7825 = vmatprep.subr.mxu0 0.0
    %7826 = vmatpush1.msra.mxu0 %v7574
    %7827 = vmatprep.subr.mxu0 0.0
    %7828 = vmatpush1.msra.mxu0 %v7575
    %7829 = vmatprep.subr.mxu0 0.0
    %7830 = vmatpush1.msra.mxu0 %v7576
    %7831 = vmatprep.subr.mxu0 0.0
    %7832 = vmatpush1.msra.mxu0 %v7577
    %7833 = vmatprep.subr.mxu0 0.0
    %7834 = vmatpush1.msra.mxu0 %v7578
    %7835 = vmatprep.subr.mxu0 0.0
    %7836 = vmatpush1.msra.mxu0 %v7579
    %7837 = vmatprep.subr.mxu0 0.0
    %7838 = vmatpush1.msra.mxu0 %v7580
    %7839 = vmatprep.subr.mxu0 0.0
    %7840 = vmatpush1.msra.mxu0 %v7581
    %7841 = vmatprep.subr.mxu0 0.0
    %7842 = vmatpush1.msra.mxu0 %v7582
    %7843 = vmatprep.subr.mxu0 0.0
    %7844 = vmatpush1.msra.mxu0 %v7583
    %7845 = vmatprep.subr.mxu0 0.0
    %7846 = vmatpush1.msra.mxu0 %v7584
    %7847 = vmatprep.subr.mxu0 0.0
    %7848 = vmatpush1.msra.mxu0 %v7585
    %7849 = vmatprep.subr.mxu0 0.0
    %7850 = vmatpush1.msra.mxu0 %v7586
    %7851 = vmatprep.subr.mxu0 0.0
    %7852 = vmatpush1.msra.mxu0 %v7587
    %7853 = vmatprep.subr.mxu0 0.0
    %7854 = vmatpush1.msra.mxu0 %v7588
    %7855 = vmatprep.subr.mxu0 0.0
    %7856 = vmatpush1.msra.mxu0 %v7589
    %7857 = vmatprep.subr.mxu0 0.0
    %7858 = vmatpush1.msra.mxu0 %v7590
    %7859 = vmatprep.subr.mxu0 0.0
    %7860 = vmatpush1.msra.mxu0 %v7591
    %7861 = vmatprep.subr.mxu0 0.0
    %7862 = vmatpush1.msra.mxu0 %v7592
    %7863 = vmatprep.subr.mxu0 0.0
    %7864 = vmatpush1.msra.mxu0 %v7593
    %7865 = vmatprep.subr.mxu0 0.0
    %7866 = vmatpush1.msra.mxu0 %v7594
    %7867 = vmatprep.subr.mxu0 0.0
    %7868 = vmatpush1.msra.mxu0 %v7595
    %7869 = vmatprep.subr.mxu0 0.0
    %7870 = vmatpush1.msra.mxu0 %v7596
    %7871 = vmatprep.subr.mxu0 0.0
    %7872 = vmatpush1.msra.mxu0 %v7597
    %7873 = vmatprep.mubr.f32.mxu0 %v7533
    %7874 = vmatmul.mubr.f32.gmra.mrb[0].mxu0 %v7532
    %v7875 = vpop.f32.mrb[0].mxu0
    %v7876 = vadd.f32 %v7806, %v7875
    %v7877 = vpop.f32.mrb[0].mxu0
    %7878 = vdwg.mxu0
    %v7879 = vmul.f32 %v7876, 0.0034722222
    %v7880 = vmul.f32 %v7738, %v7738
    %v7881 = vsub.f32 %v7879, %v7880
    %v7882 = vld [vmem:[%s11] sm:$0x1]
    %v7883 = vadd.f32 %v7881, 1e-05
    %v7884 = vrsqrt.pop %v7883
    %v7885 = vmul.f32 %v7882, %v7884
    %v7886 = vld [vmem:[%s12] sm:$0x1]
    %v7887 = vmul.f32 %v7738, %v7885
    %v7888 = vsub.f32 %v7886, %v7887
    %v7889 = vld [vmem:[%s10] sm:$0xff]
    %v7890 = vld [vmem:[%s10 + $0x8] sm:$0xff]
    %v7891 = vld [vmem:[%s10 + $0x10] sm:$0xff]
    %v7892 = vld [vmem:[%s10 + $0x18] sm:$0xff]
    %v7893 = vld [vmem:[%s10 + $0x20] sm:$0xff]
    %v7894 = vld [vmem:[%s10 + $0x28] sm:$0xff]
    %v7895 = vld [vmem:[%s10 + $0x30] sm:$0xff]
    %v7896 = vld [vmem:[%s10 + $0x38] sm:$0xff]
    %v7897 = vld [vmem:[%s10 + $0x40] sm:$0xff]
    %v7898 = vld [vmem:[%s10 + $0x48] sm:$0xff]
    %v7899 = vld [vmem:[%s10 + $0x50] sm:$0xff]
    %v7900 = vld [vmem:[%s10 + $0x58] sm:$0xff]
    %v7901 = vld [vmem:[%s10 + $0x60] sm:$0xff]
    %v7902 = vld [vmem:[%s10 + $0x68] sm:$0xff]
    %v7903 = vld [vmem:[%s10 + $0x70] sm:$0xff]
    %v7904 = vld [vmem:[%s10 + $0x78] sm:$0xff]
    %vm7905 = vcmask 261120
    %v7907 = vsel %vm7905, %v7885, 0
    %7909 = vmatprep.subr.mxu0 %v7890
    %7910 = vmatpush1.msra.mxu0 %v7889
    %7911 = vmatprep.subr.mxu0 %v7894
    %7912 = vmatpush1.msra.mxu0 %v7893
    %7913 = vmatprep.subr.mxu0 %v7898
    %7914 = vmatpush1.msra.mxu0 %v7897
    %7915 = vmatprep.subr.mxu0 %v7902
    %7916 = vmatpush1.msra.mxu0 %v7901
    %7917 = vmatprep.subr.mxu0 0.0
    %7918 = vmatpush1.msra.mxu0 0.0
    %7919 = vmatprep.subr.mxu0 0.0
    %7920 = vmatpush1.msra.mxu0 0.0
    %7921 = vmatprep.subr.mxu0 0.0
    %7922 = vmatpush1.msra.mxu0 0.0
    %7923 = vmatprep.subr.mxu0 0.0
    %7924 = vmatpush1.msra.mxu0 0.0
    %7925 = vmatprep.subr.mxu0 0.0
    %7926 = vmatpush1.msra.mxu0 0.0
    %7927 = vmatprep.subr.mxu0 0.0
    %7928 = vmatpush1.msra.mxu0 0.0
    %7929 = vmatprep.subr.mxu0 0.0
    %7930 = vmatpush1.msra.mxu0 0.0
    %7931 = vmatprep.subr.mxu0 0.0
    %7932 = vmatpush1.msra.mxu0 0.0
    %7933 = vmatprep.subr.mxu0 0.0
    %7934 = vmatpush1.msra.mxu0 0.0
    %7935 = vmatprep.subr.mxu0 0.0
    %7936 = vmatpush1.msra.mxu0 0.0
    %7937 = vmatprep.subr.mxu0 0.0
    %7938 = vmatpush1.msra.mxu0 0.0
    %7939 = vmatprep.subr.mxu0 0.0
    %7940 = vmatpush1.msra.mxu0 0.0
    %7941 = vmatprep.subr.mxu0 0.0
    %7942 = vmatpush1.msra.mxu0 0.0
    %7943 = vmatprep.subr.mxu0 0.0
    %7944 = vmatpush1.msra.mxu0 0.0
    %7945 = vmatprep.subr.mxu0 0.0
    %7946 = vmatpush1.msra.mxu0 0.0
    %7947 = vmatprep.subr.mxu0 0.0
    %7948 = vmatpush1.msra.mxu0 0.0
    %7949 = vmatprep.subr.mxu0 0.0
    %7950 = vmatpush1.msra.mxu0 0.0
    %7951 = vmatprep.subr.mxu0 0.0
    %7952 = vmatpush1.msra.mxu0 0.0
    %7953 = vmatprep.subr.mxu0 0.0
    %7954 = vmatpush1.msra.mxu0 0.0
    %7955 = vmatprep.subr.mxu0 0.0
    %7956 = vmatpush1.msra.mxu0 0.0
    %7957 = vmatprep.subr.mxu0 0.0
    %7958 = vmatpush1.msra.mxu0 0.0
    %7959 = vmatprep.subr.mxu0 0.0
    %7960 = vmatpush1.msra.mxu0 0.0
    %7961 = vmatprep.subr.mxu0 0.0
    %7962 = vmatpush1.msra.mxu0 0.0
    %7963 = vmatprep.subr.mxu0 0.0
    %7964 = vmatpush1.msra.mxu0 0.0
    %7965 = vmatprep.subr.mxu0 0.0
    %7966 = vmatpush1.msra.mxu0 0.0
    %7967 = vmatprep.subr.mxu0 0.0
    %7968 = vmatpush1.msra.mxu0 0.0
    %7969 = vmatprep.subr.mxu0 0.0
    %7970 = vmatpush1.msra.mxu0 0.0
    %7971 = vmatprep.subr.mxu0 0.0
    %7972 = vmatpush1.msra.mxu0 0.0
    %7973 = vmatprep.mubr.f32.mxu0 0.0
    %7974 = vmatmul.mubr.f32.gmra.mrb[0].mxu0 %v7907
    %v7975 = vpop.f32.mrb[0].mxu0
    %v7976 = vadd.f32 0.0, %v7975
    %v7977 = vpop.f32.mrb[0].mxu0
    %v7978 = vadd.f32 0.0, %v7977
    %7979 = vdwg.mxu0
    %7980 = vmatprep.subr.mxu0 %v7892
    %7981 = vmatpush1.msra.mxu0 %v7891
    %7982 = vmatprep.subr.mxu0 %v7896
    %7983 = vmatpush1.msra.mxu0 %v7895
    %7984 = vmatprep.subr.mxu0 %v7900
    %7985 = vmatpush1.msra.mxu0 %v7899
    %7986 = vmatprep.subr.mxu0 %v7904
    %7987 = vmatpush1.msra.mxu0 %v7903
    %7988 = vmatprep.subr.mxu0 0.0
    %7989 = vmatpush1.msra.mxu0 0.0
    %7990 = vmatprep.subr.mxu0 0.0
    %7991 = vmatpush1.msra.mxu0 0.0
    %7992 = vmatprep.subr.mxu0 0.0
    %7993 = vmatpush1.msra.mxu0 0.0
    %7994 = vmatprep.subr.mxu0 0.0
    %7995 = vmatpush1.msra.mxu0 0.0
    %7996 = vmatprep.subr.mxu0 0.0
    %7997 = vmatpush1.msra.mxu0 0.0
    %7998 = vmatprep.subr.mxu0 0.0
    %7999 = vmatpush1.msra.mxu0 0.0
    %8000 = vmatprep.subr.mxu0 0.0
    %8001 = vmatpush1.msra.mxu0 0.0
    %8002 = vmatprep.subr.mxu0 0.0
    %8003 = vmatpush1.msra.mxu0 0.0
    %8004 = vmatprep.subr.mxu0 0.0
    %8005 = vmatpush1.msra.mxu0 0.0
    %8006 = vmatprep.subr.mxu0 0.0
    %8007 = vmatpush1.msra.mxu0 0.0
    %8008 = vmatprep.subr.mxu0 0.0
    %8009 = vmatpush1.msra.mxu0 0.0
    %8010 = vmatprep.subr.mxu0 0.0
    %8011 = vmatpush1.msra.mxu0 0.0
    %8012 = vmatprep.subr.mxu0 0.0
    %8013 = vmatpush1.msra.mxu0 0.0
    %8014 = vmatprep.subr.mxu0 0.0
    %8015 = vmatpush1.msra.mxu0 0.0
    %8016 = vmatprep.subr.mxu0 0.0
    %8017 = vmatpush1.msra.mxu0 0.0
    %8018 = vmatprep.subr.mxu0 0.0
    %8019 = vmatpush1.msra.mxu0 0.0
    %8020 = vmatprep.subr.mxu0 0.0
    %8021 = vmatpush1.msra.mxu0 0.0
    %8022 = vmatprep.subr.mxu0 0.0
    %8023 = vmatpush1.msra.mxu0 0.0
    %8024 = vmatprep.subr.mxu0 0.0
    %8025 = vmatpush1.msra.mxu0 0.0
    %8026 = vmatprep.subr.mxu0 0.0
    %8027 = vmatpush1.msra.mxu0 0.0
    %8028 = vmatprep.subr.mxu0 0.0
    %8029 = vmatpush1.msra.mxu0 0.0
    %8030 = vmatprep.subr.mxu0 0.0
    %8031 = vmatpush1.msra.mxu0 0.0
    %8032 = vmatprep.subr.mxu0 0.0
    %8033 = vmatpush1.msra.mxu0 0.0
    %8034 = vmatprep.subr.mxu0 0.0
    %8035 = vmatpush1.msra.mxu0 0.0
    %8036 = vmatprep.subr.mxu0 0.0
    %8037 = vmatpush1.msra.mxu0 0.0
    %8038 = vmatprep.subr.mxu0 0.0
    %8039 = vmatpush1.msra.mxu0 0.0
    %8040 = vmatprep.subr.mxu0 0.0
    %8041 = vmatpush1.msra.mxu0 0.0
    %8042 = vmatprep.subr.mxu0 0.0
    %8043 = vmatpush1.msra.mxu0 0.0
    %8044 = vmatprep.mubr.f32.mxu0 0.0
    %8045 = vmatmul.mubr.f32.gmra.mrb[0].mxu0 %v7907
    %v8046 = vpop.f32.mrb[0].mxu0
    %v8047 = vadd.f32 0.0, %v8046
    %v8048 = vpop.f32.mrb[0].mxu0
    %v8049 = vadd.f32 0.0, %v8048
    %8050 = vdwg.mxu0
    %v8052 = vsel %vm7905, %v7888, 0
    %8054 = vmatprep.subr.mxu0 %v7890
    %8055 = vmatpush1.msra.mxu0 %v7889
    %8056 = vmatprep.subr.mxu0 %v7894
    %8057 = vmatpush1.msra.mxu0 %v7893
    %8058 = vmatprep.subr.mxu0 %v7898
    %8059 = vmatpush1.msra.mxu0 %v7897
    %8060 = vmatprep.subr.mxu0 %v7902
    %8061 = vmatpush1.msra.mxu0 %v7901
    %8062 = vmatprep.subr.mxu0 0.0
    %8063 = vmatpush1.msra.mxu0 0.0
    %8064 = vmatprep.subr.mxu0 0.0
    %8065 = vmatpush1.msra.mxu0 0.0
    %8066 = vmatprep.subr.mxu0 0.0
    %8067 = vmatpush1.msra.mxu0 0.0
    %8068 = vmatprep.subr.mxu0 0.0
    %8069 = vmatpush1.msra.mxu0 0.0
    %8070 = vmatprep.subr.mxu0 0.0
    %8071 = vmatpush1.msra.mxu0 0.0
    %8072 = vmatprep.subr.mxu0 0.0
    %8073 = vmatpush1.msra.mxu0 0.0
    %8074 = vmatprep.subr.mxu0 0.0
    %8075 = vmatpush1.msra.mxu0 0.0
    %8076 = vmatprep.subr.mxu0 0.0
    %8077 = vmatpush1.msra.mxu0 0.0
    %8078 = vmatprep.subr.mxu0 0.0
    %8079 = vmatpush1.msra.mxu0 0.0
    %8080 = vmatprep.subr.mxu0 0.0
    %8081 = vmatpush1.msra.mxu0 0.0
    %8082 = vmatprep.subr.mxu0 0.0
    %8083 = vmatpush1.msra.mxu0 0.0
    %8084 = vmatprep.subr.mxu0 0.0
    %8085 = vmatpush1.msra.mxu0 0.0
    %8086 = vmatprep.subr.mxu0 0.0
    %8087 = vmatpush1.msra.mxu0 0.0
    %8088 = vmatprep.subr.mxu0 0.0
    %8089 = vmatpush1.msra.mxu0 0.0
    %8090 = vmatprep.subr.mxu0 0.0
    %8091 = vmatpush1.msra.mxu0 0.0
    %8092 = vmatprep.subr.mxu0 0.0
    %8093 = vmatpush1.msra.mxu0 0.0
    %8094 = vmatprep.subr.mxu0 0.0
    %8095 = vmatpush1.msra.mxu0 0.0
    %8096 = vmatprep.subr.mxu0 0.0
    %8097 = vmatpush1.msra.mxu0 0.0
    %8098 = vmatprep.subr.mxu0 0.0
    %8099 = vmatpush1.msra.mxu0 0.0
    %8100 = vmatprep.subr.mxu0 0.0
    %8101 = vmatpush1.msra.mxu0 0.0
    %8102 = vmatprep.subr.mxu0 0.0
    %8103 = vmatpush1.msra.mxu0 0.0
    %8104 = vmatprep.subr.mxu0 0.0
    %8105 = vmatpush1.msra.mxu0 0.0
    %8106 = vmatprep.subr.mxu0 0.0
    %8107 = vmatpush1.msra.mxu0 0.0
    %8108 = vmatprep.subr.mxu0 0.0
    %8109 = vmatpush1.msra.mxu0 0.0
    %8110 = vmatprep.subr.mxu0 0.0
    %8111 = vmatpush1.msra.mxu0 0.0
    %8112 = vmatprep.subr.mxu0 0.0
    %8113 = vmatpush1.msra.mxu0 0.0
    %8114 = vmatprep.subr.mxu0 0.0
    %8115 = vmatpush1.msra.mxu0 0.0
    %8116 = vmatprep.subr.mxu0 0.0
    %8117 = vmatpush1.msra.mxu0 0.0
    %8118 = vmatprep.mubr.f32.mxu0 0.0
    %8119 = vmatmul.mubr.f32.gmra.mrb[0].mxu0 %v8052
    %v8120 = vpop.f32.mrb[0].mxu0
    %v8121 = vadd.f32 0.0, %v8120
    %v8122 = vpop.f32.mrb[0].mxu0
    %v8123 = vadd.f32 0.0, %v8122
    %8124 = vdwg.mxu0
    %8125 = vmatprep.subr.mxu0 %v7892
    %8126 = vmatpush1.msra.mxu0 %v7891
    %8127 = vmatprep.subr.mxu0 %v7896
    %8128 = vmatpush1.msra.mxu0 %v7895
    %8129 = vmatprep.subr.mxu0 %v7900
    %8130 = vmatpush1.msra.mxu0 %v7899
    %8131 = vmatprep.subr.mxu0 %v7904
    %8132 = vmatpush1.msra.mxu0 %v7903
    %8133 = vmatprep.subr.mxu0 0.0
    %8134 = vmatpush1.msra.mxu0 0.0
    %8135 = vmatprep.subr.mxu0 0.0
    %8136 = vmatpush1.msra.mxu0 0.0
    %8137 = vmatprep.subr.mxu0 0.0
    %8138 = vmatpush1.msra.mxu0 0.0
    %8139 = vmatprep.subr.mxu0 0.0
    %8140 = vmatpush1.msra.mxu0 0.0
    %8141 = vmatprep.subr.mxu0 0.0
    %8142 = vmatpush1.msra.mxu0 0.0
    %8143 = vmatprep.subr.mxu0 0.0
    %8144 = vmatpush1.msra.mxu0 0.0
    %8145 = vmatprep.subr.mxu0 0.0
    %8146 = vmatpush1.msra.mxu0 0.0
    %8147 = vmatprep.subr.mxu0 0.0
    %8148 = vmatpush1.msra.mxu0 0.0
    %8149 = vmatprep.subr.mxu0 0.0
    %8150 = vmatpush1.msra.mxu0 0.0
    %8151 = vmatprep.subr.mxu0 0.0
    %8152 = vmatpush1.msra.mxu0 0.0
    %8153 = vmatprep.subr.mxu0 0.0
    %8154 = vmatpush1.msra.mxu0 0.0
    %8155 = vmatprep.subr.mxu0 0.0
    %8156 = vmatpush1.msra.mxu0 0.0
    %8157 = vmatprep.subr.mxu0 0.0
    %8158 = vmatpush1.msra.mxu0 0.0
    %8159 = vmatprep.subr.mxu0 0.0
    %8160 = vmatpush1.msra.mxu0 0.0
    %8161 = vmatprep.subr.mxu0 0.0
    %8162 = vmatpush1.msra.mxu0 0.0
    %8163 = vmatprep.subr.mxu0 0.0
    %8164 = vmatpush1.msra.mxu0 0.0
    %8165 = vmatprep.subr.mxu0 0.0
    %8166 = vmatpush1.msra.mxu0 0.0
    %8167 = vmatprep.subr.mxu0 0.0
    %8168 = vmatpush1.msra.mxu0 0.0
    %8169 = vmatprep.subr.mxu0 0.0
    %8170 = vmatpush1.msra.mxu0 0.0
    %8171 = vmatprep.subr.mxu0 0.0
    %8172 = vmatpush1.msra.mxu0 0.0
    %8173 = vmatprep.subr.mxu0 0.0
    %8174 = vmatpush1.msra.mxu0 0.0
    %8175 = vmatprep.subr.mxu0 0.0
    %8176 = vmatpush1.msra.mxu0 0.0
    %8177 = vmatprep.subr.mxu0 0.0
    %8178 = vmatpush1.msra.mxu0 0.0
    %8179 = vmatprep.subr.mxu0 0.0
    %8180 = vmatpush1.msra.mxu0 0.0
    %8181 = vmatprep.subr.mxu0 0.0
    %8182 = vmatpush1.msra.mxu0 0.0
    %8183 = vmatprep.subr.mxu0 0.0
    %8184 = vmatpush1.msra.mxu0 0.0
    %8185 = vmatprep.subr.mxu0 0.0
    %8186 = vmatpush1.msra.mxu0 0.0
    %8187 = vmatprep.subr.mxu0 0.0
    %8188 = vmatpush1.msra.mxu0 0.0
    %8189 = vmatprep.mubr.f32.mxu0 0.0
    %8190 = vmatmul.mubr.f32.gmra.mrb[0].mxu0 %v8052
    %v8191 = vpop.f32.mrb[0].mxu0
    %v8192 = vadd.f32 0.0, %v8191
    %v8193 = vpop.f32.mrb[0].mxu0
    %v8194 = vadd.f32 0.0, %v8193
    %8195 = vdwg.mxu0
    %v8196 = vlaneseq
    %v8197 = vshrl.u32 %v8196, 7
    %v8198 = vsub.s32 0, %v8197
    %v8199 = vrot.slane %v7976, %v8198
    %v8200 = vlaneseq
    %v8201 = vshrl.u32 %v8200, 7
    %v8202 = vsub.s32 0, %v8201
    %v8203 = vrot.slane %v7978, %v8202
    %v8204 = vlaneseq
    %v8205 = vshrl.u32 %v8204, 7
    %v8206 = vsub.s32 0, %v8205
    %v8207 = vrot.slane %v8047, %v8206
    %v8208 = vlaneseq
    %v8209 = vshrl.u32 %v8208, 7
    %v8210 = vsub.s32 0, %v8209
    %v8211 = vrot.slane %v8049, %v8210
    %v8212 = vmul.f32 %v7132, %v8199
    %v8213 = vmul.f32 %v7134, %v8203
    %v8214 = vmul.f32 %v7209, %v8207
    %v8215 = vmul.f32 %v7211, %v8211
    %v8216 = vmul.f32 %v7138, %v8199
    %v8217 = vmul.f32 %v7140, %v8203
    %v8218 = vmul.f32 %v7215, %v8207
    %v8219 = vmul.f32 %v7217, %v8211
    %v8220 = vlaneseq
    %v8221 = vshrl.u32 %v8220, 7
    %v8222 = vsub.s32 0, %v8221
    %v8223 = vrot.slane %v8121, %v8222
    %v8224 = vlaneseq
    %v8225 = vshrl.u32 %v8224, 7
    %v8226 = vsub.s32 0, %v8225
    %v8227 = vrot.slane %v8123, %v8226
    %v8228 = vlaneseq
    %v8229 = vshrl.u32 %v8228, 7
    %v8230 = vsub.s32 0, %v8229
    %v8231 = vrot.slane %v8192, %v8230
    %v8232 = vlaneseq
    %v8233 = vshrl.u32 %v8232, 7
    %v8234 = vsub.s32 0, %v8233
    %v8235 = vrot.slane %v8194, %v8234
    %v8236 = vadd.f32 %v8212, %v8223
    %v8237 = vadd.f32 %v8213, %v8227
    %v8238 = vadd.f32 %v8214, %v8231
    %v8239 = vadd.f32 %v8215, %v8235
    %v8240 = vadd.f32 %v8216, %v8223
    %v8241 = vadd.f32 %v8217, %v8227
    %v8242 = vadd.f32 %v8218, %v8231
    %v8243 = vadd.f32 %v8219, %v8235
    %v8244 = vmul.f32 %v7295, %v8199
    %v8245 = vmul.f32 %v7297, %v8203
    %v8246 = vmul.f32 %v7372, %v8207
    %v8247 = vmul.f32 %v7374, %v8211
    %v8248 = vmul.f32 %v7301, %v8199
    %v8249 = vmul.f32 %v7303, %v8203
    %v8250 = vmul.f32 %v7378, %v8207
    %v8251 = vmul.f32 %v7380, %v8211
    %v8252 = vadd.f32 %v8244, %v8223
    %v8253 = vadd.f32 %v8245, %v8227
    %v8254 = vadd.f32 %v8246, %v8231
    %v8255 = vadd.f32 %v8247, %v8235
    %v8256 = vadd.f32 %v8248, %v8223
    %v8257 = vadd.f32 %v8249, %v8227
    %v8258 = vadd.f32 %v8250, %v8231
    %v8259 = vadd.f32 %v8251, %v8235
    %v8260 = vmax.f32 %v8236, %v8252
    %v8261 = vmax.f32 %v8237, %v8253
    %v8262 = vmax.f32 %v8238, %v8254
    %v8263 = vmax.f32 %v8239, %v8255
    %v8264 = vmax.f32 %v8240, %v8256
    %v8265 = vmax.f32 %v8241, %v8257
    %v8266 = vmax.f32 %v8242, %v8258
    %v8267 = vmax.f32 %v8243, %v8259
    %v8268 = vmax.f32 %v8260, %v8262
    %v8269 = vmax.f32 %v8261, %v8263
    %v8270 = vmax.f32 %v8264, %v8266
    %v8271 = vmax.f32 %v8265, %v8267
    %v8272 = vmax.f32 %v8268, 0.0
    %v8273 = vmax.f32 %v8269, 0.0
    %v8274 = vmax.f32 %v8270, 0.0
    %v8275 = vmax.f32 %v8271, 0.0
    %8276 = vst [vmem:[#allocation3] sm:$0xff] %v8272
    %vm8277 = vcmask 523264
    %8278 = vst.msk [vmem:[#allocation3 + $0x8] sm:$0xff] %vm8277, %v8273
    %8279 = vst [vmem:[#allocation3 + $0x10] sm:$0xf] %v8274
    %vm8280 = vcmask 519168
    %8281 = vst.msk [vmem:[#allocation3 + $0x18] sm:$0xf] %vm8280, %v8275
    %v8282 = vld [vmem:[#allocation3] sm:$0xff]
    %v8283 = vld [vmem:[#allocation3 + $0x8] sm:$0xff]
    %v8284 = vpack.c.bf16 %v8282, %v8282
    %v8285 = vpack.c.bf16 %v8283, %v8283
    %v8286 = vld [vmem:[%s13] sm:$0xff]
    %v8287 = vld [vmem:[%s13 + $0x8] sm:$0xff]
    %v8288 = vld [vmem:[%s13 + $0x10] sm:$0xff]
    %v8289 = vld [vmem:[%s13 + $0x18] sm:$0xff]
    %v8290 = vld [vmem:[%s13 + $0x20] sm:$0xff]
    %v8291 = vld [vmem:[%s13 + $0x28] sm:$0xff]
    %v8292 = vld [vmem:[%s13 + $0x30] sm:$0xff]
    %v8293 = vld [vmem:[%s13 + $0x38] sm:$0xff]
    %v8294 = vld [vmem:[%s13 + $0x40] sm:$0xff]
    %v8295 = vld [vmem:[%s13 + $0x48] sm:$0xff]
    %v8296 = vld [vmem:[%s13 + $0x50] sm:$0xff]
    %v8297 = vld [vmem:[%s13 + $0x58] sm:$0xff]
    %v8298 = vld [vmem:[%s13 + $0x60] sm:$0xff]
    %v8299 = vld [vmem:[%s13 + $0x68] sm:$0xff]
    %v8300 = vld [vmem:[%s13 + $0x70] sm:$0xff]
    %v8301 = vld [vmem:[%s13 + $0x78] sm:$0xff]
    %v8302 = vld [vmem:[%s13 + $0x80] sm:$0xff]
    %v8303 = vld [vmem:[%s13 + $0x88] sm:$0xff]
    %v8304 = vld [vmem:[%s13 + $0x90] sm:$0xff]
    %v8305 = vld [vmem:[%s13 + $0x98] sm:$0xff]
    %v8306 = vld [vmem:[%s13 + $0xa0] sm:$0xff]
    %v8307 = vld [vmem:[%s13 + $0xa8] sm:$0xff]
    %v8308 = vld [vmem:[%s13 + $0xb0] sm:$0xff]
    %v8309 = vld [vmem:[%s13 + $0xb8] sm:$0xff]
    %v8310 = vld [vmem:[#allocation3] sm:$0xfe]
    %v8311 = vld [vmem:[#allocation3 + $0x8] sm:$0xfe]
    %v8312 = vld [vmem:[#allocation3 + $0x10] sm:$0x1]
    %v8313 = vld [vmem:[#allocation3 + $0x18] sm:$0x1]
    %v8314 = vpack.c.bf16 %v8312, %v8310
    %v8315 = vpack.c.bf16 %v8313, %v8311
    %s8316 = scalar_lea.vmem %s13, 192
    %v8317 = vld [vmem:[%s8316] sm:$0xff]
    %v8318 = vld [vmem:[%s8316 + $0x8] sm:$0xff]
    %v8319 = vld [vmem:[%s8316 + $0x10] sm:$0xff]
    %v8320 = vld [vmem:[%s8316 + $0x18] sm:$0xff]
    %v8321 = vld [vmem:[%s8316 + $0x20] sm:$0xff]
    %v8322 = vld [vmem:[%s8316 + $0x28] sm:$0xff]
    %v8323 = vld [vmem:[%s8316 + $0x30] sm:$0xff]
    %v8324 = vld [vmem:[%s8316 + $0x38] sm:$0xff]
    %v8325 = vld [vmem:[%s8316 + $0x40] sm:$0xff]
    %v8326 = vld [vmem:[%s8316 + $0x48] sm:$0xff]
    %v8327 = vld [vmem:[%s8316 + $0x50] sm:$0xff]
    %v8328 = vld [vmem:[%s8316 + $0x58] sm:$0xff]
    %v8329 = vld [vmem:[%s8316 + $0x60] sm:$0xff]
    %v8330 = vld [vmem:[%s8316 + $0x68] sm:$0xff]
    %v8331 = vld [vmem:[%s8316 + $0x70] sm:$0xff]
    %v8332 = vld [vmem:[%s8316 + $0x78] sm:$0xff]
    %v8333 = vld [vmem:[%s8316 + $0x80] sm:$0xff]
    %v8334 = vld [vmem:[%s8316 + $0x88] sm:$0xff]
    %v8335 = vld [vmem:[%s8316 + $0x90] sm:$0xff]
    %v8336 = vld [vmem:[%s8316 + $0x98] sm:$0xff]
    %v8337 = vld [vmem:[%s8316 + $0xa0] sm:$0xff]
    %v8338 = vld [vmem:[%s8316 + $0xa8] sm:$0xff]
    %v8339 = vld [vmem:[%s8316 + $0xb0] sm:$0xff]
    %v8340 = vld [vmem:[%s8316 + $0xb8] sm:$0xff]
    %v8342 = vshrl.u32 %v8314, 16
    %v8344 = vshll.u32 %v8314, 16
    %v8346 = vrot.slane %v8344, 1
    %v8347 = vor.u32 %v8342, %v8346
    %v8349 = vshrl.u32 %v8315, 16
    %v8351 = vshll.u32 %v8315, 16
    %v8353 = vrot.slane %v8351, 1
    %v8354 = vor.u32 %v8349, %v8353
    %v8380 = vunpack.c.l.b16 %v8317
    %v8381 = vunpack.c.h.b16 %v8317
    %v8382 = vunpack.c.l.b16 %v8318
    %v8383 = vunpack.c.h.b16 %v8318
    %v8384 = vunpack.c.l.b16 %v8319
    %v8385 = vunpack.c.h.b16 %v8319
    %v8386 = vunpack.c.l.b16 %v8320
    %v8387 = vunpack.c.h.b16 %v8320
    %v8388 = vunpack.c.l.b16 %v8321
    %v8389 = vunpack.c.h.b16 %v8321
    %v8390 = vunpack.c.l.b16 %v8322
    %v8391 = vunpack.c.h.b16 %v8322
    %v8392 = vunpack.c.l.b16 %v8323
    %v8393 = vunpack.c.h.b16 %v8323
    %v8394 = vunpack.c.l.b16 %v8324
    %v8395 = vunpack.c.h.b16 %v8324
    %v8396 = vunpack.c.l.b16 %v8325
    %v8397 = vunpack.c.h.b16 %v8325
    %v8398 = vunpack.c.l.b16 %v8326
    %v8399 = vunpack.c.h.b16 %v8326
    %v8400 = vunpack.c.l.b16 %v8327
    %v8401 = vunpack.c.h.b16 %v8327
    %v8402 = vunpack.c.l.b16 %v8328
    %v8403 = vunpack.c.h.b16 %v8328
    %v8404 = vunpack.c.l.b16 %v8329
    %v8405 = vunpack.c.h.b16 %v8329
    %v8406 = vunpack.c.l.b16 %v8330
    %v8407 = vunpack.c.h.b16 %v8330
    %v8408 = vunpack.c.l.b16 %v8331
    %v8409 = vunpack.c.h.b16 %v8331
    %v8410 = vunpack.c.l.b16 %v8332
    %v8411 = vunpack.c.h.b16 %v8332
    %v8412 = vunpack.c.l.b16 %v8333
    %v8413 = vunpack.c.h.b16 %v8333
    %v8414 = vunpack.c.l.b16 %v8334
    %v8415 = vunpack.c.h.b16 %v8334
    %v8416 = vunpack.c.l.b16 %v8335
    %v8417 = vunpack.c.h.b16 %v8335
    %v8418 = vunpack.c.l.b16 %v8336
    %v8419 = vunpack.c.h.b16 %v8336
    %v8420 = vunpack.c.l.b16 %v8337
    %v8421 = vunpack.c.h.b16 %v8337
    %v8422 = vunpack.c.l.b16 %v8338
    %v8423 = vunpack.c.h.b16 %v8338
    %v8424 = vunpack.c.l.b16 %v8339
    %v8425 = vunpack.c.h.b16 %v8339
    %v8426 = vunpack.c.l.b16 %v8340
    %v8427 = vunpack.c.h.b16 %v8340
    %v8428 = vpack.c.b16 %v8382, %v8380
    %v8429 = vpack.c.b16 %v8383, %v8381
    %v8430 = vpack.c.b16 %v8386, %v8384
    %v8431 = vpack.c.b16 %v8387, %v8385
    %v8432 = vpack.c.b16 %v8390, %v8388
    %v8433 = vpack.c.b16 %v8391, %v8389
    %v8434 = vpack.c.b16 %v8394, %v8392
    %v8435 = vpack.c.b16 %v8395, %v8393
    %v8436 = vpack.c.b16 %v8398, %v8396
    %v8437 = vpack.c.b16 %v8399, %v8397
    %v8438 = vpack.c.b16 %v8402, %v8400
    %v8439 = vpack.c.b16 %v8403, %v8401
    %v8440 = vpack.c.b16 %v8406, %v8404
    %v8441 = vpack.c.b16 %v8407, %v8405
    %v8442 = vpack.c.b16 %v8410, %v8408
    %v8443 = vpack.c.b16 %v8411, %v8409
    %v8444 = vpack.c.b16 %v8414, %v8412
    %v8445 = vpack.c.b16 %v8415, %v8413
    %v8446 = vpack.c.b16 %v8418, %v8416
    %v8447 = vpack.c.b16 %v8419, %v8417
    %v8448 = vpack.c.b16 %v8422, %v8420
    %v8449 = vpack.c.b16 %v8423, %v8421
    %v8450 = vpack.c.b16 %v8426, %v8424
    %v8451 = vpack.c.b16 %v8427, %v8425
    %v8477 = vsel %vm8277, %v8354, 0
    %8479 = vmatprep.subr.bf16.mxu0 %v8429
    %8480 = vmatpush1.bf16.msra.mxu0 %v8428
    %8481 = vmatprep.subr.bf16.mxu0 %v8431
    %8482 = vmatpush1.bf16.msra.mxu0 %v8430
    %8483 = vmatprep.subr.bf16.mxu0 %v8433
    %8484 = vmatpush1.bf16.msra.mxu0 %v8432
    %8485 = vmatprep.subr.bf16.mxu0 %v8435
    %8486 = vmatpush1.bf16.msra.mxu0 %v8434
    %8487 = vmatprep.subr.bf16.mxu0 %v8437
    %8488 = vmatpush1.bf16.msra.mxu0 %v8436
    %8489 = vmatprep.subr.bf16.mxu0 %v8439
    %8490 = vmatpush1.bf16.msra.mxu0 %v8438
    %8491 = vmatprep.subr.bf16.mxu0 %v8441
    %8492 = vmatpush1.bf16.msra.mxu0 %v8440
    %8493 = vmatprep.subr.bf16.mxu0 %v8443
    %8494 = vmatpush1.bf16.msra.mxu0 %v8442
    %8495 = vmatprep.subr.bf16.mxu0 %v8445
    %8496 = vmatpush1.bf16.msra.mxu0 %v8444
    %8497 = vmatprep.subr.bf16.mxu0 %v8447
    %8498 = vmatpush1.bf16.msra.mxu0 %v8446
    %8499 = vmatprep.subr.bf16.mxu0 %v8449
    %8500 = vmatpush1.bf16.msra.mxu0 %v8448
    %8501 = vmatprep.subr.bf16.mxu0 %v8451
    %8502 = vmatpush1.bf16.msra.mxu0 %v8450
    %8503 = vmatprep.subr.bf16.mxu0 0
    %8504 = vmatpush1.bf16.msra.mxu0 0
    %8505 = vmatprep.subr.bf16.mxu0 0
    %8506 = vmatpush1.bf16.msra.mxu0 0
    %8507 = vmatprep.subr.bf16.mxu0 0
    %8508 = vmatpush1.bf16.msra.mxu0 0
    %8509 = vmatprep.subr.bf16.mxu0 0
    %8510 = vmatpush1.bf16.msra.mxu0 0
    %8511 = vmatprep.mubr.bf16.mxu0 %v8477
    %8512 = vmatmul.mubr.bf16.gmra.mrb[0].mxu0 %v8347
    %v8513 = vpop.f32.mrb[0].mxu0
    %v8514 = vadd.f32 0.0, %v8513
    %v8515 = vpop.f32.mrb[0].mxu0
    %v8516 = vadd.f32 0.0, %v8515
    %v8517 = vpop.f32.mrb[0].mxu0
    %v8518 = vpop.f32.mrb[0].mxu0
    %8519 = vdwg.mxu0
    %v8544 = vunpack.c.l.b16 %v8286
    %v8545 = vunpack.c.h.b16 %v8286
    %v8546 = vunpack.c.l.b16 %v8287
    %v8547 = vunpack.c.h.b16 %v8287
    %v8548 = vunpack.c.l.b16 %v8288
    %v8549 = vunpack.c.h.b16 %v8288
    %v8550 = vunpack.c.l.b16 %v8289
    %v8551 = vunpack.c.h.b16 %v8289
    %v8552 = vunpack.c.l.b16 %v8290
    %v8553 = vunpack.c.h.b16 %v8290
    %v8554 = vunpack.c.l.b16 %v8291
    %v8555 = vunpack.c.h.b16 %v8291
    %v8556 = vunpack.c.l.b16 %v8292
    %v8557 = vunpack.c.h.b16 %v8292
    %v8558 = vunpack.c.l.b16 %v8293
    %v8559 = vunpack.c.h.b16 %v8293
    %v8560 = vunpack.c.l.b16 %v8294
    %v8561 = vunpack.c.h.b16 %v8294
    %v8562 = vunpack.c.l.b16 %v8295
    %v8563 = vunpack.c.h.b16 %v8295
    %v8564 = vunpack.c.l.b16 %v8296
    %v8565 = vunpack.c.h.b16 %v8296
    %v8566 = vunpack.c.l.b16 %v8297
    %v8567 = vunpack.c.h.b16 %v8297
    %v8568 = vunpack.c.l.b16 %v8298
    %v8569 = vunpack.c.h.b16 %v8298
    %v8570 = vunpack.c.l.b16 %v8299
    %v8571 = vunpack.c.h.b16 %v8299
    %v8572 = vunpack.c.l.b16 %v8300
    %v8573 = vunpack.c.h.b16 %v8300
    %v8574 = vunpack.c.l.b16 %v8301
    %v8575 = vunpack.c.h.b16 %v8301
    %v8576 = vunpack.c.l.b16 %v8302
    %v8577 = vunpack.c.h.b16 %v8302
    %v8578 = vunpack.c.l.b16 %v8303
    %v8579 = vunpack.c.h.b16 %v8303
    %v8580 = vunpack.c.l.b16 %v8304
    %v8581 = vunpack.c.h.b16 %v8304
    %v8582 = vunpack.c.l.b16 %v8305
    %v8583 = vunpack.c.h.b16 %v8305
    %v8584 = vunpack.c.l.b16 %v8306
    %v8585 = vunpack.c.h.b16 %v8306
    %v8586 = vunpack.c.l.b16 %v8307
    %v8587 = vunpack.c.h.b16 %v8307
    %v8588 = vunpack.c.l.b16 %v8308
    %v8589 = vunpack.c.h.b16 %v8308
    %v8590 = vunpack.c.l.b16 %v8309
    %v8591 = vunpack.c.h.b16 %v8309
    %v8592 = vpack.c.b16 %v8546, %v8544
    %v8593 = vpack.c.b16 %v8547, %v8545
    %v8594 = vpack.c.b16 %v8550, %v8548
    %v8595 = vpack.c.b16 %v8551, %v8549
    %v8596 = vpack.c.b16 %v8554, %v8552
    %v8597 = vpack.c.b16 %v8555, %v8553
    %v8598 = vpack.c.b16 %v8558, %v8556
    %v8599 = vpack.c.b16 %v8559, %v8557
    %v8600 = vpack.c.b16 %v8562, %v8560
    %v8601 = vpack.c.b16 %v8563, %v8561
    %v8602 = vpack.c.b16 %v8566, %v8564
    %v8603 = vpack.c.b16 %v8567, %v8565
    %v8604 = vpack.c.b16 %v8570, %v8568
    %v8605 = vpack.c.b16 %v8571, %v8569
    %v8606 = vpack.c.b16 %v8574, %v8572
    %v8607 = vpack.c.b16 %v8575, %v8573
    %v8608 = vpack.c.b16 %v8578, %v8576
    %v8609 = vpack.c.b16 %v8579, %v8577
    %v8610 = vpack.c.b16 %v8582, %v8580
    %v8611 = vpack.c.b16 %v8583, %v8581
    %v8612 = vpack.c.b16 %v8586, %v8584
    %v8613 = vpack.c.b16 %v8587, %v8585
    %v8614 = vpack.c.b16 %v8590, %v8588
    %v8615 = vpack.c.b16 %v8591, %v8589
    %v8641 = vsel %vm8277, %v8285, 0
    %8643 = vmatprep.subr.bf16.mxu0 %v8593
    %8644 = vmatpush1.bf16.msra.mxu0 %v8592
    %8645 = vmatprep.subr.bf16.mxu0 %v8595
    %8646 = vmatpush1.bf16.msra.mxu0 %v8594
    %8647 = vmatprep.subr.bf16.mxu0 %v8597
    %8648 = vmatpush1.bf16.msra.mxu0 %v8596
    %8649 = vmatprep.subr.bf16.mxu0 %v8599
    %8650 = vmatpush1.bf16.msra.mxu0 %v8598
    %8651 = vmatprep.subr.bf16.mxu0 %v8601
    %8652 = vmatpush1.bf16.msra.mxu0 %v8600
    %8653 = vmatprep.subr.bf16.mxu0 %v8603
    %8654 = vmatpush1.bf16.msra.mxu0 %v8602
    %8655 = vmatprep.subr.bf16.mxu0 %v8605
    %8656 = vmatpush1.bf16.msra.mxu0 %v8604
    %8657 = vmatprep.subr.bf16.mxu0 %v8607
    %8658 = vmatpush1.bf16.msra.mxu0 %v8606
    %8659 = vmatprep.subr.bf16.mxu0 %v8609
    %8660 = vmatpush1.bf16.msra.mxu0 %v8608
    %8661 = vmatprep.subr.bf16.mxu0 %v8611
    %8662 = vmatpush1.bf16.msra.mxu0 %v8610
    %8663 = vmatprep.subr.bf16.mxu0 %v8613
    %8664 = vmatpush1.bf16.msra.mxu0 %v8612
    %8665 = vmatprep.subr.bf16.mxu0 %v8615
    %8666 = vmatpush1.bf16.msra.mxu0 %v8614
    %8667 = vmatprep.subr.bf16.mxu0 0
    %8668 = vmatpush1.bf16.msra.mxu0 0
    %8669 = vmatprep.subr.bf16.mxu0 0
    %8670 = vmatpush1.bf16.msra.mxu0 0
    %8671 = vmatprep.subr.bf16.mxu0 0
    %8672 = vmatpush1.bf16.msra.mxu0 0
    %8673 = vmatprep.subr.bf16.mxu0 0
    %8674 = vmatpush1.bf16.msra.mxu0 0
    %8675 = vmatprep.mubr.bf16.mxu0 %v8641
    %8676 = vmatmul.mubr.bf16.gmra.mrb[0].mxu0 %v8284
    %v8677 = vpop.f32.mrb[0].mxu0
    %v8678 = vadd.f32 %v8514, %v8677
    %v8679 = vpop.f32.mrb[0].mxu0
    %v8680 = vadd.f32 %v8516, %v8679
    %v8681 = vpop.f32.mrb[0].mxu0
    %v8682 = vpop.f32.mrb[0].mxu0
    %8683 = vdwg.mxu0
    %v8684 = vld [vmem:[#allocation3] sm:$0xfc]
    %v8685 = vld [vmem:[#allocation3 + $0x8] sm:$0xfc]
    %v8686 = vld [vmem:[#allocation3 + $0x10] sm:$0x3]
    %v8687 = vld [vmem:[#allocation3 + $0x18] sm:$0x3]
    %v8688 = vpack.c.bf16 %v8686, %v8684
    %v8689 = vpack.c.bf16 %v8687, %v8685
    %s8690 = scalar_lea.vmem %s13, 384
    %v8691 = vld [vmem:[%s8690] sm:$0xff]
    %v8692 = vld [vmem:[%s8690 + $0x8] sm:$0xff]
    %v8693 = vld [vmem:[%s8690 + $0x10] sm:$0xff]
    %v8694 = vld [vmem:[%s8690 + $0x18] sm:$0xff]
    %v8695 = vld [vmem:[%s8690 + $0x20] sm:$0xff]
    %v8696 = vld [vmem:[%s8690 + $0x28] sm:$0xff]
    %v8697 = vld [vmem:[%s8690 + $0x30] sm:$0xff]
    %v8698 = vld [vmem:[%s8690 + $0x38] sm:$0xff]
    %v8699 = vld [vmem:[%s8690 + $0x40] sm:$0xff]
    %v8700 = vld [vmem:[%s8690 + $0x48] sm:$0xff]
    %v8701 = vld [vmem:[%s8690 + $0x50] sm:$0xff]
    %v8702 = vld [vmem:[%s8690 + $0x58] sm:$0xff]
    %v8703 = vld [vmem:[%s8690 + $0x60] sm:$0xff]
    %v8704 = vld [vmem:[%s8690 + $0x68] sm:$0xff]
    %v8705 = vld [vmem:[%s8690 + $0x70] sm:$0xff]
    %v8706 = vld [vmem:[%s8690 + $0x78] sm:$0xff]
    %v8707 = vld [vmem:[%s8690 + $0x80] sm:$0xff]
    %v8708 = vld [vmem:[%s8690 + $0x88] sm:$0xff]
    %v8709 = vld [vmem:[%s8690 + $0x90] sm:$0xff]
    %v8710 = vld [vmem:[%s8690 + $0x98] sm:$0xff]
    %v8711 = vld [vmem:[%s8690 + $0xa0] sm:$0xff]
    %v8712 = vld [vmem:[%s8690 + $0xa8] sm:$0xff]
    %v8713 = vld [vmem:[%s8690 + $0xb0] sm:$0xff]
    %v8714 = vld [vmem:[%s8690 + $0xb8] sm:$0xff]
    %v8717 = vrot.slane %v8688, 1
    %v8718 = vrot.slane %v8689, 1
    %v8744 = vunpack.c.l.b16 %v8691
    %v8745 = vunpack.c.h.b16 %v8691
    %v8746 = vunpack.c.l.b16 %v8692
    %v8747 = vunpack.c.h.b16 %v8692
    %v8748 = vunpack.c.l.b16 %v8693
    %v8749 = vunpack.c.h.b16 %v8693
    %v8750 = vunpack.c.l.b16 %v8694
    %v8751 = vunpack.c.h.b16 %v8694
    %v8752 = vunpack.c.l.b16 %v8695
    %v8753 = vunpack.c.h.b16 %v8695
    %v8754 = vunpack.c.l.b16 %v8696
    %v8755 = vunpack.c.h.b16 %v8696
    %v8756 = vunpack.c.l.b16 %v8697
    %v8757 = vunpack.c.h.b16 %v8697
    %v8758 = vunpack.c.l.b16 %v8698
    %v8759 = vunpack.c.h.b16 %v8698
    %v8760 = vunpack.c.l.b16 %v8699
    %v8761 = vunpack.c.h.b16 %v8699
    %v8762 = vunpack.c.l.b16 %v8700
    %v8763 = vunpack.c.h.b16 %v8700
    %v8764 = vunpack.c.l.b16 %v8701
    %v8765 = vunpack.c.h.b16 %v8701
    %v8766 = vunpack.c.l.b16 %v8702
    %v8767 = vunpack.c.h.b16 %v8702
    %v8768 = vunpack.c.l.b16 %v8703
    %v8769 = vunpack.c.h.b16 %v8703
    %v8770 = vunpack.c.l.b16 %v8704
    %v8771 = vunpack.c.h.b16 %v8704
    %v8772 = vunpack.c.l.b16 %v8705
    %v8773 = vunpack.c.h.b16 %v8705
    %v8774 = vunpack.c.l.b16 %v8706
    %v8775 = vunpack.c.h.b16 %v8706
    %v8776 = vunpack.c.l.b16 %v8707
    %v8777 = vunpack.c.h.b16 %v8707
    %v8778 = vunpack.c.l.b16 %v8708
    %v8779 = vunpack.c.h.b16 %v8708
    %v8780 = vunpack.c.l.b16 %v8709
    %v8781 = vunpack.c.h.b16 %v8709
    %v8782 = vunpack.c.l.b16 %v8710
    %v8783 = vunpack.c.h.b16 %v8710
    %v8784 = vunpack.c.l.b16 %v8711
    %v8785 = vunpack.c.h.b16 %v8711
    %v8786 = vunpack.c.l.b16 %v8712
    %v8787 = vunpack.c.h.b16 %v8712
    %v8788 = vunpack.c.l.b16 %v8713
    %v8789 = vunpack.c.h.b16 %v8713
    %v8790 = vunpack.c.l.b16 %v8714
    %v8791 = vunpack.c.h.b16 %v8714
    %v8792 = vpack.c.b16 %v8746, %v8744
    %v8793 = vpack.c.b16 %v8747, %v8745
    %v8794 = vpack.c.b16 %v8750, %v8748
    %v8795 = vpack.c.b16 %v8751, %v8749
    %v8796 = vpack.c.b16 %v8754, %v8752
    %v8797 = vpack.c.b16 %v8755, %v8753
    %v8798 = vpack.c.b16 %v8758, %v8756
    %v8799 = vpack.c.b16 %v8759, %v8757
    %v8800 = vpack.c.b16 %v8762, %v8760
    %v8801 = vpack.c.b16 %v8763, %v8761
    %v8802 = vpack.c.b16 %v8766, %v8764
    %v8803 = vpack.c.b16 %v8767, %v8765
    %v8804 = vpack.c.b16 %v8770, %v8768
    %v8805 = vpack.c.b16 %v8771, %v8769
    %v8806 = vpack.c.b16 %v8774, %v8772
    %v8807 = vpack.c.b16 %v8775, %v8773
    %v8808 = vpack.c.b16 %v8778, %v8776
    %v8809 = vpack.c.b16 %v8779, %v8777
    %v8810 = vpack.c.b16 %v8782, %v8780
    %v8811 = vpack.c.b16 %v8783, %v8781
    %v8812 = vpack.c.b16 %v8786, %v8784
    %v8813 = vpack.c.b16 %v8787, %v8785
    %v8814 = vpack.c.b16 %v8790, %v8788
    %v8815 = vpack.c.b16 %v8791, %v8789
    %v8841 = vsel %vm8277, %v8718, 0
    %8843 = vmatprep.subr.bf16.mxu0 %v8793
    %8844 = vmatpush1.bf16.msra.mxu0 %v8792
    %8845 = vmatprep.subr.bf16.mxu0 %v8795
    %8846 = vmatpush1.bf16.msra.mxu0 %v8794
    %8847 = vmatprep.subr.bf16.mxu0 %v8797
    %8848 = vmatpush1.bf16.msra.mxu0 %v8796
    %8849 = vmatprep.subr.bf16.mxu0 %v8799
    %8850 = vmatpush1.bf16.msra.mxu0 %v8798
    %8851 = vmatprep.subr.bf16.mxu0 %v8801
    %8852 = vmatpush1.bf16.msra.mxu0 %v8800
    %8853 = vmatprep.subr.bf16.mxu0 %v8803
    %8854 = vmatpush1.bf16.msra.mxu0 %v8802
    %8855 = vmatprep.subr.bf16.mxu0 %v8805
    %8856 = vmatpush1.bf16.msra.mxu0 %v8804
    %8857 = vmatprep.subr.bf16.mxu0 %v8807
    %8858 = vmatpush1.bf16.msra.mxu0 %v8806
    %8859 = vmatprep.subr.bf16.mxu0 %v8809
    %8860 = vmatpush1.bf16.msra.mxu0 %v8808
    %8861 = vmatprep.subr.bf16.mxu0 %v8811
    %8862 = vmatpush1.bf16.msra.mxu0 %v8810
    %8863 = vmatprep.subr.bf16.mxu0 %v8813
    %8864 = vmatpush1.bf16.msra.mxu0 %v8812
    %8865 = vmatprep.subr.bf16.mxu0 %v8815
    %8866 = vmatpush1.bf16.msra.mxu0 %v8814
    %8867 = vmatprep.subr.bf16.mxu0 0
    %8868 = vmatpush1.bf16.msra.mxu0 0
    %8869 = vmatprep.subr.bf16.mxu0 0
    %8870 = vmatpush1.bf16.msra.mxu0 0
    %8871 = vmatprep.subr.bf16.mxu0 0
    %8872 = vmatpush1.bf16.msra.mxu0 0
    %8873 = vmatprep.subr.bf16.mxu0 0
    %8874 = vmatpush1.bf16.msra.mxu0 0
    %8875 = vmatprep.mubr.bf16.mxu0 %v8841
    %8876 = vmatmul.mubr.bf16.gmra.mrb[0].mxu0 %v8717
    %v8877 = vpop.f32.mrb[0].mxu0
    %v8878 = vadd.f32 0.0, %v8877
    %v8879 = vpop.f32.mrb[0].mxu0
    %v8880 = vadd.f32 0.0, %v8879
    %v8881 = vpop.f32.mrb[0].mxu0
    %v8882 = vpop.f32.mrb[0].mxu0
    %8883 = vdwg.mxu0
    %v8884 = vadd.f32 %v8678, %v8878
    %v8885 = vadd.f32 %v8680, %v8880
    %v8886 = vld [vmem:[#allocation3] sm:$0xf8]
    %v8887 = vld [vmem:[#allocation3 + $0x8] sm:$0xf8]
    %v8888 = vld [vmem:[#allocation3 + $0x10] sm:$0x7]
    %v8889 = vld [vmem:[#allocation3 + $0x18] sm:$0x7]
    %v8890 = vpack.c.bf16 %v8888, %v8886
    %v8891 = vpack.c.bf16 %v8889, %v8887
    %s8892 = scalar_lea.vmem %s13, 576
    %v8893 = vld [vmem:[%s8892] sm:$0xff]
    %v8894 = vld [vmem:[%s8892 + $0x8] sm:$0xff]
    %v8895 = vld [vmem:[%s8892 + $0x10] sm:$0xff]
    %v8896 = vld [vmem:[%s8892 + $0x18] sm:$0xff]
    %v8897 = vld [vmem:[%s8892 + $0x20] sm:$0xff]
    %v8898 = vld [vmem:[%s8892 + $0x28] sm:$0xff]
    %v8899 = vld [vmem:[%s8892 + $0x30] sm:$0xff]
    %v8900 = vld [vmem:[%s8892 + $0x38] sm:$0xff]
    %v8901 = vld [vmem:[%s8892 + $0x40] sm:$0xff]
    %v8902 = vld [vmem:[%s8892 + $0x48] sm:$0xff]
    %v8903 = vld [vmem:[%s8892 + $0x50] sm:$0xff]
    %v8904 = vld [vmem:[%s8892 + $0x58] sm:$0xff]
    %v8905 = vld [vmem:[%s8892 + $0x60] sm:$0xff]
    %v8906 = vld [vmem:[%s8892 + $0x68] sm:$0xff]
    %v8907 = vld [vmem:[%s8892 + $0x70] sm:$0xff]
    %v8908 = vld [vmem:[%s8892 + $0x78] sm:$0xff]
    %v8909 = vld [vmem:[%s8892 + $0x80] sm:$0xff]
    %v8910 = vld [vmem:[%s8892 + $0x88] sm:$0xff]
    %v8911 = vld [vmem:[%s8892 + $0x90] sm:$0xff]
    %v8912 = vld [vmem:[%s8892 + $0x98] sm:$0xff]
    %v8913 = vld [vmem:[%s8892 + $0xa0] sm:$0xff]
    %v8914 = vld [vmem:[%s8892 + $0xa8] sm:$0xff]
    %v8915 = vld [vmem:[%s8892 + $0xb0] sm:$0xff]
    %v8916 = vld [vmem:[%s8892 + $0xb8] sm:$0xff]
    %v8918 = vshrl.u32 %v8890, 16
    %v8920 = vrot.slane %v8918, 1
    %v8921 = vshll.u32 %v8890, 16
    %v8923 = vrot.slane %v8921, 2
    %v8924 = vor.u32 %v8920, %v8923
    %v8926 = vshrl.u32 %v8891, 16
    %v8928 = vrot.slane %v8926, 1
    %v8929 = vshll.u32 %v8891, 16
    %v8931 = vrot.slane %v8929, 2
    %v8932 = vor.u32 %v8928, %v8931
    %v8958 = vunpack.c.l.b16 %v8893
    %v8959 = vunpack.c.h.b16 %v8893
    %v8960 = vunpack.c.l.b16 %v8894
    %v8961 = vunpack.c.h.b16 %v8894
    %v8962 = vunpack.c.l.b16 %v8895
    %v8963 = vunpack.c.h.b16 %v8895
    %v8964 = vunpack.c.l.b16 %v8896
    %v8965 = vunpack.c.h.b16 %v8896
    %v8966 = vunpack.c.l.b16 %v8897
    %v8967 = vunpack.c.h.b16 %v8897
    %v8968 = vunpack.c.l.b16 %v8898
    %v8969 = vunpack.c.h.b16 %v8898
    %v8970 = vunpack.c.l.b16 %v8899
    %v8971 = vunpack.c.h.b16 %v8899
    %v8972 = vunpack.c.l.b16 %v8900
    %v8973 = vunpack.c.h.b16 %v8900
    %v8974 = vunpack.c.l.b16 %v8901
    %v8975 = vunpack.c.h.b16 %v8901
    %v8976 = vunpack.c.l.b16 %v8902
    %v8977 = vunpack.c.h.b16 %v8902
    %v8978 = vunpack.c.l.b16 %v8903
    %v8979 = vunpack.c.h.b16 %v8903
    %v8980 = vunpack.c.l.b16 %v8904
    %v8981 = vunpack.c.h.b16 %v8904
    %v8982 = vunpack.c.l.b16 %v8905
    %v8983 = vunpack.c.h.b16 %v8905
    %v8984 = vunpack.c.l.b16 %v8906
    %v8985 = vunpack.c.h.b16 %v8906
    %v8986 = vunpack.c.l.b16 %v8907
    %v8987 = vunpack.c.h.b16 %v8907
    %v8988 = vunpack.c.l.b16 %v8908
    %v8989 = vunpack.c.h.b16 %v8908
    %v8990 = vunpack.c.l.b16 %v8909
    %v8991 = vunpack.c.h.b16 %v8909
    %v8992 = vunpack.c.l.b16 %v8910
    %v8993 = vunpack.c.h.b16 %v8910
    %v8994 = vunpack.c.l.b16 %v8911
    %v8995 = vunpack.c.h.b16 %v8911
    %v8996 = vunpack.c.l.b16 %v8912
    %v8997 = vunpack.c.h.b16 %v8912
    %v8998 = vunpack.c.l.b16 %v8913
    %v8999 = vunpack.c.h.b16 %v8913
    %v9000 = vunpack.c.l.b16 %v8914
    %v9001 = vunpack.c.h.b16 %v8914
    %v9002 = vunpack.c.l.b16 %v8915
    %v9003 = vunpack.c.h.b16 %v8915
    %v9004 = vunpack.c.l.b16 %v8916
    %v9005 = vunpack.c.h.b16 %v8916
    %v9006 = vpack.c.b16 %v8960, %v8958
    %v9007 = vpack.c.b16 %v8961, %v8959
    %v9008 = vpack.c.b16 %v8964, %v8962
    %v9009 = vpack.c.b16 %v8965, %v8963
    %v9010 = vpack.c.b16 %v8968, %v8966
    %v9011 = vpack.c.b16 %v8969, %v8967
    %v9012 = vpack.c.b16 %v8972, %v8970
    %v9013 = vpack.c.b16 %v8973, %v8971
    %v9014 = vpack.c.b16 %v8976, %v8974
    %v9015 = vpack.c.b16 %v8977, %v8975
    %v9016 = vpack.c.b16 %v8980, %v8978
    %v9017 = vpack.c.b16 %v8981, %v8979
    %v9018 = vpack.c.b16 %v8984, %v8982
    %v9019 = vpack.c.b16 %v8985, %v8983
    %v9020 = vpack.c.b16 %v8988, %v8986
    %v9021 = vpack.c.b16 %v8989, %v8987
    %v9022 = vpack.c.b16 %v8992, %v8990
    %v9023 = vpack.c.b16 %v8993, %v8991
    %v9024 = vpack.c.b16 %v8996, %v8994
    %v9025 = vpack.c.b16 %v8997, %v8995
    %v9026 = vpack.c.b16 %v9000, %v8998
    %v9027 = vpack.c.b16 %v9001, %v8999
    %v9028 = vpack.c.b16 %v9004, %v9002
    %v9029 = vpack.c.b16 %v9005, %v9003
    %v9055 = vsel %vm8277, %v8932, 0
    %9057 = vmatprep.subr.bf16.mxu0 %v9007
    %9058 = vmatpush1.bf16.msra.mxu0 %v9006
    %9059 = vmatprep.subr.bf16.mxu0 %v9009
    %9060 = vmatpush1.bf16.msra.mxu0 %v9008
    %9061 = vmatprep.subr.bf16.mxu0 %v9011
    %9062 = vmatpush1.bf16.msra.mxu0 %v9010
    %9063 = vmatprep.subr.bf16.mxu0 %v9013
    %9064 = vmatpush1.bf16.msra.mxu0 %v9012
    %9065 = vmatprep.subr.bf16.mxu0 %v9015
    %9066 = vmatpush1.bf16.msra.mxu0 %v9014
    %9067 = vmatprep.subr.bf16.mxu0 %v9017
    %9068 = vmatpush1.bf16.msra.mxu0 %v9016
    %9069 = vmatprep.subr.bf16.mxu0 %v9019
    %9070 = vmatpush1.bf16.msra.mxu0 %v9018
    %9071 = vmatprep.subr.bf16.mxu0 %v9021
    %9072 = vmatpush1.bf16.msra.mxu0 %v9020
    %9073 = vmatprep.subr.bf16.mxu0 %v9023
    %9074 = vmatpush1.bf16.msra.mxu0 %v9022
    %9075 = vmatprep.subr.bf16.mxu0 %v9025
    %9076 = vmatpush1.bf16.msra.mxu0 %v9024
    %9077 = vmatprep.subr.bf16.mxu0 %v9027
    %9078 = vmatpush1.bf16.msra.mxu0 %v9026
    %9079 = vmatprep.subr.bf16.mxu0 %v9029
    %9080 = vmatpush1.bf16.msra.mxu0 %v9028
    %9081 = vmatprep.subr.bf16.mxu0 0
    %9082 = vmatpush1.bf16.msra.mxu0 0
    %9083 = vmatprep.subr.bf16.mxu0 0
    %9084 = vmatpush1.bf16.msra.mxu0 0
    %9085 = vmatprep.subr.bf16.mxu0 0
    %9086 = vmatpush1.bf16.msra.mxu0 0
    %9087 = vmatprep.subr.bf16.mxu0 0
    %9088 = vmatpush1.bf16.msra.mxu0 0
    %9089 = vmatprep.mubr.bf16.mxu0 %v9055
    %9090 = vmatmul.mubr.bf16.gmra.mrb[0].mxu0 %v8924
    %v9091 = vpop.f32.mrb[0].mxu0
    %v9092 = vadd.f32 0.0, %v9091
    %v9093 = vpop.f32.mrb[0].mxu0
    %v9094 = vadd.f32 0.0, %v9093
    %v9095 = vpop.f32.mrb[0].mxu0
    %v9096 = vpop.f32.mrb[0].mxu0
    %9097 = vdwg.mxu0
    %v9098 = vadd.f32 %v8884, %v9092
    %v9099 = vadd.f32 %v8885, %v9094
    %v9100 = vld [vmem:[#allocation3] sm:$0xf0]
    %v9101 = vld [vmem:[#allocation3 + $0x8] sm:$0xf0]
    %v9102 = vld [vmem:[#allocation3 + $0x10] sm:$0xf]
    %v9103 = vld [vmem:[#allocation3 + $0x18] sm:$0xf]
    %v9104 = vpack.c.bf16 %v9102, %v9100
    %v9105 = vpack.c.bf16 %v9103, %v9101
    %s9106 = scalar_lea.vmem %s13, 768
    %v9107 = vld [vmem:[%s9106] sm:$0xff]
    %v9108 = vld [vmem:[%s9106 + $0x8] sm:$0xff]
    %v9109 = vld [vmem:[%s9106 + $0x10] sm:$0xff]
    %v9110 = vld [vmem:[%s9106 + $0x18] sm:$0xff]
    %v9111 = vld [vmem:[%s9106 + $0x20] sm:$0xff]
    %v9112 = vld [vmem:[%s9106 + $0x28] sm:$0xff]
    %v9113 = vld [vmem:[%s9106 + $0x30] sm:$0xff]
    %v9114 = vld [vmem:[%s9106 + $0x38] sm:$0xff]
    %v9115 = vld [vmem:[%s9106 + $0x40] sm:$0xff]
    %v9116 = vld [vmem:[%s9106 + $0x48] sm:$0xff]
    %v9117 = vld [vmem:[%s9106 + $0x50] sm:$0xff]
    %v9118 = vld [vmem:[%s9106 + $0x58] sm:$0xff]
    %v9119 = vld [vmem:[%s9106 + $0x60] sm:$0xff]
    %v9120 = vld [vmem:[%s9106 + $0x68] sm:$0xff]
    %v9121 = vld [vmem:[%s9106 + $0x70] sm:$0xff]
    %v9122 = vld [vmem:[%s9106 + $0x78] sm:$0xff]
    %v9123 = vld [vmem:[%s9106 + $0x80] sm:$0xff]
    %v9124 = vld [vmem:[%s9106 + $0x88] sm:$0xff]
    %v9125 = vld [vmem:[%s9106 + $0x90] sm:$0xff]
    %v9126 = vld [vmem:[%s9106 + $0x98] sm:$0xff]
    %v9127 = vld [vmem:[%s9106 + $0xa0] sm:$0xff]
    %v9128 = vld [vmem:[%s9106 + $0xa8] sm:$0xff]
    %v9129 = vld [vmem:[%s9106 + $0xb0] sm:$0xff]
    %v9130 = vld [vmem:[%s9106 + $0xb8] sm:$0xff]
    %v9133 = vrot.slane %v9104, 2
    %v9134 = vrot.slane %v9105, 2
    %v9160 = vunpack.c.l.b16 %v9107
    %v9161 = vunpack.c.h.b16 %v9107
    %v9162 = vunpack.c.l.b16 %v9108
    %v9163 = vunpack.c.h.b16 %v9108
    %v9164 = vunpack.c.l.b16 %v9109
    %v9165 = vunpack.c.h.b16 %v9109
    %v9166 = vunpack.c.l.b16 %v9110
    %v9167 = vunpack.c.h.b16 %v9110
    %v9168 = vunpack.c.l.b16 %v9111
    %v9169 = vunpack.c.h.b16 %v9111
    %v9170 = vunpack.c.l.b16 %v9112
    %v9171 = vunpack.c.h.b16 %v9112
    %v9172 = vunpack.c.l.b16 %v9113
    %v9173 = vunpack.c.h.b16 %v9113
    %v9174 = vunpack.c.l.b16 %v9114
    %v9175 = vunpack.c.h.b16 %v9114
    %v9176 = vunpack.c.l.b16 %v9115
    %v9177 = vunpack.c.h.b16 %v9115
    %v9178 = vunpack.c.l.b16 %v9116
    %v9179 = vunpack.c.h.b16 %v9116
    %v9180 = vunpack.c.l.b16 %v9117
    %v9181 = vunpack.c.h.b16 %v9117
    %v9182 = vunpack.c.l.b16 %v9118
    %v9183 = vunpack.c.h.b16 %v9118
    %v9184 = vunpack.c.l.b16 %v9119
    %v9185 = vunpack.c.h.b16 %v9119
    %v9186 = vunpack.c.l.b16 %v9120
    %v9187 = vunpack.c.h.b16 %v9120
    %v9188 = vunpack.c.l.b16 %v9121
    %v9189 = vunpack.c.h.b16 %v9121
    %v9190 = vunpack.c.l.b16 %v9122
    %v9191 = vunpack.c.h.b16 %v9122
    %v9192 = vunpack.c.l.b16 %v9123
    %v9193 = vunpack.c.h.b16 %v9123
    %v9194 = vunpack.c.l.b16 %v9124
    %v9195 = vunpack.c.h.b16 %v9124
    %v9196 = vunpack.c.l.b16 %v9125
    %v9197 = vunpack.c.h.b16 %v9125
    %v9198 = vunpack.c.l.b16 %v9126
    %v9199 = vunpack.c.h.b16 %v9126
    %v9200 = vunpack.c.l.b16 %v9127
    %v9201 = vunpack.c.h.b16 %v9127
    %v9202 = vunpack.c.l.b16 %v9128
    %v9203 = vunpack.c.h.b16 %v9128
    %v9204 = vunpack.c.l.b16 %v9129
    %v9205 = vunpack.c.h.b16 %v9129
    %v9206 = vunpack.c.l.b16 %v9130
    %v9207 = vunpack.c.h.b16 %v9130
    %v9208 = vpack.c.b16 %v9162, %v9160
    %v9209 = vpack.c.b16 %v9163, %v9161
    %v9210 = vpack.c.b16 %v9166, %v9164
    %v9211 = vpack.c.b16 %v9167, %v9165
    %v9212 = vpack.c.b16 %v9170, %v9168
    %v9213 = vpack.c.b16 %v9171, %v9169
    %v9214 = vpack.c.b16 %v9174, %v9172
    %v9215 = vpack.c.b16 %v9175, %v9173
    %v9216 = vpack.c.b16 %v9178, %v9176
    %v9217 = vpack.c.b16 %v9179, %v9177
    %v9218 = vpack.c.b16 %v9182, %v9180
    %v9219 = vpack.c.b16 %v9183, %v9181
    %v9220 = vpack.c.b16 %v9186, %v9184
    %v9221 = vpack.c.b16 %v9187, %v9185
    %v9222 = vpack.c.b16 %v9190, %v9188
    %v9223 = vpack.c.b16 %v9191, %v9189
    %v9224 = vpack.c.b16 %v9194, %v9192
    %v9225 = vpack.c.b16 %v9195, %v9193
    %v9226 = vpack.c.b16 %v9198, %v9196
    %v9227 = vpack.c.b16 %v9199, %v9197
    %v9228 = vpack.c.b16 %v9202, %v9200
    %v9229 = vpack.c.b16 %v9203, %v9201
    %v9230 = vpack.c.b16 %v9206, %v9204
    %v9231 = vpack.c.b16 %v9207, %v9205
    %v9257 = vsel %vm8277, %v9134, 0
    %9259 = vmatprep.subr.bf16.mxu0 %v9209
    %9260 = vmatpush1.bf16.msra.mxu0 %v9208
    %9261 = vmatprep.subr.bf16.mxu0 %v9211
    %9262 = vmatpush1.bf16.msra.mxu0 %v9210
    %9263 = vmatprep.subr.bf16.mxu0 %v9213
    %9264 = vmatpush1.bf16.msra.mxu0 %v9212
    %9265 = vmatprep.subr.bf16.mxu0 %v9215
    %9266 = vmatpush1.bf16.msra.mxu0 %v9214
    %9267 = vmatprep.subr.bf16.mxu0 %v9217
    %9268 = vmatpush1.bf16.msra.mxu0 %v9216
    %9269 = vmatprep.subr.bf16.mxu0 %v9219
    %9270 = vmatpush1.bf16.msra.mxu0 %v9218
    %9271 = vmatprep.subr.bf16.mxu0 %v9221
    %9272 = vmatpush1.bf16.msra.mxu0 %v9220
    %9273 = vmatprep.subr.bf16.mxu0 %v9223
    %9274 = vmatpush1.bf16.msra.mxu0 %v9222
    %9275 = vmatprep.subr.bf16.mxu0 %v9225
    %9276 = vmatpush1.bf16.msra.mxu0 %v9224
    %9277 = vmatprep.subr.bf16.mxu0 %v9227
    %9278 = vmatpush1.bf16.msra.mxu0 %v9226
    %9279 = vmatprep.subr.bf16.mxu0 %v9229
    %9280 = vmatpush1.bf16.msra.mxu0 %v9228
    %9281 = vmatprep.subr.bf16.mxu0 %v9231
    %9282 = vmatpush1.bf16.msra.mxu0 %v9230
    %9283 = vmatprep.subr.bf16.mxu0 0
    %9284 = vmatpush1.bf16.msra.mxu0 0
    %9285 = vmatprep.subr.bf16.mxu0 0
    %9286 = vmatpush1.bf16.msra.mxu0 0
    %9287 = vmatprep.subr.bf16.mxu0 0
    %9288 = vmatpush1.bf16.msra.mxu0 0
    %9289 = vmatprep.subr.bf16.mxu0 0
    %9290 = vmatpush1.bf16.msra.mxu0 0
    %9291 = vmatprep.mubr.bf16.mxu0 %v9257
    %9292 = vmatmul.mubr.bf16.gmra.mrb[0].mxu0 %v9133
    %v9293 = vpop.f32.mrb[0].mxu0
    %v9294 = vadd.f32 0.0, %v9293
    %v9295 = vpop.f32.mrb[0].mxu0
    %v9296 = vadd.f32 0.0, %v9295
    %v9297 = vpop.f32.mrb[0].mxu0
    %v9298 = vpop.f32.mrb[0].mxu0
    %9299 = vdwg.mxu0
    %v9300 = vadd.f32 %v9098, %v9294
    %v9301 = vadd.f32 %v9099, %v9296
    %v9302 = vld [vmem:[%s14] sm:$0x3]
    %vm9303 = vcmask 64512
    %v9305 = vsel %vm9303, %v9302, 0
    %9307 = vmatprep.subr.mxu0 %v9301
    %9308 = vmatpush1.msra.mxu0 %v9300
    %9309 = vmatprep.subr.mxu0 0.0
    %9310 = vmatpush1.msra.mxu0 0.0
    %9311 = vmatprep.subr.mxu0 0.0
    %9312 = vmatpush1.msra.mxu0 0.0
    %9313 = vmatprep.subr.mxu0 0.0
    %9314 = vmatpush1.msra.mxu0 0.0
    %9315 = vmatprep.subr.mxu0 0.0
    %9316 = vmatpush1.msra.mxu0 0.0
    %9317 = vmatprep.subr.mxu0 0.0
    %9318 = vmatpush1.msra.mxu0 0.0
    %9319 = vmatprep.subr.mxu0 0.0
    %9320 = vmatpush1.msra.mxu0 0.0
    %9321 = vmatprep.subr.mxu0 0.0
    %9322 = vmatpush1.msra.mxu0 0.0
    %9323 = vmatprep.subr.mxu0 0.0
    %9324 = vmatpush1.msra.mxu0 0.0
    %9325 = vmatprep.subr.mxu0 0.0
    %9326 = vmatpush1.msra.mxu0 0.0
    %9327 = vmatprep.subr.mxu0 0.0
    %9328 = vmatpush1.msra.mxu0 0.0
    %9329 = vmatprep.subr.mxu0 0.0
    %9330 = vmatpush1.msra.mxu0 0.0
    %9331 = vmatprep.subr.mxu0 0.0
    %9332 = vmatpush1.msra.mxu0 0.0
    %9333 = vmatprep.subr.mxu0 0.0
    %9334 = vmatpush1.msra.mxu0 0.0
    %9335 = vmatprep.subr.mxu0 0.0
    %9336 = vmatpush1.msra.mxu0 0.0
    %9337 = vmatprep.subr.mxu0 0.0
    %9338 = vmatpush1.msra.mxu0 0.0
    %9339 = vmatprep.subr.mxu0 0.0
    %9340 = vmatpush1.msra.mxu0 0.0
    %9341 = vmatprep.subr.mxu0 0.0
    %9342 = vmatpush1.msra.mxu0 0.0
    %9343 = vmatprep.subr.mxu0 0.0
    %9344 = vmatpush1.msra.mxu0 0.0
    %9345 = vmatprep.subr.mxu0 0.0
    %9346 = vmatpush1.msra.mxu0 0.0
    %9347 = vmatprep.subr.mxu0 0.0
    %9348 = vmatpush1.msra.mxu0 0.0
    %9349 = vmatprep.subr.mxu0 0.0
    %9350 = vmatpush1.msra.mxu0 0.0
    %9351 = vmatprep.subr.mxu0 0.0
    %9352 = vmatpush1.msra.mxu0 0.0
    %9353 = vmatprep.subr.mxu0 0.0
    %9354 = vmatpush1.msra.mxu0 0.0
    %9355 = vmatprep.subr.mxu0 0.0
    %9356 = vmatpush1.msra.mxu0 0.0
    %9357 = vmatprep.subr.mxu0 0.0
    %9358 = vmatpush1.msra.mxu0 0.0
    %9359 = vmatprep.subr.mxu0 0.0
    %9360 = vmatpush1.msra.mxu0 0.0
    %9361 = vmatprep.subr.mxu0 0.0
    %9362 = vmatpush1.msra.mxu0 0.0
    %9363 = vmatprep.subr.mxu0 0.0
    %9364 = vmatpush1.msra.mxu0 0.0
    %9365 = vmatprep.subr.mxu0 0.0
    %9366 = vmatpush1.msra.mxu0 0.0
    %9367 = vmatprep.subr.mxu0 0.0
    %9368 = vmatpush1.msra.mxu0 0.0
    %9369 = vmatprep.subr.mxu0 0.0
    %9370 = vmatpush1.msra.mxu0 0.0
    %9371 = vmatprep.mubr.f32.mxu0 0.0
    %9372 = vmatmul.mubr.f32.gmra.mrb[0].mxu0 %v9305
    %v9373 = vpop.f32.mrb[0].mxu0
    %v9374 = vadd.f32 0.0, %v9373
    %v9375 = vpop.f32.mrb[0].mxu0
    %v9376 = vadd.f32 0.0, %v9375
    %9377 = vdwg.mxu0
    %s9378 = scalar_lea.vmem %s14, 2
    %v9379 = vld [vmem:[%s9378] sm:$0x3]
    %v9381 = vsel %vm9303, %v9379, 0
    %9383 = vmatprep.subr.mxu0 %v9301
    %9384 = vmatpush1.msra.mxu0 %v9300
    %9385 = vmatprep.subr.mxu0 0.0
    %9386 = vmatpush1.msra.mxu0 0.0
    %9387 = vmatprep.subr.mxu0 0.0
    %9388 = vmatpush1.msra.mxu0 0.0
    %9389 = vmatprep.subr.mxu0 0.0
    %9390 = vmatpush1.msra.mxu0 0.0
    %9391 = vmatprep.subr.mxu0 0.0
    %9392 = vmatpush1.msra.mxu0 0.0
    %9393 = vmatprep.subr.mxu0 0.0
    %9394 = vmatpush1.msra.mxu0 0.0
    %9395 = vmatprep.subr.mxu0 0.0
    %9396 = vmatpush1.msra.mxu0 0.0
    %9397 = vmatprep.subr.mxu0 0.0
    %9398 = vmatpush1.msra.mxu0 0.0
    %9399 = vmatprep.subr.mxu0 0.0
    %9400 = vmatpush1.msra.mxu0 0.0
    %9401 = vmatprep.subr.mxu0 0.0
    %9402 = vmatpush1.msra.mxu0 0.0
    %9403 = vmatprep.subr.mxu0 0.0
    %9404 = vmatpush1.msra.mxu0 0.0
    %9405 = vmatprep.subr.mxu0 0.0
    %9406 = vmatpush1.msra.mxu0 0.0
    %9407 = vmatprep.subr.mxu0 0.0
    %9408 = vmatpush1.msra.mxu0 0.0
    %9409 = vmatprep.subr.mxu0 0.0
    %9410 = vmatpush1.msra.mxu0 0.0
    %9411 = vmatprep.subr.mxu0 0.0
    %9412 = vmatpush1.msra.mxu0 0.0
    %9413 = vmatprep.subr.mxu0 0.0
    %9414 = vmatpush1.msra.mxu0 0.0
    %9415 = vmatprep.subr.mxu0 0.0
    %9416 = vmatpush1.msra.mxu0 0.0
    %9417 = vmatprep.subr.mxu0 0.0
    %9418 = vmatpush1.msra.mxu0 0.0
    %9419 = vmatprep.subr.mxu0 0.0
    %9420 = vmatpush1.msra.mxu0 0.0
    %9421 = vmatprep.subr.mxu0 0.0
    %9422 = vmatpush1.msra.mxu0 0.0
    %9423 = vmatprep.subr.mxu0 0.0
    %9424 = vmatpush1.msra.mxu0 0.0
    %9425 = vmatprep.subr.mxu0 0.0
    %9426 = vmatpush1.msra.mxu0 0.0
    %9427 = vmatprep.subr.mxu0 0.0
    %9428 = vmatpush1.msra.mxu0 0.0
    %9429 = vmatprep.subr.mxu0 0.0
    %9430 = vmatpush1.msra.mxu0 0.0
    %9431 = vmatprep.subr.mxu0 0.0
    %9432 = vmatpush1.msra.mxu0 0.0
    %9433 = vmatprep.subr.mxu0 0.0
    %9434 = vmatpush1.msra.mxu0 0.0
    %9435 = vmatprep.subr.mxu0 0.0
    %9436 = vmatpush1.msra.mxu0 0.0
    %9437 = vmatprep.subr.mxu0 0.0
    %9438 = vmatpush1.msra.mxu0 0.0
    %9439 = vmatprep.subr.mxu0 0.0
    %9440 = vmatpush1.msra.mxu0 0.0
    %9441 = vmatprep.subr.mxu0 0.0
    %9442 = vmatpush1.msra.mxu0 0.0
    %9443 = vmatprep.subr.mxu0 0.0
    %9444 = vmatpush1.msra.mxu0 0.0
    %9445 = vmatprep.subr.mxu0 0.0
    %9446 = vmatpush1.msra.mxu0 0.0
    %9447 = vmatprep.mubr.f32.mxu0 0.0
    %9448 = vmatmul.mubr.f32.gmra.mrb[0].mxu0 %v9381
    %v9449 = vpop.f32.mrb[0].mxu0
    %v9450 = vadd.f32 0.0, %v9449
    %v9451 = vpop.f32.mrb[0].mxu0
    %v9452 = vadd.f32 0.0, %v9451
    %9453 = vdwg.mxu0
    %vm9454 = vcmask 1041408
    %v9455 = vsel %vm9454, %v9374, 0.0
    %v9456 = vrot.slane %v9455, 4
    %v9457 = vadd.f32 %v9455, %v9456
    %v9458 = vrot.slane %v9457, 2
    %v9459 = vadd.f32 %v9457, %v9458
    %v9460 = vrot.slane %v9459, 1
    %v9461 = vadd.f32 %v9459, %v9460
    %v9462 = vsel %vm9454, %v9376, 0.0
    %v9463 = vrot.slane %v9462, 4
    %v9464 = vadd.f32 %v9462, %v9463
    %v9465 = vrot.slane %v9464, 2
    %v9466 = vadd.f32 %v9464, %v9465
    %v9467 = vrot.slane %v9466, 1
    %v9468 = vadd.f32 %v9466, %v9467
    %v9469 = vsel %vm9454, %v9450, 0.0
    %v9470 = vrot.slane %v9469, 4
    %v9471 = vadd.f32 %v9469, %v9470
    %v9472 = vrot.slane %v9471, 2
    %v9473 = vadd.f32 %v9471, %v9472
    %v9474 = vrot.slane %v9473, 1
    %v9475 = vadd.f32 %v9473, %v9474
    %v9476 = vsel %vm9454, %v9452, 0.0
    %v9477 = vrot.slane %v9476, 4
    %v9478 = vadd.f32 %v9476, %v9477
    %v9479 = vrot.slane %v9478, 2
    %v9480 = vadd.f32 %v9478, %v9479
    %v9481 = vrot.slane %v9480, 1
    %v9482 = vadd.f32 %v9480, %v9481
    %v9483 = vadd.f32 %v9461, %v9475
    %v9484 = vadd.f32 %v9468, %v9482
    %v9485 = vmul.f32 %v9374, %v9374
    %v9486 = vmul.f32 %v9376, %v9376
    %v9487 = vsel %vm9454, %v9485, 0.0
    %v9488 = vrot.slane %v9487, 4
    %v9489 = vadd.f32 %v9487, %v9488
    %v9490 = vrot.slane %v9489, 2
    %v9491 = vadd.f32 %v9489, %v9490
    %v9492 = vrot.slane %v9491, 1
    %v9493 = vadd.f32 %v9491, %v9492
    %v9494 = vsel %vm9454, %v9486, 0.0
    %v9495 = vrot.slane %v9494, 4
    %v9496 = vadd.f32 %v9494, %v9495
    %v9497 = vrot.slane %v9496, 2
    %v9498 = vadd.f32 %v9496, %v9497
    %v9499 = vrot.slane %v9498, 1
    %v9500 = vadd.f32 %v9498, %v9499
    %v9501 = vmul.f32 %v9450, %v9450
    %v9502 = vmul.f32 %v9452, %v9452
    %v9503 = vsel %vm9454, %v9501, 0.0
    %v9504 = vrot.slane %v9503, 4
    %v9505 = vadd.f32 %v9503, %v9504
    %v9506 = vrot.slane %v9505, 2
    %v9507 = vadd.f32 %v9505, %v9506
    %v9508 = vrot.slane %v9507, 1
    %v9509 = vadd.f32 %v9507, %v9508
    %v9510 = vsel %vm9454, %v9502, 0.0
    %v9511 = vrot.slane %v9510, 4
    %v9512 = vadd.f32 %v9510, %v9511
    %v9513 = vrot.slane %v9512, 2
    %v9514 = vadd.f32 %v9512, %v9513
    %v9515 = vrot.slane %v9514, 1
    %v9516 = vadd.f32 %v9514, %v9515
    %v9517 = vadd.f32 %v9493, %v9509
    %v9518 = vadd.f32 %v9500, %v9516
    %v9519 = vld [vmem:[%s15] sm:$0xff]
    %v9520 = vld [vmem:[%s15 + $0x8] sm:$0xff]
    %v9521 = vld [vmem:[%s15 + $0x10] sm:$0xff]
    %v9522 = vld [vmem:[%s15 + $0x18] sm:$0xff]
    %v9523 = vld [vmem:[%s15 + $0x20] sm:$0xff]
    %v9524 = vld [vmem:[%s15 + $0x28] sm:$0xff]
    %v9525 = vld [vmem:[%s15 + $0x30] sm:$0xff]
    %v9526 = vld [vmem:[%s15 + $0x38] sm:$0xff]
    %v9527 = vld [vmem:[%s15 + $0x40] sm:$0xff]
    %v9528 = vld [vmem:[%s15 + $0x48] sm:$0xff]
    %v9529 = vld [vmem:[%s15 + $0x50] sm:$0xff]
    %v9530 = vld [vmem:[%s15 + $0x58] sm:$0xff]
    %v9531 = vld [vmem:[%s15 + $0x60] sm:$0xff]
    %v9532 = vld [vmem:[%s15 + $0x68] sm:$0xff]
    %v9533 = vld [vmem:[%s15 + $0x70] sm:$0xff]
    %v9534 = vld [vmem:[%s15 + $0x78] sm:$0xff]
    %v9535 = vld [vmem:[%s15 + $0x80] sm:$0xff]
    %v9536 = vld [vmem:[%s15 + $0x88] sm:$0xff]
    %v9537 = vld [vmem:[%s15 + $0x90] sm:$0xff]
    %v9538 = vld [vmem:[%s15 + $0x98] sm:$0xff]
    %v9539 = vld [vmem:[%s15 + $0xa0] sm:$0xff]
    %v9540 = vld [vmem:[%s15 + $0xa8] sm:$0xff]
    %v9541 = vld [vmem:[%s15 + $0xb0] sm:$0xff]
    %v9542 = vld [vmem:[%s15 + $0xb8] sm:$0xff]
    %v9543 = vld [vmem:[%s15 + $0xc0] sm:$0xff]
    %v9544 = vld [vmem:[%s15 + $0xc8] sm:$0xff]
    %v9545 = vld [vmem:[%s15 + $0xd0] sm:$0xff]
    %v9546 = vld [vmem:[%s15 + $0xd8] sm:$0xff]
    %v9547 = vld [vmem:[%s15 + $0xe0] sm:$0xff]
    %v9548 = vld [vmem:[%s15 + $0xe8] sm:$0xff]
    %v9549 = vld [vmem:[%s15 + $0xf0] sm:$0xff]
    %v9550 = vld [vmem:[%s15 + $0xf8] sm:$0xff]
    %9551 = vmatprep.subr.mxu0 0.0
    %9552 = vmatpush1.msra.mxu0 %v9519
    %9553 = vmatprep.subr.mxu0 0.0
    %9554 = vmatpush1.msra.mxu0 %v9520
    %9555 = vmatprep.subr.mxu0 0.0
    %9556 = vmatpush1.msra.mxu0 %v9521
    %9557 = vmatprep.subr.mxu0 0.0
    %9558 = vmatpush1.msra.mxu0 %v9522
    %9559 = vmatprep.subr.mxu0 0.0
    %9560 = vmatpush1.msra.mxu0 %v9523
    %9561 = vmatprep.subr.mxu0 0.0
    %9562 = vmatpush1.msra.mxu0 %v9524
    %9563 = vmatprep.subr.mxu0 0.0
    %9564 = vmatpush1.msra.mxu0 %v9525
    %9565 = vmatprep.subr.mxu0 0.0
    %9566 = vmatpush1.msra.mxu0 %v9526
    %9567 = vmatprep.subr.mxu0 0.0
    %9568 = vmatpush1.msra.mxu0 %v9527
    %9569 = vmatprep.subr.mxu0 0.0
    %9570 = vmatpush1.msra.mxu0 %v9528
    %9571 = vmatprep.subr.mxu0 0.0
    %9572 = vmatpush1.msra.mxu0 %v9529
    %9573 = vmatprep.subr.mxu0 0.0
    %9574 = vmatpush1.msra.mxu0 %v9530
    %9575 = vmatprep.subr.mxu0 0.0
    %9576 = vmatpush1.msra.mxu0 %v9531
    %9577 = vmatprep.subr.mxu0 0.0
    %9578 = vmatpush1.msra.mxu0 %v9532
    %9579 = vmatprep.subr.mxu0 0.0
    %9580 = vmatpush1.msra.mxu0 %v9533
    %9581 = vmatprep.subr.mxu0 0.0
    %9582 = vmatpush1.msra.mxu0 %v9534
    %9583 = vmatprep.subr.mxu0 0.0
    %9584 = vmatpush1.msra.mxu0 %v9535
    %9585 = vmatprep.subr.mxu0 0.0
    %9586 = vmatpush1.msra.mxu0 %v9536
    %9587 = vmatprep.subr.mxu0 0.0
    %9588 = vmatpush1.msra.mxu0 %v9537
    %9589 = vmatprep.subr.mxu0 0.0
    %9590 = vmatpush1.msra.mxu0 %v9538
    %9591 = vmatprep.subr.mxu0 0.0
    %9592 = vmatpush1.msra.mxu0 %v9539
    %9593 = vmatprep.subr.mxu0 0.0
    %9594 = vmatpush1.msra.mxu0 %v9540
    %9595 = vmatprep.subr.mxu0 0.0
    %9596 = vmatpush1.msra.mxu0 %v9541
    %9597 = vmatprep.subr.mxu0 0.0
    %9598 = vmatpush1.msra.mxu0 %v9542
    %9599 = vmatprep.subr.mxu0 0.0
    %9600 = vmatpush1.msra.mxu0 %v9543
    %9601 = vmatprep.subr.mxu0 0.0
    %9602 = vmatpush1.msra.mxu0 %v9544
    %9603 = vmatprep.subr.mxu0 0.0
    %9604 = vmatpush1.msra.mxu0 %v9545
    %9605 = vmatprep.subr.mxu0 0.0
    %9606 = vmatpush1.msra.mxu0 %v9546
    %9607 = vmatprep.subr.mxu0 0.0
    %9608 = vmatpush1.msra.mxu0 %v9547
    %9609 = vmatprep.subr.mxu0 0.0
    %9610 = vmatpush1.msra.mxu0 %v9548
    %9611 = vmatprep.subr.mxu0 0.0
    %9612 = vmatpush1.msra.mxu0 %v9549
    %9613 = vmatprep.subr.mxu0 0.0
    %9614 = vmatpush1.msra.mxu0 %v9550
    %9615 = vmatprep.mubr.f32.mxu0 %v9484
    %9616 = vmatmul.mubr.f32.gmra.mrb[0].mxu0 %v9483
    %v9617 = vpop.f32.mrb[0].mxu0
    %v9618 = vadd.f32 0.0, %v9617
    %v9619 = vpop.f32.mrb[0].mxu0
    %9620 = vdwg.mxu0
    %v9621 = vmul.f32 %v9618, 0.125
    %9622 = vmatprep.subr.mxu0 0.0
    %9623 = vmatpush1.msra.mxu0 %v9519
    %9624 = vmatprep.subr.mxu0 0.0
    %9625 = vmatpush1.msra.mxu0 %v9520
    %9626 = vmatprep.subr.mxu0 0.0
    %9627 = vmatpush1.msra.mxu0 %v9521
    %9628 = vmatprep.subr.mxu0 0.0
    %9629 = vmatpush1.msra.mxu0 %v9522
    %9630 = vmatprep.subr.mxu0 0.0
    %9631 = vmatpush1.msra.mxu0 %v9523
    %9632 = vmatprep.subr.mxu0 0.0
    %9633 = vmatpush1.msra.mxu0 %v9524
    %9634 = vmatprep.subr.mxu0 0.0
    %9635 = vmatpush1.msra.mxu0 %v9525
    %9636 = vmatprep.subr.mxu0 0.0
    %9637 = vmatpush1.msra.mxu0 %v9526
    %9638 = vmatprep.subr.mxu0 0.0
    %9639 = vmatpush1.msra.mxu0 %v9527
    %9640 = vmatprep.subr.mxu0 0.0
    %9641 = vmatpush1.msra.mxu0 %v9528
    %9642 = vmatprep.subr.mxu0 0.0
    %9643 = vmatpush1.msra.mxu0 %v9529
    %9644 = vmatprep.subr.mxu0 0.0
    %9645 = vmatpush1.msra.mxu0 %v9530
    %9646 = vmatprep.subr.mxu0 0.0
    %9647 = vmatpush1.msra.mxu0 %v9531
    %9648 = vmatprep.subr.mxu0 0.0
    %9649 = vmatpush1.msra.mxu0 %v9532
    %9650 = vmatprep.subr.mxu0 0.0
    %9651 = vmatpush1.msra.mxu0 %v9533
    %9652 = vmatprep.subr.mxu0 0.0
    %9653 = vmatpush1.msra.mxu0 %v9534
    %9654 = vmatprep.subr.mxu0 0.0
    %9655 = vmatpush1.msra.mxu0 %v9535
    %9656 = vmatprep.subr.mxu0 0.0
    %9657 = vmatpush1.msra.mxu0 %v9536
    %9658 = vmatprep.subr.mxu0 0.0
    %9659 = vmatpush1.msra.mxu0 %v9537
    %9660 = vmatprep.subr.mxu0 0.0
    %9661 = vmatpush1.msra.mxu0 %v9538
    %9662 = vmatprep.subr.mxu0 0.0
    %9663 = vmatpush1.msra.mxu0 %v9539
    %9664 = vmatprep.subr.mxu0 0.0
    %9665 = vmatpush1.msra.mxu0 %v9540
    %9666 = vmatprep.subr.mxu0 0.0
    %9667 = vmatpush1.msra.mxu0 %v9541
    %9668 = vmatprep.subr.mxu0 0.0
    %9669 = vmatpush1.msra.mxu0 %v9542
    %9670 = vmatprep.subr.mxu0 0.0
    %9671 = vmatpush1.msra.mxu0 %v9543
    %9672 = vmatprep.subr.mxu0 0.0
    %9673 = vmatpush1.msra.mxu0 %v9544
    %9674 = vmatprep.subr.mxu0 0.0
    %9675 = vmatpush1.msra.mxu0 %v9545
    %9676 = vmatprep.subr.mxu0 0.0
    %9677 = vmatpush1.msra.mxu0 %v9546
    %9678 = vmatprep.subr.mxu0 0.0
    %9679 = vmatpush1.msra.mxu0 %v9547
    %9680 = vmatprep.subr.mxu0 0.0
    %9681 = vmatpush1.msra.mxu0 %v9548
    %9682 = vmatprep.subr.mxu0 0.0
    %9683 = vmatpush1.msra.mxu0 %v9549
    %9684 = vmatprep.subr.mxu0 0.0
    %9685 = vmatpush1.msra.mxu0 %v9550
    %9686 = vmatprep.mubr.f32.mxu0 %v9518
    %9687 = vmatmul.mubr.f32.gmra.mrb[0].mxu0 %v9517
    %v9688 = vpop.f32.mrb[0].mxu0
    %v9689 = vadd.f32 0.0, %v9688
    %v9690 = vpop.f32.mrb[0].mxu0
    %9691 = vdwg.mxu0
    %v9692 = vmul.f32 %v9689, 0.125
    %v9693 = vmul.f32 %v9621, %v9621
    %v9694 = vsub.f32 %v9692, %v9693
    %v9695 = vld [vmem:[%s17] sm:$0x1]
    %v9696 = vadd.f32 %v9694, 1e-05
    %v9697 = vrsqrt.pop %v9696
    %v9698 = vmul.f32 %v9695, %v9697
    %v9699 = vld [vmem:[%s18] sm:$0x1]
    %v9700 = vmul.f32 %v9621, %v9698
    %v9701 = vsub.f32 %v9699, %v9700
    %v9702 = vld [vmem:[%s16] sm:$0xff]
    %v9703 = vld [vmem:[%s16 + $0x8] sm:$0xff]
    %v9704 = vld [vmem:[%s16 + $0x10] sm:$0xff]
    %v9705 = vld [vmem:[%s16 + $0x18] sm:$0xff]
    %v9706 = vld [vmem:[%s16 + $0x20] sm:$0xff]
    %v9707 = vld [vmem:[%s16 + $0x28] sm:$0xff]
    %v9708 = vld [vmem:[%s16 + $0x30] sm:$0xff]
    %v9709 = vld [vmem:[%s16 + $0x38] sm:$0xff]
    %v9710 = vld [vmem:[%s16 + $0x40] sm:$0xff]
    %v9711 = vld [vmem:[%s16 + $0x48] sm:$0xff]
    %v9712 = vld [vmem:[%s16 + $0x50] sm:$0xff]
    %v9713 = vld [vmem:[%s16 + $0x58] sm:$0xff]
    %v9714 = vld [vmem:[%s16 + $0x60] sm:$0xff]
    %v9715 = vld [vmem:[%s16 + $0x68] sm:$0xff]
    %v9716 = vld [vmem:[%s16 + $0x70] sm:$0xff]
    %v9717 = vld [vmem:[%s16 + $0x78] sm:$0xff]
    %v9719 = vsel %vm8277, %v9698, 0
    %9721 = vmatprep.subr.mxu0 %v9703
    %9722 = vmatpush1.msra.mxu0 %v9702
    %9723 = vmatprep.subr.mxu0 %v9705
    %9724 = vmatpush1.msra.mxu0 %v9704
    %9725 = vmatprep.subr.mxu0 %v9707
    %9726 = vmatpush1.msra.mxu0 %v9706
    %9727 = vmatprep.subr.mxu0 %v9709
    %9728 = vmatpush1.msra.mxu0 %v9708
    %9729 = vmatprep.subr.mxu0 %v9711
    %9730 = vmatpush1.msra.mxu0 %v9710
    %9731 = vmatprep.subr.mxu0 %v9713
    %9732 = vmatpush1.msra.mxu0 %v9712
    %9733 = vmatprep.subr.mxu0 %v9715
    %9734 = vmatpush1.msra.mxu0 %v9714
    %9735 = vmatprep.subr.mxu0 %v9717
    %9736 = vmatpush1.msra.mxu0 %v9716
    %9737 = vmatprep.subr.mxu0 0.0
    %9738 = vmatpush1.msra.mxu0 0.0
    %9739 = vmatprep.subr.mxu0 0.0
    %9740 = vmatpush1.msra.mxu0 0.0
    %9741 = vmatprep.subr.mxu0 0.0
    %9742 = vmatpush1.msra.mxu0 0.0
    %9743 = vmatprep.subr.mxu0 0.0
    %9744 = vmatpush1.msra.mxu0 0.0
    %9745 = vmatprep.subr.mxu0 0.0
    %9746 = vmatpush1.msra.mxu0 0.0
    %9747 = vmatprep.subr.mxu0 0.0
    %9748 = vmatpush1.msra.mxu0 0.0
    %9749 = vmatprep.subr.mxu0 0.0
    %9750 = vmatpush1.msra.mxu0 0.0
    %9751 = vmatprep.subr.mxu0 0.0
    %9752 = vmatpush1.msra.mxu0 0.0
    %9753 = vmatprep.subr.mxu0 0.0
    %9754 = vmatpush1.msra.mxu0 0.0
    %9755 = vmatprep.subr.mxu0 0.0
    %9756 = vmatpush1.msra.mxu0 0.0
    %9757 = vmatprep.subr.mxu0 0.0
    %9758 = vmatpush1.msra.mxu0 0.0
    %9759 = vmatprep.subr.mxu0 0.0
    %9760 = vmatpush1.msra.mxu0 0.0
    %9761 = vmatprep.subr.mxu0 0.0
    %9762 = vmatpush1.msra.mxu0 0.0
    %9763 = vmatprep.subr.mxu0 0.0
    %9764 = vmatpush1.msra.mxu0 0.0
    %9765 = vmatprep.subr.mxu0 0.0
    %9766 = vmatpush1.msra.mxu0 0.0
    %9767 = vmatprep.subr.mxu0 0.0
    %9768 = vmatpush1.msra.mxu0 0.0
    %9769 = vmatprep.subr.mxu0 0.0
    %9770 = vmatpush1.msra.mxu0 0.0
    %9771 = vmatprep.subr.mxu0 0.0
    %9772 = vmatpush1.msra.mxu0 0.0
    %9773 = vmatprep.subr.mxu0 0.0
    %9774 = vmatpush1.msra.mxu0 0.0
    %9775 = vmatprep.subr.mxu0 0.0
    %9776 = vmatpush1.msra.mxu0 0.0
    %9777 = vmatprep.subr.mxu0 0.0
    %9778 = vmatpush1.msra.mxu0 0.0
    %9779 = vmatprep.subr.mxu0 0.0
    %9780 = vmatpush1.msra.mxu0 0.0
    %9781 = vmatprep.subr.mxu0 0.0
    %9782 = vmatpush1.msra.mxu0 0.0
    %9783 = vmatprep.subr.mxu0 0.0
    %9784 = vmatpush1.msra.mxu0 0.0
    %9785 = vmatprep.mubr.f32.mxu0 0.0
    %9786 = vmatmul.mubr.f32.gmra.mrb[0].mxu0 %v9719
    %v9787 = vpop.f32.mrb[0].mxu0
    %v9788 = vadd.f32 0.0, %v9787
    %v9789 = vpop.f32.mrb[0].mxu0
    %v9790 = vadd.f32 0.0, %v9789
    %9791 = vdwg.mxu0
    %v9793 = vsel %vm8277, %v9701, 0
    %9795 = vmatprep.subr.mxu0 %v9703
    %9796 = vmatpush1.msra.mxu0 %v9702
    %9797 = vmatprep.subr.mxu0 %v9705
    %9798 = vmatpush1.msra.mxu0 %v9704
    %9799 = vmatprep.subr.mxu0 %v9707
    %9800 = vmatpush1.msra.mxu0 %v9706
    %9801 = vmatprep.subr.mxu0 %v9709
    %9802 = vmatpush1.msra.mxu0 %v9708
    %9803 = vmatprep.subr.mxu0 %v9711
    %9804 = vmatpush1.msra.mxu0 %v9710
    %9805 = vmatprep.subr.mxu0 %v9713
    %9806 = vmatpush1.msra.mxu0 %v9712
    %9807 = vmatprep.subr.mxu0 %v9715
    %9808 = vmatpush1.msra.mxu0 %v9714
    %9809 = vmatprep.subr.mxu0 %v9717
    %9810 = vmatpush1.msra.mxu0 %v9716
    %9811 = vmatprep.subr.mxu0 0.0
    %9812 = vmatpush1.msra.mxu0 0.0
    %9813 = vmatprep.subr.mxu0 0.0
    %9814 = vmatpush1.msra.mxu0 0.0
    %9815 = vmatprep.subr.mxu0 0.0
    %9816 = vmatpush1.msra.mxu0 0.0
    %9817 = vmatprep.subr.mxu0 0.0
    %9818 = vmatpush1.msra.mxu0 0.0
    %9819 = vmatprep.subr.mxu0 0.0
    %9820 = vmatpush1.msra.mxu0 0.0
    %9821 = vmatprep.subr.mxu0 0.0
    %9822 = vmatpush1.msra.mxu0 0.0
    %9823 = vmatprep.subr.mxu0 0.0
    %9824 = vmatpush1.msra.mxu0 0.0
    %9825 = vmatprep.subr.mxu0 0.0
    %9826 = vmatpush1.msra.mxu0 0.0
    %9827 = vmatprep.subr.mxu0 0.0
    %9828 = vmatpush1.msra.mxu0 0.0
    %9829 = vmatprep.subr.mxu0 0.0
    %9830 = vmatpush1.msra.mxu0 0.0
    %9831 = vmatprep.subr.mxu0 0.0
    %9832 = vmatpush1.msra.mxu0 0.0
    %9833 = vmatprep.subr.mxu0 0.0
    %9834 = vmatpush1.msra.mxu0 0.0
    %9835 = vmatprep.subr.mxu0 0.0
    %9836 = vmatpush1.msra.mxu0 0.0
    %9837 = vmatprep.subr.mxu0 0.0
    %9838 = vmatpush1.msra.mxu0 0.0
    %9839 = vmatprep.subr.mxu0 0.0
    %9840 = vmatpush1.msra.mxu0 0.0
    %9841 = vmatprep.subr.mxu0 0.0
    %9842 = vmatpush1.msra.mxu0 0.0
    %9843 = vmatprep.subr.mxu0 0.0
    %9844 = vmatpush1.msra.mxu0 0.0
    %9845 = vmatprep.subr.mxu0 0.0
    %9846 = vmatpush1.msra.mxu0 0.0
    %9847 = vmatprep.subr.mxu0 0.0
    %9848 = vmatpush1.msra.mxu0 0.0
    %9849 = vmatprep.subr.mxu0 0.0
    %9850 = vmatpush1.msra.mxu0 0.0
    %9851 = vmatprep.subr.mxu0 0.0
    %9852 = vmatpush1.msra.mxu0 0.0
    %9853 = vmatprep.subr.mxu0 0.0
    %9854 = vmatpush1.msra.mxu0 0.0
    %9855 = vmatprep.subr.mxu0 0.0
    %9856 = vmatpush1.msra.mxu0 0.0
    %9857 = vmatprep.subr.mxu0 0.0
    %9858 = vmatpush1.msra.mxu0 0.0
    %9859 = vmatprep.mubr.f32.mxu0 0.0
    %9860 = vmatmul.mubr.f32.gmra.mrb[0].mxu0 %v9793
    %v9861 = vpop.f32.mrb[0].mxu0
    %v9862 = vadd.f32 0.0, %v9861
    %v9863 = vpop.f32.mrb[0].mxu0
    %v9864 = vadd.f32 0.0, %v9863
    %9865 = vdwg.mxu0
    %v9866 = vlaneseq
    %v9867 = vshrl.u32 %v9866, 7
    %v9868 = vsub.s32 0, %v9867
    %v9869 = vrot.slane %v9788, %v9868
    %v9870 = vlaneseq
    %v9871 = vshrl.u32 %v9870, 7
    %v9872 = vsub.s32 0, %v9871
    %v9873 = vrot.slane %v9790, %v9872
    %v9874 = vmul.f32 %v9374, %v9869
    %v9875 = vmul.f32 %v9376, %v9873
    %v9876 = vlaneseq
    %v9877 = vshrl.u32 %v9876, 7
    %v9878 = vsub.s32 0, %v9877
    %v9879 = vrot.slane %v9862, %v9878
    %v9880 = vlaneseq
    %v9881 = vshrl.u32 %v9880, 7
    %v9882 = vsub.s32 0, %v9881
    %v9883 = vrot.slane %v9864, %v9882
    %v9884 = vadd.f32 %v9874, %v9879
    %v9885 = vadd.f32 %v9875, %v9883
    %v9886 = vmul.f32 %v9450, %v9869
    %v9887 = vmul.f32 %v9452, %v9873
    %v9888 = vadd.f32 %v9886, %v9879
    %v9889 = vadd.f32 %v9887, %v9883
    %v9890 = vmax.f32 %v9884, %v9888
    %v9891 = vmax.f32 %v9885, %v9889
    %v9892 = vmax.f32 %v9890, %v9891
    %v9893 = vmax.f32 %v9892, 0.0
    %vm9894 = vcmask 517120
    %9895 = vst.msk [vmem:[#allocation4] sm:$0x3] %vm9894, %v9893
    %v9896 = vld [vmem:[#allocation4] sm:$0x3]
    %v9897 = vpack.c.bf16 %v9896, %v9896
    %v9898 = vld [vmem:[%s19] sm:$0xf]
    %v9899 = vld [vmem:[%s19 + $0x4] sm:$0xf]
    %v9900 = vld [vmem:[%s19 + $0x8] sm:$0xf]
    %v9901 = vld [vmem:[%s19 + $0xc] sm:$0xf]
    %v9902 = vld [vmem:[%s19 + $0x10] sm:$0xf]
    %v9903 = vld [vmem:[%s19 + $0x14] sm:$0xf]
    %v9904 = vld [vmem:[%s19 + $0x18] sm:$0xf]
    %v9905 = vld [vmem:[%s19 + $0x1c] sm:$0xf]
    %v9906 = vld [vmem:[%s20] sm:$0x1]
    %v9908 = vlaneseq
    %v9909 = vshrl.u32 %v9908, 7
    %v9910 = vsub.s32 0, %v9909
    %v9911 = vrot.slane %v9906, %v9910
    %v9921 = vunpack.c.l.b16 %v9898
    %v9922 = vunpack.c.l.b16 %v9899
    %v9923 = vunpack.c.l.b16 %v9900
    %v9924 = vunpack.c.l.b16 %v9901
    %v9925 = vunpack.c.l.b16 %v9902
    %v9926 = vunpack.c.l.b16 %v9903
    %v9927 = vunpack.c.l.b16 %v9904
    %v9928 = vunpack.c.l.b16 %v9905
    %v9929 = vpack.c.b16 %v9922, %v9921
    %v9930 = vpack.c.b16 %v9924, %v9923
    %v9931 = vpack.c.b16 %v9926, %v9925
    %v9932 = vpack.c.b16 %v9928, %v9927
    %v9938 = vsel %vm8277, %v9897, 0
    %9940 = vmatprep.subr.bf16.mxu0 0
    %9941 = vmatpush1.bf16.msra.mxu0 %v9929
    %9942 = vmatprep.subr.bf16.mxu0 0
    %9943 = vmatpush1.bf16.msra.mxu0 %v9930
    %9944 = vmatprep.subr.bf16.mxu0 0
    %9945 = vmatpush1.bf16.msra.mxu0 %v9931
    %9946 = vmatprep.subr.bf16.mxu0 0
    %9947 = vmatpush1.bf16.msra.mxu0 %v9932
    %9948 = vmatprep.subr.bf16.mxu0 0
    %9949 = vmatpush1.bf16.msra.mxu0 0
    %9950 = vmatprep.subr.bf16.mxu0 0
    %9951 = vmatpush1.bf16.msra.mxu0 0
    %9952 = vmatprep.subr.bf16.mxu0 0
    %9953 = vmatpush1.bf16.msra.mxu0 0
    %9954 = vmatprep.subr.bf16.mxu0 0
    %9955 = vmatpush1.bf16.msra.mxu0 0
    %9956 = vmatprep.subr.bf16.mxu0 0
    %9957 = vmatpush1.bf16.msra.mxu0 0
    %9958 = vmatprep.subr.bf16.mxu0 0
    %9959 = vmatpush1.bf16.msra.mxu0 0
    %9960 = vmatprep.subr.bf16.mxu0 0
    %9961 = vmatpush1.bf16.msra.mxu0 0
    %9962 = vmatprep.subr.bf16.mxu0 0
    %9963 = vmatpush1.bf16.msra.mxu0 0
    %9964 = vmatprep.subr.bf16.mxu0 0
    %9965 = vmatpush1.bf16.msra.mxu0 0
    %9966 = vmatprep.subr.bf16.mxu0 0
    %9967 = vmatpush1.bf16.msra.mxu0 0
    %9968 = vmatprep.subr.bf16.mxu0 0
    %9969 = vmatpush1.bf16.msra.mxu0 0
    %9970 = vmatprep.subr.bf16.mxu0 0
    %9971 = vmatpush1.bf16.msra.mxu0 0
    %9972 = vmatprep.mubr.bf16.mxu0 0
    %9973 = vmatmul.mubr.bf16.gmra.mrb[0].mxu0 %v9938
    %v9974 = vpop.f32.mrb[0].mxu0
    %v9975 = vadd.f32 %v9911, %v9974
    %v9976 = vpop.f32.mrb[0].mxu0
    %v9977 = vpop.f32.mrb[0].mxu0
    %v9978 = vpop.f32.mrb[0].mxu0
    %9979 = vdwg.mxu0
    %v9980 = vmax.f32 %v9975, 0.0
    %v9981 = vpack.c.bf16 %v9980, %v9980
    %v9982 = vld [vmem:[%s21] sm:$0xf]
    %v9983 = vld [vmem:[%s21 + $0x4] sm:$0xf]
    %v9984 = vld [vmem:[%s21 + $0x8] sm:$0xf]
    %v9985 = vld [vmem:[%s21 + $0xc] sm:$0xf]
    %v9986 = vld [vmem:[%s21 + $0x10] sm:$0xf]
    %v9987 = vld [vmem:[%s21 + $0x14] sm:$0xf]
    %v9988 = vld [vmem:[%s21 + $0x18] sm:$0xf]
    %v9989 = vld [vmem:[%s21 + $0x1c] sm:$0xf]
    %v9990 = vld [vmem:[%s21 + $0x20] sm:$0xf]
    %v9991 = vld [vmem:[%s21 + $0x24] sm:$0xf]
    %v9992 = vld [vmem:[%s21 + $0x28] sm:$0xf]
    %v9993 = vld [vmem:[%s21 + $0x2c] sm:$0xf]
    %v9994 = vld [vmem:[%s21 + $0x30] sm:$0xf]
    %v9995 = vld [vmem:[%s21 + $0x34] sm:$0xf]
    %v9996 = vld [vmem:[%s21 + $0x38] sm:$0xf]
    %v9997 = vld [vmem:[%s21 + $0x3c] sm:$0xf]
    %v9998 = vld [vmem:[%s22] sm:$0x1]
    %v10000 = vlaneseq
    %v10001 = vshrl.u32 %v10000, 7
    %v10002 = vsub.s32 0, %v10001
    %v10003 = vrot.slane %v9998, %v10002
    %v10021 = vunpack.c.l.b16 %v9982
    %v10022 = vunpack.c.l.b16 %v9983
    %v10023 = vunpack.c.l.b16 %v9984
    %v10024 = vunpack.c.l.b16 %v9985
    %v10025 = vunpack.c.l.b16 %v9986
    %v10026 = vunpack.c.l.b16 %v9987
    %v10027 = vunpack.c.l.b16 %v9988
    %v10028 = vunpack.c.l.b16 %v9989
    %v10029 = vunpack.c.l.b16 %v9990
    %v10030 = vunpack.c.l.b16 %v9991
    %v10031 = vunpack.c.l.b16 %v9992
    %v10032 = vunpack.c.l.b16 %v9993
    %v10033 = vunpack.c.l.b16 %v9994
    %v10034 = vunpack.c.l.b16 %v9995
    %v10035 = vunpack.c.l.b16 %v9996
    %v10036 = vunpack.c.l.b16 %v9997
    %v10037 = vpack.c.b16 %v10022, %v10021
    %v10038 = vpack.c.b16 %v10024, %v10023
    %v10039 = vpack.c.b16 %v10026, %v10025
    %v10040 = vpack.c.b16 %v10028, %v10027
    %v10041 = vpack.c.b16 %v10030, %v10029
    %v10042 = vpack.c.b16 %v10032, %v10031
    %v10043 = vpack.c.b16 %v10034, %v10033
    %v10044 = vpack.c.b16 %v10036, %v10035
    %10053 = vmatprep.subr.bf16.mxu0 0
    %10054 = vmatpush1.bf16.msra.mxu0 %v10037
    %10055 = vmatprep.subr.bf16.mxu0 0
    %10056 = vmatpush1.bf16.msra.mxu0 %v10038
    %10057 = vmatprep.subr.bf16.mxu0 0
    %10058 = vmatpush1.bf16.msra.mxu0 %v10039
    %10059 = vmatprep.subr.bf16.mxu0 0
    %10060 = vmatpush1.bf16.msra.mxu0 %v10040
    %10061 = vmatprep.subr.bf16.mxu0 0
    %10062 = vmatpush1.bf16.msra.mxu0 %v10041
    %10063 = vmatprep.subr.bf16.mxu0 0
    %10064 = vmatpush1.bf16.msra.mxu0 %v10042
    %10065 = vmatprep.subr.bf16.mxu0 0
    %10066 = vmatpush1.bf16.msra.mxu0 %v10043
    %10067 = vmatprep.subr.bf16.mxu0 0
    %10068 = vmatpush1.bf16.msra.mxu0 %v10044
    %10069 = vmatprep.subr.bf16.mxu0 0
    %10070 = vmatpush1.bf16.msra.mxu0 0
    %10071 = vmatprep.subr.bf16.mxu0 0
    %10072 = vmatpush1.bf16.msra.mxu0 0
    %10073 = vmatprep.subr.bf16.mxu0 0
    %10074 = vmatpush1.bf16.msra.mxu0 0
    %10075 = vmatprep.subr.bf16.mxu0 0
    %10076 = vmatpush1.bf16.msra.mxu0 0
    %10077 = vmatprep.subr.bf16.mxu0 0
    %10078 = vmatpush1.bf16.msra.mxu0 0
    %10079 = vmatprep.subr.bf16.mxu0 0
    %10080 = vmatpush1.bf16.msra.mxu0 0
    %10081 = vmatprep.subr.bf16.mxu0 0
    %10082 = vmatpush1.bf16.msra.mxu0 0
    %10083 = vmatprep.subr.bf16.mxu0 0
    %10084 = vmatpush1.bf16.msra.mxu0 0
    %10085 = vmatprep.mubr.bf16.mxu0 0
    %10086 = vmatmul.mubr.bf16.gmra.mrb[0].mxu0 %v9981
    %v10087 = vpop.f32.mrb[0].mxu0
    %v10088 = vadd.f32 %v10003, %v10087
    %v10089 = vpop.f32.mrb[0].mxu0
    %v10090 = vpop.f32.mrb[0].mxu0
    %v10091 = vpop.f32.mrb[0].mxu0
    %10092 = vdwg.mxu0
    %10093 = vst [vmem:[#allocation5] sm:$0x3] %v10088
    // Predicated region
    $region94: #{forward.1} parent=1 // pred_check
      _
    $region95: #{forward.1} parent=1 // pred_check_branch
      %10095 = sbr.rel (0) target = $region97
    $region96: #{forward.1} parent=1 // pred_region
      %s10097 = ssub.s32 32, 32
      %10098 = vsyncadd [#allocation6], %s10097
      %s10100 = sshll.u32 [#allocation5], 4
      %s10101 = int_to_ptr.vmem [resolvable:$true] %s10100
      %10103 = dma.vmem_to_hbm [thread:$0]  %s10101, 32, %s23, [#allocation6]
    $region97: #{forward.1} parent=1 // pred_fallthru
      _
    // Predicated region
    $region98: #{forward.1} parent=1 // pred_check
      _
    $region99: #{forward.1} parent=1 // pred_check_branch
      %10105 = sbr.rel (0) target = $region101
    $region100: #{forward.1} parent=1 // pred_region
      %10106 = dma.done [#allocation6], 32
    $region101: #{forward.1} parent=1 // pred_fallthru
      _
    %10107 = vsyncpa [#allocation6], 1

</llo_original>
